<compile_context>
chip_gen: v5e
topology: v5e:2x2
jax: 0.10.0
libtpu: 0.0.40
codegen_flags: <defaults>
</compile_context>

<pallas_src>
import jax
import jax.numpy as jnp
from jax import lax
from jax.experimental import pallas as pl
from jax.experimental.pallas import tpu as pltpu

IN_EPS = 1e-3   # nn.InstanceNorm2d(eps=0.001) in diff_pool / diff_unpool / OAFilter
BN_EPS = 1e-5   # nn.BatchNorm2d default eps (training-mode batch statistics)


# ----------------------------------------------------------------------------
# Kernel S: per-batch InstanceNorm statistics of `pre` (first pass of the
# two-pass cross-batch BatchNorm scheme).  grid=(B,), "parallel".
# ----------------------------------------------------------------------------
def _pre_stats_kernel(pre_ref, mu_ref, var_ref):
    x = pre_ref[0]                                            # (C, N) f32
    mu = jnp.mean(x, axis=1, keepdims=True)                   # (C, 1)
    xc = x - mu
    var = jnp.mean(xc * xc, axis=1, keepdims=True)            # (C, 1), two-pass
    mu_ref[0] = mu
    var_ref[0] = var


# ----------------------------------------------------------------------------
# Kernel A: fused IN+BN of `pre` (shared by diff_pool / diff_unpool), diff_pool
# attention + pooling, diff_unpool attention.  grid=(B,), "parallel".
# ----------------------------------------------------------------------------
def _pool_attention_kernel(pre_ref, mu_ref, var_ref,
                           dp_g_ref, dp_b_ref, du_g_ref, du_b_ref,
                           dp_w_ref, dp_bias_ref, du_w_ref, du_bias_ref,
                           x2_ref, su_ref):
    b = pl.program_id(0)
    p = pre_ref[0]                                            # (C, N) f32

    # Fused InstanceNorm + training-mode BatchNorm: the IN output has exactly
    # zero mean per (b, c), so the BN batch mean is 0 and its biased variance
    # is mean_b(var / (var + IN_EPS)); both collapse into one scale.
    mu = mu_ref[b]                                            # (C, 1)
    var = var_ref[b]                                          # (C, 1)
    var_all = var_ref[...]                                    # (B, C, 1)
    bn_var = jnp.mean(var_all / (var_all + IN_EPS), axis=0)   # (C, 1)
    xn = (p - mu) * (lax.rsqrt(var + IN_EPS) * lax.rsqrt(bn_var + BN_EPS))
    h_pool = jnp.maximum(xn * dp_g_ref[...] + dp_b_ref[...], 0.0)
    h_unpool = jnp.maximum(xn * du_g_ref[...] + du_b_ref[...], 0.0)

    # diff_pool attention: embedding (M, N), softmax over the N points (lanes).
    emb = jnp.dot(dp_w_ref[...], h_pool.astype(jnp.bfloat16),
                  preferred_element_type=jnp.float32) + dp_bias_ref[...]
    emb = emb - jnp.max(emb, axis=1, keepdims=True)
    e = jnp.exp(emb)
    s = e * (1.0 / jnp.sum(e, axis=1, keepdims=True))         # (M, N), exact
    # pooled x2[c, m] = sum_n p[c, n] * s[m, n]  -- contract N, no transpose.
    x2_ref[0] = lax.dot_general(
        p.astype(jnp.bfloat16), s.astype(jnp.bfloat16),
        dimension_numbers=(((1,), (1,)), ((), ())),
        preferred_element_type=jnp.float32)                   # (C, M)

    # diff_unpool attention: embedding (M, N), softmax over the M clusters.
    emb_u = jnp.dot(du_w_ref[...], h_unpool.astype(jnp.bfloat16),
                    preferred_element_type=jnp.float32) + du_bias_ref[...]
    emb_u = emb_u - jnp.max(emb_u, axis=0, keepdims=True)
    e_u = jnp.exp(emb_u)
    su_ref[0] = (e_u * (1.0 / jnp.sum(e_u, axis=0, keepdims=True))
                 ).astype(jnp.bfloat16)                       # (M, N) bf16


# ----------------------------------------------------------------------------
# Kernel B: stack of L OAFilter layers on the pooled (B, C, M) working set.
# Single invocation (cross-batch BatchNorm couples all batches); the working
# set is small and stays VMEM-resident.
# ----------------------------------------------------------------------------
def _oafilter_kernel(x_ref,
                     g1_ref, b1_ref, w1_ref, bi1_ref,
                     g2_ref, b2_ref, w2t_ref, bi2_ref,
                     g3_ref, b3_ref, w3_ref, bi3_ref,
                     out_ref):
    B, C, M = x_ref.shape
    L = w1_ref.shape[0]

    def fused_in_bn(v):
        # IN per (b, c) over M (eps=IN_EPS) fused with training-mode BN per c
        # over (b, m) (eps=BN_EPS); two-pass variance; no loops, no concat.
        mu = jnp.mean(v, axis=2, keepdims=True)                          # (B,C,1)
        vc = v - mu
        var = jnp.mean(vc * vc, axis=2, keepdims=True)                   # (B,C,1)
        bn_var = jnp.mean(var / (var + IN_EPS), axis=0, keepdims=True)   # (1,C,1)
        return vc * (lax.rsqrt(var + IN_EPS) * lax.rsqrt(bn_var + BN_EPS))

    x = x_ref[...]                                            # (B, C, M) f32
    for i in range(L):   # L is small (3); per-layer params hoisted to locals.
        g1, b1, bi1 = g1_ref[i], b1_ref[i], bi1_ref[i]        # (C, 1)
        g2, b2, bi2 = g2_ref[i], b2_ref[i], bi2_ref[i]        # (1, M)
        g3, b3, bi3 = g3_ref[i], b3_ref[i], bi3_ref[i]        # (C, 1)
        w1b = jnp.broadcast_to(w1_ref[i][None], (B, C, C))    # bf16
        w3b = jnp.broadcast_to(w3_ref[i][None], (B, C, C))    # bf16
        w2t = w2t_ref[i]                                      # (M, M) bf16

        # conv1: IN -> BN(C) -> ReLU -> 1x1 conv over channels (batched MXU).
        h1 = jnp.maximum(fused_in_bn(x) * g1 + b1, 0.0)
        t = lax.dot_general(
            w1b, h1.astype(jnp.bfloat16),
            dimension_numbers=(((2,), (1,)), ((0,), (0,))),
            preferred_element_type=jnp.float32) + bi1          # (B, C, M)

        # conv2: BN over the `points` channel -> ReLU -> 1x1 conv over points.
        # torch's trans(1,2) sandwich is folded into one stacked
        # (B*C, M) @ (M, M) right-multiplication by W2^T (full MXU rows).
        mu2 = jnp.mean(jnp.mean(t, axis=0, keepdims=True), axis=1, keepdims=True)
        tc = t - mu2
        var2 = jnp.mean(jnp.mean(tc * tc, axis=0, keepdims=True),
                        axis=1, keepdims=True)                 # (1, 1, M)
        h2 = jnp.maximum(tc * lax.rsqrt(var2 + BN_EPS) * g2 + b2, 0.0)
        u2 = jnp.dot(h2.reshape(B * C, M).astype(jnp.bfloat16), w2t,
                     preferred_element_type=jnp.float32).reshape(B, C, M)
        u = t + u2 + bi2

        # conv3: IN -> BN(C) -> ReLU -> 1x1 conv + residual (shot_cut is None).
        h3 = jnp.maximum(fused_in_bn(u) * g3 + b3, 0.0)
        x = lax.dot_general(
            w3b, h3.astype(jnp.bfloat16),
            dimension_numbers=(((2,), (1,)), ((0,), (0,))),
            preferred_element_type=jnp.float32) + bi3 + x

    out_ref[...] = x


# ----------------------------------------------------------------------------
# Kernel C: diff_unpool matmul, out[b] = x2_final[b] @ S_unpool[b].
# grid=(B,), "parallel".
# ----------------------------------------------------------------------------
def _unpool_kernel(x2_ref, su_ref, out_ref):
    out_ref[0] = jnp.dot(x2_ref[0].astype(jnp.bfloat16), su_ref[0],
                         preferred_element_type=jnp.float32)


# ----------------------------------------------------------------------------
# Wrapper.
# ----------------------------------------------------------------------------
def _vmem_limit_bytes(requested):
    """Cap the scoped-VMEM request against the chip's physical VMEM (64 MiB on
    v7x vs 128 MiB on v5e/v6e), leaving headroom for compiler scratch."""
    try:
        cap = int(pltpu.get_tpu_info().vmem_capacity_bytes)
    except Exception:
        cap = 64 * 1024 * 1024
    return int(max(4 * 1024 * 1024, min(int(requested), int(0.55 * cap))))


@jax.jit
def geo_attention_block(pre_nchw, params):
    """pre_nchw: (B, C, N, 1) float32 -> (B, C, N, 1) float32."""
    B, C, N, _ = pre_nchw.shape
    M = params["dp_w"].shape[0]
    L = params["w1"].shape[0]
    f32, bf16 = jnp.float32, jnp.bfloat16

    pre = pre_nchw[..., 0]                                    # (B, C, N)

    # Host-side parameter prep: pre-cast matmul weights to bf16; fold W2^T.
    dp_w = params["dp_w"].astype(bf16)                        # (M, C)
    du_w = params["du_w"].astype(bf16)                        # (M, C)
    w1 = params["w1"].astype(bf16)                            # (L, C, C)
    w3 = params["w3"].astype(bf16)                            # (L, C, C)
    w2t = jnp.swapaxes(params["w2"], 1, 2).astype(bf16)       # (L, M, M) = W2^T
    g2 = jnp.swapaxes(params["g2"], 1, 2)                     # (L, 1, M)
    b2 = jnp.swapaxes(params["b2"], 1, 2)
    bi2 = jnp.swapaxes(params["bi2"], 1, 2)

    parallel = pltpu.CompilerParams(dimension_semantics=("parallel",))

    # --- pass 1: per-batch IN statistics of `pre` (two-pass cross-batch BN). ---
    mu, var = pl.pallas_call(
        _pre_stats_kernel,
        grid=(B,),
        in_specs=[pl.BlockSpec((1, C, N), lambda b: (b, 0, 0))],
        out_specs=[pl.BlockSpec((1, C, 1), lambda b: (b, 0, 0)),
                   pl.BlockSpec((1, C, 1), lambda b: (b, 0, 0))],
        out_shape=(jax.ShapeDtypeStruct((B, C, 1), f32),
                   jax.ShapeDtypeStruct((B, C, 1), f32)),
        compiler_params=parallel,
    )(pre)

    # --- pass 2: diff_pool / diff_unpool attention on a batch-parallel grid. ---
    x2, s_u = pl.pallas_call(
        _pool_attention_kernel,
        grid=(B,),
        in_specs=[
            pl.BlockSpec((1, C, N), lambda b: (b, 0, 0)),     # pre (streamed per batch)
            pl.BlockSpec((B, C, 1), lambda b: (0, 0, 0)),     # mu  (all batches, tiny)
            pl.BlockSpec((B, C, 1), lambda b: (0, 0, 0)),     # var (all batches, tiny)
            pl.BlockSpec((C, 1), lambda b: (0, 0)),           # dp_g
            pl.BlockSpec((C, 1), lambda b: (0, 0)),           # dp_b
            pl.BlockSpec((C, 1), lambda b: (0, 0)),           # du_g
            pl.BlockSpec((C, 1), lambda b: (0, 0)),           # du_b
            pl.BlockSpec((M, C), lambda b: (0, 0)),           # dp_w (bf16)
            pl.BlockSpec((M, 1), lambda b: (0, 0)),           # dp_bias
            pl.BlockSpec((M, C), lambda b: (0, 0)),           # du_w (bf16)
            pl.BlockSpec((M, 1), lambda b: (0, 0)),           # du_bias
        ],
        out_specs=[pl.BlockSpec((1, C, M), lambda b: (b, 0, 0)),
                   pl.BlockSpec((1, M, N), lambda b: (b, 0, 0))],
        out_shape=(jax.ShapeDtypeStruct((B, C, M), f32),
                   jax.ShapeDtypeStruct((B, M, N), bf16)),
        compiler_params=parallel,
    )(pre, mu, var,
      params["dp_g"], params["dp_b"], params["du_g"], params["du_b"],
      dp_w, params["dp_bias"], du_w, params["du_bias"])

    # --- pass 3: OAFilter stack on the small pooled working set. ---
    work = 4 * B * C * M
    param_bytes = 2 * L * (2 * C * C + M * M) + 4 * L * (6 * C + 4 * M)
    oaf_vmem = _vmem_limit_bytes(10 * work + param_bytes + 8 * 1024 * 1024)
    vmem_spec = pl.BlockSpec(memory_space=pltpu.MemorySpace.VMEM)
    y2 = pl.pallas_call(
        _oafilter_kernel,
        out_shape=jax.ShapeDtypeStruct((B, C, M), f32),
        in_specs=[vmem_spec] * 13,
        out_specs=vmem_spec,
        input_output_aliases={0: 0},          # x2 is dead after this call
        compiler_params=pltpu.CompilerParams(vmem_limit_bytes=oaf_vmem),
    )(x2, params["g1"], params["b1"], w1, params["bi1"],
      g2, b2, w2t, bi2,
      params["g3"], params["b3"], w3, params["bi3"])

    # --- pass 4: diff_unpool matmul on a batch-parallel grid. ---
    out = pl.pallas_call(
        _unpool_kernel,
        grid=(B,),
        in_specs=[pl.BlockSpec((1, C, M), lambda b: (b, 0, 0)),
                  pl.BlockSpec((1, M, N), lambda b: (b, 0, 0))],
        out_specs=pl.BlockSpec((1, C, N), lambda b: (b, 0, 0)),
        out_shape=jax.ShapeDtypeStruct((B, C, N), f32),
        compiler_params=parallel,
    )(y2, s_u)

    # TODO(synk): for very large per-batch N, further tile N inside the batch
    # grid (online softmax for the pool attention, pl.Buffered streaming).
    # TODO(synk): on v6e/v7x the affine/ReLU/exp elementwise passes could run
    # in bf16 (stats in f32); v5e has no bf16 VPU so this needs gating.
    return out[..., None]


# ----------------------------------------------------------------------------
# Deterministic parameter init (shapes from the PyTorch module __init__).
# ----------------------------------------------------------------------------
def init_params(key, channels, l2_nums, num_layers):
    C, M, L = channels, l2_nums, num_layers
    ks = iter(jax.random.split(key, 32))

    def uni(k, shape, fan_in):
        bound = 1.0 / float(fan_in) ** 0.5
        return jax.random.uniform(k, shape, jnp.float32, -bound, bound)

    def bn(k, n, lead=()):
        kw, kb = jax.random.split(k)
        g = 1.0 + 0.1 * jax.random.normal(kw, lead + (n, 1), jnp.float32)
        b = 0.1 * jax.random.normal(kb, lead + (n, 1), jnp.float32)
        return g, b

    p = {}
    p["dp_g"], p["dp_b"] = bn(next(ks), C)
    p["dp_w"] = uni(next(ks), (M, C), C)
    p["dp_bias"] = uni(next(ks), (M, 1), C)
    p["du_g"], p["du_b"] = bn(next(ks), C)
    p["du_w"] = uni(next(ks), (M, C), C)
    p["du_bias"] = uni(next(ks), (M, 1), C)
    p["g1"], p["b1"] = bn(next(ks), C, (L,))
    p["w1"] = uni(next(ks), (L, C, C), C)
    p["bi1"] = uni(next(ks), (L, C, 1), C)
    p["g2"], p["b2"] = bn(next(ks), M, (L,))
    p["w2"] = uni(next(ks), (L, M, M), M)
    p["bi2"] = uni(next(ks), (L, M, 1), M)
    p["g3"], p["b3"] = bn(next(ks), C, (L,))
    p["w3"] = uni(next(ks), (L, C, C), C)
    p["bi3"] = uni(next(ks), (L, C, 1), C)
    return p


# ----------------------------------------------------------------------------
# Pure-JAX reference in the original PyTorch (B, C, X) ordering.  Uses the same
# bf16-operand / f32-accumulation matmul precision as the kernels so the
# comparison isolates layout / fusion correctness.
# ----------------------------------------------------------------------------
def _ref_in(x, eps=IN_EPS):
    mu = jnp.mean(x, axis=-1, keepdims=True)
    var = jnp.mean((x - mu) ** 2, axis=-1, keepdims=True)
    return (x - mu) * lax.rsqrt(var + eps)


def _ref_bn(x, gamma, beta, eps=BN_EPS):
    mu = jnp.mean(x, axis=(0, 2), keepdims=True)
    var = jnp.mean((x - mu) ** 2, axis=(0, 2), keepdims=True)
    return (x - mu) * lax.rsqrt(var + eps) * gamma[None] + beta[None]


def _ref_conv1x1(x, w, b):
    y = jnp.einsum("oc,bcx->box", w.astype(jnp.bfloat16), x.astype(jnp.bfloat16),
                   preferred_element_type=jnp.float32)
    return y + b[None]


def _ref_softmax(x, axis):
    m = jnp.max(x, axis=axis, keepdims=True)
    e = jnp.exp(x - m)
    return e / jnp.sum(e, axis=axis, keepdims=True)


def _ref_diff_pool(x, g, b, w, bias):
    h = jnp.maximum(_ref_bn(_ref_in(x), g, b), 0.0)
    s = _ref_softmax(_ref_conv1x1(h, w, bias), axis=2)            # (B, M, N)
    return jnp.einsum("bcn,bmn->bcm", x.astype(jnp.bfloat16), s.astype(jnp.bfloat16),
                      preferred_element_type=jnp.float32)


def _ref_oafilter(x, g1, b1, w1, bi1, g2, b2, w2, bi2, g3, b3, w3, bi3):
    h = jnp.maximum(_ref_bn(_ref_in(x), g1, b1), 0.0)
    out = jnp.transpose(_ref_conv1x1(h, w1, bi1), (0, 2, 1))       # (B, M, C)
    h2 = jnp.maximum(_ref_bn(out, g2, b2), 0.0)
    out = out + _ref_conv1x1(h2, w2, bi2)
    u = jnp.transpose(out, (0, 2, 1))                              # (B, C, M)
    h3 = jnp.maximum(_ref_bn(_ref_in(u), g3, b3), 0.0)
    return _ref_conv1x1(h3, w3, bi3) + x


def _ref_diff_unpool(x_geo, x_down, g, b, w, bias):
    h = jnp.maximum(_ref_bn(_ref_in(x_geo), g, b), 0.0)
    s = _ref_softmax(_ref_conv1x1(h, w, bias), axis=1)             # (B, M, N)
    return jnp.einsum("bcm,bmn->bcn", x_down.astype(jnp.bfloat16), s.astype(jnp.bfloat16),
                      preferred_element_type=jnp.float32)


def reference_forward(pre_nchw, params):
    pre = pre_nchw[..., 0]
    xd = _ref_diff_pool(pre, params["dp_g"], params["dp_b"],
                        params["dp_w"], params["dp_bias"])
    for i in range(params["w1"].shape[0]):
        xd = _ref_oafilter(xd,
                           params["g1"][i], params["b1"][i], params["w1"][i], params["bi1"][i],
                           params["g2"][i], params["b2"][i], params["w2"][i], params["bi2"][i],
                           params["g3"][i], params["b3"][i], params["w3"][i], params["bi3"][i])
    xg = _ref_diff_unpool(pre, xd, params["du_g"], params["du_b"],
                          params["du_w"], params["du_bias"])
    return xg[..., None]


if __name__ == "__main__":
    # Small but lane-friendly: N, M multiples of 128; C multiple of 8.
    B, C, N = 2, 32, 256        # batch, channels, number of points
    L2_NUMS, NUM = 128, 3       # cluster count, number of OAFilter layers

    key = jax.random.PRNGKey(0)
    kx, kp = jax.random.split(key)
    pre = jax.random.normal(kx, (B, C, N, 1), jnp.float32)
    params = init_params(kp, C, L2_NUMS, NUM)

    out = jax.block_until_ready(geo_attention_block(pre, params))
    ref = jax.block_until_ready(reference_forward(pre, params))

    assert out.shape == (B, C, N, 1), out.shape
    max_err = float(jnp.max(jnp.abs(out - ref)))
    if not jnp.allclose(out, ref, atol=5e-2, rtol=5e-2):
        raise SystemExit(f"mismatch vs reference, max_err={max_err}")
    print("KERNEL_OK")
</pallas_src>

<mosaic_0001>
module attributes {stable_mosaic.version = 11 : i64} {
  func.func @_pre_stats_kernel(%arg0: i32, %arg1: memref<1x32x256xf32, #tpu.memory_space<vmem>>, %arg2: memref<1x32x1xf32, #tpu.memory_space<vmem>>, %arg3: memref<1x32x1xf32, #tpu.memory_space<vmem>>) attributes {dimension_semantics = [#tpu.dimension_semantics<parallel>], iteration_bounds = array<i64: 2>, scalar_prefetch = 0 : i64, scratch_operands = 0 : i64, tpu.core_type = #tpu.core_type<tc>, window_params = [{transform_indices = @transform_0, window_bounds = array<i64: 1, 32, 256>}, {transform_indices = @transform_1, window_bounds = array<i64: 1, 32, 1>}, {transform_indices = @transform_2, window_bounds = array<i64: 1, 32, 1>}]} {
    %c0 = arith.constant 0 : index
    %c0_0 = arith.constant 0 : index
    %c0_1 = arith.constant 0 : index
    %0 = vector.load %arg1[%c0, %c0_0, %c0_1] : memref<1x32x256xf32, #tpu.memory_space<vmem>>, vector<1x32x256xf32>
    %1 = vector.shape_cast %0 : vector<1x32x256xf32> to vector<32x256xf32>
    %cst = arith.constant dense<0.000000e+00> : vector<32xf32>
    %2 = vector.multi_reduction <add>, %1, %cst [1] : vector<32x256xf32> to vector<32xf32>
    %3 = vector.shape_cast %2 : vector<32xf32> to vector<32x1xf32>
    %cst_2 = arith.constant 2.560000e+02 : f32
    %4 = vector.broadcast %cst_2 : f32 to vector<32x1xf32>
    %5 = arith.divf %3, %4 : vector<32x1xf32>
    %6 = vector.broadcast %5 : vector<32x1xf32> to vector<32x256xf32>
    %7 = arith.subf %1, %6 : vector<32x256xf32>
    %8 = arith.mulf %7, %7 : vector<32x256xf32>
    %cst_3 = arith.constant dense<0.000000e+00> : vector<32xf32>
    %9 = vector.multi_reduction <add>, %8, %cst_3 [1] : vector<32x256xf32> to vector<32xf32>
    %10 = vector.shape_cast %9 : vector<32xf32> to vector<32x1xf32>
    %cst_4 = arith.constant 2.560000e+02 : f32
    %11 = vector.broadcast %cst_4 : f32 to vector<32x1xf32>
    %12 = arith.divf %10, %11 : vector<32x1xf32>
    %c0_5 = arith.constant 0 : index
    %c0_6 = arith.constant 0 : index
    %c0_7 = arith.constant 0 : index
    %13 = vector.load %arg2[%c0_5, %c0_6, %c0_7] : memref<1x32x1xf32, #tpu.memory_space<vmem>>, vector<1x32x1xf32>
    %14 = vector.shape_cast %13 : vector<1x32x1xf32> to vector<32x1xf32>
    %15 = vector.shape_cast %5 : vector<32x1xf32> to vector<1x32x1xf32>
    tpu.vector_store %arg2[%c0_5, %c0_6, %c0_7], %15 {strides = array<i32>} : memref<1x32x1xf32, #tpu.memory_space<vmem>>, vector<1x32x1xf32>,
    %c0_8 = arith.constant 0 : index
    %c0_9 = arith.constant 0 : index
    %c0_10 = arith.constant 0 : index
    %16 = vector.load %arg3[%c0_8, %c0_9, %c0_10] : memref<1x32x1xf32, #tpu.memory_space<vmem>>, vector<1x32x1xf32>
    %17 = vector.shape_cast %16 : vector<1x32x1xf32> to vector<32x1xf32>
    %18 = vector.shape_cast %12 : vector<32x1xf32> to vector<1x32x1xf32>
    tpu.vector_store %arg3[%c0_8, %c0_9, %c0_10], %18 {strides = array<i32>} : memref<1x32x1xf32, #tpu.memory_space<vmem>>, vector<1x32x1xf32>,
    return
  }
  func.func @transform_0(%arg0: i32) -> (i32, i32, i32) {
    %c0_i32 = arith.constant 0 : i32
    %c0_i32_0 = arith.constant 0 : i32
    %c0_i32_1 = arith.constant 0 : i32
    return %arg0, %c0_i32, %c0_i32_0 : i32, i32, i32
  }
  func.func @transform_1(%arg0: i32) -> (i32, i32, i32) {
    %c0_i32 = arith.constant 0 : i32
    %c0_i32_0 = arith.constant 0 : i32
    %c0_i32_1 = arith.constant 0 : i32
    return %arg0, %c0_i32, %c0_i32_0 : i32, i32, i32
  }
  func.func @transform_2(%arg0: i32) -> (i32, i32, i32) {
    %c0_i32 = arith.constant 0 : i32
    %c0_i32_0 = arith.constant 0 : i32
    %c0_i32_1 = arith.constant 0 : i32
    return %arg0, %c0_i32, %c0_i32_0 : i32, i32, i32
  }
}

module attributes {stable_mosaic.version = 11 : i64} {
  func.func @_pool_attention_kernel(%arg0: i32, %arg1: memref<1x32x256xf32, #tpu.memory_space<vmem>>, %arg2: memref<2x32x1xf32, #tpu.memory_space<vmem>>, %arg3: memref<2x32x1xf32, #tpu.memory_space<vmem>>, %arg4: memref<32x1xf32, #tpu.memory_space<vmem>>, %arg5: memref<32x1xf32, #tpu.memory_space<vmem>>, %arg6: memref<32x1xf32, #tpu.memory_space<vmem>>, %arg7: memref<32x1xf32, #tpu.memory_space<vmem>>, %arg8: memref<128x32xbf16, #tpu.memory_space<vmem>>, %arg9: memref<128x1xf32, #tpu.memory_space<vmem>>, %arg10: memref<128x32xbf16, #tpu.memory_space<vmem>>, %arg11: memref<128x1xf32, #tpu.memory_space<vmem>>, %arg12: memref<1x32x128xf32, #tpu.memory_space<vmem>>, %arg13: memref<1x128x256xbf16, #tpu.memory_space<vmem>>) attributes {dimension_semantics = [#tpu.dimension_semantics<parallel>], iteration_bounds = array<i64: 2>, scalar_prefetch = 0 : i64, scratch_operands = 0 : i64, tpu.core_type = #tpu.core_type<tc>, window_params = [{transform_indices = @transform_0, window_bounds = array<i64: 1, 32, 256>}, {pipeline_mode = #tpu.pipeline_mode<synchronous>, transform_indices = @transform_1, window_bounds = array<i64: 2, 32, 1>}, {pipeline_mode = #tpu.pipeline_mode<synchronous>, transform_indices = @transform_2, window_bounds = array<i64: 2, 32, 1>}, {pipeline_mode = #tpu.pipeline_mode<synchronous>, transform_indices = @transform_3, window_bounds = array<i64: 32, 1>}, {pipeline_mode = #tpu.pipeline_mode<synchronous>, transform_indices = @transform_4, window_bounds = array<i64: 32, 1>}, {pipeline_mode = #tpu.pipeline_mode<synchronous>, transform_indices = @transform_5, window_bounds = array<i64: 32, 1>}, {pipeline_mode = #tpu.pipeline_mode<synchronous>, transform_indices = @transform_6, window_bounds = array<i64: 32, 1>}, {pipeline_mode = #tpu.pipeline_mode<synchronous>, transform_indices = @transform_7, window_bounds = array<i64: 128, 32>}, {pipeline_mode = #tpu.pipeline_mode<synchronous>, transform_indices = @transform_8, window_bounds = array<i64: 128, 1>}, {pipeline_mode = #tpu.pipeline_mode<synchronous>, transform_indices = @transform_9, window_bounds = array<i64: 128, 32>}, {pipeline_mode = #tpu.pipeline_mode<synchronous>, transform_indices = @transform_10, window_bounds = array<i64: 128, 1>}, {transform_indices = @transform_11, window_bounds = array<i64: 1, 32, 128>}, {transform_indices = @transform_12, window_bounds = array<i64: 1, 128, 256>}]} {
    %c0 = arith.constant 0 : index
    %c0_0 = arith.constant 0 : index
    %c0_1 = arith.constant 0 : index
    %0 = vector.load %arg1[%c0, %c0_0, %c0_1] : memref<1x32x256xf32, #tpu.memory_space<vmem>>, vector<1x32x256xf32>
    %1 = vector.shape_cast %0 : vector<1x32x256xf32> to vector<32x256xf32>
    %2 = arith.index_cast %arg0 : i32 to index
    %c0_2 = arith.constant 0 : index
    %c0_3 = arith.constant 0 : index
    %3 = vector.load %arg2[%2, %c0_2, %c0_3] : memref<2x32x1xf32, #tpu.memory_space<vmem>>, vector<1x32x1xf32>
    %4 = vector.shape_cast %3 : vector<1x32x1xf32> to vector<32x1xf32>
    %5 = arith.index_cast %arg0 : i32 to index
    %c0_4 = arith.constant 0 : index
    %c0_5 = arith.constant 0 : index
    %6 = vector.load %arg3[%5, %c0_4, %c0_5] : memref<2x32x1xf32, #tpu.memory_space<vmem>>, vector<1x32x1xf32>
    %7 = vector.shape_cast %6 : vector<1x32x1xf32> to vector<32x1xf32>
    %c0_6 = arith.constant 0 : index
    %c0_7 = arith.constant 0 : index
    %c0_8 = arith.constant 0 : index
    %8 = vector.load %arg3[%c0_6, %c0_7, %c0_8] : memref<2x32x1xf32, #tpu.memory_space<vmem>>, vector<2x32x1xf32>
    %cst = arith.constant 1.000000e-03 : f32
    %9 = vector.broadcast %cst : f32 to vector<2x32x1xf32>
    %10 = arith.addf %8, %9 : vector<2x32x1xf32>
    %11 = arith.divf %8, %10 : vector<2x32x1xf32>
    %cst_9 = arith.constant dense<0.000000e+00> : vector<32x1xf32>
    %12 = vector.multi_reduction <add>, %11, %cst_9 [0] : vector<2x32x1xf32> to vector<32x1xf32>
    %cst_10 = arith.constant 2.000000e+00 : f32
    %13 = vector.broadcast %cst_10 : f32 to vector<32x1xf32>
    %14 = arith.divf %12, %13 : vector<32x1xf32>
    %15 = vector.broadcast %4 : vector<32x1xf32> to vector<32x256xf32>
    %16 = arith.subf %1, %15 : vector<32x256xf32>
    %cst_11 = arith.constant 1.000000e-03 : f32
    %17 = vector.broadcast %cst_11 : f32 to vector<32x1xf32>
    %18 = arith.addf %7, %17 : vector<32x1xf32>
    %19 = math.rsqrt %18 : vector<32x1xf32>
    %cst_12 = arith.constant 9.99999974E-6 : f32
    %20 = vector.broadcast %cst_12 : f32 to vector<32x1xf32>
    %21 = arith.addf %14, %20 : vector<32x1xf32>
    %22 = math.rsqrt %21 : vector<32x1xf32>
    %23 = arith.mulf %19, %22 : vector<32x1xf32>
    %24 = vector.broadcast %23 : vector<32x1xf32> to vector<32x256xf32>
    %25 = arith.mulf %16, %24 : vector<32x256xf32>
    %c0_13 = arith.constant 0 : index
    %c0_14 = arith.constant 0 : index
    %26 = vector.load %arg4[%c0_13, %c0_14] : memref<32x1xf32, #tpu.memory_space<vmem>>, vector<32x1xf32>
    %27 = vector.broadcast %26 : vector<32x1xf32> to vector<32x256xf32>
    %28 = arith.mulf %25, %27 : vector<32x256xf32>
    %c0_15 = arith.constant 0 : index
    %c0_16 = arith.constant 0 : index
    %29 = vector.load %arg5[%c0_15, %c0_16] : memref<32x1xf32, #tpu.memory_space<vmem>>, vector<32x1xf32>
    %30 = vector.broadcast %29 : vector<32x1xf32> to vector<32x256xf32>
    %31 = arith.addf %28, %30 : vector<32x256xf32>
    %cst_17 = arith.constant 0.000000e+00 : f32
    %32 = vector.broadcast %cst_17 : f32 to vector<32x256xf32>
    %33 = arith.maximumf %31, %32 : vector<32x256xf32>
    %c0_18 = arith.constant 0 : index
    %c0_19 = arith.constant 0 : index
    %34 = vector.load %arg6[%c0_18, %c0_19] : memref<32x1xf32, #tpu.memory_space<vmem>>, vector<32x1xf32>
    %35 = vector.broadcast %34 : vector<32x1xf32> to vector<32x256xf32>
    %36 = arith.mulf %25, %35 : vector<32x256xf32>
    %c0_20 = arith.constant 0 : index
    %c0_21 = arith.constant 0 : index
    %37 = vector.load %arg7[%c0_20, %c0_21] : memref<32x1xf32, #tpu.memory_space<vmem>>, vector<32x1xf32>
    %38 = vector.broadcast %37 : vector<32x1xf32> to vector<32x256xf32>
    %39 = arith.addf %36, %38 : vector<32x256xf32>
    %cst_22 = arith.constant 0.000000e+00 : f32
    %40 = vector.broadcast %cst_22 : f32 to vector<32x256xf32>
    %41 = arith.maximumf %39, %40 : vector<32x256xf32>
    %c0_23 = arith.constant 0 : index
    %c0_24 = arith.constant 0 : index
    %42 = vector.load %arg8[%c0_23, %c0_24] : memref<128x32xbf16, #tpu.memory_space<vmem>>, vector<128x32xbf16>
    %43 = arith.truncf %33 : vector<32x256xf32> to vector<32x256xbf16>
    %cst_25 = arith.constant dense<0.000000e+00> : vector<128x256xf32>
    %44 = tpu.matmul %42, %43, %cst_25 {dimension_numbers = #tpu.dot_dimension_numbers<[1], [0], [0], [1], [0, 0, 1, 1], [], []>} : vector<128x32xbf16>, vector<32x256xbf16>, vector<128x256xf32> -> vector<128x256xf32>
    %c0_26 = arith.constant 0 : index
    %c0_27 = arith.constant 0 : index
    %45 = vector.load %arg9[%c0_26, %c0_27] : memref<128x1xf32, #tpu.memory_space<vmem>>, vector<128x1xf32>
    %46 = vector.broadcast %45 : vector<128x1xf32> to vector<128x256xf32>
    %47 = arith.addf %44, %46 : vector<128x256xf32>
    %cst_28 = arith.constant dense<0xFF800000> : vector<128xf32>
    %48 = vector.multi_reduction <maximumf>, %47, %cst_28 [1] : vector<128x256xf32> to vector<128xf32>
    %49 = vector.shape_cast %48 : vector<128xf32> to vector<128x1xf32>
    %50 = vector.broadcast %49 : vector<128x1xf32> to vector<128x256xf32>
    %51 = arith.subf %47, %50 : vector<128x256xf32>
    %52 = math.exp %51 : vector<128x256xf32>
    %cst_29 = arith.constant dense<0.000000e+00> : vector<128xf32>
    %53 = vector.multi_reduction <add>, %52, %cst_29 [1] : vector<128x256xf32> to vector<128xf32>
    %54 = vector.shape_cast %53 : vector<128xf32> to vector<128x1xf32>
    %cst_30 = arith.constant 1.000000e+00 : f32
    %55 = vector.broadcast %cst_30 : f32 to vector<128x1xf32>
    %56 = arith.divf %55, %54 : vector<128x1xf32>
    %57 = vector.broadcast %56 : vector<128x1xf32> to vector<128x256xf32>
    %58 = arith.mulf %52, %57 : vector<128x256xf32>
    %59 = arith.truncf %1 : vector<32x256xf32> to vector<32x256xbf16>
    %60 = arith.truncf %58 : vector<128x256xf32> to vector<128x256xbf16>
    %cst_31 = arith.constant dense<0.000000e+00> : vector<32x128xf32>
    %61 = tpu.matmul %59, %60, %cst_31 {dimension_numbers = #tpu.dot_dimension_numbers<[1], [1], [0], [0], [0, 0, 1, 0], [], []>} : vector<32x256xbf16>, vector<128x256xbf16>, vector<32x128xf32> -> vector<32x128xf32>
    %c0_32 = arith.constant 0 : index
    %c0_33 = arith.constant 0 : index
    %c0_34 = arith.constant 0 : index
    %62 = vector.load %arg12[%c0_32, %c0_33, %c0_34] : memref<1x32x128xf32, #tpu.memory_space<vmem>>, vector<1x32x128xf32>
    %63 = vector.shape_cast %62 : vector<1x32x128xf32> to vector<32x128xf32>
    %64 = vector.shape_cast %61 : vector<32x128xf32> to vector<1x32x128xf32>
    tpu.vector_store %arg12[%c0_32, %c0_33, %c0_34], %64 {strides = array<i32>} : memref<1x32x128xf32, #tpu.memory_space<vmem>>, vector<1x32x128xf32>,
    %c0_35 = arith.constant 0 : index
    %c0_36 = arith.constant 0 : index
    %65 = vector.load %arg10[%c0_35, %c0_36] : memref<128x32xbf16, #tpu.memory_space<vmem>>, vector<128x32xbf16>
    %66 = arith.truncf %41 : vector<32x256xf32> to vector<32x256xbf16>
    %cst_37 = arith.constant dense<0.000000e+00> : vector<128x256xf32>
    %67 = tpu.matmul %65, %66, %cst_37 {dimension_numbers = #tpu.dot_dimension_numbers<[1], [0], [0], [1], [0, 0, 1, 1], [], []>} : vector<128x32xbf16>, vector<32x256xbf16>, vector<128x256xf32> -> vector<128x256xf32>
    %c0_38 = arith.constant 0 : index
    %c0_39 = arith.constant 0 : index
    %68 = vector.load %arg11[%c0_38, %c0_39] : memref<128x1xf32, #tpu.memory_space<vmem>>, vector<128x1xf32>
    %69 = vector.broadcast %68 : vector<128x1xf32> to vector<128x256xf32>
    %70 = arith.addf %67, %69 : vector<128x256xf32>
    %cst_40 = arith.constant dense<0xFF800000> : vector<256xf32>
    %71 = vector.multi_reduction <maximumf>, %70, %cst_40 [0] : vector<128x256xf32> to vector<256xf32>
    %72 = vector.shape_cast %71 : vector<256xf32> to vector<1x256xf32>
    %73 = vector.broadcast %72 : vector<1x256xf32> to vector<128x256xf32>
    %74 = arith.subf %70, %73 : vector<128x256xf32>
    %75 = math.exp %74 : vector<128x256xf32>
    %cst_41 = arith.constant dense<0.000000e+00> : vector<256xf32>
    %76 = vector.multi_reduction <add>, %75, %cst_41 [0] : vector<128x256xf32> to vector<256xf32>
    %77 = vector.shape_cast %76 : vector<256xf32> to vector<1x256xf32>
    %cst_42 = arith.constant 1.000000e+00 : f32
    %78 = vector.broadcast %cst_42 : f32 to vector<1x256xf32>
    %79 = arith.divf %78, %77 : vector<1x256xf32>
    %80 = vector.broadcast %79 : vector<1x256xf32> to vector<128x256xf32>
    %81 = arith.mulf %75, %80 : vector<128x256xf32>
    %82 = arith.truncf %81 : vector<128x256xf32> to vector<128x256xbf16>
    %c0_43 = arith.constant 0 : index
    %c0_44 = arith.constant 0 : index
    %c0_45 = arith.constant 0 : index
    %83 = vector.load %arg13[%c0_43, %c0_44, %c0_45] : memref<1x128x256xbf16, #tpu.memory_space<vmem>>, vector<1x128x256xbf16>
    %84 = vector.shape_cast %83 : vector<1x128x256xbf16> to vector<128x256xbf16>
    %85 = vector.shape_cast %82 : vector<128x256xbf16> to vector<1x128x256xbf16>
    tpu.vector_store %arg13[%c0_43, %c0_44, %c0_45], %85 {strides = array<i32>} : memref<1x128x256xbf16, #tpu.memory_space<vmem>>, vector<1x128x256xbf16>,
    return
  }
  func.func @transform_0(%arg0: i32) -> (i32, i32, i32) {
    %c0_i32 = arith.constant 0 : i32
    %c0_i32_0 = arith.constant 0 : i32
    %c0_i32_1 = arith.constant 0 : i32
    return %arg0, %c0_i32, %c0_i32_0 : i32, i32, i32
  }
  func.func @transform_1(%arg0: i32) -> (i32, i32, i32) {
    %c0_i32 = arith.constant 0 : i32
    %c0_i32_0 = arith.constant 0 : i32
    %c0_i32_1 = arith.constant 0 : i32
    %c0_i32_2 = arith.constant 0 : i32
    return %c0_i32, %c0_i32_0, %c0_i32_1 : i32, i32, i32
  }
  func.func @transform_2(%arg0: i32) -> (i32, i32, i32) {
    %c0_i32 = arith.constant 0 : i32
    %c0_i32_0 = arith.constant 0 : i32
    %c0_i32_1 = arith.constant 0 : i32
    %c0_i32_2 = arith.constant 0 : i32
    return %c0_i32, %c0_i32_0, %c0_i32_1 : i32, i32, i32
  }
  func.func @transform_3(%arg0: i32) -> (i32, i32) {
    %c0_i32 = arith.constant 0 : i32
    %c0_i32_0 = arith.constant 0 : i32
    %c0_i32_1 = arith.constant 0 : i32
    return %c0_i32, %c0_i32_0 : i32, i32
  }
  func.func @transform_4(%arg0: i32) -> (i32, i32) {
    %c0_i32 = arith.constant 0 : i32
    %c0_i32_0 = arith.constant 0 : i32
    %c0_i32_1 = arith.constant 0 : i32
    return %c0_i32, %c0_i32_0 : i32, i32
  }
  func.func @transform_5(%arg0: i32) -> (i32, i32) {
    %c0_i32 = arith.constant 0 : i32
    %c0_i32_0 = arith.constant 0 : i32
    %c0_i32_1 = arith.constant 0 : i32
    return %c0_i32, %c0_i32_0 : i32, i32
  }
  func.func @transform_6(%arg0: i32) -> (i32, i32) {
    %c0_i32 = arith.constant 0 : i32
    %c0_i32_0 = arith.constant 0 : i32
    %c0_i32_1 = arith.constant 0 : i32
    return %c0_i32, %c0_i32_0 : i32, i32
  }
  func.func @transform_7(%arg0: i32) -> (i32, i32) {
    %c0_i32 = arith.constant 0 : i32
    %c0_i32_0 = arith.constant 0 : i32
    %c0_i32_1 = arith.constant 0 : i32
    return %c0_i32, %c0_i32_0 : i32, i32
  }
  func.func @transform_8(%arg0: i32) -> (i32, i32) {
    %c0_i32 = arith.constant 0 : i32
    %c0_i32_0 = arith.constant 0 : i32
    %c0_i32_1 = arith.constant 0 : i32
    return %c0_i32, %c0_i32_0 : i32, i32
  }
  func.func @transform_9(%arg0: i32) -> (i32, i32) {
    %c0_i32 = arith.constant 0 : i32
    %c0_i32_0 = arith.constant 0 : i32
    %c0_i32_1 = arith.constant 0 : i32
    return %c0_i32, %c0_i32_0 : i32, i32
  }
  func.func @transform_10(%arg0: i32) -> (i32, i32) {
    %c0_i32 = arith.constant 0 : i32
    %c0_i32_0 = arith.constant 0 : i32
    %c0_i32_1 = arith.constant 0 : i32
    return %c0_i32, %c0_i32_0 : i32, i32
  }
  func.func @transform_11(%arg0: i32) -> (i32, i32, i32) {
    %c0_i32 = arith.constant 0 : i32
    %c0_i32_0 = arith.constant 0 : i32
    %c0_i32_1 = arith.constant 0 : i32
    return %arg0, %c0_i32, %c0_i32_0 : i32, i32, i32
  }
  func.func @transform_12(%arg0: i32) -> (i32, i32, i32) {
    %c0_i32 = arith.constant 0 : i32
    %c0_i32_0 = arith.constant 0 : i32
    %c0_i32_1 = arith.constant 0 : i32
    return %arg0, %c0_i32, %c0_i32_0 : i32, i32, i32
  }
}

module attributes {stable_mosaic.version = 11 : i64} {
  func.func @_unpool_kernel(%arg0: i32, %arg1: memref<1x32x128xf32, #tpu.memory_space<vmem>>, %arg2: memref<1x128x256xbf16, #tpu.memory_space<vmem>>, %arg3: memref<1x32x256xf32, #tpu.memory_space<vmem>>) attributes {dimension_semantics = [#tpu.dimension_semantics<parallel>], iteration_bounds = array<i64: 2>, scalar_prefetch = 0 : i64, scratch_operands = 0 : i64, tpu.core_type = #tpu.core_type<tc>, window_params = [{transform_indices = @transform_0, window_bounds = array<i64: 1, 32, 128>}, {transform_indices = @transform_1, window_bounds = array<i64: 1, 128, 256>}, {transform_indices = @transform_2, window_bounds = array<i64: 1, 32, 256>}]} {
    %c0 = arith.constant 0 : index
    %c0_0 = arith.constant 0 : index
    %c0_1 = arith.constant 0 : index
    %0 = vector.load %arg1[%c0, %c0_0, %c0_1] : memref<1x32x128xf32, #tpu.memory_space<vmem>>, vector<1x32x128xf32>
    %1 = vector.shape_cast %0 : vector<1x32x128xf32> to vector<32x128xf32>
    %2 = arith.truncf %1 : vector<32x128xf32> to vector<32x128xbf16>
    %c0_2 = arith.constant 0 : index
    %c0_3 = arith.constant 0 : index
    %c0_4 = arith.constant 0 : index
    %3 = vector.load %arg2[%c0_2, %c0_3, %c0_4] : memref<1x128x256xbf16, #tpu.memory_space<vmem>>, vector<1x128x256xbf16>
    %4 = vector.shape_cast %3 : vector<1x128x256xbf16> to vector<128x256xbf16>
    %cst = arith.constant dense<0.000000e+00> : vector<32x256xf32>
    %5 = tpu.matmul %2, %4, %cst {dimension_numbers = #tpu.dot_dimension_numbers<[1], [0], [0], [1], [0, 0, 1, 1], [], []>} : vector<32x128xbf16>, vector<128x256xbf16>, vector<32x256xf32> -> vector<32x256xf32>
    %c0_5 = arith.constant 0 : index
    %c0_6 = arith.constant 0 : index
    %c0_7 = arith.constant 0 : index
    %6 = vector.load %arg3[%c0_5, %c0_6, %c0_7] : memref<1x32x256xf32, #tpu.memory_space<vmem>>, vector<1x32x256xf32>
    %7 = vector.shape_cast %6 : vector<1x32x256xf32> to vector<32x256xf32>
    %8 = vector.shape_cast %5 : vector<32x256xf32> to vector<1x32x256xf32>
    tpu.vector_store %arg3[%c0_5, %c0_6, %c0_7], %8 {strides = array<i32>} : memref<1x32x256xf32, #tpu.memory_space<vmem>>, vector<1x32x256xf32>,
    return
  }
  func.func @transform_0(%arg0: i32) -> (i32, i32, i32) {
    %c0_i32 = arith.constant 0 : i32
    %c0_i32_0 = arith.constant 0 : i32
    %c0_i32_1 = arith.constant 0 : i32
    return %arg0, %c0_i32, %c0_i32_0 : i32, i32, i32
  }
  func.func @transform_1(%arg0: i32) -> (i32, i32, i32) {
    %c0_i32 = arith.constant 0 : i32
    %c0_i32_0 = arith.constant 0 : i32
    %c0_i32_1 = arith.constant 0 : i32
    return %arg0, %c0_i32, %c0_i32_0 : i32, i32, i32
  }
  func.func @transform_2(%arg0: i32) -> (i32, i32, i32) {
    %c0_i32 = arith.constant 0 : i32
    %c0_i32_0 = arith.constant 0 : i32
    %c0_i32_1 = arith.constant 0 : i32
    return %arg0, %c0_i32, %c0_i32_0 : i32, i32, i32
  }
}

module attributes {stable_mosaic.version = 11 : i64} {
  func.func @_oafilter_kernel(%arg0: memref<2x32x128xf32, #tpu.memory_space<vmem>>, %arg1: memref<3x32x1xf32, #tpu.memory_space<vmem>>, %arg2: memref<3x32x1xf32, #tpu.memory_space<vmem>>, %arg3: memref<3x32x32xbf16, #tpu.memory_space<vmem>>, %arg4: memref<3x32x1xf32, #tpu.memory_space<vmem>>, %arg5: memref<3x1x128xf32, #tpu.memory_space<vmem>>, %arg6: memref<3x1x128xf32, #tpu.memory_space<vmem>>, %arg7: memref<3x128x128xbf16, #tpu.memory_space<vmem>>, %arg8: memref<3x1x128xf32, #tpu.memory_space<vmem>>, %arg9: memref<3x32x1xf32, #tpu.memory_space<vmem>>, %arg10: memref<3x32x1xf32, #tpu.memory_space<vmem>>, %arg11: memref<3x32x32xbf16, #tpu.memory_space<vmem>>, %arg12: memref<3x32x1xf32, #tpu.memory_space<vmem>>, %arg13: memref<2x32x128xf32, #tpu.memory_space<vmem>>) attributes {dimension_semantics = [], scalar_prefetch = 0 : i64, scratch_operands = 0 : i64, tpu.core_type = #tpu.core_type<tc>} {
    %c0 = arith.constant 0 : index
    %c0_0 = arith.constant 0 : index
    %c0_1 = arith.constant 0 : index
    %0 = vector.load %arg0[%c0, %c0_0, %c0_1] : memref<2x32x128xf32, #tpu.memory_space<vmem>>, vector<2x32x128xf32>
    %c0_2 = arith.constant 0 : index
    %c0_3 = arith.constant 0 : index
    %c0_4 = arith.constant 0 : index
    %1 = vector.load %arg1[%c0_2, %c0_3, %c0_4] : memref<3x32x1xf32, #tpu.memory_space<vmem>>, vector<1x32x1xf32>
    %2 = vector.shape_cast %1 : vector<1x32x1xf32> to vector<32x1xf32>
    %c0_5 = arith.constant 0 : index
    %c0_6 = arith.constant 0 : index
    %c0_7 = arith.constant 0 : index
    %3 = vector.load %arg2[%c0_5, %c0_6, %c0_7] : memref<3x32x1xf32, #tpu.memory_space<vmem>>, vector<1x32x1xf32>
    %4 = vector.shape_cast %3 : vector<1x32x1xf32> to vector<32x1xf32>
    %c0_8 = arith.constant 0 : index
    %c0_9 = arith.constant 0 : index
    %c0_10 = arith.constant 0 : index
    %5 = vector.load %arg4[%c0_8, %c0_9, %c0_10] : memref<3x32x1xf32, #tpu.memory_space<vmem>>, vector<1x32x1xf32>
    %6 = vector.shape_cast %5 : vector<1x32x1xf32> to vector<32x1xf32>
    %c0_11 = arith.constant 0 : index
    %c0_12 = arith.constant 0 : index
    %c0_13 = arith.constant 0 : index
    %7 = vector.load %arg5[%c0_11, %c0_12, %c0_13] : memref<3x1x128xf32, #tpu.memory_space<vmem>>, vector<1x1x128xf32>
    %8 = vector.shape_cast %7 : vector<1x1x128xf32> to vector<1x128xf32>
    %c0_14 = arith.constant 0 : index
    %c0_15 = arith.constant 0 : index
    %c0_16 = arith.constant 0 : index
    %9 = vector.load %arg6[%c0_14, %c0_15, %c0_16] : memref<3x1x128xf32, #tpu.memory_space<vmem>>, vector<1x1x128xf32>
    %10 = vector.shape_cast %9 : vector<1x1x128xf32> to vector<1x128xf32>
    %c0_17 = arith.constant 0 : index
    %c0_18 = arith.constant 0 : index
    %c0_19 = arith.constant 0 : index
    %11 = vector.load %arg8[%c0_17, %c0_18, %c0_19] : memref<3x1x128xf32, #tpu.memory_space<vmem>>, vector<1x1x128xf32>
    %12 = vector.shape_cast %11 : vector<1x1x128xf32> to vector<1x128xf32>
    %c0_20 = arith.constant 0 : index
    %c0_21 = arith.constant 0 : index
    %c0_22 = arith.constant 0 : index
    %13 = vector.load %arg9[%c0_20, %c0_21, %c0_22] : memref<3x32x1xf32, #tpu.memory_space<vmem>>, vector<1x32x1xf32>
    %14 = vector.shape_cast %13 : vector<1x32x1xf32> to vector<32x1xf32>
    %c0_23 = arith.constant 0 : index
    %c0_24 = arith.constant 0 : index
    %c0_25 = arith.constant 0 : index
    %15 = vector.load %arg10[%c0_23, %c0_24, %c0_25] : memref<3x32x1xf32, #tpu.memory_space<vmem>>, vector<1x32x1xf32>
    %16 = vector.shape_cast %15 : vector<1x32x1xf32> to vector<32x1xf32>
    %c0_26 = arith.constant 0 : index
    %c0_27 = arith.constant 0 : index
    %c0_28 = arith.constant 0 : index
    %17 = vector.load %arg12[%c0_26, %c0_27, %c0_28] : memref<3x32x1xf32, #tpu.memory_space<vmem>>, vector<1x32x1xf32>
    %18 = vector.shape_cast %17 : vector<1x32x1xf32> to vector<32x1xf32>
    %c0_29 = arith.constant 0 : index
    %c0_30 = arith.constant 0 : index
    %c0_31 = arith.constant 0 : index
    %19 = vector.load %arg3[%c0_29, %c0_30, %c0_31] : memref<3x32x32xbf16, #tpu.memory_space<vmem>>, vector<1x32x32xbf16>
    %20 = vector.shape_cast %19 : vector<1x32x32xbf16> to vector<32x32xbf16>
    %21 = vector.shape_cast %20 : vector<32x32xbf16> to vector<1x32x32xbf16>
    %22 = vector.shape_cast %21 : vector<1x32x32xbf16> to vector<1x32x32xbf16>
    %23 = vector.broadcast %22 : vector<1x32x32xbf16> to vector<2x32x32xbf16>
    %c0_32 = arith.constant 0 : index
    %c0_33 = arith.constant 0 : index
    %c0_34 = arith.constant 0 : index
    %24 = vector.load %arg11[%c0_32, %c0_33, %c0_34] : memref<3x32x32xbf16, #tpu.memory_space<vmem>>, vector<1x32x32xbf16>
    %25 = vector.shape_cast %24 : vector<1x32x32xbf16> to vector<32x32xbf16>
    %26 = vector.shape_cast %25 : vector<32x32xbf16> to vector<1x32x32xbf16>
    %27 = vector.shape_cast %26 : vector<1x32x32xbf16> to vector<1x32x32xbf16>
    %28 = vector.broadcast %27 : vector<1x32x32xbf16> to vector<2x32x32xbf16>
    %c0_35 = arith.constant 0 : index
    %c0_36 = arith.constant 0 : index
    %c0_37 = arith.constant 0 : index
    %29 = vector.load %arg7[%c0_35, %c0_36, %c0_37] : memref<3x128x128xbf16, #tpu.memory_space<vmem>>, vector<1x128x128xbf16>
    %30 = vector.shape_cast %29 : vector<1x128x128xbf16> to vector<128x128xbf16>
    %cst = arith.constant dense<0.000000e+00> : vector<2x32xf32>
    %31 = vector.multi_reduction <add>, %0, %cst [2] : vector<2x32x128xf32> to vector<2x32xf32>
    %32 = vector.shape_cast %31 : vector<2x32xf32> to vector<2x32x1xf32>
    %cst_38 = arith.constant 1.280000e+02 : f32
    %33 = vector.broadcast %cst_38 : f32 to vector<2x32x1xf32>
    %34 = arith.divf %32, %33 : vector<2x32x1xf32>
    %35 = vector.broadcast %34 : vector<2x32x1xf32> to vector<2x32x128xf32>
    %36 = arith.subf %0, %35 : vector<2x32x128xf32>
    %37 = arith.mulf %36, %36 : vector<2x32x128xf32>
    %cst_39 = arith.constant dense<0.000000e+00> : vector<2x32xf32>
    %38 = vector.multi_reduction <add>, %37, %cst_39 [2] : vector<2x32x128xf32> to vector<2x32xf32>
    %39 = vector.shape_cast %38 : vector<2x32xf32> to vector<2x32x1xf32>
    %cst_40 = arith.constant 1.280000e+02 : f32
    %40 = vector.broadcast %cst_40 : f32 to vector<2x32x1xf32>
    %41 = arith.divf %39, %40 : vector<2x32x1xf32>
    %cst_41 = arith.constant 1.000000e-03 : f32
    %42 = vector.broadcast %cst_41 : f32 to vector<2x32x1xf32>
    %43 = arith.addf %41, %42 : vector<2x32x1xf32>
    %44 = arith.divf %41, %43 : vector<2x32x1xf32>
    %cst_42 = arith.constant dense<0.000000e+00> : vector<32x1xf32>
    %45 = vector.multi_reduction <add>, %44, %cst_42 [0] : vector<2x32x1xf32> to vector<32x1xf32>
    %46 = vector.shape_cast %45 : vector<32x1xf32> to vector<1x32x1xf32>
    %cst_43 = arith.constant 2.000000e+00 : f32
    %47 = vector.broadcast %cst_43 : f32 to vector<1x32x1xf32>
    %48 = arith.divf %46, %47 : vector<1x32x1xf32>
    %cst_44 = arith.constant 1.000000e-03 : f32
    %49 = vector.broadcast %cst_44 : f32 to vector<2x32x1xf32>
    %50 = arith.addf %41, %49 : vector<2x32x1xf32>
    %51 = math.rsqrt %50 : vector<2x32x1xf32>
    %cst_45 = arith.constant 9.99999974E-6 : f32
    %52 = vector.broadcast %cst_45 : f32 to vector<1x32x1xf32>
    %53 = arith.addf %48, %52 : vector<1x32x1xf32>
    %54 = math.rsqrt %53 : vector<1x32x1xf32>
    %55 = vector.broadcast %54 : vector<1x32x1xf32> to vector<2x32x1xf32>
    %56 = arith.mulf %51, %55 : vector<2x32x1xf32>
    %57 = vector.broadcast %56 : vector<2x32x1xf32> to vector<2x32x128xf32>
    %58 = arith.mulf %36, %57 : vector<2x32x128xf32>
    %59 = vector.shape_cast %2 : vector<32x1xf32> to vector<1x32x1xf32>
    %60 = vector.broadcast %59 : vector<1x32x1xf32> to vector<2x32x128xf32>
    %61 = arith.mulf %58, %60 : vector<2x32x128xf32>
    %62 = vector.shape_cast %4 : vector<32x1xf32> to vector<1x32x1xf32>
    %63 = vector.broadcast %62 : vector<1x32x1xf32> to vector<2x32x128xf32>
    %64 = arith.addf %61, %63 : vector<2x32x128xf32>
    %cst_46 = arith.constant 0.000000e+00 : f32
    %65 = vector.broadcast %cst_46 : f32 to vector<2x32x128xf32>
    %66 = arith.maximumf %64, %65 : vector<2x32x128xf32>
    %67 = arith.truncf %66 : vector<2x32x128xf32> to vector<2x32x128xbf16>
    %cst_47 = arith.constant dense<0.000000e+00> : vector<2x32x128xf32>
    %68 = tpu.matmul %23, %67, %cst_47 {dimension_numbers = #tpu.dot_dimension_numbers<[2], [1], [1], [2], [0, 0, 0, 1, 1, 2], [0], [0]>} : vector<2x32x32xbf16>, vector<2x32x128xbf16>, vector<2x32x128xf32> -> vector<2x32x128xf32>
    %69 = vector.shape_cast %6 : vector<32x1xf32> to vector<1x32x1xf32>
    %70 = vector.broadcast %69 : vector<1x32x1xf32> to vector<2x32x128xf32>
    %71 = arith.addf %68, %70 : vector<2x32x128xf32>
    %cst_48 = arith.constant dense<0.000000e+00> : vector<32x128xf32>
    %72 = vector.multi_reduction <add>, %71, %cst_48 [0] : vector<2x32x128xf32> to vector<32x128xf32>
    %73 = vector.shape_cast %72 : vector<32x128xf32> to vector<1x32x128xf32>
    %cst_49 = arith.constant 2.000000e+00 : f32
    %74 = vector.broadcast %cst_49 : f32 to vector<1x32x128xf32>
    %75 = arith.divf %73, %74 : vector<1x32x128xf32>
    %cst_50 = arith.constant dense<0.000000e+00> : vector<1x128xf32>
    %76 = vector.multi_reduction <add>, %75, %cst_50 [1] : vector<1x32x128xf32> to vector<1x128xf32>
    %77 = vector.shape_cast %76 : vector<1x128xf32> to vector<1x1x128xf32>
    %cst_51 = arith.constant 3.200000e+01 : f32
    %78 = vector.broadcast %cst_51 : f32 to vector<1x1x128xf32>
    %79 = arith.divf %77, %78 : vector<1x1x128xf32>
    %80 = vector.broadcast %79 : vector<1x1x128xf32> to vector<2x32x128xf32>
    %81 = arith.subf %71, %80 : vector<2x32x128xf32>
    %82 = arith.mulf %81, %81 : vector<2x32x128xf32>
    %cst_52 = arith.constant dense<0.000000e+00> : vector<32x128xf32>
    %83 = vector.multi_reduction <add>, %82, %cst_52 [0] : vector<2x32x128xf32> to vector<32x128xf32>
    %84 = vector.shape_cast %83 : vector<32x128xf32> to vector<1x32x128xf32>
    %cst_53 = arith.constant 2.000000e+00 : f32
    %85 = vector.broadcast %cst_53 : f32 to vector<1x32x128xf32>
    %86 = arith.divf %84, %85 : vector<1x32x128xf32>
    %cst_54 = arith.constant dense<0.000000e+00> : vector<1x128xf32>
    %87 = vector.multi_reduction <add>, %86, %cst_54 [1] : vector<1x32x128xf32> to vector<1x128xf32>
    %88 = vector.shape_cast %87 : vector<1x128xf32> to vector<1x1x128xf32>
    %cst_55 = arith.constant 3.200000e+01 : f32
    %89 = vector.broadcast %cst_55 : f32 to vector<1x1x128xf32>
    %90 = arith.divf %88, %89 : vector<1x1x128xf32>
    %cst_56 = arith.constant 9.99999974E-6 : f32
    %91 = vector.broadcast %cst_56 : f32 to vector<1x1x128xf32>
    %92 = arith.addf %90, %91 : vector<1x1x128xf32>
    %93 = math.rsqrt %92 : vector<1x1x128xf32>
    %94 = vector.broadcast %93 : vector<1x1x128xf32> to vector<2x32x128xf32>
    %95 = arith.mulf %81, %94 : vector<2x32x128xf32>
    %96 = vector.shape_cast %8 : vector<1x128xf32> to vector<1x1x128xf32>
    %97 = vector.broadcast %96 : vector<1x1x128xf32> to vector<2x32x128xf32>
    %98 = arith.mulf %95, %97 : vector<2x32x128xf32>
    %99 = vector.shape_cast %10 : vector<1x128xf32> to vector<1x1x128xf32>
    %100 = vector.broadcast %99 : vector<1x1x128xf32> to vector<2x32x128xf32>
    %101 = arith.addf %98, %100 : vector<2x32x128xf32>
    %cst_57 = arith.constant 0.000000e+00 : f32
    %102 = vector.broadcast %cst_57 : f32 to vector<2x32x128xf32>
    %103 = arith.maximumf %101, %102 : vector<2x32x128xf32>
    %104 = vector.shape_cast %103 : vector<2x32x128xf32> to vector<64x128xf32>
    %105 = arith.truncf %104 : vector<64x128xf32> to vector<64x128xbf16>
    %cst_58 = arith.constant dense<0.000000e+00> : vector<64x128xf32>
    %106 = tpu.matmul %105, %30, %cst_58 {dimension_numbers = #tpu.dot_dimension_numbers<[1], [0], [0], [1], [0, 0, 1, 1], [], []>} : vector<64x128xbf16>, vector<128x128xbf16>, vector<64x128xf32> -> vector<64x128xf32>
    %107 = vector.shape_cast %106 : vector<64x128xf32> to vector<2x32x128xf32>
    %108 = arith.addf %71, %107 : vector<2x32x128xf32>
    %109 = vector.shape_cast %12 : vector<1x128xf32> to vector<1x1x128xf32>
    %110 = vector.broadcast %109 : vector<1x1x128xf32> to vector<2x32x128xf32>
    %111 = arith.addf %108, %110 : vector<2x32x128xf32>
    %cst_59 = arith.constant dense<0.000000e+00> : vector<2x32xf32>
    %112 = vector.multi_reduction <add>, %111, %cst_59 [2] : vector<2x32x128xf32> to vector<2x32xf32>
    %113 = vector.shape_cast %112 : vector<2x32xf32> to vector<2x32x1xf32>
    %cst_60 = arith.constant 1.280000e+02 : f32
    %114 = vector.broadcast %cst_60 : f32 to vector<2x32x1xf32>
    %115 = arith.divf %113, %114 : vector<2x32x1xf32>
    %116 = vector.broadcast %115 : vector<2x32x1xf32> to vector<2x32x128xf32>
    %117 = arith.subf %111, %116 : vector<2x32x128xf32>
    %118 = arith.mulf %117, %117 : vector<2x32x128xf32>
    %cst_61 = arith.constant dense<0.000000e+00> : vector<2x32xf32>
    %119 = vector.multi_reduction <add>, %118, %cst_61 [2] : vector<2x32x128xf32> to vector<2x32xf32>
    %120 = vector.shape_cast %119 : vector<2x32xf32> to vector<2x32x1xf32>
    %cst_62 = arith.constant 1.280000e+02 : f32
    %121 = vector.broadcast %cst_62 : f32 to vector<2x32x1xf32>
    %122 = arith.divf %120, %121 : vector<2x32x1xf32>
    %cst_63 = arith.constant 1.000000e-03 : f32
    %123 = vector.broadcast %cst_63 : f32 to vector<2x32x1xf32>
    %124 = arith.addf %122, %123 : vector<2x32x1xf32>
    %125 = arith.divf %122, %124 : vector<2x32x1xf32>
    %cst_64 = arith.constant dense<0.000000e+00> : vector<32x1xf32>
    %126 = vector.multi_reduction <add>, %125, %cst_64 [0] : vector<2x32x1xf32> to vector<32x1xf32>
    %127 = vector.shape_cast %126 : vector<32x1xf32> to vector<1x32x1xf32>
    %cst_65 = arith.constant 2.000000e+00 : f32
    %128 = vector.broadcast %cst_65 : f32 to vector<1x32x1xf32>
    %129 = arith.divf %127, %128 : vector<1x32x1xf32>
    %cst_66 = arith.constant 1.000000e-03 : f32
    %130 = vector.broadcast %cst_66 : f32 to vector<2x32x1xf32>
    %131 = arith.addf %122, %130 : vector<2x32x1xf32>
    %132 = math.rsqrt %131 : vector<2x32x1xf32>
    %cst_67 = arith.constant 9.99999974E-6 : f32
    %133 = vector.broadcast %cst_67 : f32 to vector<1x32x1xf32>
    %134 = arith.addf %129, %133 : vector<1x32x1xf32>
    %135 = math.rsqrt %134 : vector<1x32x1xf32>
    %136 = vector.broadcast %135 : vector<1x32x1xf32> to vector<2x32x1xf32>
    %137 = arith.mulf %132, %136 : vector<2x32x1xf32>
    %138 = vector.broadcast %137 : vector<2x32x1xf32> to vector<2x32x128xf32>
    %139 = arith.mulf %117, %138 : vector<2x32x128xf32>
    %140 = vector.shape_cast %14 : vector<32x1xf32> to vector<1x32x1xf32>
    %141 = vector.broadcast %140 : vector<1x32x1xf32> to vector<2x32x128xf32>
    %142 = arith.mulf %139, %141 : vector<2x32x128xf32>
    %143 = vector.shape_cast %16 : vector<32x1xf32> to vector<1x32x1xf32>
    %144 = vector.broadcast %143 : vector<1x32x1xf32> to vector<2x32x128xf32>
    %145 = arith.addf %142, %144 : vector<2x32x128xf32>
    %cst_68 = arith.constant 0.000000e+00 : f32
    %146 = vector.broadcast %cst_68 : f32 to vector<2x32x128xf32>
    %147 = arith.maximumf %145, %146 : vector<2x32x128xf32>
    %148 = arith.truncf %147 : vector<2x32x128xf32> to vector<2x32x128xbf16>
    %cst_69 = arith.constant dense<0.000000e+00> : vector<2x32x128xf32>
    %149 = tpu.matmul %28, %148, %cst_69 {dimension_numbers = #tpu.dot_dimension_numbers<[2], [1], [1], [2], [0, 0, 0, 1, 1, 2], [0], [0]>} : vector<2x32x32xbf16>, vector<2x32x128xbf16>, vector<2x32x128xf32> -> vector<2x32x128xf32>
    %150 = vector.shape_cast %18 : vector<32x1xf32> to vector<1x32x1xf32>
    %151 = vector.broadcast %150 : vector<1x32x1xf32> to vector<2x32x128xf32>
    %152 = arith.addf %149, %151 : vector<2x32x128xf32>
    %153 = arith.addf %152, %0 : vector<2x32x128xf32>
    %c1 = arith.constant 1 : index
    %c0_70 = arith.constant 0 : index
    %c0_71 = arith.constant 0 : index
    %154 = vector.load %arg1[%c1, %c0_70, %c0_71] : memref<3x32x1xf32, #tpu.memory_space<vmem>>, vector<1x32x1xf32>
    %155 = vector.shape_cast %154 : vector<1x32x1xf32> to vector<32x1xf32>
    %c1_72 = arith.constant 1 : index
    %c0_73 = arith.constant 0 : index
    %c0_74 = arith.constant 0 : index
    %156 = vector.load %arg2[%c1_72, %c0_73, %c0_74] : memref<3x32x1xf32, #tpu.memory_space<vmem>>, vector<1x32x1xf32>
    %157 = vector.shape_cast %156 : vector<1x32x1xf32> to vector<32x1xf32>
    %c1_75 = arith.constant 1 : index
    %c0_76 = arith.constant 0 : index
    %c0_77 = arith.constant 0 : index
    %158 = vector.load %arg4[%c1_75, %c0_76, %c0_77] : memref<3x32x1xf32, #tpu.memory_space<vmem>>, vector<1x32x1xf32>
    %159 = vector.shape_cast %158 : vector<1x32x1xf32> to vector<32x1xf32>
    %c1_78 = arith.constant 1 : index
    %c0_79 = arith.constant 0 : index
    %c0_80 = arith.constant 0 : index
    %160 = vector.load %arg5[%c1_78, %c0_79, %c0_80] : memref<3x1x128xf32, #tpu.memory_space<vmem>>, vector<1x1x128xf32>
    %161 = vector.shape_cast %160 : vector<1x1x128xf32> to vector<1x128xf32>
    %c1_81 = arith.constant 1 : index
    %c0_82 = arith.constant 0 : index
    %c0_83 = arith.constant 0 : index
    %162 = vector.load %arg6[%c1_81, %c0_82, %c0_83] : memref<3x1x128xf32, #tpu.memory_space<vmem>>, vector<1x1x128xf32>
    %163 = vector.shape_cast %162 : vector<1x1x128xf32> to vector<1x128xf32>
    %c1_84 = arith.constant 1 : index
    %c0_85 = arith.constant 0 : index
    %c0_86 = arith.constant 0 : index
    %164 = vector.load %arg8[%c1_84, %c0_85, %c0_86] : memref<3x1x128xf32, #tpu.memory_space<vmem>>, vector<1x1x128xf32>
    %165 = vector.shape_cast %164 : vector<1x1x128xf32> to vector<1x128xf32>
    %c1_87 = arith.constant 1 : index
    %c0_88 = arith.constant 0 : index
    %c0_89 = arith.constant 0 : index
    %166 = vector.load %arg9[%c1_87, %c0_88, %c0_89] : memref<3x32x1xf32, #tpu.memory_space<vmem>>, vector<1x32x1xf32>
    %167 = vector.shape_cast %166 : vector<1x32x1xf32> to vector<32x1xf32>
    %c1_90 = arith.constant 1 : index
    %c0_91 = arith.constant 0 : index
    %c0_92 = arith.constant 0 : index
    %168 = vector.load %arg10[%c1_90, %c0_91, %c0_92] : memref<3x32x1xf32, #tpu.memory_space<vmem>>, vector<1x32x1xf32>
    %169 = vector.shape_cast %168 : vector<1x32x1xf32> to vector<32x1xf32>
    %c1_93 = arith.constant 1 : index
    %c0_94 = arith.constant 0 : index
    %c0_95 = arith.constant 0 : index
    %170 = vector.load %arg12[%c1_93, %c0_94, %c0_95] : memref<3x32x1xf32, #tpu.memory_space<vmem>>, vector<1x32x1xf32>
    %171 = vector.shape_cast %170 : vector<1x32x1xf32> to vector<32x1xf32>
    %c1_96 = arith.constant 1 : index
    %c0_97 = arith.constant 0 : index
    %c0_98 = arith.constant 0 : index
    %172 = vector.load %arg3[%c1_96, %c0_97, %c0_98] : memref<3x32x32xbf16, #tpu.memory_space<vmem>>, vector<1x32x32xbf16>
    %173 = vector.shape_cast %172 : vector<1x32x32xbf16> to vector<32x32xbf16>
    %174 = vector.shape_cast %173 : vector<32x32xbf16> to vector<1x32x32xbf16>
    %175 = vector.shape_cast %174 : vector<1x32x32xbf16> to vector<1x32x32xbf16>
    %176 = vector.broadcast %175 : vector<1x32x32xbf16> to vector<2x32x32xbf16>
    %c1_99 = arith.constant 1 : index
    %c0_100 = arith.constant 0 : index
    %c0_101 = arith.constant 0 : index
    %177 = vector.load %arg11[%c1_99, %c0_100, %c0_101] : memref<3x32x32xbf16, #tpu.memory_space<vmem>>, vector<1x32x32xbf16>
    %178 = vector.shape_cast %177 : vector<1x32x32xbf16> to vector<32x32xbf16>
    %179 = vector.shape_cast %178 : vector<32x32xbf16> to vector<1x32x32xbf16>
    %180 = vector.shape_cast %179 : vector<1x32x32xbf16> to vector<1x32x32xbf16>
    %181 = vector.broadcast %180 : vector<1x32x32xbf16> to vector<2x32x32xbf16>
    %c1_102 = arith.constant 1 : index
    %c0_103 = arith.constant 0 : index
    %c0_104 = arith.constant 0 : index
    %182 = vector.load %arg7[%c1_102, %c0_103, %c0_104] : memref<3x128x128xbf16, #tpu.memory_space<vmem>>, vector<1x128x128xbf16>
    %183 = vector.shape_cast %182 : vector<1x128x128xbf16> to vector<128x128xbf16>
    %cst_105 = arith.constant dense<0.000000e+00> : vector<2x32xf32>
    %184 = vector.multi_reduction <add>, %153, %cst_105 [2] : vector<2x32x128xf32> to vector<2x32xf32>
    %185 = vector.shape_cast %184 : vector<2x32xf32> to vector<2x32x1xf32>
    %cst_106 = arith.constant 1.280000e+02 : f32
    %186 = vector.broadcast %cst_106 : f32 to vector<2x32x1xf32>
    %187 = arith.divf %185, %186 : vector<2x32x1xf32>
    %188 = vector.broadcast %187 : vector<2x32x1xf32> to vector<2x32x128xf32>
    %189 = arith.subf %153, %188 : vector<2x32x128xf32>
    %190 = arith.mulf %189, %189 : vector<2x32x128xf32>
    %cst_107 = arith.constant dense<0.000000e+00> : vector<2x32xf32>
    %191 = vector.multi_reduction <add>, %190, %cst_107 [2] : vector<2x32x128xf32> to vector<2x32xf32>
    %192 = vector.shape_cast %191 : vector<2x32xf32> to vector<2x32x1xf32>
    %cst_108 = arith.constant 1.280000e+02 : f32
    %193 = vector.broadcast %cst_108 : f32 to vector<2x32x1xf32>
    %194 = arith.divf %192, %193 : vector<2x32x1xf32>
    %cst_109 = arith.constant 1.000000e-03 : f32
    %195 = vector.broadcast %cst_109 : f32 to vector<2x32x1xf32>
    %196 = arith.addf %194, %195 : vector<2x32x1xf32>
    %197 = arith.divf %194, %196 : vector<2x32x1xf32>
    %cst_110 = arith.constant dense<0.000000e+00> : vector<32x1xf32>
    %198 = vector.multi_reduction <add>, %197, %cst_110 [0] : vector<2x32x1xf32> to vector<32x1xf32>
    %199 = vector.shape_cast %198 : vector<32x1xf32> to vector<1x32x1xf32>
    %cst_111 = arith.constant 2.000000e+00 : f32
    %200 = vector.broadcast %cst_111 : f32 to vector<1x32x1xf32>
    %201 = arith.divf %199, %200 : vector<1x32x1xf32>
    %cst_112 = arith.constant 1.000000e-03 : f32
    %202 = vector.broadcast %cst_112 : f32 to vector<2x32x1xf32>
    %203 = arith.addf %194, %202 : vector<2x32x1xf32>
    %204 = math.rsqrt %203 : vector<2x32x1xf32>
    %cst_113 = arith.constant 9.99999974E-6 : f32
    %205 = vector.broadcast %cst_113 : f32 to vector<1x32x1xf32>
    %206 = arith.addf %201, %205 : vector<1x32x1xf32>
    %207 = math.rsqrt %206 : vector<1x32x1xf32>
    %208 = vector.broadcast %207 : vector<1x32x1xf32> to vector<2x32x1xf32>
    %209 = arith.mulf %204, %208 : vector<2x32x1xf32>
    %210 = vector.broadcast %209 : vector<2x32x1xf32> to vector<2x32x128xf32>
    %211 = arith.mulf %189, %210 : vector<2x32x128xf32>
    %212 = vector.shape_cast %155 : vector<32x1xf32> to vector<1x32x1xf32>
    %213 = vector.broadcast %212 : vector<1x32x1xf32> to vector<2x32x128xf32>
    %214 = arith.mulf %211, %213 : vector<2x32x128xf32>
    %215 = vector.shape_cast %157 : vector<32x1xf32> to vector<1x32x1xf32>
    %216 = vector.broadcast %215 : vector<1x32x1xf32> to vector<2x32x128xf32>
    %217 = arith.addf %214, %216 : vector<2x32x128xf32>
    %cst_114 = arith.constant 0.000000e+00 : f32
    %218 = vector.broadcast %cst_114 : f32 to vector<2x32x128xf32>
    %219 = arith.maximumf %217, %218 : vector<2x32x128xf32>
    %220 = arith.truncf %219 : vector<2x32x128xf32> to vector<2x32x128xbf16>
    %cst_115 = arith.constant dense<0.000000e+00> : vector<2x32x128xf32>
    %221 = tpu.matmul %176, %220, %cst_115 {dimension_numbers = #tpu.dot_dimension_numbers<[2], [1], [1], [2], [0, 0, 0, 1, 1, 2], [0], [0]>} : vector<2x32x32xbf16>, vector<2x32x128xbf16>, vector<2x32x128xf32> -> vector<2x32x128xf32>
    %222 = vector.shape_cast %159 : vector<32x1xf32> to vector<1x32x1xf32>
    %223 = vector.broadcast %222 : vector<1x32x1xf32> to vector<2x32x128xf32>
    %224 = arith.addf %221, %223 : vector<2x32x128xf32>
    %cst_116 = arith.constant dense<0.000000e+00> : vector<32x128xf32>
    %225 = vector.multi_reduction <add>, %224, %cst_116 [0] : vector<2x32x128xf32> to vector<32x128xf32>
    %226 = vector.shape_cast %225 : vector<32x128xf32> to vector<1x32x128xf32>
    %cst_117 = arith.constant 2.000000e+00 : f32
    %227 = vector.broadcast %cst_117 : f32 to vector<1x32x128xf32>
    %228 = arith.divf %226, %227 : vector<1x32x128xf32>
    %cst_118 = arith.constant dense<0.000000e+00> : vector<1x128xf32>
    %229 = vector.multi_reduction <add>, %228, %cst_118 [1] : vector<1x32x128xf32> to vector<1x128xf32>
    %230 = vector.shape_cast %229 : vector<1x128xf32> to vector<1x1x128xf32>
    %cst_119 = arith.constant 3.200000e+01 : f32
    %231 = vector.broadcast %cst_119 : f32 to vector<1x1x128xf32>
    %232 = arith.divf %230, %231 : vector<1x1x128xf32>
    %233 = vector.broadcast %232 : vector<1x1x128xf32> to vector<2x32x128xf32>
    %234 = arith.subf %224, %233 : vector<2x32x128xf32>
    %235 = arith.mulf %234, %234 : vector<2x32x128xf32>
    %cst_120 = arith.constant dense<0.000000e+00> : vector<32x128xf32>
    %236 = vector.multi_reduction <add>, %235, %cst_120 [0] : vector<2x32x128xf32> to vector<32x128xf32>
    %237 = vector.shape_cast %236 : vector<32x128xf32> to vector<1x32x128xf32>
    %cst_121 = arith.constant 2.000000e+00 : f32
    %238 = vector.broadcast %cst_121 : f32 to vector<1x32x128xf32>
    %239 = arith.divf %237, %238 : vector<1x32x128xf32>
    %cst_122 = arith.constant dense<0.000000e+00> : vector<1x128xf32>
    %240 = vector.multi_reduction <add>, %239, %cst_122 [1] : vector<1x32x128xf32> to vector<1x128xf32>
    %241 = vector.shape_cast %240 : vector<1x128xf32> to vector<1x1x128xf32>
    %cst_123 = arith.constant 3.200000e+01 : f32
    %242 = vector.broadcast %cst_123 : f32 to vector<1x1x128xf32>
    %243 = arith.divf %241, %242 : vector<1x1x128xf32>
    %cst_124 = arith.constant 9.99999974E-6 : f32
    %244 = vector.broadcast %cst_124 : f32 to vector<1x1x128xf32>
    %245 = arith.addf %243, %244 : vector<1x1x128xf32>
    %246 = math.rsqrt %245 : vector<1x1x128xf32>
    %247 = vector.broadcast %246 : vector<1x1x128xf32> to vector<2x32x128xf32>
    %248 = arith.mulf %234, %247 : vector<2x32x128xf32>
    %249 = vector.shape_cast %161 : vector<1x128xf32> to vector<1x1x128xf32>
    %250 = vector.broadcast %249 : vector<1x1x128xf32> to vector<2x32x128xf32>
    %251 = arith.mulf %248, %250 : vector<2x32x128xf32>
    %252 = vector.shape_cast %163 : vector<1x128xf32> to vector<1x1x128xf32>
    %253 = vector.broadcast %252 : vector<1x1x128xf32> to vector<2x32x128xf32>
    %254 = arith.addf %251, %253 : vector<2x32x128xf32>
    %cst_125 = arith.constant 0.000000e+00 : f32
    %255 = vector.broadcast %cst_125 : f32 to vector<2x32x128xf32>
    %256 = arith.maximumf %254, %255 : vector<2x32x128xf32>
    %257 = vector.shape_cast %256 : vector<2x32x128xf32> to vector<64x128xf32>
    %258 = arith.truncf %257 : vector<64x128xf32> to vector<64x128xbf16>
    %cst_126 = arith.constant dense<0.000000e+00> : vector<64x128xf32>
    %259 = tpu.matmul %258, %183, %cst_126 {dimension_numbers = #tpu.dot_dimension_numbers<[1], [0], [0], [1], [0, 0, 1, 1], [], []>} : vector<64x128xbf16>, vector<128x128xbf16>, vector<64x128xf32> -> vector<64x128xf32>
    %260 = vector.shape_cast %259 : vector<64x128xf32> to vector<2x32x128xf32>
    %261 = arith.addf %224, %260 : vector<2x32x128xf32>
    %262 = vector.shape_cast %165 : vector<1x128xf32> to vector<1x1x128xf32>
    %263 = vector.broadcast %262 : vector<1x1x128xf32> to vector<2x32x128xf32>
    %264 = arith.addf %261, %263 : vector<2x32x128xf32>
    %cst_127 = arith.constant dense<0.000000e+00> : vector<2x32xf32>
    %265 = vector.multi_reduction <add>, %264, %cst_127 [2] : vector<2x32x128xf32> to vector<2x32xf32>
    %266 = vector.shape_cast %265 : vector<2x32xf32> to vector<2x32x1xf32>
    %cst_128 = arith.constant 1.280000e+02 : f32
    %267 = vector.broadcast %cst_128 : f32 to vector<2x32x1xf32>
    %268 = arith.divf %266, %267 : vector<2x32x1xf32>
    %269 = vector.broadcast %268 : vector<2x32x1xf32> to vector<2x32x128xf32>
    %270 = arith.subf %264, %269 : vector<2x32x128xf32>
    %271 = arith.mulf %270, %270 : vector<2x32x128xf32>
    %cst_129 = arith.constant dense<0.000000e+00> : vector<2x32xf32>
    %272 = vector.multi_reduction <add>, %271, %cst_129 [2] : vector<2x32x128xf32> to vector<2x32xf32>
    %273 = vector.shape_cast %272 : vector<2x32xf32> to vector<2x32x1xf32>
    %cst_130 = arith.constant 1.280000e+02 : f32
    %274 = vector.broadcast %cst_130 : f32 to vector<2x32x1xf32>
    %275 = arith.divf %273, %274 : vector<2x32x1xf32>
    %cst_131 = arith.constant 1.000000e-03 : f32
    %276 = vector.broadcast %cst_131 : f32 to vector<2x32x1xf32>
    %277 = arith.addf %275, %276 : vector<2x32x1xf32>
    %278 = arith.divf %275, %277 : vector<2x32x1xf32>
    %cst_132 = arith.constant dense<0.000000e+00> : vector<32x1xf32>
    %279 = vector.multi_reduction <add>, %278, %cst_132 [0] : vector<2x32x1xf32> to vector<32x1xf32>
    %280 = vector.shape_cast %279 : vector<32x1xf32> to vector<1x32x1xf32>
    %cst_133 = arith.constant 2.000000e+00 : f32
    %281 = vector.broadcast %cst_133 : f32 to vector<1x32x1xf32>
    %282 = arith.divf %280, %281 : vector<1x32x1xf32>
    %cst_134 = arith.constant 1.000000e-03 : f32
    %283 = vector.broadcast %cst_134 : f32 to vector<2x32x1xf32>
    %284 = arith.addf %275, %283 : vector<2x32x1xf32>
    %285 = math.rsqrt %284 : vector<2x32x1xf32>
    %cst_135 = arith.constant 9.99999974E-6 : f32
    %286 = vector.broadcast %cst_135 : f32 to vector<1x32x1xf32>
    %287 = arith.addf %282, %286 : vector<1x32x1xf32>
    %288 = math.rsqrt %287 : vector<1x32x1xf32>
    %289 = vector.broadcast %288 : vector<1x32x1xf32> to vector<2x32x1xf32>
    %290 = arith.mulf %285, %289 : vector<2x32x1xf32>
    %291 = vector.broadcast %290 : vector<2x32x1xf32> to vector<2x32x128xf32>
    %292 = arith.mulf %270, %291 : vector<2x32x128xf32>
    %293 = vector.shape_cast %167 : vector<32x1xf32> to vector<1x32x1xf32>
    %294 = vector.broadcast %293 : vector<1x32x1xf32> to vector<2x32x128xf32>
    %295 = arith.mulf %292, %294 : vector<2x32x128xf32>
    %296 = vector.shape_cast %169 : vector<32x1xf32> to vector<1x32x1xf32>
    %297 = vector.broadcast %296 : vector<1x32x1xf32> to vector<2x32x128xf32>
    %298 = arith.addf %295, %297 : vector<2x32x128xf32>
    %cst_136 = arith.constant 0.000000e+00 : f32
    %299 = vector.broadcast %cst_136 : f32 to vector<2x32x128xf32>
    %300 = arith.maximumf %298, %299 : vector<2x32x128xf32>
    %301 = arith.truncf %300 : vector<2x32x128xf32> to vector<2x32x128xbf16>
    %cst_137 = arith.constant dense<0.000000e+00> : vector<2x32x128xf32>
    %302 = tpu.matmul %181, %301, %cst_137 {dimension_numbers = #tpu.dot_dimension_numbers<[2], [1], [1], [2], [0, 0, 0, 1, 1, 2], [0], [0]>} : vector<2x32x32xbf16>, vector<2x32x128xbf16>, vector<2x32x128xf32> -> vector<2x32x128xf32>
    %303 = vector.shape_cast %171 : vector<32x1xf32> to vector<1x32x1xf32>
    %304 = vector.broadcast %303 : vector<1x32x1xf32> to vector<2x32x128xf32>
    %305 = arith.addf %302, %304 : vector<2x32x128xf32>
    %306 = arith.addf %305, %153 : vector<2x32x128xf32>
    %c2 = arith.constant 2 : index
    %c0_138 = arith.constant 0 : index
    %c0_139 = arith.constant 0 : index
    %307 = vector.load %arg1[%c2, %c0_138, %c0_139] : memref<3x32x1xf32, #tpu.memory_space<vmem>>, vector<1x32x1xf32>
    %308 = vector.shape_cast %307 : vector<1x32x1xf32> to vector<32x1xf32>
    %c2_140 = arith.constant 2 : index
    %c0_141 = arith.constant 0 : index
    %c0_142 = arith.constant 0 : index
    %309 = vector.load %arg2[%c2_140, %c0_141, %c0_142] : memref<3x32x1xf32, #tpu.memory_space<vmem>>, vector<1x32x1xf32>
    %310 = vector.shape_cast %309 : vector<1x32x1xf32> to vector<32x1xf32>
    %c2_143 = arith.constant 2 : index
    %c0_144 = arith.constant 0 : index
    %c0_145 = arith.constant 0 : index
    %311 = vector.load %arg4[%c2_143, %c0_144, %c0_145] : memref<3x32x1xf32, #tpu.memory_space<vmem>>, vector<1x32x1xf32>
    %312 = vector.shape_cast %311 : vector<1x32x1xf32> to vector<32x1xf32>
    %c2_146 = arith.constant 2 : index
    %c0_147 = arith.constant 0 : index
    %c0_148 = arith.constant 0 : index
    %313 = vector.load %arg5[%c2_146, %c0_147, %c0_148] : memref<3x1x128xf32, #tpu.memory_space<vmem>>, vector<1x1x128xf32>
    %314 = vector.shape_cast %313 : vector<1x1x128xf32> to vector<1x128xf32>
    %c2_149 = arith.constant 2 : index
    %c0_150 = arith.constant 0 : index
    %c0_151 = arith.constant 0 : index
    %315 = vector.load %arg6[%c2_149, %c0_150, %c0_151] : memref<3x1x128xf32, #tpu.memory_space<vmem>>, vector<1x1x128xf32>
    %316 = vector.shape_cast %315 : vector<1x1x128xf32> to vector<1x128xf32>
    %c2_152 = arith.constant 2 : index
    %c0_153 = arith.constant 0 : index
    %c0_154 = arith.constant 0 : index
    %317 = vector.load %arg8[%c2_152, %c0_153, %c0_154] : memref<3x1x128xf32, #tpu.memory_space<vmem>>, vector<1x1x128xf32>
    %318 = vector.shape_cast %317 : vector<1x1x128xf32> to vector<1x128xf32>
    %c2_155 = arith.constant 2 : index
    %c0_156 = arith.constant 0 : index
    %c0_157 = arith.constant 0 : index
    %319 = vector.load %arg9[%c2_155, %c0_156, %c0_157] : memref<3x32x1xf32, #tpu.memory_space<vmem>>, vector<1x32x1xf32>
    %320 = vector.shape_cast %319 : vector<1x32x1xf32> to vector<32x1xf32>
    %c2_158 = arith.constant 2 : index
    %c0_159 = arith.constant 0 : index
    %c0_160 = arith.constant 0 : index
    %321 = vector.load %arg10[%c2_158, %c0_159, %c0_160] : memref<3x32x1xf32, #tpu.memory_space<vmem>>, vector<1x32x1xf32>
    %322 = vector.shape_cast %321 : vector<1x32x1xf32> to vector<32x1xf32>
    %c2_161 = arith.constant 2 : index
    %c0_162 = arith.constant 0 : index
    %c0_163 = arith.constant 0 : index
    %323 = vector.load %arg12[%c2_161, %c0_162, %c0_163] : memref<3x32x1xf32, #tpu.memory_space<vmem>>, vector<1x32x1xf32>
    %324 = vector.shape_cast %323 : vector<1x32x1xf32> to vector<32x1xf32>
    %c2_164 = arith.constant 2 : index
    %c0_165 = arith.constant 0 : index
    %c0_166 = arith.constant 0 : index
    %325 = vector.load %arg3[%c2_164, %c0_165, %c0_166] : memref<3x32x32xbf16, #tpu.memory_space<vmem>>, vector<1x32x32xbf16>
    %326 = vector.shape_cast %325 : vector<1x32x32xbf16> to vector<32x32xbf16>
    %327 = vector.shape_cast %326 : vector<32x32xbf16> to vector<1x32x32xbf16>
    %328 = vector.shape_cast %327 : vector<1x32x32xbf16> to vector<1x32x32xbf16>
    %329 = vector.broadcast %328 : vector<1x32x32xbf16> to vector<2x32x32xbf16>
    %c2_167 = arith.constant 2 : index
    %c0_168 = arith.constant 0 : index
    %c0_169 = arith.constant 0 : index
    %330 = vector.load %arg11[%c2_167, %c0_168, %c0_169] : memref<3x32x32xbf16, #tpu.memory_space<vmem>>, vector<1x32x32xbf16>
    %331 = vector.shape_cast %330 : vector<1x32x32xbf16> to vector<32x32xbf16>
    %332 = vector.shape_cast %331 : vector<32x32xbf16> to vector<1x32x32xbf16>
    %333 = vector.shape_cast %332 : vector<1x32x32xbf16> to vector<1x32x32xbf16>
    %334 = vector.broadcast %333 : vector<1x32x32xbf16> to vector<2x32x32xbf16>
    %c2_170 = arith.constant 2 : index
    %c0_171 = arith.constant 0 : index
    %c0_172 = arith.constant 0 : index
    %335 = vector.load %arg7[%c2_170, %c0_171, %c0_172] : memref<3x128x128xbf16, #tpu.memory_space<vmem>>, vector<1x128x128xbf16>
    %336 = vector.shape_cast %335 : vector<1x128x128xbf16> to vector<128x128xbf16>
    %cst_173 = arith.constant dense<0.000000e+00> : vector<2x32xf32>
    %337 = vector.multi_reduction <add>, %306, %cst_173 [2] : vector<2x32x128xf32> to vector<2x32xf32>
    %338 = vector.shape_cast %337 : vector<2x32xf32> to vector<2x32x1xf32>
    %cst_174 = arith.constant 1.280000e+02 : f32
    %339 = vector.broadcast %cst_174 : f32 to vector<2x32x1xf32>
    %340 = arith.divf %338, %339 : vector<2x32x1xf32>
    %341 = vector.broadcast %340 : vector<2x32x1xf32> to vector<2x32x128xf32>
    %342 = arith.subf %306, %341 : vector<2x32x128xf32>
    %343 = arith.mulf %342, %342 : vector<2x32x128xf32>
    %cst_175 = arith.constant dense<0.000000e+00> : vector<2x32xf32>
    %344 = vector.multi_reduction <add>, %343, %cst_175 [2] : vector<2x32x128xf32> to vector<2x32xf32>
    %345 = vector.shape_cast %344 : vector<2x32xf32> to vector<2x32x1xf32>
    %cst_176 = arith.constant 1.280000e+02 : f32
    %346 = vector.broadcast %cst_176 : f32 to vector<2x32x1xf32>
    %347 = arith.divf %345, %346 : vector<2x32x1xf32>
    %cst_177 = arith.constant 1.000000e-03 : f32
    %348 = vector.broadcast %cst_177 : f32 to vector<2x32x1xf32>
    %349 = arith.addf %347, %348 : vector<2x32x1xf32>
    %350 = arith.divf %347, %349 : vector<2x32x1xf32>
    %cst_178 = arith.constant dense<0.000000e+00> : vector<32x1xf32>
    %351 = vector.multi_reduction <add>, %350, %cst_178 [0] : vector<2x32x1xf32> to vector<32x1xf32>
    %352 = vector.shape_cast %351 : vector<32x1xf32> to vector<1x32x1xf32>
    %cst_179 = arith.constant 2.000000e+00 : f32
    %353 = vector.broadcast %cst_179 : f32 to vector<1x32x1xf32>
    %354 = arith.divf %352, %353 : vector<1x32x1xf32>
    %cst_180 = arith.constant 1.000000e-03 : f32
    %355 = vector.broadcast %cst_180 : f32 to vector<2x32x1xf32>
    %356 = arith.addf %347, %355 : vector<2x32x1xf32>
    %357 = math.rsqrt %356 : vector<2x32x1xf32>
    %cst_181 = arith.constant 9.99999974E-6 : f32
    %358 = vector.broadcast %cst_181 : f32 to vector<1x32x1xf32>
    %359 = arith.addf %354, %358 : vector<1x32x1xf32>
    %360 = math.rsqrt %359 : vector<1x32x1xf32>
    %361 = vector.broadcast %360 : vector<1x32x1xf32> to vector<2x32x1xf32>
    %362 = arith.mulf %357, %361 : vector<2x32x1xf32>
    %363 = vector.broadcast %362 : vector<2x32x1xf32> to vector<2x32x128xf32>
    %364 = arith.mulf %342, %363 : vector<2x32x128xf32>
    %365 = vector.shape_cast %308 : vector<32x1xf32> to vector<1x32x1xf32>
    %366 = vector.broadcast %365 : vector<1x32x1xf32> to vector<2x32x128xf32>
    %367 = arith.mulf %364, %366 : vector<2x32x128xf32>
    %368 = vector.shape_cast %310 : vector<32x1xf32> to vector<1x32x1xf32>
    %369 = vector.broadcast %368 : vector<1x32x1xf32> to vector<2x32x128xf32>
    %370 = arith.addf %367, %369 : vector<2x32x128xf32>
    %cst_182 = arith.constant 0.000000e+00 : f32
    %371 = vector.broadcast %cst_182 : f32 to vector<2x32x128xf32>
    %372 = arith.maximumf %370, %371 : vector<2x32x128xf32>
    %373 = arith.truncf %372 : vector<2x32x128xf32> to vector<2x32x128xbf16>
    %cst_183 = arith.constant dense<0.000000e+00> : vector<2x32x128xf32>
    %374 = tpu.matmul %329, %373, %cst_183 {dimension_numbers = #tpu.dot_dimension_numbers<[2], [1], [1], [2], [0, 0, 0, 1, 1, 2], [0], [0]>} : vector<2x32x32xbf16>, vector<2x32x128xbf16>, vector<2x32x128xf32> -> vector<2x32x128xf32>
    %375 = vector.shape_cast %312 : vector<32x1xf32> to vector<1x32x1xf32>
    %376 = vector.broadcast %375 : vector<1x32x1xf32> to vector<2x32x128xf32>
    %377 = arith.addf %374, %376 : vector<2x32x128xf32>
    %cst_184 = arith.constant dense<0.000000e+00> : vector<32x128xf32>
    %378 = vector.multi_reduction <add>, %377, %cst_184 [0] : vector<2x32x128xf32> to vector<32x128xf32>
    %379 = vector.shape_cast %378 : vector<32x128xf32> to vector<1x32x128xf32>
    %cst_185 = arith.constant 2.000000e+00 : f32
    %380 = vector.broadcast %cst_185 : f32 to vector<1x32x128xf32>
    %381 = arith.divf %379, %380 : vector<1x32x128xf32>
    %cst_186 = arith.constant dense<0.000000e+00> : vector<1x128xf32>
    %382 = vector.multi_reduction <add>, %381, %cst_186 [1] : vector<1x32x128xf32> to vector<1x128xf32>
    %383 = vector.shape_cast %382 : vector<1x128xf32> to vector<1x1x128xf32>
    %cst_187 = arith.constant 3.200000e+01 : f32
    %384 = vector.broadcast %cst_187 : f32 to vector<1x1x128xf32>
    %385 = arith.divf %383, %384 : vector<1x1x128xf32>
    %386 = vector.broadcast %385 : vector<1x1x128xf32> to vector<2x32x128xf32>
    %387 = arith.subf %377, %386 : vector<2x32x128xf32>
    %388 = arith.mulf %387, %387 : vector<2x32x128xf32>
    %cst_188 = arith.constant dense<0.000000e+00> : vector<32x128xf32>
    %389 = vector.multi_reduction <add>, %388, %cst_188 [0] : vector<2x32x128xf32> to vector<32x128xf32>
    %390 = vector.shape_cast %389 : vector<32x128xf32> to vector<1x32x128xf32>
    %cst_189 = arith.constant 2.000000e+00 : f32
    %391 = vector.broadcast %cst_189 : f32 to vector<1x32x128xf32>
    %392 = arith.divf %390, %391 : vector<1x32x128xf32>
    %cst_190 = arith.constant dense<0.000000e+00> : vector<1x128xf32>
    %393 = vector.multi_reduction <add>, %392, %cst_190 [1] : vector<1x32x128xf32> to vector<1x128xf32>
    %394 = vector.shape_cast %393 : vector<1x128xf32> to vector<1x1x128xf32>
    %cst_191 = arith.constant 3.200000e+01 : f32
    %395 = vector.broadcast %cst_191 : f32 to vector<1x1x128xf32>
    %396 = arith.divf %394, %395 : vector<1x1x128xf32>
    %cst_192 = arith.constant 9.99999974E-6 : f32
    %397 = vector.broadcast %cst_192 : f32 to vector<1x1x128xf32>
    %398 = arith.addf %396, %397 : vector<1x1x128xf32>
    %399 = math.rsqrt %398 : vector<1x1x128xf32>
    %400 = vector.broadcast %399 : vector<1x1x128xf32> to vector<2x32x128xf32>
    %401 = arith.mulf %387, %400 : vector<2x32x128xf32>
    %402 = vector.shape_cast %314 : vector<1x128xf32> to vector<1x1x128xf32>
    %403 = vector.broadcast %402 : vector<1x1x128xf32> to vector<2x32x128xf32>
    %404 = arith.mulf %401, %403 : vector<2x32x128xf32>
    %405 = vector.shape_cast %316 : vector<1x128xf32> to vector<1x1x128xf32>
    %406 = vector.broadcast %405 : vector<1x1x128xf32> to vector<2x32x128xf32>
    %407 = arith.addf %404, %406 : vector<2x32x128xf32>
    %cst_193 = arith.constant 0.000000e+00 : f32
    %408 = vector.broadcast %cst_193 : f32 to vector<2x32x128xf32>
    %409 = arith.maximumf %407, %408 : vector<2x32x128xf32>
    %410 = vector.shape_cast %409 : vector<2x32x128xf32> to vector<64x128xf32>
    %411 = arith.truncf %410 : vector<64x128xf32> to vector<64x128xbf16>
    %cst_194 = arith.constant dense<0.000000e+00> : vector<64x128xf32>
    %412 = tpu.matmul %411, %336, %cst_194 {dimension_numbers = #tpu.dot_dimension_numbers<[1], [0], [0], [1], [0, 0, 1, 1], [], []>} : vector<64x128xbf16>, vector<128x128xbf16>, vector<64x128xf32> -> vector<64x128xf32>
    %413 = vector.shape_cast %412 : vector<64x128xf32> to vector<2x32x128xf32>
    %414 = arith.addf %377, %413 : vector<2x32x128xf32>
    %415 = vector.shape_cast %318 : vector<1x128xf32> to vector<1x1x128xf32>
    %416 = vector.broadcast %415 : vector<1x1x128xf32> to vector<2x32x128xf32>
    %417 = arith.addf %414, %416 : vector<2x32x128xf32>
    %cst_195 = arith.constant dense<0.000000e+00> : vector<2x32xf32>
    %418 = vector.multi_reduction <add>, %417, %cst_195 [2] : vector<2x32x128xf32> to vector<2x32xf32>
    %419 = vector.shape_cast %418 : vector<2x32xf32> to vector<2x32x1xf32>
    %cst_196 = arith.constant 1.280000e+02 : f32
    %420 = vector.broadcast %cst_196 : f32 to vector<2x32x1xf32>
    %421 = arith.divf %419, %420 : vector<2x32x1xf32>
    %422 = vector.broadcast %421 : vector<2x32x1xf32> to vector<2x32x128xf32>
    %423 = arith.subf %417, %422 : vector<2x32x128xf32>
    %424 = arith.mulf %423, %423 : vector<2x32x128xf32>
    %cst_197 = arith.constant dense<0.000000e+00> : vector<2x32xf32>
    %425 = vector.multi_reduction <add>, %424, %cst_197 [2] : vector<2x32x128xf32> to vector<2x32xf32>
    %426 = vector.shape_cast %425 : vector<2x32xf32> to vector<2x32x1xf32>
    %cst_198 = arith.constant 1.280000e+02 : f32
    %427 = vector.broadcast %cst_198 : f32 to vector<2x32x1xf32>
    %428 = arith.divf %426, %427 : vector<2x32x1xf32>
    %cst_199 = arith.constant 1.000000e-03 : f32
    %429 = vector.broadcast %cst_199 : f32 to vector<2x32x1xf32>
    %430 = arith.addf %428, %429 : vector<2x32x1xf32>
    %431 = arith.divf %428, %430 : vector<2x32x1xf32>
    %cst_200 = arith.constant dense<0.000000e+00> : vector<32x1xf32>
    %432 = vector.multi_reduction <add>, %431, %cst_200 [0] : vector<2x32x1xf32> to vector<32x1xf32>
    %433 = vector.shape_cast %432 : vector<32x1xf32> to vector<1x32x1xf32>
    %cst_201 = arith.constant 2.000000e+00 : f32
    %434 = vector.broadcast %cst_201 : f32 to vector<1x32x1xf32>
    %435 = arith.divf %433, %434 : vector<1x32x1xf32>
    %cst_202 = arith.constant 1.000000e-03 : f32
    %436 = vector.broadcast %cst_202 : f32 to vector<2x32x1xf32>
    %437 = arith.addf %428, %436 : vector<2x32x1xf32>
    %438 = math.rsqrt %437 : vector<2x32x1xf32>
    %cst_203 = arith.constant 9.99999974E-6 : f32
    %439 = vector.broadcast %cst_203 : f32 to vector<1x32x1xf32>
    %440 = arith.addf %435, %439 : vector<1x32x1xf32>
    %441 = math.rsqrt %440 : vector<1x32x1xf32>
    %442 = vector.broadcast %441 : vector<1x32x1xf32> to vector<2x32x1xf32>
    %443 = arith.mulf %438, %442 : vector<2x32x1xf32>
    %444 = vector.broadcast %443 : vector<2x32x1xf32> to vector<2x32x128xf32>
    %445 = arith.mulf %423, %444 : vector<2x32x128xf32>
    %446 = vector.shape_cast %320 : vector<32x1xf32> to vector<1x32x1xf32>
    %447 = vector.broadcast %446 : vector<1x32x1xf32> to vector<2x32x128xf32>
    %448 = arith.mulf %445, %447 : vector<2x32x128xf32>
    %449 = vector.shape_cast %322 : vector<32x1xf32> to vector<1x32x1xf32>
    %450 = vector.broadcast %449 : vector<1x32x1xf32> to vector<2x32x128xf32>
    %451 = arith.addf %448, %450 : vector<2x32x128xf32>
    %cst_204 = arith.constant 0.000000e+00 : f32
    %452 = vector.broadcast %cst_204 : f32 to vector<2x32x128xf32>
    %453 = arith.maximumf %451, %452 : vector<2x32x128xf32>
    %454 = arith.truncf %453 : vector<2x32x128xf32> to vector<2x32x128xbf16>
    %cst_205 = arith.constant dense<0.000000e+00> : vector<2x32x128xf32>
    %455 = tpu.matmul %334, %454, %cst_205 {dimension_numbers = #tpu.dot_dimension_numbers<[2], [1], [1], [2], [0, 0, 0, 1, 1, 2], [0], [0]>} : vector<2x32x32xbf16>, vector<2x32x128xbf16>, vector<2x32x128xf32> -> vector<2x32x128xf32>
    %456 = vector.shape_cast %324 : vector<32x1xf32> to vector<1x32x1xf32>
    %457 = vector.broadcast %456 : vector<1x32x1xf32> to vector<2x32x128xf32>
    %458 = arith.addf %455, %457 : vector<2x32x128xf32>
    %459 = arith.addf %458, %306 : vector<2x32x128xf32>
    %c0_206 = arith.constant 0 : index
    %c0_207 = arith.constant 0 : index
    %c0_208 = arith.constant 0 : index
    %460 = vector.load %arg13[%c0_206, %c0_207, %c0_208] : memref<2x32x128xf32, #tpu.memory_space<vmem>>, vector<2x32x128xf32>
    tpu.vector_store %arg13[%c0_206, %c0_207, %c0_208], %459 {strides = array<i32>} : memref<2x32x128xf32, #tpu.memory_space<vmem>>, vector<2x32x128xf32>,
    return
  }
}

</mosaic_0001>

<llo_original>
// kernel: geo_attention_block.4
$region0: #{geo_attention_block.4}
  #allocation0 [shape = 'u32[]', space=smem, size = 0x4, offset = 0x4, fixed_abs, tag = 'smem constant byte address 0x4 - core index']
  #allocation1 [shape = 'u32[72,128]{1,0:T(1,128)}', space=vmem, size = 0x9000, scoped, tag = 'internal scratch']
  %s0 = inlined_call_operand.vmem [shape: f32[2,32,256], index: 0, kind: input, shape index: {}]
  %s1 = inlined_call_operand.vmem [shape: f32[2,32,1], index: 1, kind: output, shape index: {0}]
  %s2 = inlined_call_operand.vmem [shape: f32[2,32,1], index: 2, kind: output, shape index: {1}]
  %3 = xla_tuple %s1, %s2
  %s4 = sld [smem:[#allocation0]]
  $region45: #{geo_attention_block.4} parent=0
    _
  %s6 = ssub.s32 1, %s4
  %s7 = scalar_select 0, %s6, %s4
  loop: start=0, step=1, limit=4
  $region2: #{geo_attention_block.4} parent=0 // loop_pre_header
    _
  $region3: #{geo_attention_block.4} parent=0 // loop_header
    %s9 = sphi 0, %s13
    %p10 = scmp.ge.s32.totalorder %s9, 4
    %s19 = sphi 0, %s21
    %s22 = sphi 0, %s19
    %s23 = sphi 0, %s22
    %s39 = sphi 0, %s23
    %s45 = sphi 0, %s47
    %s48 = sphi 0, %s45
    %s49 = sphi 0, %s48
    %s65 = sphi 0, %s49
    %s71 = sphi 0, %s73
    %s74 = sphi 0, %s71
    %s75 = sphi 0, %s74
    %s91 = sphi 0, %s75
  $region4: #{geo_attention_block.4} parent=0 // loop_header_branch
    %12 = sbr.rel (%p10) target = $region8
  $region5: #{geo_attention_block.4} parent=0 // loop_body
    %s14 = ssub.s32 %s9, 1
    %s15 = ssub.s32 %s9, 2
    %s16 = sadd.s32 %s9, 1
    %s17 = ssub.s32 %s9, %s16
    %p18 = scmp.eq.s32.totalorder %s17, 0
    %s20 = sadd.s32 %s19, 1
    %s21 = scalar_select %p18, %s19, %s20
    %p24 = pneg %p18
    %p25 = scmp.eq.s32.totalorder %s9, 1
    %p26 = por %p24, %p25
    %p27 = scmp.ne.s32.totalorder %s19, %s22
    %p28 = scmp.eq.s32.totalorder %s9, 0
    %p29 = por %p27, %p28
    %p30 = scmp.ne.s32.totalorder %s19, %s22
    %p31 = scmp.eq.s32.totalorder %s14, 1
    %p32 = por %p30, %p31
    %p33 = scmp.ne.s32.totalorder %s22, %s23
    %p34 = scmp.eq.s32.totalorder %s14, 0
    %p35 = por %p33, %p34
    %p36 = scmp.ne.s32.totalorder %s22, %s23
    %p37 = scmp.eq.s32.totalorder %s15, 1
    %p38 = por %p36, %p37
    %p40 = scmp.ne.s32.totalorder %s23, %s39
    %p41 = scmp.eq.s32.totalorder %s15, 0
    %p42 = por %p40, %p41
    %s43 = ssub.s32 %s9, %s16
    %p44 = scmp.eq.s32.totalorder %s43, 0
    %s46 = sadd.s32 %s45, 1
    %s47 = scalar_select %p44, %s45, %s46
    %p50 = pneg %p44
    %p51 = scmp.eq.s32.totalorder %s9, 1
    %p52 = por %p50, %p51
    %p53 = scmp.ne.s32.totalorder %s45, %s48
    %p54 = scmp.eq.s32.totalorder %s9, 0
    %p55 = por %p53, %p54
    %p56 = scmp.ne.s32.totalorder %s45, %s48
    %p57 = scmp.eq.s32.totalorder %s14, 1
    %p58 = por %p56, %p57
    %p59 = scmp.ne.s32.totalorder %s48, %s49
    %p60 = scmp.eq.s32.totalorder %s14, 0
    %p61 = por %p59, %p60
    %p62 = scmp.ne.s32.totalorder %s48, %s49
    %p63 = scmp.eq.s32.totalorder %s15, 1
    %p64 = por %p62, %p63
    %p66 = scmp.ne.s32.totalorder %s49, %s65
    %p67 = scmp.eq.s32.totalorder %s15, 0
    %p68 = por %p66, %p67
    %s69 = ssub.s32 %s9, %s16
    %p70 = scmp.eq.s32.totalorder %s69, 0
    %s72 = sadd.s32 %s71, 1
    %s73 = scalar_select %p70, %s71, %s72
    %p76 = pneg %p70
    %p77 = scmp.eq.s32.totalorder %s9, 1
    %p78 = por %p76, %p77
    %p79 = scmp.ne.s32.totalorder %s71, %s74
    %p80 = scmp.eq.s32.totalorder %s9, 0
    %p81 = por %p79, %p80
    %p82 = scmp.ne.s32.totalorder %s71, %s74
    %p83 = scmp.eq.s32.totalorder %s14, 1
    %p84 = por %p82, %p83
    %p85 = scmp.ne.s32.totalorder %s74, %s75
    %p86 = scmp.eq.s32.totalorder %s14, 0
    %p87 = por %p85, %p86
    %p88 = scmp.ne.s32.totalorder %s74, %s75
    %p89 = scmp.eq.s32.totalorder %s15, 1
    %p90 = por %p88, %p89
    %p92 = scmp.ne.s32.totalorder %s75, %s91
    %p93 = scmp.eq.s32.totalorder %s15, 0
    %p94 = por %p92, %p93
    %p95 = scmp.le.s32.totalorder 1, %s9
    %p96 = scmp.lt.s32.totalorder %s9, 3
    %p97 = pnand %p95, %p96
    %p98 = pneg %p97
    // Predicated region
    $region9: #{geo_attention_block.4} parent=5 // pred_check
      _
    $region10: #{geo_attention_block.4} parent=5 // pred_check_branch
      %100 = sbr.rel (%p97) target = $region12
    $region11: #{geo_attention_block.4} parent=5 // pred_region
      %s101 = ssub.s32 %s9, 1
    $region12: #{geo_attention_block.4} parent=5 // pred_fallthru
      _
    %p102 = scmp.lt.s32.totalorder %s9, 2
    // Predicated region
    $region13: #{geo_attention_block.4} parent=5 // pred_check
      %p103 = pneg %p102
    $region14: #{geo_attention_block.4} parent=5 // pred_check_branch
      %105 = sbr.rel (%p103) target = $region16
    $region15: #{geo_attention_block.4} parent=5 // pred_region
      // Predicated region
      $region17: #{geo_attention_block.4} parent=15 // pred_check
        %p106 = pneg %p29
      $region18: #{geo_attention_block.4} parent=15 // pred_check_branch
        %108 = sbr.rel (%p106) target = $region20
      $region19: #{geo_attention_block.4} parent=15 // pred_region
        %p109 = scmp.lt.s32.totalorder %s9, 1
        %s110 = scalar_select %p109, %s9, 1
        %s111 = smul.addr %s110, 8
        %s112 = smul.addr %s111, 8
        %s113 = scalar_lea.vmem %s0, %s112
      $region20: #{geo_attention_block.4} parent=15 // pred_fallthru
        _
    $region16: #{geo_attention_block.4} parent=5 // pred_fallthru
      _
    %p114 = scmp.le.s32.totalorder 1, %s9
    %p115 = scmp.lt.s32.totalorder %s9, 3
    %p116 = pnand %p114, %p115
    %p117 = pneg %p116
    // Predicated region
    $region21: #{geo_attention_block.4} parent=5 // pred_check
      _
    $region22: #{geo_attention_block.4} parent=5 // pred_check_branch
      %119 = sbr.rel (%p116) target = $region24
    $region23: #{geo_attention_block.4} parent=5 // pred_region
      %s120 = ssub.s32 %s9, 1
      %p121 = scmp.lt.s32.totalorder %s14, 1
      %s122 = scalar_select %p121, %s14, 1
      %s123 = smul.addr %s122, 8
      %s124 = smul.addr %s123, 8
      %s125 = scalar_lea.vmem %s0, %s124
      %p126 = pneg %p35
      %p127 = pneg %p32
      %p128 = pneg %p61
      %p129 = pneg %p58
      %p130 = scmp.lt.s32.totalorder %s14, 1
      %s131 = scalar_select %p130, %s14, 1
      %s132 = smul.addr %s131, 4
      %s133 = smul.addr %s132, 8
      %s134 = scalar_lea.vmem %s1, %s133
      %p135 = pneg %p87
      %p136 = pneg %p84
      %p137 = scmp.lt.s32.totalorder %s14, 1
      %s138 = scalar_select %p137, %s14, 1
      %s139 = smul.addr %s138, 4
      %s140 = smul.addr %s139, 8
      %s141 = scalar_lea.vmem %s2, %s140
      %p142 = scmp.lt.s32.totalorder %s14, 1
      %s143 = scalar_select %p142, %s14, 1
      %s144 = smul.addr %s143, 8
      %s145 = smul.addr %s144, 8
      %s146 = scalar_lea.vmem %s0, %s145
      %p147 = scmp.lt.s32.totalorder %s14, 1
      %s148 = scalar_select %p147, %s14, 1
      %s149 = smul.addr %s148, 4
      %s150 = smul.addr %s149, 8
      %s151 = scalar_lea.vmem %s1, %s150
      %p152 = scmp.lt.s32.totalorder %s14, 1
      %s153 = scalar_select %p152, %s14, 1
      %s154 = smul.addr %s153, 4
      %s155 = smul.addr %s154, 8
      %s156 = scalar_lea.vmem %s2, %s155
      %v157 = vld [vmem:[%s146] sm:$0xff]
      %v158 = vld [vmem:[%s146 + $0x8] sm:$0xff]
      %v159 = vld [vmem:[%s146 + $0x10] sm:$0xff]
      %v160 = vld [vmem:[%s146 + $0x18] sm:$0xff]
      %v161 = vld [vmem:[%s146 + $0x20] sm:$0xff]
      %v162 = vld [vmem:[%s146 + $0x28] sm:$0xff]
      %v163 = vld [vmem:[%s146 + $0x30] sm:$0xff]
      %v164 = vld [vmem:[%s146 + $0x38] sm:$0xff]
      %v165 = vadd.f32 %v157, %v158
      %166 = vadd.xlane.f32.xlu0 %v165
      %v167 = vpop.xlane.xlu0 %166
      %v168 = vadd.f32 %v159, %v160
      %169 = vadd.xlane.f32.xlu0 %v168
      %v170 = vpop.xlane.xlu0 %169
      %v171 = vadd.f32 %v161, %v162
      %172 = vadd.xlane.f32.xlu0 %v171
      %v173 = vpop.xlane.xlu0 %172
      %v174 = vadd.f32 %v163, %v164
      %175 = vadd.xlane.f32.xlu0 %v174
      %v176 = vpop.xlane.xlu0 %175
      %v177 = vrcp.pop 256.0
      %v178 = vmul.f32 256.0, %v177
      %v179 = vsub.f32 1.0, %v178
      %v180 = vmul.f32 %v177, %v179
      %v181 = vadd.f32 %v177, %v180
      %vm182 = vweird.f32 %v177
      %v183 = vsel %vm182, %v177, %v181
      %v184 = vmul.f32 %v167, %v183
      %v185 = vmul.f32 %v170, %v183
      %v186 = vmul.f32 %v173, %v183
      %v187 = vmul.f32 %v176, %v183
      %v188 = vsub.f32 %v157, %v184
      %v189 = vsub.f32 %v158, %v184
      %v190 = vsub.f32 %v159, %v185
      %v191 = vsub.f32 %v160, %v185
      %v192 = vsub.f32 %v161, %v186
      %v193 = vsub.f32 %v162, %v186
      %v194 = vsub.f32 %v163, %v187
      %v195 = vsub.f32 %v164, %v187
      %v196 = vmul.f32 %v188, %v188
      %v197 = vmul.f32 %v189, %v189
      %v198 = vmul.f32 %v190, %v190
      %v199 = vmul.f32 %v191, %v191
      %v200 = vmul.f32 %v192, %v192
      %v201 = vmul.f32 %v193, %v193
      %v202 = vmul.f32 %v194, %v194
      %v203 = vmul.f32 %v195, %v195
      %v204 = vadd.f32 %v196, %v197
      %205 = vadd.xlane.f32.xlu0 %v204
      %v206 = vpop.xlane.xlu0 %205
      %v207 = vadd.f32 %v198, %v199
      %208 = vadd.xlane.f32.xlu0 %v207
      %v209 = vpop.xlane.xlu0 %208
      %v210 = vadd.f32 %v200, %v201
      %211 = vadd.xlane.f32.xlu0 %v210
      %v212 = vpop.xlane.xlu0 %211
      %v213 = vadd.f32 %v202, %v203
      %214 = vadd.xlane.f32.xlu0 %v213
      %v215 = vpop.xlane.xlu0 %214
      %v216 = vmul.f32 %v206, %v183
      %v217 = vmul.f32 %v209, %v183
      %v218 = vmul.f32 %v212, %v183
      %v219 = vmul.f32 %v215, %v183
      %vm220 = vcmask 7168
      %221 = vst.msk [vmem:[%s151] sm:$0xff] %vm220, %v184
      %222 = vst.msk [vmem:[%s151 + $0x8] sm:$0xff] %vm220, %v185
      %223 = vst.msk [vmem:[%s151 + $0x10] sm:$0xff] %vm220, %v186
      %224 = vst.msk [vmem:[%s151 + $0x18] sm:$0xff] %vm220, %v187
      %225 = vst.msk [vmem:[%s156] sm:$0xff] %vm220, %v216
      %226 = vst.msk [vmem:[%s156 + $0x8] sm:$0xff] %vm220, %v217
      %227 = vst.msk [vmem:[%s156 + $0x10] sm:$0xff] %vm220, %v218
      %228 = vst.msk [vmem:[%s156 + $0x18] sm:$0xff] %vm220, %v219
      %p229 = scmp.lt.s32.totalorder %s14, 1
      %s230 = scalar_select %p229, %s14, 1
      %s231 = smul.addr %s230, 4
      %s232 = smul.addr %s231, 8
      %s233 = scalar_lea.vmem %s1, %s232
      %p234 = scmp.lt.s32.totalorder %s14, 1
      %s235 = scalar_select %p234, %s14, 1
      %s236 = smul.addr %s235, 4
      %s237 = smul.addr %s236, 8
      %s238 = scalar_lea.vmem %s2, %s237
      // Predicated region
      $region25: #{geo_attention_block.4} parent=23 // pred_check
        %p239 = pneg %p58
      $region26: #{geo_attention_block.4} parent=23 // pred_check_branch
        %241 = sbr.rel (%p239) target = $region28
      $region27: #{geo_attention_block.4} parent=23 // pred_region
        _
      $region28: #{geo_attention_block.4} parent=23 // pred_fallthru
        _
      // Predicated region
      $region29: #{geo_attention_block.4} parent=23 // pred_check
        %p242 = pneg %p84
      $region30: #{geo_attention_block.4} parent=23 // pred_check_branch
        %244 = sbr.rel (%p242) target = $region32
      $region31: #{geo_attention_block.4} parent=23 // pred_region
        _
      $region32: #{geo_attention_block.4} parent=23 // pred_fallthru
        _
    $region24: #{geo_attention_block.4} parent=5 // pred_fallthru
      _
    %p245 = scmp.le.s32.totalorder 2, %s9
    // Predicated region
    $region33: #{geo_attention_block.4} parent=5 // pred_check
      %p246 = pneg %p245
    $region34: #{geo_attention_block.4} parent=5 // pred_check_branch
      %248 = sbr.rel (%p246) target = $region36
    $region35: #{geo_attention_block.4} parent=5 // pred_region
      %s249 = ssub.s32 %s9, 2
      // Predicated region
      $region37: #{geo_attention_block.4} parent=35 // pred_check
        %p250 = pneg %p64
      $region38: #{geo_attention_block.4} parent=35 // pred_check_branch
        %252 = sbr.rel (%p250) target = $region40
      $region39: #{geo_attention_block.4} parent=35 // pred_region
        %p253 = scmp.lt.s32.totalorder %s15, 1
        %s254 = scalar_select %p253, %s15, 1
        %s255 = smul.addr %s254, 4
        %s256 = smul.addr %s255, 8
        %s257 = scalar_lea.vmem %s1, %s256
      $region40: #{geo_attention_block.4} parent=35 // pred_fallthru
        _
      // Predicated region
      $region41: #{geo_attention_block.4} parent=35 // pred_check
        %p258 = pneg %p90
      $region42: #{geo_attention_block.4} parent=35 // pred_check_branch
        %260 = sbr.rel (%p258) target = $region44
      $region43: #{geo_attention_block.4} parent=35 // pred_region
        %p261 = scmp.lt.s32.totalorder %s15, 1
        %s262 = scalar_select %p261, %s15, 1
        %s263 = smul.addr %s262, 4
        %s264 = smul.addr %s263, 8
        %s265 = scalar_lea.vmem %s2, %s264
      $region44: #{geo_attention_block.4} parent=35 // pred_fallthru
        _
    $region36: #{geo_attention_block.4} parent=5 // pred_fallthru
      _
  $region6: #{geo_attention_block.4} parent=0 // loop_footer
    %s13 = sadd.s32 1, %s9
  $region7: #{geo_attention_block.4} parent=0 // loop_footer_branch
    %8 = sbr.rel target = $region3
  $region8: #{geo_attention_block.4} parent=0 // loop_exit
    _

// kernel: geo_attention_block.7
$region0: #{geo_attention_block.7}
  #allocation0 [shape = 'u32[]', space=smem, size = 0x4, offset = 0x4, fixed_abs, tag = 'smem constant byte address 0x4 - core index']
  #allocation1 [shape = 'u32[72,128]{1,0:T(1,128)}', space=vmem, size = 0x9000, scoped, tag = 'internal scratch']
  %s0 = inlined_call_operand.vmem [shape: f32[2,32,128], index: 0, kind: input, shape index: {}]
  %s1 = inlined_call_operand.vmem [shape: bf16[2,128,256], index: 1, kind: input, shape index: {}]
  %s2 = inlined_call_operand.vmem [shape: f32[2,32,256], index: 2, kind: output, shape index: {}]
  %s3 = sld [smem:[#allocation0]]
  $region41: #{geo_attention_block.7} parent=0
    _
  %s5 = ssub.s32 1, %s3
  %s6 = scalar_select 0, %s5, %s3
  loop: start=0, step=1, limit=4
  $region2: #{geo_attention_block.7} parent=0 // loop_pre_header
    _
  $region3: #{geo_attention_block.7} parent=0 // loop_header
    %s8 = sphi 0, %s12
    %p9 = scmp.ge.s32.totalorder %s8, 4
    %s18 = sphi 0, %s20
    %s21 = sphi 0, %s18
    %s22 = sphi 0, %s21
    %s38 = sphi 0, %s22
    %s44 = sphi 0, %s46
    %s47 = sphi 0, %s44
    %s48 = sphi 0, %s47
    %s64 = sphi 0, %s48
    %s70 = sphi 0, %s72
    %s73 = sphi 0, %s70
    %s74 = sphi 0, %s73
    %s90 = sphi 0, %s74
  $region4: #{geo_attention_block.7} parent=0 // loop_header_branch
    %11 = sbr.rel (%p9) target = $region8
  $region5: #{geo_attention_block.7} parent=0 // loop_body
    %s13 = ssub.s32 %s8, 1
    %s14 = ssub.s32 %s8, 2
    %s15 = sadd.s32 %s8, 1
    %s16 = ssub.s32 %s8, %s15
    %p17 = scmp.eq.s32.totalorder %s16, 0
    %s19 = sadd.s32 %s18, 1
    %s20 = scalar_select %p17, %s18, %s19
    %p23 = pneg %p17
    %p24 = scmp.eq.s32.totalorder %s8, 1
    %p25 = por %p23, %p24
    %p26 = scmp.ne.s32.totalorder %s18, %s21
    %p27 = scmp.eq.s32.totalorder %s8, 0
    %p28 = por %p26, %p27
    %p29 = scmp.ne.s32.totalorder %s18, %s21
    %p30 = scmp.eq.s32.totalorder %s13, 1
    %p31 = por %p29, %p30
    %p32 = scmp.ne.s32.totalorder %s21, %s22
    %p33 = scmp.eq.s32.totalorder %s13, 0
    %p34 = por %p32, %p33
    %p35 = scmp.ne.s32.totalorder %s21, %s22
    %p36 = scmp.eq.s32.totalorder %s14, 1
    %p37 = por %p35, %p36
    %p39 = scmp.ne.s32.totalorder %s22, %s38
    %p40 = scmp.eq.s32.totalorder %s14, 0
    %p41 = por %p39, %p40
    %s42 = ssub.s32 %s8, %s15
    %p43 = scmp.eq.s32.totalorder %s42, 0
    %s45 = sadd.s32 %s44, 1
    %s46 = scalar_select %p43, %s44, %s45
    %p49 = pneg %p43
    %p50 = scmp.eq.s32.totalorder %s8, 1
    %p51 = por %p49, %p50
    %p52 = scmp.ne.s32.totalorder %s44, %s47
    %p53 = scmp.eq.s32.totalorder %s8, 0
    %p54 = por %p52, %p53
    %p55 = scmp.ne.s32.totalorder %s44, %s47
    %p56 = scmp.eq.s32.totalorder %s13, 1
    %p57 = por %p55, %p56
    %p58 = scmp.ne.s32.totalorder %s47, %s48
    %p59 = scmp.eq.s32.totalorder %s13, 0
    %p60 = por %p58, %p59
    %p61 = scmp.ne.s32.totalorder %s47, %s48
    %p62 = scmp.eq.s32.totalorder %s14, 1
    %p63 = por %p61, %p62
    %p65 = scmp.ne.s32.totalorder %s48, %s64
    %p66 = scmp.eq.s32.totalorder %s14, 0
    %p67 = por %p65, %p66
    %s68 = ssub.s32 %s8, %s15
    %p69 = scmp.eq.s32.totalorder %s68, 0
    %s71 = sadd.s32 %s70, 1
    %s72 = scalar_select %p69, %s70, %s71
    %p75 = pneg %p69
    %p76 = scmp.eq.s32.totalorder %s8, 1
    %p77 = por %p75, %p76
    %p78 = scmp.ne.s32.totalorder %s70, %s73
    %p79 = scmp.eq.s32.totalorder %s8, 0
    %p80 = por %p78, %p79
    %p81 = scmp.ne.s32.totalorder %s70, %s73
    %p82 = scmp.eq.s32.totalorder %s13, 1
    %p83 = por %p81, %p82
    %p84 = scmp.ne.s32.totalorder %s73, %s74
    %p85 = scmp.eq.s32.totalorder %s13, 0
    %p86 = por %p84, %p85
    %p87 = scmp.ne.s32.totalorder %s73, %s74
    %p88 = scmp.eq.s32.totalorder %s14, 1
    %p89 = por %p87, %p88
    %p91 = scmp.ne.s32.totalorder %s74, %s90
    %p92 = scmp.eq.s32.totalorder %s14, 0
    %p93 = por %p91, %p92
    %p94 = scmp.le.s32.totalorder 1, %s8
    %p95 = scmp.lt.s32.totalorder %s8, 3
    %p96 = pnand %p94, %p95
    %p97 = pneg %p96
    // Predicated region
    $region9: #{geo_attention_block.7} parent=5 // pred_check
      _
    $region10: #{geo_attention_block.7} parent=5 // pred_check_branch
      %99 = sbr.rel (%p96) target = $region12
    $region11: #{geo_attention_block.7} parent=5 // pred_region
      %s100 = ssub.s32 %s8, 1
    $region12: #{geo_attention_block.7} parent=5 // pred_fallthru
      _
    %p101 = scmp.lt.s32.totalorder %s8, 2
    // Predicated region
    $region13: #{geo_attention_block.7} parent=5 // pred_check
      %p102 = pneg %p101
    $region14: #{geo_attention_block.7} parent=5 // pred_check_branch
      %104 = sbr.rel (%p102) target = $region16
    $region15: #{geo_attention_block.7} parent=5 // pred_region
      // Predicated region
      $region17: #{geo_attention_block.7} parent=15 // pred_check
        %p105 = pneg %p28
      $region18: #{geo_attention_block.7} parent=15 // pred_check_branch
        %107 = sbr.rel (%p105) target = $region20
      $region19: #{geo_attention_block.7} parent=15 // pred_region
        %p108 = scmp.lt.s32.totalorder %s8, 1
        %s109 = scalar_select %p108, %s8, 1
        %s110 = smul.addr %s109, 4
        %s111 = smul.addr %s110, 8
        %s112 = scalar_lea.vmem %s0, %s111
      $region20: #{geo_attention_block.7} parent=15 // pred_fallthru
        _
      // Predicated region
      $region21: #{geo_attention_block.7} parent=15 // pred_check
        %p113 = pneg %p54
      $region22: #{geo_attention_block.7} parent=15 // pred_check_branch
        %115 = sbr.rel (%p113) target = $region24
      $region23: #{geo_attention_block.7} parent=15 // pred_region
        %p116 = scmp.lt.s32.totalorder %s8, 1
        %s117 = scalar_select %p116, %s8, 1
        %s118 = smul.addr %s117, 32
        %s119 = smul.addr %s118, 4
        %s120 = scalar_lea.vmem %s1, %s119
      $region24: #{geo_attention_block.7} parent=15 // pred_fallthru
        _
    $region16: #{geo_attention_block.7} parent=5 // pred_fallthru
      _
    %p121 = scmp.le.s32.totalorder 1, %s8
    %p122 = scmp.lt.s32.totalorder %s8, 3
    %p123 = pnand %p121, %p122
    %p124 = pneg %p123
    // Predicated region
    $region25: #{geo_attention_block.7} parent=5 // pred_check
      _
    $region26: #{geo_attention_block.7} parent=5 // pred_check_branch
      %126 = sbr.rel (%p123) target = $region28
    $region27: #{geo_attention_block.7} parent=5 // pred_region
      %s127 = ssub.s32 %s8, 1
      %p128 = scmp.lt.s32.totalorder %s13, 1
      %s129 = scalar_select %p128, %s13, 1
      %s130 = smul.addr %s129, 4
      %s131 = smul.addr %s130, 8
      %s132 = scalar_lea.vmem %s0, %s131
      %p133 = pneg %p34
      %p134 = pneg %p31
      %p135 = scmp.lt.s32.totalorder %s13, 1
      %s136 = scalar_select %p135, %s13, 1
      %s137 = smul.addr %s136, 32
      %s138 = smul.addr %s137, 4
      %s139 = scalar_lea.vmem %s1, %s138
      %p140 = pneg %p60
      %p141 = pneg %p57
      %p142 = pneg %p86
      %p143 = pneg %p83
      %p144 = scmp.lt.s32.totalorder %s13, 1
      %s145 = scalar_select %p144, %s13, 1
      %s146 = smul.addr %s145, 8
      %s147 = smul.addr %s146, 8
      %s148 = scalar_lea.vmem %s2, %s147
      %p149 = scmp.lt.s32.totalorder %s13, 1
      %s150 = scalar_select %p149, %s13, 1
      %s151 = smul.addr %s150, 4
      %s152 = smul.addr %s151, 8
      %s153 = scalar_lea.vmem %s0, %s152
      %p154 = scmp.lt.s32.totalorder %s13, 1
      %s155 = scalar_select %p154, %s13, 1
      %s156 = smul.addr %s155, 32
      %s157 = smul.addr %s156, 4
      %s158 = scalar_lea.vmem %s1, %s157
      %p159 = scmp.lt.s32.totalorder %s13, 1
      %s160 = scalar_select %p159, %s13, 1
      %s161 = smul.addr %s160, 8
      %s162 = smul.addr %s161, 8
      %s163 = scalar_lea.vmem %s2, %s162
      %v164 = vld [vmem:[%s153] sm:$0xff]
      %v165 = vld [vmem:[%s153 + $0x8] sm:$0xff]
      %v166 = vld [vmem:[%s153 + $0x10] sm:$0xff]
      %v167 = vld [vmem:[%s153 + $0x18] sm:$0xff]
      %v168 = vpack.c.bf16 %v165, %v164
      %v169 = vpack.c.bf16 %v167, %v166
      %v170 = vld [vmem:[%s158] sm:$0xff]
      %v171 = vld [vmem:[%s158 + $0x8] sm:$0xff]
      %v172 = vld [vmem:[%s158 + $0x10] sm:$0xff]
      %v173 = vld [vmem:[%s158 + $0x18] sm:$0xff]
      %v174 = vld [vmem:[%s158 + $0x20] sm:$0xff]
      %v175 = vld [vmem:[%s158 + $0x28] sm:$0xff]
      %v176 = vld [vmem:[%s158 + $0x30] sm:$0xff]
      %v177 = vld [vmem:[%s158 + $0x38] sm:$0xff]
      %v178 = vld [vmem:[%s158 + $0x40] sm:$0xff]
      %v179 = vld [vmem:[%s158 + $0x48] sm:$0xff]
      %v180 = vld [vmem:[%s158 + $0x50] sm:$0xff]
      %v181 = vld [vmem:[%s158 + $0x58] sm:$0xff]
      %v182 = vld [vmem:[%s158 + $0x60] sm:$0xff]
      %v183 = vld [vmem:[%s158 + $0x68] sm:$0xff]
      %v184 = vld [vmem:[%s158 + $0x70] sm:$0xff]
      %v185 = vld [vmem:[%s158 + $0x78] sm:$0xff]
      %v202 = vunpack.c.l.b16 %v170
      %v203 = vunpack.c.h.b16 %v170
      %v204 = vunpack.c.l.b16 %v171
      %v205 = vunpack.c.h.b16 %v171
      %v206 = vunpack.c.l.b16 %v172
      %v207 = vunpack.c.h.b16 %v172
      %v208 = vunpack.c.l.b16 %v173
      %v209 = vunpack.c.h.b16 %v173
      %v210 = vunpack.c.l.b16 %v174
      %v211 = vunpack.c.h.b16 %v174
      %v212 = vunpack.c.l.b16 %v175
      %v213 = vunpack.c.h.b16 %v175
      %v214 = vunpack.c.l.b16 %v176
      %v215 = vunpack.c.h.b16 %v176
      %v216 = vunpack.c.l.b16 %v177
      %v217 = vunpack.c.h.b16 %v177
      %v218 = vunpack.c.l.b16 %v178
      %v219 = vunpack.c.h.b16 %v178
      %v220 = vunpack.c.l.b16 %v179
      %v221 = vunpack.c.h.b16 %v179
      %v222 = vunpack.c.l.b16 %v180
      %v223 = vunpack.c.h.b16 %v180
      %v224 = vunpack.c.l.b16 %v181
      %v225 = vunpack.c.h.b16 %v181
      %v226 = vunpack.c.l.b16 %v182
      %v227 = vunpack.c.h.b16 %v182
      %v228 = vunpack.c.l.b16 %v183
      %v229 = vunpack.c.h.b16 %v183
      %v230 = vunpack.c.l.b16 %v184
      %v231 = vunpack.c.h.b16 %v184
      %v232 = vunpack.c.l.b16 %v185
      %v233 = vunpack.c.h.b16 %v185
      %v234 = vpack.c.b16 %v204, %v202
      %v235 = vpack.c.b16 %v205, %v203
      %v236 = vpack.c.b16 %v208, %v206
      %v237 = vpack.c.b16 %v209, %v207
      %v238 = vpack.c.b16 %v212, %v210
      %v239 = vpack.c.b16 %v213, %v211
      %v240 = vpack.c.b16 %v216, %v214
      %v241 = vpack.c.b16 %v217, %v215
      %v242 = vpack.c.b16 %v220, %v218
      %v243 = vpack.c.b16 %v221, %v219
      %v244 = vpack.c.b16 %v224, %v222
      %v245 = vpack.c.b16 %v225, %v223
      %v246 = vpack.c.b16 %v228, %v226
      %v247 = vpack.c.b16 %v229, %v227
      %v248 = vpack.c.b16 %v232, %v230
      %v249 = vpack.c.b16 %v233, %v231
      %266 = vmatpush.bf16.msra.mxu0 %v248
      %267 = vmatpush.bf16.msra.mxu0 %v246
      %268 = vmatpush.bf16.msra.mxu0 %v244
      %269 = vmatpush.bf16.msra.mxu0 %v242
      %270 = vmatpush.bf16.msra.mxu0 %v240
      %271 = vmatpush.bf16.msra.mxu0 %v238
      %272 = vmatpush.bf16.msra.mxu0 %v236
      %273 = vmatpush.bf16.msra.mxu0 %v234
      %274 = vmatmul.bf16.gmra.mxu0 %v168
      %v275 = vpop.f32.mrf.mxu0
      %v276 = vadd.f32 0.0, %v275
      %v277 = vpop.f32.mrf.mxu0
      %v278 = vadd.f32 0.0, %v277
      %279 = vmatmul.bf16.gmra.mxu0 %v169
      %v280 = vpop.f32.mrf.mxu0
      %v281 = vadd.f32 0.0, %v280
      %v282 = vpop.f32.mrf.mxu0
      %v283 = vadd.f32 0.0, %v282
      %284 = vdwg.mxu0
      %285 = vmatpush.bf16.msra.mxu0 %v249
      %286 = vmatpush.bf16.msra.mxu0 %v247
      %287 = vmatpush.bf16.msra.mxu0 %v245
      %288 = vmatpush.bf16.msra.mxu0 %v243
      %289 = vmatpush.bf16.msra.mxu0 %v241
      %290 = vmatpush.bf16.msra.mxu0 %v239
      %291 = vmatpush.bf16.msra.mxu0 %v237
      %292 = vmatpush.bf16.msra.mxu0 %v235
      %293 = vmatmul.bf16.gmra.mxu0 %v168
      %v294 = vpop.f32.mrf.mxu0
      %v295 = vadd.f32 0.0, %v294
      %v296 = vpop.f32.mrf.mxu0
      %v297 = vadd.f32 0.0, %v296
      %298 = vmatmul.bf16.gmra.mxu0 %v169
      %v299 = vpop.f32.mrf.mxu0
      %v300 = vadd.f32 0.0, %v299
      %v301 = vpop.f32.mrf.mxu0
      %v302 = vadd.f32 0.0, %v301
      %303 = vdwg.mxu0
      %304 = vst [vmem:[%s163] sm:$0xff] %v276
      %305 = vst [vmem:[%s163 + $0x8] sm:$0xff] %v295
      %306 = vst [vmem:[%s163 + $0x10] sm:$0xff] %v278
      %307 = vst [vmem:[%s163 + $0x18] sm:$0xff] %v297
      %308 = vst [vmem:[%s163 + $0x20] sm:$0xff] %v281
      %309 = vst [vmem:[%s163 + $0x28] sm:$0xff] %v300
      %310 = vst [vmem:[%s163 + $0x30] sm:$0xff] %v283
      %311 = vst [vmem:[%s163 + $0x38] sm:$0xff] %v302
      %p312 = scmp.lt.s32.totalorder %s13, 1
      %s313 = scalar_select %p312, %s13, 1
      %s314 = smul.addr %s313, 8
      %s315 = smul.addr %s314, 8
      %s316 = scalar_lea.vmem %s2, %s315
      // Predicated region
      $region29: #{geo_attention_block.7} parent=27 // pred_check
        %p317 = pneg %p83
      $region30: #{geo_attention_block.7} parent=27 // pred_check_branch
        %319 = sbr.rel (%p317) target = $region32
      $region31: #{geo_attention_block.7} parent=27 // pred_region
        _
      $region32: #{geo_attention_block.7} parent=27 // pred_fallthru
        _
    $region28: #{geo_attention_block.7} parent=5 // pred_fallthru
      _
    %p320 = scmp.le.s32.totalorder 2, %s8
    // Predicated region
    $region33: #{geo_attention_block.7} parent=5 // pred_check
      %p321 = pneg %p320
    $region34: #{geo_attention_block.7} parent=5 // pred_check_branch
      %323 = sbr.rel (%p321) target = $region36
    $region35: #{geo_attention_block.7} parent=5 // pred_region
      %s324 = ssub.s32 %s8, 2
      // Predicated region
      $region37: #{geo_attention_block.7} parent=35 // pred_check
        %p325 = pneg %p89
      $region38: #{geo_attention_block.7} parent=35 // pred_check_branch
        %327 = sbr.rel (%p325) target = $region40
      $region39: #{geo_attention_block.7} parent=35 // pred_region
        %p328 = scmp.lt.s32.totalorder %s14, 1
        %s329 = scalar_select %p328, %s14, 1
        %s330 = smul.addr %s329, 8
        %s331 = smul.addr %s330, 8
        %s332 = scalar_lea.vmem %s2, %s331
      $region40: #{geo_attention_block.7} parent=35 // pred_fallthru
        _
    $region36: #{geo_attention_block.7} parent=5 // pred_fallthru
      _
  $region6: #{geo_attention_block.7} parent=0 // loop_footer
    %s12 = sadd.s32 1, %s8
  $region7: #{geo_attention_block.7} parent=0 // loop_footer_branch
    %7 = sbr.rel target = $region3
  $region8: #{geo_attention_block.7} parent=0 // loop_exit
    _

// kernel: geo_attention_block.5
$region0: #{geo_attention_block.5}
  #allocation0 [shape = 'u32[]', space=smem, size = 0x4, offset = 0x4, fixed_abs, tag = 'smem constant byte address 0x4 - core index']
  #allocation1 [shape = 'u32[72,128]{1,0:T(1,128)}', space=vmem, size = 0x9000, scoped, tag = 'internal scratch']
  %s0 = inlined_call_operand.vmem [shape: f32[2,32,256], index: 0, kind: input, shape index: {}]
  %s1 = inlined_call_operand.vmem [shape: f32[2,32,1], index: 1, kind: input, shape index: {}]
  %s2 = inlined_call_operand.vmem [shape: f32[2,32,1], index: 2, kind: input, shape index: {}]
  %s3 = inlined_call_operand.vmem [shape: f32[32,1], index: 3, kind: input, shape index: {}]
  %s4 = inlined_call_operand.vmem [shape: f32[32,1], index: 4, kind: input, shape index: {}]
  %s5 = inlined_call_operand.vmem [shape: f32[32,1], index: 5, kind: input, shape index: {}]
  %s6 = inlined_call_operand.vmem [shape: f32[32,1], index: 6, kind: input, shape index: {}]
  %s7 = inlined_call_operand.vmem [shape: bf16[128,32], index: 7, kind: input, shape index: {}]
  %s8 = inlined_call_operand.vmem [shape: f32[128,1], index: 8, kind: input, shape index: {}]
  %s9 = inlined_call_operand.vmem [shape: bf16[128,32], index: 9, kind: input, shape index: {}]
  %s10 = inlined_call_operand.vmem [shape: f32[128,1], index: 10, kind: input, shape index: {}]
  %s11 = inlined_call_operand.vmem [shape: f32[2,32,128], index: 11, kind: output, shape index: {0}]
  %s12 = inlined_call_operand.vmem [shape: bf16[2,128,256], index: 12, kind: output, shape index: {1}]
  %13 = xla_tuple %s11, %s12
  %s14 = sld [smem:[#allocation0]]
  $region85: #{geo_attention_block.5} parent=0
    _
  %s16 = ssub.s32 1, %s14
  %s17 = scalar_select 0, %s16, %s14
  loop: start=0, step=1, limit=4
  $region2: #{geo_attention_block.5} parent=0 // loop_pre_header
    _
  $region3: #{geo_attention_block.5} parent=0 // loop_header
    %s19 = sphi 0, %s23
    %p20 = scmp.ge.s32.totalorder %s19, 4
    %s29 = sphi 0, %s31
    %s32 = sphi 0, %s29
    %s33 = sphi 0, %s32
    %s49 = sphi 0, %s33
    %s53 = sphi 0, %s53
    %s55 = sphi 0, %s53
    %s56 = sphi 0, %s55
    %s70 = sphi 0, %s56
    %s74 = sphi 0, %s74
    %s76 = sphi 0, %s74
    %s77 = sphi 0, %s76
    %s91 = sphi 0, %s77
    %s95 = sphi 0, %s95
    %s97 = sphi 0, %s95
    %s98 = sphi 0, %s97
    %s112 = sphi 0, %s98
    %s116 = sphi 0, %s116
    %s118 = sphi 0, %s116
    %s119 = sphi 0, %s118
    %s133 = sphi 0, %s119
    %s137 = sphi 0, %s137
    %s139 = sphi 0, %s137
    %s140 = sphi 0, %s139
    %s154 = sphi 0, %s140
    %s158 = sphi 0, %s158
    %s160 = sphi 0, %s158
    %s161 = sphi 0, %s160
    %s175 = sphi 0, %s161
    %s179 = sphi 0, %s179
    %s181 = sphi 0, %s179
    %s182 = sphi 0, %s181
    %s196 = sphi 0, %s182
    %s200 = sphi 0, %s200
    %s202 = sphi 0, %s200
    %s203 = sphi 0, %s202
    %s217 = sphi 0, %s203
    %s221 = sphi 0, %s221
    %s223 = sphi 0, %s221
    %s224 = sphi 0, %s223
    %s238 = sphi 0, %s224
    %s242 = sphi 0, %s242
    %s244 = sphi 0, %s242
    %s245 = sphi 0, %s244
    %s259 = sphi 0, %s245
    %s265 = sphi 0, %s267
    %s268 = sphi 0, %s265
    %s269 = sphi 0, %s268
    %s285 = sphi 0, %s269
    %s291 = sphi 0, %s293
    %s294 = sphi 0, %s291
    %s295 = sphi 0, %s294
    %s311 = sphi 0, %s295
  $region4: #{geo_attention_block.5} parent=0 // loop_header_branch
    %22 = sbr.rel (%p20) target = $region8
  $region5: #{geo_attention_block.5} parent=0 // loop_body
    %s24 = ssub.s32 %s19, 1
    %s25 = ssub.s32 %s19, 2
    %s26 = sadd.s32 %s19, 1
    %s27 = ssub.s32 %s19, %s26
    %p28 = scmp.eq.s32.totalorder %s27, 0
    %s30 = sadd.s32 %s29, 1
    %s31 = scalar_select %p28, %s29, %s30
    %p34 = pneg %p28
    %p35 = scmp.eq.s32.totalorder %s19, 1
    %p36 = por %p34, %p35
    %p37 = scmp.ne.s32.totalorder %s29, %s32
    %p38 = scmp.eq.s32.totalorder %s19, 0
    %p39 = por %p37, %p38
    %p40 = scmp.ne.s32.totalorder %s29, %s32
    %p41 = scmp.eq.s32.totalorder %s24, 1
    %p42 = por %p40, %p41
    %p43 = scmp.ne.s32.totalorder %s32, %s33
    %p44 = scmp.eq.s32.totalorder %s24, 0
    %p45 = por %p43, %p44
    %p46 = scmp.ne.s32.totalorder %s32, %s33
    %p47 = scmp.eq.s32.totalorder %s25, 1
    %p48 = por %p46, %p47
    %p50 = scmp.ne.s32.totalorder %s33, %s49
    %p51 = scmp.eq.s32.totalorder %s25, 0
    %p52 = por %p50, %p51
    %s54 = sadd.s32 %s53, 1
    %p57 = scmp.eq.s32.totalorder %s19, 1
    %p58 = scmp.ne.s32.totalorder %s53, %s55
    %p59 = scmp.eq.s32.totalorder %s19, 0
    %p60 = por %p58, %p59
    %p61 = scmp.ne.s32.totalorder %s53, %s55
    %p62 = scmp.eq.s32.totalorder %s24, 1
    %p63 = por %p61, %p62
    %p64 = scmp.ne.s32.totalorder %s55, %s56
    %p65 = scmp.eq.s32.totalorder %s24, 0
    %p66 = por %p64, %p65
    %p67 = scmp.ne.s32.totalorder %s55, %s56
    %p68 = scmp.eq.s32.totalorder %s25, 1
    %p69 = por %p67, %p68
    %p71 = scmp.ne.s32.totalorder %s56, %s70
    %p72 = scmp.eq.s32.totalorder %s25, 0
    %p73 = por %p71, %p72
    %s75 = sadd.s32 %s74, 1
    %p78 = scmp.eq.s32.totalorder %s19, 1
    %p79 = scmp.ne.s32.totalorder %s74, %s76
    %p80 = scmp.eq.s32.totalorder %s19, 0
    %p81 = por %p79, %p80
    %p82 = scmp.ne.s32.totalorder %s74, %s76
    %p83 = scmp.eq.s32.totalorder %s24, 1
    %p84 = por %p82, %p83
    %p85 = scmp.ne.s32.totalorder %s76, %s77
    %p86 = scmp.eq.s32.totalorder %s24, 0
    %p87 = por %p85, %p86
    %p88 = scmp.ne.s32.totalorder %s76, %s77
    %p89 = scmp.eq.s32.totalorder %s25, 1
    %p90 = por %p88, %p89
    %p92 = scmp.ne.s32.totalorder %s77, %s91
    %p93 = scmp.eq.s32.totalorder %s25, 0
    %p94 = por %p92, %p93
    %s96 = sadd.s32 %s95, 1
    %p99 = scmp.eq.s32.totalorder %s19, 1
    %p100 = scmp.ne.s32.totalorder %s95, %s97
    %p101 = scmp.eq.s32.totalorder %s19, 0
    %p102 = por %p100, %p101
    %p103 = scmp.ne.s32.totalorder %s95, %s97
    %p104 = scmp.eq.s32.totalorder %s24, 1
    %p105 = por %p103, %p104
    %p106 = scmp.ne.s32.totalorder %s97, %s98
    %p107 = scmp.eq.s32.totalorder %s24, 0
    %p108 = por %p106, %p107
    %p109 = scmp.ne.s32.totalorder %s97, %s98
    %p110 = scmp.eq.s32.totalorder %s25, 1
    %p111 = por %p109, %p110
    %p113 = scmp.ne.s32.totalorder %s98, %s112
    %p114 = scmp.eq.s32.totalorder %s25, 0
    %p115 = por %p113, %p114
    %s117 = sadd.s32 %s116, 1
    %p120 = scmp.eq.s32.totalorder %s19, 1
    %p121 = scmp.ne.s32.totalorder %s116, %s118
    %p122 = scmp.eq.s32.totalorder %s19, 0
    %p123 = por %p121, %p122
    %p124 = scmp.ne.s32.totalorder %s116, %s118
    %p125 = scmp.eq.s32.totalorder %s24, 1
    %p126 = por %p124, %p125
    %p127 = scmp.ne.s32.totalorder %s118, %s119
    %p128 = scmp.eq.s32.totalorder %s24, 0
    %p129 = por %p127, %p128
    %p130 = scmp.ne.s32.totalorder %s118, %s119
    %p131 = scmp.eq.s32.totalorder %s25, 1
    %p132 = por %p130, %p131
    %p134 = scmp.ne.s32.totalorder %s119, %s133
    %p135 = scmp.eq.s32.totalorder %s25, 0
    %p136 = por %p134, %p135
    %s138 = sadd.s32 %s137, 1
    %p141 = scmp.eq.s32.totalorder %s19, 1
    %p142 = scmp.ne.s32.totalorder %s137, %s139
    %p143 = scmp.eq.s32.totalorder %s19, 0
    %p144 = por %p142, %p143
    %p145 = scmp.ne.s32.totalorder %s137, %s139
    %p146 = scmp.eq.s32.totalorder %s24, 1
    %p147 = por %p145, %p146
    %p148 = scmp.ne.s32.totalorder %s139, %s140
    %p149 = scmp.eq.s32.totalorder %s24, 0
    %p150 = por %p148, %p149
    %p151 = scmp.ne.s32.totalorder %s139, %s140
    %p152 = scmp.eq.s32.totalorder %s25, 1
    %p153 = por %p151, %p152
    %p155 = scmp.ne.s32.totalorder %s140, %s154
    %p156 = scmp.eq.s32.totalorder %s25, 0
    %p157 = por %p155, %p156
    %s159 = sadd.s32 %s158, 1
    %p162 = scmp.eq.s32.totalorder %s19, 1
    %p163 = scmp.ne.s32.totalorder %s158, %s160
    %p164 = scmp.eq.s32.totalorder %s19, 0
    %p165 = por %p163, %p164
    %p166 = scmp.ne.s32.totalorder %s158, %s160
    %p167 = scmp.eq.s32.totalorder %s24, 1
    %p168 = por %p166, %p167
    %p169 = scmp.ne.s32.totalorder %s160, %s161
    %p170 = scmp.eq.s32.totalorder %s24, 0
    %p171 = por %p169, %p170
    %p172 = scmp.ne.s32.totalorder %s160, %s161
    %p173 = scmp.eq.s32.totalorder %s25, 1
    %p174 = por %p172, %p173
    %p176 = scmp.ne.s32.totalorder %s161, %s175
    %p177 = scmp.eq.s32.totalorder %s25, 0
    %p178 = por %p176, %p177
    %s180 = sadd.s32 %s179, 1
    %p183 = scmp.eq.s32.totalorder %s19, 1
    %p184 = scmp.ne.s32.totalorder %s179, %s181
    %p185 = scmp.eq.s32.totalorder %s19, 0
    %p186 = por %p184, %p185
    %p187 = scmp.ne.s32.totalorder %s179, %s181
    %p188 = scmp.eq.s32.totalorder %s24, 1
    %p189 = por %p187, %p188
    %p190 = scmp.ne.s32.totalorder %s181, %s182
    %p191 = scmp.eq.s32.totalorder %s24, 0
    %p192 = por %p190, %p191
    %p193 = scmp.ne.s32.totalorder %s181, %s182
    %p194 = scmp.eq.s32.totalorder %s25, 1
    %p195 = por %p193, %p194
    %p197 = scmp.ne.s32.totalorder %s182, %s196
    %p198 = scmp.eq.s32.totalorder %s25, 0
    %p199 = por %p197, %p198
    %s201 = sadd.s32 %s200, 1
    %p204 = scmp.eq.s32.totalorder %s19, 1
    %p205 = scmp.ne.s32.totalorder %s200, %s202
    %p206 = scmp.eq.s32.totalorder %s19, 0
    %p207 = por %p205, %p206
    %p208 = scmp.ne.s32.totalorder %s200, %s202
    %p209 = scmp.eq.s32.totalorder %s24, 1
    %p210 = por %p208, %p209
    %p211 = scmp.ne.s32.totalorder %s202, %s203
    %p212 = scmp.eq.s32.totalorder %s24, 0
    %p213 = por %p211, %p212
    %p214 = scmp.ne.s32.totalorder %s202, %s203
    %p215 = scmp.eq.s32.totalorder %s25, 1
    %p216 = por %p214, %p215
    %p218 = scmp.ne.s32.totalorder %s203, %s217
    %p219 = scmp.eq.s32.totalorder %s25, 0
    %p220 = por %p218, %p219
    %s222 = sadd.s32 %s221, 1
    %p225 = scmp.eq.s32.totalorder %s19, 1
    %p226 = scmp.ne.s32.totalorder %s221, %s223
    %p227 = scmp.eq.s32.totalorder %s19, 0
    %p228 = por %p226, %p227
    %p229 = scmp.ne.s32.totalorder %s221, %s223
    %p230 = scmp.eq.s32.totalorder %s24, 1
    %p231 = por %p229, %p230
    %p232 = scmp.ne.s32.totalorder %s223, %s224
    %p233 = scmp.eq.s32.totalorder %s24, 0
    %p234 = por %p232, %p233
    %p235 = scmp.ne.s32.totalorder %s223, %s224
    %p236 = scmp.eq.s32.totalorder %s25, 1
    %p237 = por %p235, %p236
    %p239 = scmp.ne.s32.totalorder %s224, %s238
    %p240 = scmp.eq.s32.totalorder %s25, 0
    %p241 = por %p239, %p240
    %s243 = sadd.s32 %s242, 1
    %p246 = scmp.eq.s32.totalorder %s19, 1
    %p247 = scmp.ne.s32.totalorder %s242, %s244
    %p248 = scmp.eq.s32.totalorder %s19, 0
    %p249 = por %p247, %p248
    %p250 = scmp.ne.s32.totalorder %s242, %s244
    %p251 = scmp.eq.s32.totalorder %s24, 1
    %p252 = por %p250, %p251
    %p253 = scmp.ne.s32.totalorder %s244, %s245
    %p254 = scmp.eq.s32.totalorder %s24, 0
    %p255 = por %p253, %p254
    %p256 = scmp.ne.s32.totalorder %s244, %s245
    %p257 = scmp.eq.s32.totalorder %s25, 1
    %p258 = por %p256, %p257
    %p260 = scmp.ne.s32.totalorder %s245, %s259
    %p261 = scmp.eq.s32.totalorder %s25, 0
    %p262 = por %p260, %p261
    %s263 = ssub.s32 %s19, %s26
    %p264 = scmp.eq.s32.totalorder %s263, 0
    %s266 = sadd.s32 %s265, 1
    %s267 = scalar_select %p264, %s265, %s266
    %p270 = pneg %p264
    %p271 = scmp.eq.s32.totalorder %s19, 1
    %p272 = por %p270, %p271
    %p273 = scmp.ne.s32.totalorder %s265, %s268
    %p274 = scmp.eq.s32.totalorder %s19, 0
    %p275 = por %p273, %p274
    %p276 = scmp.ne.s32.totalorder %s265, %s268
    %p277 = scmp.eq.s32.totalorder %s24, 1
    %p278 = por %p276, %p277
    %p279 = scmp.ne.s32.totalorder %s268, %s269
    %p280 = scmp.eq.s32.totalorder %s24, 0
    %p281 = por %p279, %p280
    %p282 = scmp.ne.s32.totalorder %s268, %s269
    %p283 = scmp.eq.s32.totalorder %s25, 1
    %p284 = por %p282, %p283
    %p286 = scmp.ne.s32.totalorder %s269, %s285
    %p287 = scmp.eq.s32.totalorder %s25, 0
    %p288 = por %p286, %p287
    %s289 = ssub.s32 %s19, %s26
    %p290 = scmp.eq.s32.totalorder %s289, 0
    %s292 = sadd.s32 %s291, 1
    %s293 = scalar_select %p290, %s291, %s292
    %p296 = pneg %p290
    %p297 = scmp.eq.s32.totalorder %s19, 1
    %p298 = por %p296, %p297
    %p299 = scmp.ne.s32.totalorder %s291, %s294
    %p300 = scmp.eq.s32.totalorder %s19, 0
    %p301 = por %p299, %p300
    %p302 = scmp.ne.s32.totalorder %s291, %s294
    %p303 = scmp.eq.s32.totalorder %s24, 1
    %p304 = por %p302, %p303
    %p305 = scmp.ne.s32.totalorder %s294, %s295
    %p306 = scmp.eq.s32.totalorder %s24, 0
    %p307 = por %p305, %p306
    %p308 = scmp.ne.s32.totalorder %s294, %s295
    %p309 = scmp.eq.s32.totalorder %s25, 1
    %p310 = por %p308, %p309
    %p312 = scmp.ne.s32.totalorder %s295, %s311
    %p313 = scmp.eq.s32.totalorder %s25, 0
    %p314 = por %p312, %p313
    %p315 = scmp.le.s32.totalorder 1, %s19
    %p316 = scmp.lt.s32.totalorder %s19, 3
    %p317 = pnand %p315, %p316
    %p318 = pneg %p317
    // Predicated region
    $region9: #{geo_attention_block.5} parent=5 // pred_check
      _
    $region10: #{geo_attention_block.5} parent=5 // pred_check_branch
      %320 = sbr.rel (%p317) target = $region12
    $region11: #{geo_attention_block.5} parent=5 // pred_region
      %s321 = ssub.s32 %s19, 1
      // Predicated region
      $region13: #{geo_attention_block.5} parent=11 // pred_check
        %p322 = pneg %p66
      $region14: #{geo_attention_block.5} parent=11 // pred_check_branch
        %324 = sbr.rel (%p322) target = $region16
      $region15: #{geo_attention_block.5} parent=11 // pred_region
        _
      $region16: #{geo_attention_block.5} parent=11 // pred_fallthru
        _
      // Predicated region
      $region17: #{geo_attention_block.5} parent=11 // pred_check
        %p325 = pneg %p87
      $region18: #{geo_attention_block.5} parent=11 // pred_check_branch
        %327 = sbr.rel (%p325) target = $region20
      $region19: #{geo_attention_block.5} parent=11 // pred_region
        _
      $region20: #{geo_attention_block.5} parent=11 // pred_fallthru
        _
      // Predicated region
      $region21: #{geo_attention_block.5} parent=11 // pred_check
        %p328 = pneg %p108
      $region22: #{geo_attention_block.5} parent=11 // pred_check_branch
        %330 = sbr.rel (%p328) target = $region24
      $region23: #{geo_attention_block.5} parent=11 // pred_region
        _
      $region24: #{geo_attention_block.5} parent=11 // pred_fallthru
        _
      // Predicated region
      $region25: #{geo_attention_block.5} parent=11 // pred_check
        %p331 = pneg %p129
      $region26: #{geo_attention_block.5} parent=11 // pred_check_branch
        %333 = sbr.rel (%p331) target = $region28
      $region27: #{geo_attention_block.5} parent=11 // pred_region
        _
      $region28: #{geo_attention_block.5} parent=11 // pred_fallthru
        _
      // Predicated region
      $region29: #{geo_attention_block.5} parent=11 // pred_check
        %p334 = pneg %p150
      $region30: #{geo_attention_block.5} parent=11 // pred_check_branch
        %336 = sbr.rel (%p334) target = $region32
      $region31: #{geo_attention_block.5} parent=11 // pred_region
        _
      $region32: #{geo_attention_block.5} parent=11 // pred_fallthru
        _
      // Predicated region
      $region33: #{geo_attention_block.5} parent=11 // pred_check
        %p337 = pneg %p171
      $region34: #{geo_attention_block.5} parent=11 // pred_check_branch
        %339 = sbr.rel (%p337) target = $region36
      $region35: #{geo_attention_block.5} parent=11 // pred_region
        _
      $region36: #{geo_attention_block.5} parent=11 // pred_fallthru
        _
      // Predicated region
      $region37: #{geo_attention_block.5} parent=11 // pred_check
        %p340 = pneg %p192
      $region38: #{geo_attention_block.5} parent=11 // pred_check_branch
        %342 = sbr.rel (%p340) target = $region40
      $region39: #{geo_attention_block.5} parent=11 // pred_region
        _
      $region40: #{geo_attention_block.5} parent=11 // pred_fallthru
        _
      // Predicated region
      $region41: #{geo_attention_block.5} parent=11 // pred_check
        %p343 = pneg %p213
      $region42: #{geo_attention_block.5} parent=11 // pred_check_branch
        %345 = sbr.rel (%p343) target = $region44
      $region43: #{geo_attention_block.5} parent=11 // pred_region
        _
      $region44: #{geo_attention_block.5} parent=11 // pred_fallthru
        _
      // Predicated region
      $region45: #{geo_attention_block.5} parent=11 // pred_check
        %p346 = pneg %p234
      $region46: #{geo_attention_block.5} parent=11 // pred_check_branch
        %348 = sbr.rel (%p346) target = $region48
      $region47: #{geo_attention_block.5} parent=11 // pred_region
        _
      $region48: #{geo_attention_block.5} parent=11 // pred_fallthru
        _
      // Predicated region
      $region49: #{geo_attention_block.5} parent=11 // pred_check
        %p349 = pneg %p255
      $region50: #{geo_attention_block.5} parent=11 // pred_check_branch
        %351 = sbr.rel (%p349) target = $region52
      $region51: #{geo_attention_block.5} parent=11 // pred_region
        _
      $region52: #{geo_attention_block.5} parent=11 // pred_fallthru
        _
    $region12: #{geo_attention_block.5} parent=5 // pred_fallthru
      _
    %p352 = scmp.lt.s32.totalorder %s19, 2
    // Predicated region
    $region53: #{geo_attention_block.5} parent=5 // pred_check
      %p353 = pneg %p352
    $region54: #{geo_attention_block.5} parent=5 // pred_check_branch
      %355 = sbr.rel (%p353) target = $region56
    $region55: #{geo_attention_block.5} parent=5 // pred_region
      // Predicated region
      $region57: #{geo_attention_block.5} parent=55 // pred_check
        %p356 = pneg %p39
      $region58: #{geo_attention_block.5} parent=55 // pred_check_branch
        %358 = sbr.rel (%p356) target = $region60
      $region59: #{geo_attention_block.5} parent=55 // pred_region
        %p359 = scmp.lt.s32.totalorder %s19, 1
        %s360 = scalar_select %p359, %s19, 1
        %s361 = smul.addr %s360, 8
        %s362 = smul.addr %s361, 8
        %s363 = scalar_lea.vmem %s0, %s362
      $region60: #{geo_attention_block.5} parent=55 // pred_fallthru
        _
    $region56: #{geo_attention_block.5} parent=5 // pred_fallthru
      _
    %p364 = scmp.le.s32.totalorder 1, %s19
    %p365 = scmp.lt.s32.totalorder %s19, 3
    %p366 = pnand %p364, %p365
    %p367 = pneg %p366
    // Predicated region
    $region61: #{geo_attention_block.5} parent=5 // pred_check
      _
    $region62: #{geo_attention_block.5} parent=5 // pred_check_branch
      %369 = sbr.rel (%p366) target = $region64
    $region63: #{geo_attention_block.5} parent=5 // pred_region
      %s370 = ssub.s32 %s19, 1
      %p371 = scmp.lt.s32.totalorder %s24, 1
      %s372 = scalar_select %p371, %s24, 1
      %s373 = smul.addr %s372, 8
      %s374 = smul.addr %s373, 8
      %s375 = scalar_lea.vmem %s0, %s374
      %p376 = pneg %p45
      %p377 = pneg %p42
      %p378 = pneg %p66
      %p379 = pneg %p63
      %p380 = pneg %p87
      %p381 = pneg %p84
      %p382 = pneg %p108
      %p383 = pneg %p105
      %p384 = pneg %p129
      %p385 = pneg %p126
      %p386 = pneg %p150
      %p387 = pneg %p147
      %p388 = pneg %p171
      %p389 = pneg %p168
      %p390 = pneg %p192
      %p391 = pneg %p189
      %p392 = pneg %p213
      %p393 = pneg %p210
      %p394 = pneg %p234
      %p395 = pneg %p231
      %p396 = pneg %p255
      %p397 = pneg %p252
      %p398 = pneg %p281
      %p399 = pneg %p278
      %p400 = scmp.lt.s32.totalorder %s24, 1
      %s401 = scalar_select %p400, %s24, 1
      %s402 = smul.addr %s401, 4
      %s403 = smul.addr %s402, 8
      %s404 = scalar_lea.vmem %s11, %s403
      %p405 = pneg %p307
      %p406 = pneg %p304
      %p407 = scmp.lt.s32.totalorder %s24, 1
      %s408 = scalar_select %p407, %s24, 1
      %s409 = smul.addr %s408, 32
      %s410 = smul.addr %s409, 4
      %s411 = scalar_lea.vmem %s12, %s410
      %p412 = scmp.lt.s32.totalorder %s24, 1
      %s413 = scalar_select %p412, %s24, 1
      %s414 = smul.addr %s413, 8
      %s415 = smul.addr %s414, 8
      %s416 = scalar_lea.vmem %s0, %s415
      %p417 = scmp.lt.s32.totalorder %s24, 1
      %s418 = scalar_select %p417, %s24, 1
      %s419 = smul.addr %s418, 4
      %s420 = smul.addr %s419, 8
      %s421 = scalar_lea.vmem %s11, %s420
      %p422 = scmp.lt.s32.totalorder %s24, 1
      %s423 = scalar_select %p422, %s24, 1
      %s424 = smul.addr %s423, 32
      %s425 = smul.addr %s424, 4
      %s426 = scalar_lea.vmem %s12, %s425
      %v428 = vld [vmem:[%s416] sm:$0xff]
      %v429 = vld [vmem:[%s416 + $0x8] sm:$0xff]
      %v430 = vld [vmem:[%s416 + $0x10] sm:$0xff]
      %v431 = vld [vmem:[%s416 + $0x18] sm:$0xff]
      %v432 = vld [vmem:[%s416 + $0x20] sm:$0xff]
      %v433 = vld [vmem:[%s416 + $0x28] sm:$0xff]
      %v434 = vld [vmem:[%s416 + $0x30] sm:$0xff]
      %v435 = vld [vmem:[%s416 + $0x38] sm:$0xff]
      %s436 = smul.u32 %s24, 32
      %s437 = scalar_lea.vmem %s1, %s436
      %v438 = vld [vmem:[%s437] sm:$0xff]
      %v439 = vld [vmem:[%s437 + $0x8] sm:$0xff]
      %v440 = vld [vmem:[%s437 + $0x10] sm:$0xff]
      %v441 = vld [vmem:[%s437 + $0x18] sm:$0xff]
      %s442 = scalar_lea.vmem %s2, %s436
      %v443 = vld [vmem:[%s442] sm:$0xff]
      %v444 = vld [vmem:[%s442 + $0x8] sm:$0xff]
      %v445 = vld [vmem:[%s442 + $0x10] sm:$0xff]
      %v446 = vld [vmem:[%s442 + $0x18] sm:$0xff]
      %v447 = vld [vmem:[%s2] sm:$0xff]
      %v448 = vld [vmem:[%s2 + $0x8] sm:$0xff]
      %v449 = vld [vmem:[%s2 + $0x10] sm:$0xff]
      %v450 = vld [vmem:[%s2 + $0x18] sm:$0xff]
      %v451 = vld [vmem:[%s2 + $0x20] sm:$0xff]
      %v452 = vld [vmem:[%s2 + $0x28] sm:$0xff]
      %v453 = vld [vmem:[%s2 + $0x30] sm:$0xff]
      %v454 = vld [vmem:[%s2 + $0x38] sm:$0xff]
      %v455 = vadd.f32 %v447, 0.001
      %v456 = vadd.f32 %v448, 0.001
      %v457 = vadd.f32 %v449, 0.001
      %v458 = vadd.f32 %v450, 0.001
      %v459 = vadd.f32 %v451, 0.001
      %v460 = vadd.f32 %v452, 0.001
      %v461 = vadd.f32 %v453, 0.001
      %v462 = vadd.f32 %v454, 0.001
      %v463 = vrcp.pop %v455
      %v464 = vmul.f32 %v455, %v463
      %v465 = vsub.f32 1.0, %v464
      %v466 = vmul.f32 %v463, %v465
      %v467 = vadd.f32 %v463, %v466
      %vm468 = vweird.f32 %v455
      %vm469 = vweird.f32 %v463
      %vm470 = vmor %vm468, %vm469
      %v471 = vsel %vm470, %v463, %v467
      %v472 = vand.u32 2147483647, %v455
      %vm473 = vcmp.eq.f32.partialorder %v472, 8.507059e+37
      %v474 = vand.u32 %v455, 2147483648
      %v475 = vor.u32 1.1754944e-38, %v474
      %v476 = vsel %vm473, %v475, %v471
      %v477 = vmul.f32 %v447, %v476
      %v478 = vrcp.pop %v456
      %v479 = vmul.f32 %v456, %v478
      %v480 = vsub.f32 1.0, %v479
      %v481 = vmul.f32 %v478, %v480
      %v482 = vadd.f32 %v478, %v481
      %vm483 = vweird.f32 %v456
      %vm484 = vweird.f32 %v478
      %vm485 = vmor %vm483, %vm484
      %v486 = vsel %vm485, %v478, %v482
      %v487 = vand.u32 2147483647, %v456
      %vm488 = vcmp.eq.f32.partialorder %v487, 8.507059e+37
      %v489 = vand.u32 %v456, 2147483648
      %v490 = vor.u32 1.1754944e-38, %v489
      %v491 = vsel %vm488, %v490, %v486
      %v492 = vmul.f32 %v448, %v491
      %v493 = vrcp.pop %v457
      %v494 = vmul.f32 %v457, %v493
      %v495 = vsub.f32 1.0, %v494
      %v496 = vmul.f32 %v493, %v495
      %v497 = vadd.f32 %v493, %v496
      %vm498 = vweird.f32 %v457
      %vm499 = vweird.f32 %v493
      %vm500 = vmor %vm498, %vm499
      %v501 = vsel %vm500, %v493, %v497
      %v502 = vand.u32 2147483647, %v457
      %vm503 = vcmp.eq.f32.partialorder %v502, 8.507059e+37
      %v504 = vand.u32 %v457, 2147483648
      %v505 = vor.u32 1.1754944e-38, %v504
      %v506 = vsel %vm503, %v505, %v501
      %v507 = vmul.f32 %v449, %v506
      %v508 = vrcp.pop %v458
      %v509 = vmul.f32 %v458, %v508
      %v510 = vsub.f32 1.0, %v509
      %v511 = vmul.f32 %v508, %v510
      %v512 = vadd.f32 %v508, %v511
      %vm513 = vweird.f32 %v458
      %vm514 = vweird.f32 %v508
      %vm515 = vmor %vm513, %vm514
      %v516 = vsel %vm515, %v508, %v512
      %v517 = vand.u32 2147483647, %v458
      %vm518 = vcmp.eq.f32.partialorder %v517, 8.507059e+37
      %v519 = vand.u32 %v458, 2147483648
      %v520 = vor.u32 1.1754944e-38, %v519
      %v521 = vsel %vm518, %v520, %v516
      %v522 = vmul.f32 %v450, %v521
      %v523 = vrcp.pop %v459
      %v524 = vmul.f32 %v459, %v523
      %v525 = vsub.f32 1.0, %v524
      %v526 = vmul.f32 %v523, %v525
      %v527 = vadd.f32 %v523, %v526
      %vm528 = vweird.f32 %v459
      %vm529 = vweird.f32 %v523
      %vm530 = vmor %vm528, %vm529
      %v531 = vsel %vm530, %v523, %v527
      %v532 = vand.u32 2147483647, %v459
      %vm533 = vcmp.eq.f32.partialorder %v532, 8.507059e+37
      %v534 = vand.u32 %v459, 2147483648
      %v535 = vor.u32 1.1754944e-38, %v534
      %v536 = vsel %vm533, %v535, %v531
      %v537 = vmul.f32 %v451, %v536
      %v538 = vrcp.pop %v460
      %v539 = vmul.f32 %v460, %v538
      %v540 = vsub.f32 1.0, %v539
      %v541 = vmul.f32 %v538, %v540
      %v542 = vadd.f32 %v538, %v541
      %vm543 = vweird.f32 %v460
      %vm544 = vweird.f32 %v538
      %vm545 = vmor %vm543, %vm544
      %v546 = vsel %vm545, %v538, %v542
      %v547 = vand.u32 2147483647, %v460
      %vm548 = vcmp.eq.f32.partialorder %v547, 8.507059e+37
      %v549 = vand.u32 %v460, 2147483648
      %v550 = vor.u32 1.1754944e-38, %v549
      %v551 = vsel %vm548, %v550, %v546
      %v552 = vmul.f32 %v452, %v551
      %v553 = vrcp.pop %v461
      %v554 = vmul.f32 %v461, %v553
      %v555 = vsub.f32 1.0, %v554
      %v556 = vmul.f32 %v553, %v555
      %v557 = vadd.f32 %v553, %v556
      %vm558 = vweird.f32 %v461
      %vm559 = vweird.f32 %v553
      %vm560 = vmor %vm558, %vm559
      %v561 = vsel %vm560, %v553, %v557
      %v562 = vand.u32 2147483647, %v461
      %vm563 = vcmp.eq.f32.partialorder %v562, 8.507059e+37
      %v564 = vand.u32 %v461, 2147483648
      %v565 = vor.u32 1.1754944e-38, %v564
      %v566 = vsel %vm563, %v565, %v561
      %v567 = vmul.f32 %v453, %v566
      %v568 = vrcp.pop %v462
      %v569 = vmul.f32 %v462, %v568
      %v570 = vsub.f32 1.0, %v569
      %v571 = vmul.f32 %v568, %v570
      %v572 = vadd.f32 %v568, %v571
      %vm573 = vweird.f32 %v462
      %vm574 = vweird.f32 %v568
      %vm575 = vmor %vm573, %vm574
      %v576 = vsel %vm575, %v568, %v572
      %v577 = vand.u32 2147483647, %v462
      %vm578 = vcmp.eq.f32.partialorder %v577, 8.507059e+37
      %v579 = vand.u32 %v462, 2147483648
      %v580 = vor.u32 1.1754944e-38, %v579
      %v581 = vsel %vm578, %v580, %v576
      %v582 = vmul.f32 %v454, %v581
      %vm583 = vcmask 7168
      %v584 = vsel %vm583, %v477, 0.0
      %v585 = vsel %vm583, %v537, 0.0
      %v586 = vadd.f32 %v584, %v585
      %v587 = vsel %vm583, %v492, 0.0
      %v588 = vsel %vm583, %v552, 0.0
      %v589 = vadd.f32 %v587, %v588
      %v590 = vsel %vm583, %v507, 0.0
      %v591 = vsel %vm583, %v567, 0.0
      %v592 = vadd.f32 %v590, %v591
      %v593 = vsel %vm583, %v522, 0.0
      %v594 = vsel %vm583, %v582, 0.0
      %v595 = vadd.f32 %v593, %v594
      %v596 = vrcp.pop 2.0
      %v597 = vmul.f32 2.0, %v596
      %v598 = vsub.f32 1.0, %v597
      %v599 = vmul.f32 %v596, %v598
      %v600 = vadd.f32 %v596, %v599
      %vm601 = vweird.f32 %v596
      %v602 = vsel %vm601, %v596, %v600
      %v603 = vmul.f32 %v586, %v602
      %v604 = vmul.f32 %v589, %v602
      %v605 = vmul.f32 %v592, %v602
      %v606 = vmul.f32 %v595, %v602
      %608 = vset.pattern.permute.xlu0 0
      %609 = vperm.xlu0 %608, %v438
      %v610 = vpop.permute.xlu0 %609
      %613 = vset.pattern.permute.xlu0 0
      %614 = vperm.xlu0 %613, %v439
      %v615 = vpop.permute.xlu0 %614
      %618 = vset.pattern.permute.xlu0 0
      %619 = vperm.xlu0 %618, %v440
      %v620 = vpop.permute.xlu0 %619
      %623 = vset.pattern.permute.xlu0 0
      %624 = vperm.xlu0 %623, %v441
      %v625 = vpop.permute.xlu0 %624
      %v627 = vsub.f32 %v428, %v610
      %v628 = vsub.f32 %v429, %v610
      %v629 = vsub.f32 %v430, %v615
      %v630 = vsub.f32 %v431, %v615
      %v631 = vsub.f32 %v432, %v620
      %v632 = vsub.f32 %v433, %v620
      %v633 = vsub.f32 %v434, %v625
      %v634 = vsub.f32 %v435, %v625
      %v635 = vadd.f32 %v443, 0.001
      %v636 = vadd.f32 %v444, 0.001
      %v637 = vadd.f32 %v445, 0.001
      %v638 = vadd.f32 %v446, 0.001
      %v639 = vrsqrt.pop %v635
      %v640 = vmul.f32 %v639, %v635
      %v641 = vmul.f32 %v640, %v639
      %v642 = vmul.f32 0.5, %v641
      %v643 = vsub.f32 1.5, %v642
      %v644 = vmul.f32 %v639, %v643
      %vm645 = vweird.f32 %v635
      %vm646 = vweird.f32 %v639
      %vm647 = vmor %vm645, %vm646
      %v648 = vsel %vm647, %v639, %v644
      %v649 = vrsqrt.pop %v636
      %v650 = vmul.f32 %v649, %v636
      %v651 = vmul.f32 %v650, %v649
      %v652 = vmul.f32 0.5, %v651
      %v653 = vsub.f32 1.5, %v652
      %v654 = vmul.f32 %v649, %v653
      %vm655 = vweird.f32 %v636
      %vm656 = vweird.f32 %v649
      %vm657 = vmor %vm655, %vm656
      %v658 = vsel %vm657, %v649, %v654
      %v659 = vrsqrt.pop %v637
      %v660 = vmul.f32 %v659, %v637
      %v661 = vmul.f32 %v660, %v659
      %v662 = vmul.f32 0.5, %v661
      %v663 = vsub.f32 1.5, %v662
      %v664 = vmul.f32 %v659, %v663
      %vm665 = vweird.f32 %v637
      %vm666 = vweird.f32 %v659
      %vm667 = vmor %vm665, %vm666
      %v668 = vsel %vm667, %v659, %v664
      %v669 = vrsqrt.pop %v638
      %v670 = vmul.f32 %v669, %v638
      %v671 = vmul.f32 %v670, %v669
      %v672 = vmul.f32 0.5, %v671
      %v673 = vsub.f32 1.5, %v672
      %v674 = vmul.f32 %v669, %v673
      %vm675 = vweird.f32 %v638
      %vm676 = vweird.f32 %v669
      %vm677 = vmor %vm675, %vm676
      %v678 = vsel %vm677, %v669, %v674
      %v679 = vadd.f32 %v603, 1e-05
      %v680 = vadd.f32 %v604, 1e-05
      %v681 = vadd.f32 %v605, 1e-05
      %v682 = vadd.f32 %v606, 1e-05
      %v683 = vrsqrt.pop %v679
      %v684 = vmul.f32 %v683, %v679
      %v685 = vmul.f32 %v684, %v683
      %v686 = vmul.f32 0.5, %v685
      %v687 = vsub.f32 1.5, %v686
      %v688 = vmul.f32 %v683, %v687
      %vm689 = vweird.f32 %v679
      %vm690 = vweird.f32 %v683
      %vm691 = vmor %vm689, %vm690
      %v692 = vsel %vm691, %v683, %v688
      %v693 = vrsqrt.pop %v680
      %v694 = vmul.f32 %v693, %v680
      %v695 = vmul.f32 %v694, %v693
      %v696 = vmul.f32 0.5, %v695
      %v697 = vsub.f32 1.5, %v696
      %v698 = vmul.f32 %v693, %v697
      %vm699 = vweird.f32 %v680
      %vm700 = vweird.f32 %v693
      %vm701 = vmor %vm699, %vm700
      %v702 = vsel %vm701, %v693, %v698
      %v703 = vrsqrt.pop %v681
      %v704 = vmul.f32 %v703, %v681
      %v705 = vmul.f32 %v704, %v703
      %v706 = vmul.f32 0.5, %v705
      %v707 = vsub.f32 1.5, %v706
      %v708 = vmul.f32 %v703, %v707
      %vm709 = vweird.f32 %v681
      %vm710 = vweird.f32 %v703
      %vm711 = vmor %vm709, %vm710
      %v712 = vsel %vm711, %v703, %v708
      %v713 = vrsqrt.pop %v682
      %v714 = vmul.f32 %v713, %v682
      %v715 = vmul.f32 %v714, %v713
      %v716 = vmul.f32 0.5, %v715
      %v717 = vsub.f32 1.5, %v716
      %v718 = vmul.f32 %v713, %v717
      %vm719 = vweird.f32 %v682
      %vm720 = vweird.f32 %v713
      %vm721 = vmor %vm719, %vm720
      %v722 = vsel %vm721, %v713, %v718
      %v723 = vmul.f32 %v648, %v692
      %v724 = vmul.f32 %v658, %v702
      %v725 = vmul.f32 %v668, %v712
      %v726 = vmul.f32 %v678, %v722
      %728 = vset.pattern.permute.xlu0 0
      %729 = vperm.xlu0 %728, %v723
      %v730 = vpop.permute.xlu0 %729
      %733 = vset.pattern.permute.xlu0 0
      %734 = vperm.xlu0 %733, %v724
      %v735 = vpop.permute.xlu0 %734
      %738 = vset.pattern.permute.xlu0 0
      %739 = vperm.xlu0 %738, %v725
      %v740 = vpop.permute.xlu0 %739
      %743 = vset.pattern.permute.xlu0 0
      %744 = vperm.xlu0 %743, %v726
      %v745 = vpop.permute.xlu0 %744
      %v747 = vmul.f32 %v627, %v730
      %v748 = vmul.f32 %v628, %v730
      %v749 = vmul.f32 %v629, %v735
      %v750 = vmul.f32 %v630, %v735
      %v751 = vmul.f32 %v631, %v740
      %v752 = vmul.f32 %v632, %v740
      %v753 = vmul.f32 %v633, %v745
      %v754 = vmul.f32 %v634, %v745
      %v755 = vld [vmem:[%s3] sm:$0xff]
      %v756 = vld [vmem:[%s3 + $0x8] sm:$0xff]
      %v757 = vld [vmem:[%s3 + $0x10] sm:$0xff]
      %v758 = vld [vmem:[%s3 + $0x18] sm:$0xff]
      %760 = vset.pattern.permute.xlu0 0
      %761 = vperm.xlu0 %760, %v755
      %v762 = vpop.permute.xlu0 %761
      %765 = vset.pattern.permute.xlu0 0
      %766 = vperm.xlu0 %765, %v756
      %v767 = vpop.permute.xlu0 %766
      %770 = vset.pattern.permute.xlu0 0
      %771 = vperm.xlu0 %770, %v757
      %v772 = vpop.permute.xlu0 %771
      %775 = vset.pattern.permute.xlu0 0
      %776 = vperm.xlu0 %775, %v758
      %v777 = vpop.permute.xlu0 %776
      %v779 = vmul.f32 %v747, %v762
      %v780 = vmul.f32 %v748, %v762
      %v781 = vmul.f32 %v749, %v767
      %v782 = vmul.f32 %v750, %v767
      %v783 = vmul.f32 %v751, %v772
      %v784 = vmul.f32 %v752, %v772
      %v785 = vmul.f32 %v753, %v777
      %v786 = vmul.f32 %v754, %v777
      %v787 = vld [vmem:[%s4] sm:$0xff]
      %v788 = vld [vmem:[%s4 + $0x8] sm:$0xff]
      %v789 = vld [vmem:[%s4 + $0x10] sm:$0xff]
      %v790 = vld [vmem:[%s4 + $0x18] sm:$0xff]
      %792 = vset.pattern.permute.xlu0 0
      %793 = vperm.xlu0 %792, %v787
      %v794 = vpop.permute.xlu0 %793
      %797 = vset.pattern.permute.xlu0 0
      %798 = vperm.xlu0 %797, %v788
      %v799 = vpop.permute.xlu0 %798
      %802 = vset.pattern.permute.xlu0 0
      %803 = vperm.xlu0 %802, %v789
      %v804 = vpop.permute.xlu0 %803
      %807 = vset.pattern.permute.xlu0 0
      %808 = vperm.xlu0 %807, %v790
      %v809 = vpop.permute.xlu0 %808
      %v811 = vadd.f32 %v779, %v794
      %v812 = vadd.f32 %v780, %v794
      %v813 = vadd.f32 %v781, %v799
      %v814 = vadd.f32 %v782, %v799
      %v815 = vadd.f32 %v783, %v804
      %v816 = vadd.f32 %v784, %v804
      %v817 = vadd.f32 %v785, %v809
      %v818 = vadd.f32 %v786, %v809
      %v819 = vmax.f32 %v811, 0.0
      %v820 = vmax.f32 %v812, 0.0
      %v821 = vmax.f32 %v813, 0.0
      %v822 = vmax.f32 %v814, 0.0
      %v823 = vmax.f32 %v815, 0.0
      %v824 = vmax.f32 %v816, 0.0
      %v825 = vmax.f32 %v817, 0.0
      %v826 = vmax.f32 %v818, 0.0
      %v827 = vld [vmem:[%s5] sm:$0xff]
      %v828 = vld [vmem:[%s5 + $0x8] sm:$0xff]
      %v829 = vld [vmem:[%s5 + $0x10] sm:$0xff]
      %v830 = vld [vmem:[%s5 + $0x18] sm:$0xff]
      %832 = vset.pattern.permute.xlu0 0
      %833 = vperm.xlu0 %832, %v827
      %v834 = vpop.permute.xlu0 %833
      %837 = vset.pattern.permute.xlu0 0
      %838 = vperm.xlu0 %837, %v828
      %v839 = vpop.permute.xlu0 %838
      %842 = vset.pattern.permute.xlu0 0
      %843 = vperm.xlu0 %842, %v829
      %v844 = vpop.permute.xlu0 %843
      %847 = vset.pattern.permute.xlu0 0
      %848 = vperm.xlu0 %847, %v830
      %v849 = vpop.permute.xlu0 %848
      %v851 = vmul.f32 %v747, %v834
      %v852 = vmul.f32 %v748, %v834
      %v853 = vmul.f32 %v749, %v839
      %v854 = vmul.f32 %v750, %v839
      %v855 = vmul.f32 %v751, %v844
      %v856 = vmul.f32 %v752, %v844
      %v857 = vmul.f32 %v753, %v849
      %v858 = vmul.f32 %v754, %v849
      %v859 = vld [vmem:[%s6] sm:$0xff]
      %v860 = vld [vmem:[%s6 + $0x8] sm:$0xff]
      %v861 = vld [vmem:[%s6 + $0x10] sm:$0xff]
      %v862 = vld [vmem:[%s6 + $0x18] sm:$0xff]
      %864 = vset.pattern.permute.xlu0 0
      %865 = vperm.xlu0 %864, %v859
      %v866 = vpop.permute.xlu0 %865
      %869 = vset.pattern.permute.xlu0 0
      %870 = vperm.xlu0 %869, %v860
      %v871 = vpop.permute.xlu0 %870
      %874 = vset.pattern.permute.xlu0 0
      %875 = vperm.xlu0 %874, %v861
      %v876 = vpop.permute.xlu0 %875
      %879 = vset.pattern.permute.xlu0 0
      %880 = vperm.xlu0 %879, %v862
      %v881 = vpop.permute.xlu0 %880
      %v883 = vadd.f32 %v851, %v866
      %v884 = vadd.f32 %v852, %v866
      %v885 = vadd.f32 %v853, %v871
      %v886 = vadd.f32 %v854, %v871
      %v887 = vadd.f32 %v855, %v876
      %v888 = vadd.f32 %v856, %v876
      %v889 = vadd.f32 %v857, %v881
      %v890 = vadd.f32 %v858, %v881
      %v891 = vmax.f32 %v883, 0.0
      %v892 = vmax.f32 %v884, 0.0
      %v893 = vmax.f32 %v885, 0.0
      %v894 = vmax.f32 %v886, 0.0
      %v895 = vmax.f32 %v887, 0.0
      %v896 = vmax.f32 %v888, 0.0
      %v897 = vmax.f32 %v889, 0.0
      %v898 = vmax.f32 %v890, 0.0
      %v899 = vld [vmem:[%s7] sm:$0xf]
      %v900 = vld [vmem:[%s7 + $0x4] sm:$0xf]
      %v901 = vld [vmem:[%s7 + $0x8] sm:$0xf]
      %v902 = vld [vmem:[%s7 + $0xc] sm:$0xf]
      %v903 = vld [vmem:[%s7 + $0x10] sm:$0xf]
      %v904 = vld [vmem:[%s7 + $0x14] sm:$0xf]
      %v905 = vld [vmem:[%s7 + $0x18] sm:$0xf]
      %v906 = vld [vmem:[%s7 + $0x1c] sm:$0xf]
      %v907 = vld [vmem:[%s7 + $0x20] sm:$0xf]
      %v908 = vld [vmem:[%s7 + $0x24] sm:$0xf]
      %v909 = vld [vmem:[%s7 + $0x28] sm:$0xf]
      %v910 = vld [vmem:[%s7 + $0x2c] sm:$0xf]
      %v911 = vld [vmem:[%s7 + $0x30] sm:$0xf]
      %v912 = vld [vmem:[%s7 + $0x34] sm:$0xf]
      %v913 = vld [vmem:[%s7 + $0x38] sm:$0xf]
      %v914 = vld [vmem:[%s7 + $0x3c] sm:$0xf]
      %v915 = vpack.c.bf16 %v821, %v819
      %v916 = vpack.c.bf16 %v822, %v820
      %v917 = vpack.c.bf16 %v825, %v823
      %v918 = vpack.c.bf16 %v826, %v824
      %v919 = vld [vmem:[%s8] sm:$0xff]
      %v920 = vld [vmem:[%s8 + $0x8] sm:$0xff]
      %v921 = vld [vmem:[%s8 + $0x10] sm:$0xff]
      %v922 = vld [vmem:[%s8 + $0x18] sm:$0xff]
      %v923 = vld [vmem:[%s8 + $0x20] sm:$0xff]
      %v924 = vld [vmem:[%s8 + $0x28] sm:$0xff]
      %v925 = vld [vmem:[%s8 + $0x30] sm:$0xff]
      %v926 = vld [vmem:[%s8 + $0x38] sm:$0xff]
      %v927 = vld [vmem:[%s8 + $0x40] sm:$0xff]
      %v928 = vld [vmem:[%s8 + $0x48] sm:$0xff]
      %v929 = vld [vmem:[%s8 + $0x50] sm:$0xff]
      %v930 = vld [vmem:[%s8 + $0x58] sm:$0xff]
      %v931 = vld [vmem:[%s8 + $0x60] sm:$0xff]
      %v932 = vld [vmem:[%s8 + $0x68] sm:$0xff]
      %v933 = vld [vmem:[%s8 + $0x70] sm:$0xff]
      %v934 = vld [vmem:[%s8 + $0x78] sm:$0xff]
      %936 = vset.pattern.permute.xlu0 0
      %937 = vperm.xlu0 %936, %v919
      %v938 = vpop.permute.xlu0 %937
      %941 = vset.pattern.permute.xlu0 0
      %942 = vperm.xlu0 %941, %v920
      %v943 = vpop.permute.xlu0 %942
      %946 = vset.pattern.permute.xlu0 0
      %947 = vperm.xlu0 %946, %v921
      %v948 = vpop.permute.xlu0 %947
      %951 = vset.pattern.permute.xlu0 0
      %952 = vperm.xlu0 %951, %v922
      %v953 = vpop.permute.xlu0 %952
      %956 = vset.pattern.permute.xlu0 0
      %957 = vperm.xlu0 %956, %v923
      %v958 = vpop.permute.xlu0 %957
      %961 = vset.pattern.permute.xlu0 0
      %962 = vperm.xlu0 %961, %v924
      %v963 = vpop.permute.xlu0 %962
      %966 = vset.pattern.permute.xlu0 0
      %967 = vperm.xlu0 %966, %v925
      %v968 = vpop.permute.xlu0 %967
      %971 = vset.pattern.permute.xlu0 0
      %972 = vperm.xlu0 %971, %v926
      %v973 = vpop.permute.xlu0 %972
      %976 = vset.pattern.permute.xlu0 0
      %977 = vperm.xlu0 %976, %v927
      %v978 = vpop.permute.xlu0 %977
      %981 = vset.pattern.permute.xlu0 0
      %982 = vperm.xlu0 %981, %v928
      %v983 = vpop.permute.xlu0 %982
      %986 = vset.pattern.permute.xlu0 0
      %987 = vperm.xlu0 %986, %v929
      %v988 = vpop.permute.xlu0 %987
      %991 = vset.pattern.permute.xlu0 0
      %992 = vperm.xlu0 %991, %v930
      %v993 = vpop.permute.xlu0 %992
      %996 = vset.pattern.permute.xlu0 0
      %997 = vperm.xlu0 %996, %v931
      %v998 = vpop.permute.xlu0 %997
      %1001 = vset.pattern.permute.xlu0 0
      %1002 = vperm.xlu0 %1001, %v932
      %v1003 = vpop.permute.xlu0 %1002
      %1006 = vset.pattern.permute.xlu0 0
      %1007 = vperm.xlu0 %1006, %v933
      %v1008 = vpop.permute.xlu0 %1007
      %1011 = vset.pattern.permute.xlu0 0
      %1012 = vperm.xlu0 %1011, %v934
      %v1013 = vpop.permute.xlu0 %1012
      %v1031 = vunpack.c.l.b16 %v899
      %v1032 = vunpack.c.l.b16 %v900
      %v1033 = vunpack.c.l.b16 %v901
      %v1034 = vunpack.c.l.b16 %v902
      %v1035 = vunpack.c.l.b16 %v903
      %v1036 = vunpack.c.l.b16 %v904
      %v1037 = vunpack.c.l.b16 %v905
      %v1038 = vunpack.c.l.b16 %v906
      %v1039 = vunpack.c.l.b16 %v907
      %v1040 = vunpack.c.l.b16 %v908
      %v1041 = vunpack.c.l.b16 %v909
      %v1042 = vunpack.c.l.b16 %v910
      %v1043 = vunpack.c.l.b16 %v911
      %v1044 = vunpack.c.l.b16 %v912
      %v1045 = vunpack.c.l.b16 %v913
      %v1046 = vunpack.c.l.b16 %v914
      %v1047 = vpack.c.b16 %v1032, %v1031
      %v1048 = vpack.c.b16 %v1034, %v1033
      %v1049 = vpack.c.b16 %v1036, %v1035
      %v1050 = vpack.c.b16 %v1038, %v1037
      %v1051 = vpack.c.b16 %v1040, %v1039
      %v1052 = vpack.c.b16 %v1042, %v1041
      %v1053 = vpack.c.b16 %v1044, %v1043
      %v1054 = vpack.c.b16 %v1046, %v1045
      %vm1055 = vcmask 261120
      %v1057 = vsel %vm1055, %v1047, 0
      %v1060 = vsel %vm1055, %v1048, 0
      %v1063 = vsel %vm1055, %v1049, 0
      %v1066 = vsel %vm1055, %v1050, 0
      %v1069 = vsel %vm1055, %v1051, 0
      %v1072 = vsel %vm1055, %v1052, 0
      %v1075 = vsel %vm1055, %v1053, 0
      %v1078 = vsel %vm1055, %v1054, 0
      %1080 = vmatpush.bf16.msra.mxu0 0
      %1081 = vmatpush.bf16.msra.mxu0 0
      %1082 = vmatpush.bf16.msra.mxu0 0
      %1083 = vmatpush.bf16.msra.mxu0 0
      %1084 = vmatpush.bf16.msra.mxu0 0
      %1085 = vmatpush.bf16.msra.mxu0 0
      %1086 = vmatpush.bf16.msra.mxu0 %v917
      %1087 = vmatpush.bf16.msra.mxu0 %v915
      %1088 = vmatmul.bf16.gmra.mxu0 %v1057
      %v1089 = vpop.f32.mrf.mxu0
      %v1090 = vadd.f32 %v938, %v1089
      %v1091 = vpop.f32.mrf.mxu0
      %v1092 = vadd.f32 %v943, %v1091
      %1093 = vmatmul.bf16.gmra.mxu0 %v1060
      %v1094 = vpop.f32.mrf.mxu0
      %v1095 = vadd.f32 %v948, %v1094
      %v1096 = vpop.f32.mrf.mxu0
      %v1097 = vadd.f32 %v953, %v1096
      %1098 = vmatmul.bf16.gmra.mxu0 %v1063
      %v1099 = vpop.f32.mrf.mxu0
      %v1100 = vadd.f32 %v958, %v1099
      %v1101 = vpop.f32.mrf.mxu0
      %v1102 = vadd.f32 %v963, %v1101
      %1103 = vmatmul.bf16.gmra.mxu0 %v1066
      %v1104 = vpop.f32.mrf.mxu0
      %v1105 = vadd.f32 %v968, %v1104
      %v1106 = vpop.f32.mrf.mxu0
      %v1107 = vadd.f32 %v973, %v1106
      %1108 = vmatmul.bf16.gmra.mxu0 %v1069
      %v1109 = vpop.f32.mrf.mxu0
      %v1110 = vadd.f32 %v978, %v1109
      %v1111 = vpop.f32.mrf.mxu0
      %v1112 = vadd.f32 %v983, %v1111
      %1113 = vmatmul.bf16.gmra.mxu0 %v1072
      %v1114 = vpop.f32.mrf.mxu0
      %v1115 = vadd.f32 %v988, %v1114
      %v1116 = vpop.f32.mrf.mxu0
      %v1117 = vadd.f32 %v993, %v1116
      %1118 = vmatmul.bf16.gmra.mxu0 %v1075
      %v1119 = vpop.f32.mrf.mxu0
      %v1120 = vadd.f32 %v998, %v1119
      %v1121 = vpop.f32.mrf.mxu0
      %v1122 = vadd.f32 %v1003, %v1121
      %1123 = vmatmul.bf16.gmra.mxu0 %v1078
      %v1124 = vpop.f32.mrf.mxu0
      %v1125 = vadd.f32 %v1008, %v1124
      %v1126 = vpop.f32.mrf.mxu0
      %v1127 = vadd.f32 %v1013, %v1126
      %1128 = vdwg.mxu0
      %1129 = vmatpush.bf16.msra.mxu0 0
      %1130 = vmatpush.bf16.msra.mxu0 0
      %1131 = vmatpush.bf16.msra.mxu0 0
      %1132 = vmatpush.bf16.msra.mxu0 0
      %1133 = vmatpush.bf16.msra.mxu0 0
      %1134 = vmatpush.bf16.msra.mxu0 0
      %1135 = vmatpush.bf16.msra.mxu0 %v918
      %1136 = vmatpush.bf16.msra.mxu0 %v916
      %1137 = vmatmul.bf16.gmra.mxu0 %v1057
      %v1138 = vpop.f32.mrf.mxu0
      %v1139 = vadd.f32 %v938, %v1138
      %v1140 = vpop.f32.mrf.mxu0
      %v1141 = vadd.f32 %v943, %v1140
      %1142 = vmatmul.bf16.gmra.mxu0 %v1060
      %v1143 = vpop.f32.mrf.mxu0
      %v1144 = vadd.f32 %v948, %v1143
      %v1145 = vpop.f32.mrf.mxu0
      %v1146 = vadd.f32 %v953, %v1145
      %1147 = vmatmul.bf16.gmra.mxu0 %v1063
      %v1148 = vpop.f32.mrf.mxu0
      %v1149 = vadd.f32 %v958, %v1148
      %v1150 = vpop.f32.mrf.mxu0
      %v1151 = vadd.f32 %v963, %v1150
      %1152 = vmatmul.bf16.gmra.mxu0 %v1066
      %v1153 = vpop.f32.mrf.mxu0
      %v1154 = vadd.f32 %v968, %v1153
      %v1155 = vpop.f32.mrf.mxu0
      %v1156 = vadd.f32 %v973, %v1155
      %1157 = vmatmul.bf16.gmra.mxu0 %v1069
      %v1158 = vpop.f32.mrf.mxu0
      %v1159 = vadd.f32 %v978, %v1158
      %v1160 = vpop.f32.mrf.mxu0
      %v1161 = vadd.f32 %v983, %v1160
      %1162 = vmatmul.bf16.gmra.mxu0 %v1072
      %v1163 = vpop.f32.mrf.mxu0
      %v1164 = vadd.f32 %v988, %v1163
      %v1165 = vpop.f32.mrf.mxu0
      %v1166 = vadd.f32 %v993, %v1165
      %1167 = vmatmul.bf16.gmra.mxu0 %v1075
      %v1168 = vpop.f32.mrf.mxu0
      %v1169 = vadd.f32 %v998, %v1168
      %v1170 = vpop.f32.mrf.mxu0
      %v1171 = vadd.f32 %v1003, %v1170
      %1172 = vmatmul.bf16.gmra.mxu0 %v1078
      %v1173 = vpop.f32.mrf.mxu0
      %v1174 = vadd.f32 %v1008, %v1173
      %v1175 = vpop.f32.mrf.mxu0
      %v1176 = vadd.f32 %v1013, %v1175
      %1177 = vdwg.mxu0
      %v1178 = vmax.f32 %v1090, %v1139
      %1179 = vmax.xlane.f32.xlu0 %v1178
      %v1180 = vpop.xlane.xlu0 %1179
      %v1181 = vmax.f32 %v1092, %v1141
      %1182 = vmax.xlane.f32.xlu0 %v1181
      %v1183 = vpop.xlane.xlu0 %1182
      %v1184 = vmax.f32 %v1095, %v1144
      %1185 = vmax.xlane.f32.xlu0 %v1184
      %v1186 = vpop.xlane.xlu0 %1185
      %v1187 = vmax.f32 %v1097, %v1146
      %1188 = vmax.xlane.f32.xlu0 %v1187
      %v1189 = vpop.xlane.xlu0 %1188
      %v1190 = vmax.f32 %v1100, %v1149
      %1191 = vmax.xlane.f32.xlu0 %v1190
      %v1192 = vpop.xlane.xlu0 %1191
      %v1193 = vmax.f32 %v1102, %v1151
      %1194 = vmax.xlane.f32.xlu0 %v1193
      %v1195 = vpop.xlane.xlu0 %1194
      %v1196 = vmax.f32 %v1105, %v1154
      %1197 = vmax.xlane.f32.xlu0 %v1196
      %v1198 = vpop.xlane.xlu0 %1197
      %v1199 = vmax.f32 %v1107, %v1156
      %1200 = vmax.xlane.f32.xlu0 %v1199
      %v1201 = vpop.xlane.xlu0 %1200
      %v1202 = vmax.f32 %v1110, %v1159
      %1203 = vmax.xlane.f32.xlu0 %v1202
      %v1204 = vpop.xlane.xlu0 %1203
      %v1205 = vmax.f32 %v1112, %v1161
      %1206 = vmax.xlane.f32.xlu0 %v1205
      %v1207 = vpop.xlane.xlu0 %1206
      %v1208 = vmax.f32 %v1115, %v1164
      %1209 = vmax.xlane.f32.xlu0 %v1208
      %v1210 = vpop.xlane.xlu0 %1209
      %v1211 = vmax.f32 %v1117, %v1166
      %1212 = vmax.xlane.f32.xlu0 %v1211
      %v1213 = vpop.xlane.xlu0 %1212
      %v1214 = vmax.f32 %v1120, %v1169
      %1215 = vmax.xlane.f32.xlu0 %v1214
      %v1216 = vpop.xlane.xlu0 %1215
      %v1217 = vmax.f32 %v1122, %v1171
      %1218 = vmax.xlane.f32.xlu0 %v1217
      %v1219 = vpop.xlane.xlu0 %1218
      %v1220 = vmax.f32 %v1125, %v1174
      %1221 = vmax.xlane.f32.xlu0 %v1220
      %v1222 = vpop.xlane.xlu0 %1221
      %v1223 = vmax.f32 %v1127, %v1176
      %1224 = vmax.xlane.f32.xlu0 %v1223
      %v1225 = vpop.xlane.xlu0 %1224
      %v1226 = vsub.f32 %v1090, %v1180
      %v1227 = vsub.f32 %v1139, %v1180
      %v1228 = vsub.f32 %v1092, %v1183
      %v1229 = vsub.f32 %v1141, %v1183
      %v1230 = vsub.f32 %v1095, %v1186
      %v1231 = vsub.f32 %v1144, %v1186
      %v1232 = vsub.f32 %v1097, %v1189
      %v1233 = vsub.f32 %v1146, %v1189
      %v1234 = vsub.f32 %v1100, %v1192
      %v1235 = vsub.f32 %v1149, %v1192
      %v1236 = vsub.f32 %v1102, %v1195
      %v1237 = vsub.f32 %v1151, %v1195
      %v1238 = vsub.f32 %v1105, %v1198
      %v1239 = vsub.f32 %v1154, %v1198
      %v1240 = vsub.f32 %v1107, %v1201
      %v1241 = vsub.f32 %v1156, %v1201
      %v1242 = vsub.f32 %v1110, %v1204
      %v1243 = vsub.f32 %v1159, %v1204
      %v1244 = vsub.f32 %v1112, %v1207
      %v1245 = vsub.f32 %v1161, %v1207
      %v1246 = vsub.f32 %v1115, %v1210
      %v1247 = vsub.f32 %v1164, %v1210
      %v1248 = vsub.f32 %v1117, %v1213
      %v1249 = vsub.f32 %v1166, %v1213
      %v1250 = vsub.f32 %v1120, %v1216
      %v1251 = vsub.f32 %v1169, %v1216
      %v1252 = vsub.f32 %v1122, %v1219
      %v1253 = vsub.f32 %v1171, %v1219
      %v1254 = vsub.f32 %v1125, %v1222
      %v1255 = vsub.f32 %v1174, %v1222
      %v1256 = vsub.f32 %v1127, %v1225
      %v1257 = vsub.f32 %v1176, %v1225
      %v1258 = vmul.f32 %v1226, 1.442695
      %v1259 = vpow.pop %v1258
      %v1260 = vmul.f32 %v1227, 1.442695
      %v1261 = vpow.pop %v1260
      %v1262 = vmul.f32 %v1228, 1.442695
      %v1263 = vpow.pop %v1262
      %v1264 = vmul.f32 %v1229, 1.442695
      %v1265 = vpow.pop %v1264
      %v1266 = vmul.f32 %v1230, 1.442695
      %v1267 = vpow.pop %v1266
      %v1268 = vmul.f32 %v1231, 1.442695
      %v1269 = vpow.pop %v1268
      %v1270 = vmul.f32 %v1232, 1.442695
      %v1271 = vpow.pop %v1270
      %v1272 = vmul.f32 %v1233, 1.442695
      %v1273 = vpow.pop %v1272
      %v1274 = vmul.f32 %v1234, 1.442695
      %v1275 = vpow.pop %v1274
      %v1276 = vmul.f32 %v1235, 1.442695
      %v1277 = vpow.pop %v1276
      %v1278 = vmul.f32 %v1236, 1.442695
      %v1279 = vpow.pop %v1278
      %v1280 = vmul.f32 %v1237, 1.442695
      %v1281 = vpow.pop %v1280
      %v1282 = vmul.f32 %v1238, 1.442695
      %v1283 = vpow.pop %v1282
      %v1284 = vmul.f32 %v1239, 1.442695
      %v1285 = vpow.pop %v1284
      %v1286 = vmul.f32 %v1240, 1.442695
      %v1287 = vpow.pop %v1286
      %v1288 = vmul.f32 %v1241, 1.442695
      %v1289 = vpow.pop %v1288
      %v1290 = vmul.f32 %v1242, 1.442695
      %v1291 = vpow.pop %v1290
      %v1292 = vmul.f32 %v1243, 1.442695
      %v1293 = vpow.pop %v1292
      %v1294 = vmul.f32 %v1244, 1.442695
      %v1295 = vpow.pop %v1294
      %v1296 = vmul.f32 %v1245, 1.442695
      %v1297 = vpow.pop %v1296
      %v1298 = vmul.f32 %v1246, 1.442695
      %v1299 = vpow.pop %v1298
      %v1300 = vmul.f32 %v1247, 1.442695
      %v1301 = vpow.pop %v1300
      %v1302 = vmul.f32 %v1248, 1.442695
      %v1303 = vpow.pop %v1302
      %v1304 = vmul.f32 %v1249, 1.442695
      %v1305 = vpow.pop %v1304
      %v1306 = vmul.f32 %v1250, 1.442695
      %v1307 = vpow.pop %v1306
      %v1308 = vmul.f32 %v1251, 1.442695
      %v1309 = vpow.pop %v1308
      %v1310 = vmul.f32 %v1252, 1.442695
      %v1311 = vpow.pop %v1310
      %v1312 = vmul.f32 %v1253, 1.442695
      %v1313 = vpow.pop %v1312
      %v1314 = vmul.f32 %v1254, 1.442695
      %v1315 = vpow.pop %v1314
      %v1316 = vmul.f32 %v1255, 1.442695
      %v1317 = vpow.pop %v1316
      %v1318 = vmul.f32 %v1256, 1.442695
      %v1319 = vpow.pop %v1318
      %v1320 = vmul.f32 %v1257, 1.442695
      %v1321 = vpow.pop %v1320
      %v1322 = vadd.f32 %v1259, %v1261
      %1323 = vadd.xlane.f32.xlu0 %v1322
      %v1324 = vpop.xlane.xlu0 %1323
      %v1325 = vadd.f32 %v1263, %v1265
      %1326 = vadd.xlane.f32.xlu0 %v1325
      %v1327 = vpop.xlane.xlu0 %1326
      %v1328 = vadd.f32 %v1267, %v1269
      %1329 = vadd.xlane.f32.xlu0 %v1328
      %v1330 = vpop.xlane.xlu0 %1329
      %v1331 = vadd.f32 %v1271, %v1273
      %1332 = vadd.xlane.f32.xlu0 %v1331
      %v1333 = vpop.xlane.xlu0 %1332
      %v1334 = vadd.f32 %v1275, %v1277
      %1335 = vadd.xlane.f32.xlu0 %v1334
      %v1336 = vpop.xlane.xlu0 %1335
      %v1337 = vadd.f32 %v1279, %v1281
      %1338 = vadd.xlane.f32.xlu0 %v1337
      %v1339 = vpop.xlane.xlu0 %1338
      %v1340 = vadd.f32 %v1283, %v1285
      %1341 = vadd.xlane.f32.xlu0 %v1340
      %v1342 = vpop.xlane.xlu0 %1341
      %v1343 = vadd.f32 %v1287, %v1289
      %1344 = vadd.xlane.f32.xlu0 %v1343
      %v1345 = vpop.xlane.xlu0 %1344
      %v1346 = vadd.f32 %v1291, %v1293
      %1347 = vadd.xlane.f32.xlu0 %v1346
      %v1348 = vpop.xlane.xlu0 %1347
      %v1349 = vadd.f32 %v1295, %v1297
      %1350 = vadd.xlane.f32.xlu0 %v1349
      %v1351 = vpop.xlane.xlu0 %1350
      %v1352 = vadd.f32 %v1299, %v1301
      %1353 = vadd.xlane.f32.xlu0 %v1352
      %v1354 = vpop.xlane.xlu0 %1353
      %v1355 = vadd.f32 %v1303, %v1305
      %1356 = vadd.xlane.f32.xlu0 %v1355
      %v1357 = vpop.xlane.xlu0 %1356
      %v1358 = vadd.f32 %v1307, %v1309
      %1359 = vadd.xlane.f32.xlu0 %v1358
      %v1360 = vpop.xlane.xlu0 %1359
      %v1361 = vadd.f32 %v1311, %v1313
      %1362 = vadd.xlane.f32.xlu0 %v1361
      %v1363 = vpop.xlane.xlu0 %1362
      %v1364 = vadd.f32 %v1315, %v1317
      %1365 = vadd.xlane.f32.xlu0 %v1364
      %v1366 = vpop.xlane.xlu0 %1365
      %v1367 = vadd.f32 %v1319, %v1321
      %1368 = vadd.xlane.f32.xlu0 %v1367
      %v1369 = vpop.xlane.xlu0 %1368
      %v1370 = vrcp.pop %v1324
      %v1371 = vmul.f32 %v1324, %v1370
      %v1372 = vsub.f32 1.0, %v1371
      %v1373 = vmul.f32 %v1370, %v1372
      %v1374 = vadd.f32 %v1370, %v1373
      %vm1375 = vweird.f32 %v1324
      %vm1376 = vweird.f32 %v1370
      %vm1377 = vmor %vm1375, %vm1376
      %v1378 = vsel %vm1377, %v1370, %v1374
      %v1379 = vand.u32 2147483647, %v1324
      %vm1380 = vcmp.eq.f32.partialorder %v1379, 8.507059e+37
      %v1381 = vand.u32 %v1324, 2147483648
      %v1382 = vor.u32 1.1754944e-38, %v1381
      %v1383 = vsel %vm1380, %v1382, %v1378
      %v1384 = vmul.f32 1.0, %v1383
      %v1385 = vrcp.pop %v1327
      %v1386 = vmul.f32 %v1327, %v1385
      %v1387 = vsub.f32 1.0, %v1386
      %v1388 = vmul.f32 %v1385, %v1387
      %v1389 = vadd.f32 %v1385, %v1388
      %vm1390 = vweird.f32 %v1327
      %vm1391 = vweird.f32 %v1385
      %vm1392 = vmor %vm1390, %vm1391
      %v1393 = vsel %vm1392, %v1385, %v1389
      %v1394 = vand.u32 2147483647, %v1327
      %vm1395 = vcmp.eq.f32.partialorder %v1394, 8.507059e+37
      %v1396 = vand.u32 %v1327, 2147483648
      %v1397 = vor.u32 1.1754944e-38, %v1396
      %v1398 = vsel %vm1395, %v1397, %v1393
      %v1399 = vmul.f32 1.0, %v1398
      %v1400 = vrcp.pop %v1330
      %v1401 = vmul.f32 %v1330, %v1400
      %v1402 = vsub.f32 1.0, %v1401
      %v1403 = vmul.f32 %v1400, %v1402
      %v1404 = vadd.f32 %v1400, %v1403
      %vm1405 = vweird.f32 %v1330
      %vm1406 = vweird.f32 %v1400
      %vm1407 = vmor %vm1405, %vm1406
      %v1408 = vsel %vm1407, %v1400, %v1404
      %v1409 = vand.u32 2147483647, %v1330
      %vm1410 = vcmp.eq.f32.partialorder %v1409, 8.507059e+37
      %v1411 = vand.u32 %v1330, 2147483648
      %v1412 = vor.u32 1.1754944e-38, %v1411
      %v1413 = vsel %vm1410, %v1412, %v1408
      %v1414 = vmul.f32 1.0, %v1413
      %v1415 = vrcp.pop %v1333
      %v1416 = vmul.f32 %v1333, %v1415
      %v1417 = vsub.f32 1.0, %v1416
      %v1418 = vmul.f32 %v1415, %v1417
      %v1419 = vadd.f32 %v1415, %v1418
      %vm1420 = vweird.f32 %v1333
      %vm1421 = vweird.f32 %v1415
      %vm1422 = vmor %vm1420, %vm1421
      %v1423 = vsel %vm1422, %v1415, %v1419
      %v1424 = vand.u32 2147483647, %v1333
      %vm1425 = vcmp.eq.f32.partialorder %v1424, 8.507059e+37
      %v1426 = vand.u32 %v1333, 2147483648
      %v1427 = vor.u32 1.1754944e-38, %v1426
      %v1428 = vsel %vm1425, %v1427, %v1423
      %v1429 = vmul.f32 1.0, %v1428
      %v1430 = vrcp.pop %v1336
      %v1431 = vmul.f32 %v1336, %v1430
      %v1432 = vsub.f32 1.0, %v1431
      %v1433 = vmul.f32 %v1430, %v1432
      %v1434 = vadd.f32 %v1430, %v1433
      %vm1435 = vweird.f32 %v1336
      %vm1436 = vweird.f32 %v1430
      %vm1437 = vmor %vm1435, %vm1436
      %v1438 = vsel %vm1437, %v1430, %v1434
      %v1439 = vand.u32 2147483647, %v1336
      %vm1440 = vcmp.eq.f32.partialorder %v1439, 8.507059e+37
      %v1441 = vand.u32 %v1336, 2147483648
      %v1442 = vor.u32 1.1754944e-38, %v1441
      %v1443 = vsel %vm1440, %v1442, %v1438
      %v1444 = vmul.f32 1.0, %v1443
      %v1445 = vrcp.pop %v1339
      %v1446 = vmul.f32 %v1339, %v1445
      %v1447 = vsub.f32 1.0, %v1446
      %v1448 = vmul.f32 %v1445, %v1447
      %v1449 = vadd.f32 %v1445, %v1448
      %vm1450 = vweird.f32 %v1339
      %vm1451 = vweird.f32 %v1445
      %vm1452 = vmor %vm1450, %vm1451
      %v1453 = vsel %vm1452, %v1445, %v1449
      %v1454 = vand.u32 2147483647, %v1339
      %vm1455 = vcmp.eq.f32.partialorder %v1454, 8.507059e+37
      %v1456 = vand.u32 %v1339, 2147483648
      %v1457 = vor.u32 1.1754944e-38, %v1456
      %v1458 = vsel %vm1455, %v1457, %v1453
      %v1459 = vmul.f32 1.0, %v1458
      %v1460 = vrcp.pop %v1342
      %v1461 = vmul.f32 %v1342, %v1460
      %v1462 = vsub.f32 1.0, %v1461
      %v1463 = vmul.f32 %v1460, %v1462
      %v1464 = vadd.f32 %v1460, %v1463
      %vm1465 = vweird.f32 %v1342
      %vm1466 = vweird.f32 %v1460
      %vm1467 = vmor %vm1465, %vm1466
      %v1468 = vsel %vm1467, %v1460, %v1464
      %v1469 = vand.u32 2147483647, %v1342
      %vm1470 = vcmp.eq.f32.partialorder %v1469, 8.507059e+37
      %v1471 = vand.u32 %v1342, 2147483648
      %v1472 = vor.u32 1.1754944e-38, %v1471
      %v1473 = vsel %vm1470, %v1472, %v1468
      %v1474 = vmul.f32 1.0, %v1473
      %v1475 = vrcp.pop %v1345
      %v1476 = vmul.f32 %v1345, %v1475
      %v1477 = vsub.f32 1.0, %v1476
      %v1478 = vmul.f32 %v1475, %v1477
      %v1479 = vadd.f32 %v1475, %v1478
      %vm1480 = vweird.f32 %v1345
      %vm1481 = vweird.f32 %v1475
      %vm1482 = vmor %vm1480, %vm1481
      %v1483 = vsel %vm1482, %v1475, %v1479
      %v1484 = vand.u32 2147483647, %v1345
      %vm1485 = vcmp.eq.f32.partialorder %v1484, 8.507059e+37
      %v1486 = vand.u32 %v1345, 2147483648
      %v1487 = vor.u32 1.1754944e-38, %v1486
      %v1488 = vsel %vm1485, %v1487, %v1483
      %v1489 = vmul.f32 1.0, %v1488
      %v1490 = vrcp.pop %v1348
      %v1491 = vmul.f32 %v1348, %v1490
      %v1492 = vsub.f32 1.0, %v1491
      %v1493 = vmul.f32 %v1490, %v1492
      %v1494 = vadd.f32 %v1490, %v1493
      %vm1495 = vweird.f32 %v1348
      %vm1496 = vweird.f32 %v1490
      %vm1497 = vmor %vm1495, %vm1496
      %v1498 = vsel %vm1497, %v1490, %v1494
      %v1499 = vand.u32 2147483647, %v1348
      %vm1500 = vcmp.eq.f32.partialorder %v1499, 8.507059e+37
      %v1501 = vand.u32 %v1348, 2147483648
      %v1502 = vor.u32 1.1754944e-38, %v1501
      %v1503 = vsel %vm1500, %v1502, %v1498
      %v1504 = vmul.f32 1.0, %v1503
      %v1505 = vrcp.pop %v1351
      %v1506 = vmul.f32 %v1351, %v1505
      %v1507 = vsub.f32 1.0, %v1506
      %v1508 = vmul.f32 %v1505, %v1507
      %v1509 = vadd.f32 %v1505, %v1508
      %vm1510 = vweird.f32 %v1351
      %vm1511 = vweird.f32 %v1505
      %vm1512 = vmor %vm1510, %vm1511
      %v1513 = vsel %vm1512, %v1505, %v1509
      %v1514 = vand.u32 2147483647, %v1351
      %vm1515 = vcmp.eq.f32.partialorder %v1514, 8.507059e+37
      %v1516 = vand.u32 %v1351, 2147483648
      %v1517 = vor.u32 1.1754944e-38, %v1516
      %v1518 = vsel %vm1515, %v1517, %v1513
      %v1519 = vmul.f32 1.0, %v1518
      %v1520 = vrcp.pop %v1354
      %v1521 = vmul.f32 %v1354, %v1520
      %v1522 = vsub.f32 1.0, %v1521
      %v1523 = vmul.f32 %v1520, %v1522
      %v1524 = vadd.f32 %v1520, %v1523
      %vm1525 = vweird.f32 %v1354
      %vm1526 = vweird.f32 %v1520
      %vm1527 = vmor %vm1525, %vm1526
      %v1528 = vsel %vm1527, %v1520, %v1524
      %v1529 = vand.u32 2147483647, %v1354
      %vm1530 = vcmp.eq.f32.partialorder %v1529, 8.507059e+37
      %v1531 = vand.u32 %v1354, 2147483648
      %v1532 = vor.u32 1.1754944e-38, %v1531
      %v1533 = vsel %vm1530, %v1532, %v1528
      %v1534 = vmul.f32 1.0, %v1533
      %v1535 = vrcp.pop %v1357
      %v1536 = vmul.f32 %v1357, %v1535
      %v1537 = vsub.f32 1.0, %v1536
      %v1538 = vmul.f32 %v1535, %v1537
      %v1539 = vadd.f32 %v1535, %v1538
      %vm1540 = vweird.f32 %v1357
      %vm1541 = vweird.f32 %v1535
      %vm1542 = vmor %vm1540, %vm1541
      %v1543 = vsel %vm1542, %v1535, %v1539
      %v1544 = vand.u32 2147483647, %v1357
      %vm1545 = vcmp.eq.f32.partialorder %v1544, 8.507059e+37
      %v1546 = vand.u32 %v1357, 2147483648
      %v1547 = vor.u32 1.1754944e-38, %v1546
      %v1548 = vsel %vm1545, %v1547, %v1543
      %v1549 = vmul.f32 1.0, %v1548
      %v1550 = vrcp.pop %v1360
      %v1551 = vmul.f32 %v1360, %v1550
      %v1552 = vsub.f32 1.0, %v1551
      %v1553 = vmul.f32 %v1550, %v1552
      %v1554 = vadd.f32 %v1550, %v1553
      %vm1555 = vweird.f32 %v1360
      %vm1556 = vweird.f32 %v1550
      %vm1557 = vmor %vm1555, %vm1556
      %v1558 = vsel %vm1557, %v1550, %v1554
      %v1559 = vand.u32 2147483647, %v1360
      %vm1560 = vcmp.eq.f32.partialorder %v1559, 8.507059e+37
      %v1561 = vand.u32 %v1360, 2147483648
      %v1562 = vor.u32 1.1754944e-38, %v1561
      %v1563 = vsel %vm1560, %v1562, %v1558
      %v1564 = vmul.f32 1.0, %v1563
      %v1565 = vrcp.pop %v1363
      %v1566 = vmul.f32 %v1363, %v1565
      %v1567 = vsub.f32 1.0, %v1566
      %v1568 = vmul.f32 %v1565, %v1567
      %v1569 = vadd.f32 %v1565, %v1568
      %vm1570 = vweird.f32 %v1363
      %vm1571 = vweird.f32 %v1565
      %vm1572 = vmor %vm1570, %vm1571
      %v1573 = vsel %vm1572, %v1565, %v1569
      %v1574 = vand.u32 2147483647, %v1363
      %vm1575 = vcmp.eq.f32.partialorder %v1574, 8.507059e+37
      %v1576 = vand.u32 %v1363, 2147483648
      %v1577 = vor.u32 1.1754944e-38, %v1576
      %v1578 = vsel %vm1575, %v1577, %v1573
      %v1579 = vmul.f32 1.0, %v1578
      %v1580 = vrcp.pop %v1366
      %v1581 = vmul.f32 %v1366, %v1580
      %v1582 = vsub.f32 1.0, %v1581
      %v1583 = vmul.f32 %v1580, %v1582
      %v1584 = vadd.f32 %v1580, %v1583
      %vm1585 = vweird.f32 %v1366
      %vm1586 = vweird.f32 %v1580
      %vm1587 = vmor %vm1585, %vm1586
      %v1588 = vsel %vm1587, %v1580, %v1584
      %v1589 = vand.u32 2147483647, %v1366
      %vm1590 = vcmp.eq.f32.partialorder %v1589, 8.507059e+37
      %v1591 = vand.u32 %v1366, 2147483648
      %v1592 = vor.u32 1.1754944e-38, %v1591
      %v1593 = vsel %vm1590, %v1592, %v1588
      %v1594 = vmul.f32 1.0, %v1593
      %v1595 = vrcp.pop %v1369
      %v1596 = vmul.f32 %v1369, %v1595
      %v1597 = vsub.f32 1.0, %v1596
      %v1598 = vmul.f32 %v1595, %v1597
      %v1599 = vadd.f32 %v1595, %v1598
      %vm1600 = vweird.f32 %v1369
      %vm1601 = vweird.f32 %v1595
      %vm1602 = vmor %vm1600, %vm1601
      %v1603 = vsel %vm1602, %v1595, %v1599
      %v1604 = vand.u32 2147483647, %v1369
      %vm1605 = vcmp.eq.f32.partialorder %v1604, 8.507059e+37
      %v1606 = vand.u32 %v1369, 2147483648
      %v1607 = vor.u32 1.1754944e-38, %v1606
      %v1608 = vsel %vm1605, %v1607, %v1603
      %v1609 = vmul.f32 1.0, %v1608
      %v1610 = vmul.f32 %v1259, %v1384
      %v1611 = vmul.f32 %v1261, %v1384
      %v1612 = vmul.f32 %v1263, %v1399
      %v1613 = vmul.f32 %v1265, %v1399
      %v1614 = vmul.f32 %v1267, %v1414
      %v1615 = vmul.f32 %v1269, %v1414
      %v1616 = vmul.f32 %v1271, %v1429
      %v1617 = vmul.f32 %v1273, %v1429
      %v1618 = vmul.f32 %v1275, %v1444
      %v1619 = vmul.f32 %v1277, %v1444
      %v1620 = vmul.f32 %v1279, %v1459
      %v1621 = vmul.f32 %v1281, %v1459
      %v1622 = vmul.f32 %v1283, %v1474
      %v1623 = vmul.f32 %v1285, %v1474
      %v1624 = vmul.f32 %v1287, %v1489
      %v1625 = vmul.f32 %v1289, %v1489
      %v1626 = vmul.f32 %v1291, %v1504
      %v1627 = vmul.f32 %v1293, %v1504
      %v1628 = vmul.f32 %v1295, %v1519
      %v1629 = vmul.f32 %v1297, %v1519
      %v1630 = vmul.f32 %v1299, %v1534
      %v1631 = vmul.f32 %v1301, %v1534
      %v1632 = vmul.f32 %v1303, %v1549
      %v1633 = vmul.f32 %v1305, %v1549
      %v1634 = vmul.f32 %v1307, %v1564
      %v1635 = vmul.f32 %v1309, %v1564
      %v1636 = vmul.f32 %v1311, %v1579
      %v1637 = vmul.f32 %v1313, %v1579
      %v1638 = vmul.f32 %v1315, %v1594
      %v1639 = vmul.f32 %v1317, %v1594
      %v1640 = vmul.f32 %v1319, %v1609
      %v1641 = vmul.f32 %v1321, %v1609
      %v1642 = vpack.c.bf16 %v430, %v428
      %v1643 = vpack.c.bf16 %v431, %v429
      %v1644 = vpack.c.bf16 %v434, %v432
      %v1645 = vpack.c.bf16 %v435, %v433
      %v1646 = vpack.c.bf16 %v1612, %v1610
      %v1647 = vpack.c.bf16 %v1613, %v1611
      %v1648 = vpack.c.bf16 %v1616, %v1614
      %v1649 = vpack.c.bf16 %v1617, %v1615
      %v1650 = vpack.c.bf16 %v1620, %v1618
      %v1651 = vpack.c.bf16 %v1621, %v1619
      %v1652 = vpack.c.bf16 %v1624, %v1622
      %v1653 = vpack.c.bf16 %v1625, %v1623
      %v1654 = vpack.c.bf16 %v1628, %v1626
      %v1655 = vpack.c.bf16 %v1629, %v1627
      %v1656 = vpack.c.bf16 %v1632, %v1630
      %v1657 = vpack.c.bf16 %v1633, %v1631
      %v1658 = vpack.c.bf16 %v1636, %v1634
      %v1659 = vpack.c.bf16 %v1637, %v1635
      %v1660 = vpack.c.bf16 %v1640, %v1638
      %v1661 = vpack.c.bf16 %v1641, %v1639
      %1662 = vmatpush.bf16.xpose.msra.mxu0 %v1660
      %1663 = vmatpush.bf16.xpose.msra.mxu0 %v1658
      %1664 = vmatpush.bf16.xpose.msra.mxu0 %v1656
      %1665 = vmatpush.bf16.xpose.msra.mxu0 %v1654
      %1666 = vmatpush.bf16.xpose.msra.mxu0 %v1652
      %1667 = vmatpush.bf16.xpose.msra.mxu0 %v1650
      %1668 = vmatpush.bf16.xpose.msra.mxu0 %v1648
      %1669 = vmatpush.bf16.xpose.msra.mxu0 %v1646
      %1670 = vmatmul.bf16.gmra.mxu0 %v1642
      %v1671 = vpop.f32.mrf.mxu0
      %v1672 = vadd.f32 0.0, %v1671
      %v1673 = vpop.f32.mrf.mxu0
      %v1674 = vadd.f32 0.0, %v1673
      %1675 = vmatmul.bf16.gmra.mxu0 %v1644
      %v1676 = vpop.f32.mrf.mxu0
      %v1677 = vadd.f32 0.0, %v1676
      %v1678 = vpop.f32.mrf.mxu0
      %v1679 = vadd.f32 0.0, %v1678
      %1680 = vdwg.mxu0
      %1681 = vmatpush.bf16.xpose.msra.mxu0 %v1661
      %1682 = vmatpush.bf16.xpose.msra.mxu0 %v1659
      %1683 = vmatpush.bf16.xpose.msra.mxu0 %v1657
      %1684 = vmatpush.bf16.xpose.msra.mxu0 %v1655
      %1685 = vmatpush.bf16.xpose.msra.mxu0 %v1653
      %1686 = vmatpush.bf16.xpose.msra.mxu0 %v1651
      %1687 = vmatpush.bf16.xpose.msra.mxu0 %v1649
      %1688 = vmatpush.bf16.xpose.msra.mxu0 %v1647
      %1689 = vmatmul.bf16.gmra.mxu0 %v1643
      %v1690 = vpop.f32.mrf.mxu0
      %v1691 = vadd.f32 %v1672, %v1690
      %v1692 = vpop.f32.mrf.mxu0
      %v1693 = vadd.f32 %v1674, %v1692
      %1694 = vmatmul.bf16.gmra.mxu0 %v1645
      %v1695 = vpop.f32.mrf.mxu0
      %v1696 = vadd.f32 %v1677, %v1695
      %v1697 = vpop.f32.mrf.mxu0
      %v1698 = vadd.f32 %v1679, %v1697
      %1699 = vdwg.mxu0
      %1700 = vst [vmem:[%s421] sm:$0xff] %v1691
      %1701 = vst [vmem:[%s421 + $0x8] sm:$0xff] %v1693
      %1702 = vst [vmem:[%s421 + $0x10] sm:$0xff] %v1696
      %1703 = vst [vmem:[%s421 + $0x18] sm:$0xff] %v1698
      %v1704 = vld [vmem:[%s9] sm:$0xf]
      %v1705 = vld [vmem:[%s9 + $0x4] sm:$0xf]
      %v1706 = vld [vmem:[%s9 + $0x8] sm:$0xf]
      %v1707 = vld [vmem:[%s9 + $0xc] sm:$0xf]
      %v1708 = vld [vmem:[%s9 + $0x10] sm:$0xf]
      %v1709 = vld [vmem:[%s9 + $0x14] sm:$0xf]
      %v1710 = vld [vmem:[%s9 + $0x18] sm:$0xf]
      %v1711 = vld [vmem:[%s9 + $0x1c] sm:$0xf]
      %v1712 = vld [vmem:[%s9 + $0x20] sm:$0xf]
      %v1713 = vld [vmem:[%s9 + $0x24] sm:$0xf]
      %v1714 = vld [vmem:[%s9 + $0x28] sm:$0xf]
      %v1715 = vld [vmem:[%s9 + $0x2c] sm:$0xf]
      %v1716 = vld [vmem:[%s9 + $0x30] sm:$0xf]
      %v1717 = vld [vmem:[%s9 + $0x34] sm:$0xf]
      %v1718 = vld [vmem:[%s9 + $0x38] sm:$0xf]
      %v1719 = vld [vmem:[%s9 + $0x3c] sm:$0xf]
      %v1720 = vpack.c.bf16 %v893, %v891
      %v1721 = vpack.c.bf16 %v894, %v892
      %v1722 = vpack.c.bf16 %v897, %v895
      %v1723 = vpack.c.bf16 %v898, %v896
      %v1724 = vld [vmem:[%s10] sm:$0xff]
      %v1725 = vld [vmem:[%s10 + $0x8] sm:$0xff]
      %v1726 = vld [vmem:[%s10 + $0x10] sm:$0xff]
      %v1727 = vld [vmem:[%s10 + $0x18] sm:$0xff]
      %v1728 = vld [vmem:[%s10 + $0x20] sm:$0xff]
      %v1729 = vld [vmem:[%s10 + $0x28] sm:$0xff]
      %v1730 = vld [vmem:[%s10 + $0x30] sm:$0xff]
      %v1731 = vld [vmem:[%s10 + $0x38] sm:$0xff]
      %v1732 = vld [vmem:[%s10 + $0x40] sm:$0xff]
      %v1733 = vld [vmem:[%s10 + $0x48] sm:$0xff]
      %v1734 = vld [vmem:[%s10 + $0x50] sm:$0xff]
      %v1735 = vld [vmem:[%s10 + $0x58] sm:$0xff]
      %v1736 = vld [vmem:[%s10 + $0x60] sm:$0xff]
      %v1737 = vld [vmem:[%s10 + $0x68] sm:$0xff]
      %v1738 = vld [vmem:[%s10 + $0x70] sm:$0xff]
      %v1739 = vld [vmem:[%s10 + $0x78] sm:$0xff]
      %1741 = vset.pattern.permute.xlu0 0
      %1742 = vperm.xlu0 %1741, %v1724
      %v1743 = vpop.permute.xlu0 %1742
      %1746 = vset.pattern.permute.xlu0 0
      %1747 = vperm.xlu0 %1746, %v1725
      %v1748 = vpop.permute.xlu0 %1747
      %1751 = vset.pattern.permute.xlu0 0
      %1752 = vperm.xlu0 %1751, %v1726
      %v1753 = vpop.permute.xlu0 %1752
      %1756 = vset.pattern.permute.xlu0 0
      %1757 = vperm.xlu0 %1756, %v1727
      %v1758 = vpop.permute.xlu0 %1757
      %1761 = vset.pattern.permute.xlu0 0
      %1762 = vperm.xlu0 %1761, %v1728
      %v1763 = vpop.permute.xlu0 %1762
      %1766 = vset.pattern.permute.xlu0 0
      %1767 = vperm.xlu0 %1766, %v1729
      %v1768 = vpop.permute.xlu0 %1767
      %1771 = vset.pattern.permute.xlu0 0
      %1772 = vperm.xlu0 %1771, %v1730
      %v1773 = vpop.permute.xlu0 %1772
      %1776 = vset.pattern.permute.xlu0 0
      %1777 = vperm.xlu0 %1776, %v1731
      %v1778 = vpop.permute.xlu0 %1777
      %1781 = vset.pattern.permute.xlu0 0
      %1782 = vperm.xlu0 %1781, %v1732
      %v1783 = vpop.permute.xlu0 %1782
      %1786 = vset.pattern.permute.xlu0 0
      %1787 = vperm.xlu0 %1786, %v1733
      %v1788 = vpop.permute.xlu0 %1787
      %1791 = vset.pattern.permute.xlu0 0
      %1792 = vperm.xlu0 %1791, %v1734
      %v1793 = vpop.permute.xlu0 %1792
      %1796 = vset.pattern.permute.xlu0 0
      %1797 = vperm.xlu0 %1796, %v1735
      %v1798 = vpop.permute.xlu0 %1797
      %1801 = vset.pattern.permute.xlu0 0
      %1802 = vperm.xlu0 %1801, %v1736
      %v1803 = vpop.permute.xlu0 %1802
      %1806 = vset.pattern.permute.xlu0 0
      %1807 = vperm.xlu0 %1806, %v1737
      %v1808 = vpop.permute.xlu0 %1807
      %1811 = vset.pattern.permute.xlu0 0
      %1812 = vperm.xlu0 %1811, %v1738
      %v1813 = vpop.permute.xlu0 %1812
      %1816 = vset.pattern.permute.xlu0 0
      %1817 = vperm.xlu0 %1816, %v1739
      %v1818 = vpop.permute.xlu0 %1817
      %v1836 = vunpack.c.l.b16 %v1704
      %v1837 = vunpack.c.l.b16 %v1705
      %v1838 = vunpack.c.l.b16 %v1706
      %v1839 = vunpack.c.l.b16 %v1707
      %v1840 = vunpack.c.l.b16 %v1708
      %v1841 = vunpack.c.l.b16 %v1709
      %v1842 = vunpack.c.l.b16 %v1710
      %v1843 = vunpack.c.l.b16 %v1711
      %v1844 = vunpack.c.l.b16 %v1712
      %v1845 = vunpack.c.l.b16 %v1713
      %v1846 = vunpack.c.l.b16 %v1714
      %v1847 = vunpack.c.l.b16 %v1715
      %v1848 = vunpack.c.l.b16 %v1716
      %v1849 = vunpack.c.l.b16 %v1717
      %v1850 = vunpack.c.l.b16 %v1718
      %v1851 = vunpack.c.l.b16 %v1719
      %v1852 = vpack.c.b16 %v1837, %v1836
      %v1853 = vpack.c.b16 %v1839, %v1838
      %v1854 = vpack.c.b16 %v1841, %v1840
      %v1855 = vpack.c.b16 %v1843, %v1842
      %v1856 = vpack.c.b16 %v1845, %v1844
      %v1857 = vpack.c.b16 %v1847, %v1846
      %v1858 = vpack.c.b16 %v1849, %v1848
      %v1859 = vpack.c.b16 %v1851, %v1850
      %v1861 = vsel %vm1055, %v1852, 0
      %v1864 = vsel %vm1055, %v1853, 0
      %v1867 = vsel %vm1055, %v1854, 0
      %v1870 = vsel %vm1055, %v1855, 0
      %v1873 = vsel %vm1055, %v1856, 0
      %v1876 = vsel %vm1055, %v1857, 0
      %v1879 = vsel %vm1055, %v1858, 0
      %v1882 = vsel %vm1055, %v1859, 0
      %1884 = vmatpush.bf16.msra.mxu0 0
      %1885 = vmatpush.bf16.msra.mxu0 0
      %1886 = vmatpush.bf16.msra.mxu0 0
      %1887 = vmatpush.bf16.msra.mxu0 0
      %1888 = vmatpush.bf16.msra.mxu0 0
      %1889 = vmatpush.bf16.msra.mxu0 0
      %1890 = vmatpush.bf16.msra.mxu0 %v1722
      %1891 = vmatpush.bf16.msra.mxu0 %v1720
      %1892 = vmatmul.bf16.gmra.mxu0 %v1861
      %v1893 = vpop.f32.mrf.mxu0
      %v1894 = vadd.f32 %v1743, %v1893
      %v1895 = vpop.f32.mrf.mxu0
      %v1896 = vadd.f32 %v1748, %v1895
      %1897 = vmatmul.bf16.gmra.mxu0 %v1864
      %v1898 = vpop.f32.mrf.mxu0
      %v1899 = vadd.f32 %v1753, %v1898
      %v1900 = vpop.f32.mrf.mxu0
      %v1901 = vadd.f32 %v1758, %v1900
      %1902 = vmatmul.bf16.gmra.mxu0 %v1867
      %v1903 = vpop.f32.mrf.mxu0
      %v1904 = vadd.f32 %v1763, %v1903
      %v1905 = vpop.f32.mrf.mxu0
      %v1906 = vadd.f32 %v1768, %v1905
      %1907 = vmatmul.bf16.gmra.mxu0 %v1870
      %v1908 = vpop.f32.mrf.mxu0
      %v1909 = vadd.f32 %v1773, %v1908
      %v1910 = vpop.f32.mrf.mxu0
      %v1911 = vadd.f32 %v1778, %v1910
      %1912 = vmatmul.bf16.gmra.mxu0 %v1873
      %v1913 = vpop.f32.mrf.mxu0
      %v1914 = vadd.f32 %v1783, %v1913
      %v1915 = vpop.f32.mrf.mxu0
      %v1916 = vadd.f32 %v1788, %v1915
      %1917 = vmatmul.bf16.gmra.mxu0 %v1876
      %v1918 = vpop.f32.mrf.mxu0
      %v1919 = vadd.f32 %v1793, %v1918
      %v1920 = vpop.f32.mrf.mxu0
      %v1921 = vadd.f32 %v1798, %v1920
      %1922 = vmatmul.bf16.gmra.mxu0 %v1879
      %v1923 = vpop.f32.mrf.mxu0
      %v1924 = vadd.f32 %v1803, %v1923
      %v1925 = vpop.f32.mrf.mxu0
      %v1926 = vadd.f32 %v1808, %v1925
      %1927 = vmatmul.bf16.gmra.mxu0 %v1882
      %v1928 = vpop.f32.mrf.mxu0
      %v1929 = vadd.f32 %v1813, %v1928
      %v1930 = vpop.f32.mrf.mxu0
      %v1931 = vadd.f32 %v1818, %v1930
      %1932 = vdwg.mxu0
      %1933 = vmatpush.bf16.msra.mxu0 0
      %1934 = vmatpush.bf16.msra.mxu0 0
      %1935 = vmatpush.bf16.msra.mxu0 0
      %1936 = vmatpush.bf16.msra.mxu0 0
      %1937 = vmatpush.bf16.msra.mxu0 0
      %1938 = vmatpush.bf16.msra.mxu0 0
      %1939 = vmatpush.bf16.msra.mxu0 %v1723
      %1940 = vmatpush.bf16.msra.mxu0 %v1721
      %1941 = vmatmul.bf16.gmra.mxu0 %v1861
      %v1942 = vpop.f32.mrf.mxu0
      %v1943 = vadd.f32 %v1743, %v1942
      %v1944 = vpop.f32.mrf.mxu0
      %v1945 = vadd.f32 %v1748, %v1944
      %1946 = vmatmul.bf16.gmra.mxu0 %v1864
      %v1947 = vpop.f32.mrf.mxu0
      %v1948 = vadd.f32 %v1753, %v1947
      %v1949 = vpop.f32.mrf.mxu0
      %v1950 = vadd.f32 %v1758, %v1949
      %1951 = vmatmul.bf16.gmra.mxu0 %v1867
      %v1952 = vpop.f32.mrf.mxu0
      %v1953 = vadd.f32 %v1763, %v1952
      %v1954 = vpop.f32.mrf.mxu0
      %v1955 = vadd.f32 %v1768, %v1954
      %1956 = vmatmul.bf16.gmra.mxu0 %v1870
      %v1957 = vpop.f32.mrf.mxu0
      %v1958 = vadd.f32 %v1773, %v1957
      %v1959 = vpop.f32.mrf.mxu0
      %v1960 = vadd.f32 %v1778, %v1959
      %1961 = vmatmul.bf16.gmra.mxu0 %v1873
      %v1962 = vpop.f32.mrf.mxu0
      %v1963 = vadd.f32 %v1783, %v1962
      %v1964 = vpop.f32.mrf.mxu0
      %v1965 = vadd.f32 %v1788, %v1964
      %1966 = vmatmul.bf16.gmra.mxu0 %v1876
      %v1967 = vpop.f32.mrf.mxu0
      %v1968 = vadd.f32 %v1793, %v1967
      %v1969 = vpop.f32.mrf.mxu0
      %v1970 = vadd.f32 %v1798, %v1969
      %1971 = vmatmul.bf16.gmra.mxu0 %v1879
      %v1972 = vpop.f32.mrf.mxu0
      %v1973 = vadd.f32 %v1803, %v1972
      %v1974 = vpop.f32.mrf.mxu0
      %v1975 = vadd.f32 %v1808, %v1974
      %1976 = vmatmul.bf16.gmra.mxu0 %v1882
      %v1977 = vpop.f32.mrf.mxu0
      %v1978 = vadd.f32 %v1813, %v1977
      %v1979 = vpop.f32.mrf.mxu0
      %v1980 = vadd.f32 %v1818, %v1979
      %1981 = vdwg.mxu0
      %v1982 = vmax.f32 %v1894, %v1899
      %v1983 = vmax.f32 %v1896, %v1901
      %v1984 = vmax.f32 %v1982, %v1904
      %v1985 = vmax.f32 %v1983, %v1906
      %v1986 = vmax.f32 %v1984, %v1909
      %v1987 = vmax.f32 %v1985, %v1911
      %v1988 = vmax.f32 %v1986, %v1914
      %v1989 = vmax.f32 %v1987, %v1916
      %v1990 = vmax.f32 %v1988, %v1919
      %v1991 = vmax.f32 %v1989, %v1921
      %v1992 = vmax.f32 %v1990, %v1924
      %v1993 = vmax.f32 %v1991, %v1926
      %v1994 = vmax.f32 %v1992, %v1929
      %v1995 = vmax.f32 %v1993, %v1931
      %v1996 = vmax.f32 %v1994, %v1995
      %v1997 = vrot.slane %v1996, 4
      %v1998 = vmax.f32 %v1996, %v1997
      %v1999 = vrot.slane %v1998, 2
      %v2000 = vmax.f32 %v1998, %v1999
      %v2001 = vrot.slane %v2000, 1
      %v2002 = vmax.f32 %v2000, %v2001
      %v2003 = vmax.f32 %v1943, %v1948
      %v2004 = vmax.f32 %v1945, %v1950
      %v2005 = vmax.f32 %v2003, %v1953
      %v2006 = vmax.f32 %v2004, %v1955
      %v2007 = vmax.f32 %v2005, %v1958
      %v2008 = vmax.f32 %v2006, %v1960
      %v2009 = vmax.f32 %v2007, %v1963
      %v2010 = vmax.f32 %v2008, %v1965
      %v2011 = vmax.f32 %v2009, %v1968
      %v2012 = vmax.f32 %v2010, %v1970
      %v2013 = vmax.f32 %v2011, %v1973
      %v2014 = vmax.f32 %v2012, %v1975
      %v2015 = vmax.f32 %v2013, %v1978
      %v2016 = vmax.f32 %v2014, %v1980
      %v2017 = vmax.f32 %v2015, %v2016
      %v2018 = vrot.slane %v2017, 4
      %v2019 = vmax.f32 %v2017, %v2018
      %v2020 = vrot.slane %v2019, 2
      %v2021 = vmax.f32 %v2019, %v2020
      %v2022 = vrot.slane %v2021, 1
      %v2023 = vmax.f32 %v2021, %v2022
      %v2024 = vsub.f32 %v1894, %v2002
      %v2025 = vsub.f32 %v1943, %v2023
      %v2026 = vsub.f32 %v1896, %v2002
      %v2027 = vsub.f32 %v1945, %v2023
      %v2028 = vsub.f32 %v1899, %v2002
      %v2029 = vsub.f32 %v1948, %v2023
      %v2030 = vsub.f32 %v1901, %v2002
      %v2031 = vsub.f32 %v1950, %v2023
      %v2032 = vsub.f32 %v1904, %v2002
      %v2033 = vsub.f32 %v1953, %v2023
      %v2034 = vsub.f32 %v1906, %v2002
      %v2035 = vsub.f32 %v1955, %v2023
      %v2036 = vsub.f32 %v1909, %v2002
      %v2037 = vsub.f32 %v1958, %v2023
      %v2038 = vsub.f32 %v1911, %v2002
      %v2039 = vsub.f32 %v1960, %v2023
      %v2040 = vsub.f32 %v1914, %v2002
      %v2041 = vsub.f32 %v1963, %v2023
      %v2042 = vsub.f32 %v1916, %v2002
      %v2043 = vsub.f32 %v1965, %v2023
      %v2044 = vsub.f32 %v1919, %v2002
      %v2045 = vsub.f32 %v1968, %v2023
      %v2046 = vsub.f32 %v1921, %v2002
      %v2047 = vsub.f32 %v1970, %v2023
      %v2048 = vsub.f32 %v1924, %v2002
      %v2049 = vsub.f32 %v1973, %v2023
      %v2050 = vsub.f32 %v1926, %v2002
      %v2051 = vsub.f32 %v1975, %v2023
      %v2052 = vsub.f32 %v1929, %v2002
      %v2053 = vsub.f32 %v1978, %v2023
      %v2054 = vsub.f32 %v1931, %v2002
      %v2055 = vsub.f32 %v1980, %v2023
      %v2056 = vmul.f32 %v2024, 1.442695
      %v2057 = vpow.pop %v2056
      %v2058 = vmul.f32 %v2025, 1.442695
      %v2059 = vpow.pop %v2058
      %v2060 = vmul.f32 %v2026, 1.442695
      %v2061 = vpow.pop %v2060
      %v2062 = vmul.f32 %v2027, 1.442695
      %v2063 = vpow.pop %v2062
      %v2064 = vmul.f32 %v2028, 1.442695
      %v2065 = vpow.pop %v2064
      %v2066 = vmul.f32 %v2029, 1.442695
      %v2067 = vpow.pop %v2066
      %v2068 = vmul.f32 %v2030, 1.442695
      %v2069 = vpow.pop %v2068
      %v2070 = vmul.f32 %v2031, 1.442695
      %v2071 = vpow.pop %v2070
      %v2072 = vmul.f32 %v2032, 1.442695
      %v2073 = vpow.pop %v2072
      %v2074 = vmul.f32 %v2033, 1.442695
      %v2075 = vpow.pop %v2074
      %v2076 = vmul.f32 %v2034, 1.442695
      %v2077 = vpow.pop %v2076
      %v2078 = vmul.f32 %v2035, 1.442695
      %v2079 = vpow.pop %v2078
      %v2080 = vmul.f32 %v2036, 1.442695
      %v2081 = vpow.pop %v2080
      %v2082 = vmul.f32 %v2037, 1.442695
      %v2083 = vpow.pop %v2082
      %v2084 = vmul.f32 %v2038, 1.442695
      %v2085 = vpow.pop %v2084
      %v2086 = vmul.f32 %v2039, 1.442695
      %v2087 = vpow.pop %v2086
      %v2088 = vmul.f32 %v2040, 1.442695
      %v2089 = vpow.pop %v2088
      %v2090 = vmul.f32 %v2041, 1.442695
      %v2091 = vpow.pop %v2090
      %v2092 = vmul.f32 %v2042, 1.442695
      %v2093 = vpow.pop %v2092
      %v2094 = vmul.f32 %v2043, 1.442695
      %v2095 = vpow.pop %v2094
      %v2096 = vmul.f32 %v2044, 1.442695
      %v2097 = vpow.pop %v2096
      %v2098 = vmul.f32 %v2045, 1.442695
      %v2099 = vpow.pop %v2098
      %v2100 = vmul.f32 %v2046, 1.442695
      %v2101 = vpow.pop %v2100
      %v2102 = vmul.f32 %v2047, 1.442695
      %v2103 = vpow.pop %v2102
      %v2104 = vmul.f32 %v2048, 1.442695
      %v2105 = vpow.pop %v2104
      %v2106 = vmul.f32 %v2049, 1.442695
      %v2107 = vpow.pop %v2106
      %v2108 = vmul.f32 %v2050, 1.442695
      %v2109 = vpow.pop %v2108
      %v2110 = vmul.f32 %v2051, 1.442695
      %v2111 = vpow.pop %v2110
      %v2112 = vmul.f32 %v2052, 1.442695
      %v2113 = vpow.pop %v2112
      %v2114 = vmul.f32 %v2053, 1.442695
      %v2115 = vpow.pop %v2114
      %v2116 = vmul.f32 %v2054, 1.442695
      %v2117 = vpow.pop %v2116
      %v2118 = vmul.f32 %v2055, 1.442695
      %v2119 = vpow.pop %v2118
      %v2120 = vadd.f32 %v2057, %v2061
      %v2121 = vadd.f32 %v2120, %v2065
      %v2122 = vadd.f32 %v2121, %v2069
      %v2123 = vadd.f32 %v2122, %v2073
      %v2124 = vadd.f32 %v2123, %v2077
      %v2125 = vadd.f32 %v2124, %v2081
      %v2126 = vadd.f32 %v2125, %v2085
      %v2127 = vadd.f32 %v2126, %v2089
      %v2128 = vadd.f32 %v2127, %v2093
      %v2129 = vadd.f32 %v2128, %v2097
      %v2130 = vadd.f32 %v2129, %v2101
      %v2131 = vadd.f32 %v2130, %v2105
      %v2132 = vadd.f32 %v2131, %v2109
      %v2133 = vadd.f32 %v2132, %v2113
      %v2134 = vadd.f32 %v2133, %v2117
      %v2135 = vrot.slane %v2134, 4
      %v2136 = vadd.f32 %v2134, %v2135
      %v2137 = vrot.slane %v2136, 2
      %v2138 = vadd.f32 %v2136, %v2137
      %v2139 = vrot.slane %v2138, 1
      %v2140 = vadd.f32 %v2138, %v2139
      %v2141 = vadd.f32 %v2059, %v2063
      %v2142 = vadd.f32 %v2141, %v2067
      %v2143 = vadd.f32 %v2142, %v2071
      %v2144 = vadd.f32 %v2143, %v2075
      %v2145 = vadd.f32 %v2144, %v2079
      %v2146 = vadd.f32 %v2145, %v2083
      %v2147 = vadd.f32 %v2146, %v2087
      %v2148 = vadd.f32 %v2147, %v2091
      %v2149 = vadd.f32 %v2148, %v2095
      %v2150 = vadd.f32 %v2149, %v2099
      %v2151 = vadd.f32 %v2150, %v2103
      %v2152 = vadd.f32 %v2151, %v2107
      %v2153 = vadd.f32 %v2152, %v2111
      %v2154 = vadd.f32 %v2153, %v2115
      %v2155 = vadd.f32 %v2154, %v2119
      %v2156 = vrot.slane %v2155, 4
      %v2157 = vadd.f32 %v2155, %v2156
      %v2158 = vrot.slane %v2157, 2
      %v2159 = vadd.f32 %v2157, %v2158
      %v2160 = vrot.slane %v2159, 1
      %v2161 = vadd.f32 %v2159, %v2160
      %v2162 = vrcp.pop %v2140
      %v2163 = vmul.f32 %v2140, %v2162
      %v2164 = vsub.f32 1.0, %v2163
      %v2165 = vmul.f32 %v2162, %v2164
      %v2166 = vadd.f32 %v2162, %v2165
      %vm2167 = vweird.f32 %v2140
      %vm2168 = vweird.f32 %v2162
      %vm2169 = vmor %vm2167, %vm2168
      %v2170 = vsel %vm2169, %v2162, %v2166
      %v2171 = vand.u32 2147483647, %v2140
      %vm2172 = vcmp.eq.f32.partialorder %v2171, 8.507059e+37
      %v2173 = vand.u32 %v2140, 2147483648
      %v2174 = vor.u32 1.1754944e-38, %v2173
      %v2175 = vsel %vm2172, %v2174, %v2170
      %v2176 = vmul.f32 1.0, %v2175
      %v2177 = vrcp.pop %v2161
      %v2178 = vmul.f32 %v2161, %v2177
      %v2179 = vsub.f32 1.0, %v2178
      %v2180 = vmul.f32 %v2177, %v2179
      %v2181 = vadd.f32 %v2177, %v2180
      %vm2182 = vweird.f32 %v2161
      %vm2183 = vweird.f32 %v2177
      %vm2184 = vmor %vm2182, %vm2183
      %v2185 = vsel %vm2184, %v2177, %v2181
      %v2186 = vand.u32 2147483647, %v2161
      %vm2187 = vcmp.eq.f32.partialorder %v2186, 8.507059e+37
      %v2188 = vand.u32 %v2161, 2147483648
      %v2189 = vor.u32 1.1754944e-38, %v2188
      %v2190 = vsel %vm2187, %v2189, %v2185
      %v2191 = vmul.f32 1.0, %v2190
      %v2192 = vmul.f32 %v2057, %v2176
      %v2193 = vmul.f32 %v2059, %v2191
      %v2194 = vmul.f32 %v2061, %v2176
      %v2195 = vmul.f32 %v2063, %v2191
      %v2196 = vmul.f32 %v2065, %v2176
      %v2197 = vmul.f32 %v2067, %v2191
      %v2198 = vmul.f32 %v2069, %v2176
      %v2199 = vmul.f32 %v2071, %v2191
      %v2200 = vmul.f32 %v2073, %v2176
      %v2201 = vmul.f32 %v2075, %v2191
      %v2202 = vmul.f32 %v2077, %v2176
      %v2203 = vmul.f32 %v2079, %v2191
      %v2204 = vmul.f32 %v2081, %v2176
      %v2205 = vmul.f32 %v2083, %v2191
      %v2206 = vmul.f32 %v2085, %v2176
      %v2207 = vmul.f32 %v2087, %v2191
      %v2208 = vmul.f32 %v2089, %v2176
      %v2209 = vmul.f32 %v2091, %v2191
      %v2210 = vmul.f32 %v2093, %v2176
      %v2211 = vmul.f32 %v2095, %v2191
      %v2212 = vmul.f32 %v2097, %v2176
      %v2213 = vmul.f32 %v2099, %v2191
      %v2214 = vmul.f32 %v2101, %v2176
      %v2215 = vmul.f32 %v2103, %v2191
      %v2216 = vmul.f32 %v2105, %v2176
      %v2217 = vmul.f32 %v2107, %v2191
      %v2218 = vmul.f32 %v2109, %v2176
      %v2219 = vmul.f32 %v2111, %v2191
      %v2220 = vmul.f32 %v2113, %v2176
      %v2221 = vmul.f32 %v2115, %v2191
      %v2222 = vmul.f32 %v2117, %v2176
      %v2223 = vmul.f32 %v2119, %v2191
      %v2224 = vpack.c.bf16 %v2193, %v2192
      %v2225 = vpack.c.bf16 %v2195, %v2194
      %v2226 = vpack.c.bf16 %v2197, %v2196
      %v2227 = vpack.c.bf16 %v2199, %v2198
      %v2228 = vpack.c.bf16 %v2201, %v2200
      %v2229 = vpack.c.bf16 %v2203, %v2202
      %v2230 = vpack.c.bf16 %v2205, %v2204
      %v2231 = vpack.c.bf16 %v2207, %v2206
      %v2232 = vpack.c.bf16 %v2209, %v2208
      %v2233 = vpack.c.bf16 %v2211, %v2210
      %v2234 = vpack.c.bf16 %v2213, %v2212
      %v2235 = vpack.c.bf16 %v2215, %v2214
      %v2236 = vpack.c.bf16 %v2217, %v2216
      %v2237 = vpack.c.bf16 %v2219, %v2218
      %v2238 = vpack.c.bf16 %v2221, %v2220
      %v2239 = vpack.c.bf16 %v2223, %v2222
      %2240 = vst [vmem:[%s426] sm:$0xff] %v2224
      %2241 = vst [vmem:[%s426 + $0x8] sm:$0xff] %v2225
      %2242 = vst [vmem:[%s426 + $0x10] sm:$0xff] %v2226
      %2243 = vst [vmem:[%s426 + $0x18] sm:$0xff] %v2227
      %2244 = vst [vmem:[%s426 + $0x20] sm:$0xff] %v2228
      %2245 = vst [vmem:[%s426 + $0x28] sm:$0xff] %v2229
      %2246 = vst [vmem:[%s426 + $0x30] sm:$0xff] %v2230
      %2247 = vst [vmem:[%s426 + $0x38] sm:$0xff] %v2231
      %2248 = vst [vmem:[%s426 + $0x40] sm:$0xff] %v2232
      %2249 = vst [vmem:[%s426 + $0x48] sm:$0xff] %v2233
      %2250 = vst [vmem:[%s426 + $0x50] sm:$0xff] %v2234
      %2251 = vst [vmem:[%s426 + $0x58] sm:$0xff] %v2235
      %2252 = vst [vmem:[%s426 + $0x60] sm:$0xff] %v2236
      %2253 = vst [vmem:[%s426 + $0x68] sm:$0xff] %v2237
      %2254 = vst [vmem:[%s426 + $0x70] sm:$0xff] %v2238
      %2255 = vst [vmem:[%s426 + $0x78] sm:$0xff] %v2239
      %p2256 = scmp.lt.s32.totalorder %s24, 1
      %s2257 = scalar_select %p2256, %s24, 1
      %s2258 = smul.addr %s2257, 4
      %s2259 = smul.addr %s2258, 8
      %s2260 = scalar_lea.vmem %s11, %s2259
      %p2261 = scmp.lt.s32.totalorder %s24, 1
      %s2262 = scalar_select %p2261, %s24, 1
      %s2263 = smul.addr %s2262, 32
      %s2264 = smul.addr %s2263, 4
      %s2265 = scalar_lea.vmem %s12, %s2264
      // Predicated region
      $region65: #{geo_attention_block.5} parent=63 // pred_check
        %p2266 = pneg %p278
      $region66: #{geo_attention_block.5} parent=63 // pred_check_branch
        %2268 = sbr.rel (%p2266) target = $region68
      $region67: #{geo_attention_block.5} parent=63 // pred_region
        _
      $region68: #{geo_attention_block.5} parent=63 // pred_fallthru
        _
      // Predicated region
      $region69: #{geo_attention_block.5} parent=63 // pred_check
        %p2269 = pneg %p304
      $region70: #{geo_attention_block.5} parent=63 // pred_check_branch
        %2271 = sbr.rel (%p2269) target = $region72
      $region71: #{geo_attention_block.5} parent=63 // pred_region
        _
      $region72: #{geo_attention_block.5} parent=63 // pred_fallthru
        _
    $region64: #{geo_attention_block.5} parent=5 // pred_fallthru
      _
    %p2272 = scmp.le.s32.totalorder 2, %s19
    // Predicated region
    $region73: #{geo_attention_block.5} parent=5 // pred_check
      %p2273 = pneg %p2272
    $region74: #{geo_attention_block.5} parent=5 // pred_check_branch
      %2275 = sbr.rel (%p2273) target = $region76
    $region75: #{geo_attention_block.5} parent=5 // pred_region
      %s2276 = ssub.s32 %s19, 2
      // Predicated region
      $region77: #{geo_attention_block.5} parent=75 // pred_check
        %p2277 = pneg %p284
      $region78: #{geo_attention_block.5} parent=75 // pred_check_branch
        %2279 = sbr.rel (%p2277) target = $region80
      $region79: #{geo_attention_block.5} parent=75 // pred_region
        %p2280 = scmp.lt.s32.totalorder %s25, 1
        %s2281 = scalar_select %p2280, %s25, 1
        %s2282 = smul.addr %s2281, 4
        %s2283 = smul.addr %s2282, 8
        %s2284 = scalar_lea.vmem %s11, %s2283
      $region80: #{geo_attention_block.5} parent=75 // pred_fallthru
        _
      // Predicated region
      $region81: #{geo_attention_block.5} parent=75 // pred_check
        %p2285 = pneg %p310
      $region82: #{geo_attention_block.5} parent=75 // pred_check_branch
        %2287 = sbr.rel (%p2285) target = $region84
      $region83: #{geo_attention_block.5} parent=75 // pred_region
        %p2288 = scmp.lt.s32.totalorder %s25, 1
        %s2289 = scalar_select %p2288, %s25, 1
        %s2290 = smul.addr %s2289, 32
        %s2291 = smul.addr %s2290, 4
        %s2292 = scalar_lea.vmem %s12, %s2291
      $region84: #{geo_attention_block.5} parent=75 // pred_fallthru
        _
    $region76: #{geo_attention_block.5} parent=5 // pred_fallthru
      _
  $region6: #{geo_attention_block.5} parent=0 // loop_footer
    %s23 = sadd.s32 1, %s19
  $region7: #{geo_attention_block.5} parent=0 // loop_footer_branch
    %18 = sbr.rel target = $region3
  $region8: #{geo_attention_block.5} parent=0 // loop_exit
    _

// kernel: geo_attention_block.6
$region0: #{geo_attention_block.6}
  #allocation0 [shape = 'u32[]', space=smem, size = 0x4, offset = 0x4, fixed_abs, tag = 'smem constant byte address 0x4 - core index']
  #allocation1 [shape = 'u32[72,128]{1,0:T(1,128)}', space=vmem, size = 0x9000, scoped, tag = 'internal scratch']
  %s0 = inlined_call_operand.vmem [shape: f32[2,32,128], index: 0, kind: input, shape index: {}, may-alias: {0,13}]
  %s1 = inlined_call_operand.vmem [shape: f32[3,32,1], index: 1, kind: input, shape index: {}]
  %s2 = inlined_call_operand.vmem [shape: f32[3,32,1], index: 2, kind: input, shape index: {}]
  %s3 = inlined_call_operand.vmem [shape: bf16[3,32,32], index: 3, kind: input, shape index: {}]
  %s4 = inlined_call_operand.vmem [shape: f32[3,32,1], index: 4, kind: input, shape index: {}]
  %s5 = inlined_call_operand.vmem [shape: f32[3,1,128], index: 5, kind: input, shape index: {}]
  %s6 = inlined_call_operand.vmem [shape: f32[3,1,128], index: 6, kind: input, shape index: {}]
  %s7 = inlined_call_operand.vmem [shape: bf16[3,128,128], index: 7, kind: input, shape index: {}]
  %s8 = inlined_call_operand.vmem [shape: f32[3,1,128], index: 8, kind: input, shape index: {}]
  %s9 = inlined_call_operand.vmem [shape: f32[3,32,1], index: 9, kind: input, shape index: {}]
  %s10 = inlined_call_operand.vmem [shape: f32[3,32,1], index: 10, kind: input, shape index: {}]
  %s11 = inlined_call_operand.vmem [shape: bf16[3,32,32], index: 11, kind: input, shape index: {}]
  %s12 = inlined_call_operand.vmem [shape: f32[3,32,1], index: 12, kind: input, shape index: {}]
  %s13 = inlined_call_operand.vmem [shape: f32[2,32,128], index: 13, kind: output, shape index: {}, may-alias: {0,13}]
  %s14 = sld [smem:[#allocation0]]
  $region62: #{geo_attention_block.6} parent=0
    _
  %s16 = ssub.s32 1, %s14
  %s17 = scalar_select 0, %s16, %s14
  // Predicated region
  $region2: #{geo_attention_block.6} parent=0 // pred_check
    _
  $region3: #{geo_attention_block.6} parent=0 // pred_check_branch
    %19 = sbr.rel (0) target = $region5
  $region4: #{geo_attention_block.6} parent=0 // pred_region
    _
  $region5: #{geo_attention_block.6} parent=0 // pred_fallthru
    _
  // Predicated region
  $region6: #{geo_attention_block.6} parent=0 // pred_check
    _
  $region7: #{geo_attention_block.6} parent=0 // pred_check_branch
    %21 = sbr.rel (0) target = $region9
  $region8: #{geo_attention_block.6} parent=0 // pred_region
    _
  $region9: #{geo_attention_block.6} parent=0 // pred_fallthru
    _
  // Predicated region
  $region10: #{geo_attention_block.6} parent=0 // pred_check
    _
  $region11: #{geo_attention_block.6} parent=0 // pred_check_branch
    %23 = sbr.rel (0) target = $region13
  $region12: #{geo_attention_block.6} parent=0 // pred_region
    _
  $region13: #{geo_attention_block.6} parent=0 // pred_fallthru
    _
  // Predicated region
  $region14: #{geo_attention_block.6} parent=0 // pred_check
    _
  $region15: #{geo_attention_block.6} parent=0 // pred_check_branch
    %25 = sbr.rel (0) target = $region17
  $region16: #{geo_attention_block.6} parent=0 // pred_region
    _
  $region17: #{geo_attention_block.6} parent=0 // pred_fallthru
    _
  // Predicated region
  $region18: #{geo_attention_block.6} parent=0 // pred_check
    _
  $region19: #{geo_attention_block.6} parent=0 // pred_check_branch
    %27 = sbr.rel (0) target = $region21
  $region20: #{geo_attention_block.6} parent=0 // pred_region
    _
  $region21: #{geo_attention_block.6} parent=0 // pred_fallthru
    _
  // Predicated region
  $region22: #{geo_attention_block.6} parent=0 // pred_check
    _
  $region23: #{geo_attention_block.6} parent=0 // pred_check_branch
    %29 = sbr.rel (0) target = $region25
  $region24: #{geo_attention_block.6} parent=0 // pred_region
    _
  $region25: #{geo_attention_block.6} parent=0 // pred_fallthru
    _
  // Predicated region
  $region26: #{geo_attention_block.6} parent=0 // pred_check
    _
  $region27: #{geo_attention_block.6} parent=0 // pred_check_branch
    %31 = sbr.rel (0) target = $region29
  $region28: #{geo_attention_block.6} parent=0 // pred_region
    _
  $region29: #{geo_attention_block.6} parent=0 // pred_fallthru
    _
  // Predicated region
  $region30: #{geo_attention_block.6} parent=0 // pred_check
    _
  $region31: #{geo_attention_block.6} parent=0 // pred_check_branch
    %33 = sbr.rel (0) target = $region33
  $region32: #{geo_attention_block.6} parent=0 // pred_region
    _
  $region33: #{geo_attention_block.6} parent=0 // pred_fallthru
    _
  // Predicated region
  $region34: #{geo_attention_block.6} parent=0 // pred_check
    _
  $region35: #{geo_attention_block.6} parent=0 // pred_check_branch
    %35 = sbr.rel (0) target = $region37
  $region36: #{geo_attention_block.6} parent=0 // pred_region
    _
  $region37: #{geo_attention_block.6} parent=0 // pred_fallthru
    _
  // Predicated region
  $region38: #{geo_attention_block.6} parent=0 // pred_check
    _
  $region39: #{geo_attention_block.6} parent=0 // pred_check_branch
    %37 = sbr.rel (0) target = $region41
  $region40: #{geo_attention_block.6} parent=0 // pred_region
    _
  $region41: #{geo_attention_block.6} parent=0 // pred_fallthru
    _
  // Predicated region
  $region42: #{geo_attention_block.6} parent=0 // pred_check
    _
  $region43: #{geo_attention_block.6} parent=0 // pred_check_branch
    %39 = sbr.rel (0) target = $region45
  $region44: #{geo_attention_block.6} parent=0 // pred_region
    _
  $region45: #{geo_attention_block.6} parent=0 // pred_fallthru
    _
  // Predicated region
  $region46: #{geo_attention_block.6} parent=0 // pred_check
    _
  $region47: #{geo_attention_block.6} parent=0 // pred_check_branch
    %41 = sbr.rel (0) target = $region49
  $region48: #{geo_attention_block.6} parent=0 // pred_region
    _
  $region49: #{geo_attention_block.6} parent=0 // pred_fallthru
    _
  // Predicated region
  $region50: #{geo_attention_block.6} parent=0 // pred_check
    _
  $region51: #{geo_attention_block.6} parent=0 // pred_check_branch
    %43 = sbr.rel (0) target = $region53
  $region52: #{geo_attention_block.6} parent=0 // pred_region
    _
  $region53: #{geo_attention_block.6} parent=0 // pred_fallthru
    _
  %v45 = vld [vmem:[%s0] sm:$0xff]
  %v46 = vld [vmem:[%s0 + $0x8] sm:$0xff]
  %v47 = vld [vmem:[%s0 + $0x10] sm:$0xff]
  %v48 = vld [vmem:[%s0 + $0x18] sm:$0xff]
  %v49 = vld [vmem:[%s0 + $0x20] sm:$0xff]
  %v50 = vld [vmem:[%s0 + $0x28] sm:$0xff]
  %v51 = vld [vmem:[%s0 + $0x30] sm:$0xff]
  %v52 = vld [vmem:[%s0 + $0x38] sm:$0xff]
  %v53 = vld [vmem:[%s1] sm:$0xff]
  %v54 = vld [vmem:[%s1 + $0x8] sm:$0xff]
  %v55 = vld [vmem:[%s1 + $0x10] sm:$0xff]
  %v56 = vld [vmem:[%s1 + $0x18] sm:$0xff]
  %v57 = vld [vmem:[%s2] sm:$0xff]
  %v58 = vld [vmem:[%s2 + $0x8] sm:$0xff]
  %v59 = vld [vmem:[%s2 + $0x10] sm:$0xff]
  %v60 = vld [vmem:[%s2 + $0x18] sm:$0xff]
  %v61 = vld [vmem:[%s4] sm:$0xff]
  %v62 = vld [vmem:[%s4 + $0x8] sm:$0xff]
  %v63 = vld [vmem:[%s4 + $0x10] sm:$0xff]
  %v64 = vld [vmem:[%s4 + $0x18] sm:$0xff]
  %v65 = vld [vmem:[%s5] sm:$0x1]
  %v66 = vld [vmem:[%s6] sm:$0x1]
  %v67 = vld [vmem:[%s8] sm:$0x1]
  %v68 = vld [vmem:[%s9] sm:$0xff]
  %v69 = vld [vmem:[%s9 + $0x8] sm:$0xff]
  %v70 = vld [vmem:[%s9 + $0x10] sm:$0xff]
  %v71 = vld [vmem:[%s9 + $0x18] sm:$0xff]
  %v72 = vld [vmem:[%s10] sm:$0xff]
  %v73 = vld [vmem:[%s10 + $0x8] sm:$0xff]
  %v74 = vld [vmem:[%s10 + $0x10] sm:$0xff]
  %v75 = vld [vmem:[%s10 + $0x18] sm:$0xff]
  %v76 = vld [vmem:[%s12] sm:$0xff]
  %v77 = vld [vmem:[%s12 + $0x8] sm:$0xff]
  %v78 = vld [vmem:[%s12 + $0x10] sm:$0xff]
  %v79 = vld [vmem:[%s12 + $0x18] sm:$0xff]
  %v80 = vld [vmem:[%s3] sm:$0xf]
  %v81 = vld [vmem:[%s3 + $0x4] sm:$0xf]
  %v82 = vld [vmem:[%s3 + $0x8] sm:$0xf]
  %v83 = vld [vmem:[%s3 + $0xc] sm:$0xf]
  %v84 = vld [vmem:[%s11] sm:$0xf]
  %v85 = vld [vmem:[%s11 + $0x4] sm:$0xf]
  %v86 = vld [vmem:[%s11 + $0x8] sm:$0xf]
  %v87 = vld [vmem:[%s11 + $0xc] sm:$0xf]
  %v88 = vld [vmem:[%s7] sm:$0xf]
  %v89 = vld [vmem:[%s7 + $0x4] sm:$0xf]
  %v90 = vld [vmem:[%s7 + $0x8] sm:$0xf]
  %v91 = vld [vmem:[%s7 + $0xc] sm:$0xf]
  %v92 = vld [vmem:[%s7 + $0x10] sm:$0xf]
  %v93 = vld [vmem:[%s7 + $0x14] sm:$0xf]
  %v94 = vld [vmem:[%s7 + $0x18] sm:$0xf]
  %v95 = vld [vmem:[%s7 + $0x1c] sm:$0xf]
  %v96 = vld [vmem:[%s7 + $0x20] sm:$0xf]
  %v97 = vld [vmem:[%s7 + $0x24] sm:$0xf]
  %v98 = vld [vmem:[%s7 + $0x28] sm:$0xf]
  %v99 = vld [vmem:[%s7 + $0x2c] sm:$0xf]
  %v100 = vld [vmem:[%s7 + $0x30] sm:$0xf]
  %v101 = vld [vmem:[%s7 + $0x34] sm:$0xf]
  %v102 = vld [vmem:[%s7 + $0x38] sm:$0xf]
  %v103 = vld [vmem:[%s7 + $0x3c] sm:$0xf]
  %104 = vadd.xlane.f32.xlu0 %v45
  %v105 = vpop.xlane.xlu0 %104
  %106 = vadd.xlane.f32.xlu0 %v46
  %v107 = vpop.xlane.xlu0 %106
  %108 = vadd.xlane.f32.xlu0 %v47
  %v109 = vpop.xlane.xlu0 %108
  %110 = vadd.xlane.f32.xlu0 %v48
  %v111 = vpop.xlane.xlu0 %110
  %112 = vadd.xlane.f32.xlu0 %v49
  %v113 = vpop.xlane.xlu0 %112
  %114 = vadd.xlane.f32.xlu0 %v50
  %v115 = vpop.xlane.xlu0 %114
  %116 = vadd.xlane.f32.xlu0 %v51
  %v117 = vpop.xlane.xlu0 %116
  %118 = vadd.xlane.f32.xlu0 %v52
  %v119 = vpop.xlane.xlu0 %118
  %v120 = vrcp.pop 128.0
  %v121 = vmul.f32 128.0, %v120
  %v122 = vsub.f32 1.0, %v121
  %v123 = vmul.f32 %v120, %v122
  %v124 = vadd.f32 %v120, %v123
  %vm125 = vweird.f32 %v120
  %v126 = vsel %vm125, %v120, %v124
  %v127 = vmul.f32 %v105, %v126
  %v128 = vmul.f32 %v107, %v126
  %v129 = vmul.f32 %v109, %v126
  %v130 = vmul.f32 %v111, %v126
  %v131 = vmul.f32 %v113, %v126
  %v132 = vmul.f32 %v115, %v126
  %v133 = vmul.f32 %v117, %v126
  %v134 = vmul.f32 %v119, %v126
  %v135 = vsub.f32 %v45, %v127
  %v136 = vsub.f32 %v46, %v128
  %v137 = vsub.f32 %v47, %v129
  %v138 = vsub.f32 %v48, %v130
  %v139 = vsub.f32 %v49, %v131
  %v140 = vsub.f32 %v50, %v132
  %v141 = vsub.f32 %v51, %v133
  %v142 = vsub.f32 %v52, %v134
  %v143 = vmul.f32 %v135, %v135
  %v144 = vmul.f32 %v136, %v136
  %v145 = vmul.f32 %v137, %v137
  %v146 = vmul.f32 %v138, %v138
  %v147 = vmul.f32 %v139, %v139
  %v148 = vmul.f32 %v140, %v140
  %v149 = vmul.f32 %v141, %v141
  %v150 = vmul.f32 %v142, %v142
  %151 = vadd.xlane.f32.xlu0 %v143
  %v152 = vpop.xlane.xlu0 %151
  %153 = vadd.xlane.f32.xlu0 %v144
  %v154 = vpop.xlane.xlu0 %153
  %155 = vadd.xlane.f32.xlu0 %v145
  %v156 = vpop.xlane.xlu0 %155
  %157 = vadd.xlane.f32.xlu0 %v146
  %v158 = vpop.xlane.xlu0 %157
  %159 = vadd.xlane.f32.xlu0 %v147
  %v160 = vpop.xlane.xlu0 %159
  %161 = vadd.xlane.f32.xlu0 %v148
  %v162 = vpop.xlane.xlu0 %161
  %163 = vadd.xlane.f32.xlu0 %v149
  %v164 = vpop.xlane.xlu0 %163
  %165 = vadd.xlane.f32.xlu0 %v150
  %v166 = vpop.xlane.xlu0 %165
  %v167 = vmul.f32 %v152, %v126
  %v168 = vmul.f32 %v154, %v126
  %v169 = vmul.f32 %v156, %v126
  %v170 = vmul.f32 %v158, %v126
  %v171 = vmul.f32 %v160, %v126
  %v172 = vmul.f32 %v162, %v126
  %v173 = vmul.f32 %v164, %v126
  %v174 = vmul.f32 %v166, %v126
  %v175 = vadd.f32 %v167, 0.001
  %v176 = vadd.f32 %v168, 0.001
  %v177 = vadd.f32 %v169, 0.001
  %v178 = vadd.f32 %v170, 0.001
  %v179 = vadd.f32 %v171, 0.001
  %v180 = vadd.f32 %v172, 0.001
  %v181 = vadd.f32 %v173, 0.001
  %v182 = vadd.f32 %v174, 0.001
  %v183 = vrcp.pop %v175
  %v184 = vmul.f32 %v175, %v183
  %v185 = vsub.f32 1.0, %v184
  %v186 = vmul.f32 %v183, %v185
  %v187 = vadd.f32 %v183, %v186
  %vm188 = vweird.f32 %v175
  %vm189 = vweird.f32 %v183
  %vm190 = vmor %vm188, %vm189
  %v191 = vsel %vm190, %v183, %v187
  %v192 = vand.u32 2147483647, %v175
  %vm193 = vcmp.eq.f32.partialorder %v192, 8.507059e+37
  %v194 = vand.u32 %v175, 2147483648
  %v195 = vor.u32 1.1754944e-38, %v194
  %v196 = vsel %vm193, %v195, %v191
  %v197 = vmul.f32 %v167, %v196
  %v198 = vrcp.pop %v176
  %v199 = vmul.f32 %v176, %v198
  %v200 = vsub.f32 1.0, %v199
  %v201 = vmul.f32 %v198, %v200
  %v202 = vadd.f32 %v198, %v201
  %vm203 = vweird.f32 %v176
  %vm204 = vweird.f32 %v198
  %vm205 = vmor %vm203, %vm204
  %v206 = vsel %vm205, %v198, %v202
  %v207 = vand.u32 2147483647, %v176
  %vm208 = vcmp.eq.f32.partialorder %v207, 8.507059e+37
  %v209 = vand.u32 %v176, 2147483648
  %v210 = vor.u32 1.1754944e-38, %v209
  %v211 = vsel %vm208, %v210, %v206
  %v212 = vmul.f32 %v168, %v211
  %v213 = vrcp.pop %v177
  %v214 = vmul.f32 %v177, %v213
  %v215 = vsub.f32 1.0, %v214
  %v216 = vmul.f32 %v213, %v215
  %v217 = vadd.f32 %v213, %v216
  %vm218 = vweird.f32 %v177
  %vm219 = vweird.f32 %v213
  %vm220 = vmor %vm218, %vm219
  %v221 = vsel %vm220, %v213, %v217
  %v222 = vand.u32 2147483647, %v177
  %vm223 = vcmp.eq.f32.partialorder %v222, 8.507059e+37
  %v224 = vand.u32 %v177, 2147483648
  %v225 = vor.u32 1.1754944e-38, %v224
  %v226 = vsel %vm223, %v225, %v221
  %v227 = vmul.f32 %v169, %v226
  %v228 = vrcp.pop %v178
  %v229 = vmul.f32 %v178, %v228
  %v230 = vsub.f32 1.0, %v229
  %v231 = vmul.f32 %v228, %v230
  %v232 = vadd.f32 %v228, %v231
  %vm233 = vweird.f32 %v178
  %vm234 = vweird.f32 %v228
  %vm235 = vmor %vm233, %vm234
  %v236 = vsel %vm235, %v228, %v232
  %v237 = vand.u32 2147483647, %v178
  %vm238 = vcmp.eq.f32.partialorder %v237, 8.507059e+37
  %v239 = vand.u32 %v178, 2147483648
  %v240 = vor.u32 1.1754944e-38, %v239
  %v241 = vsel %vm238, %v240, %v236
  %v242 = vmul.f32 %v170, %v241
  %v243 = vrcp.pop %v179
  %v244 = vmul.f32 %v179, %v243
  %v245 = vsub.f32 1.0, %v244
  %v246 = vmul.f32 %v243, %v245
  %v247 = vadd.f32 %v243, %v246
  %vm248 = vweird.f32 %v179
  %vm249 = vweird.f32 %v243
  %vm250 = vmor %vm248, %vm249
  %v251 = vsel %vm250, %v243, %v247
  %v252 = vand.u32 2147483647, %v179
  %vm253 = vcmp.eq.f32.partialorder %v252, 8.507059e+37
  %v254 = vand.u32 %v179, 2147483648
  %v255 = vor.u32 1.1754944e-38, %v254
  %v256 = vsel %vm253, %v255, %v251
  %v257 = vmul.f32 %v171, %v256
  %v258 = vrcp.pop %v180
  %v259 = vmul.f32 %v180, %v258
  %v260 = vsub.f32 1.0, %v259
  %v261 = vmul.f32 %v258, %v260
  %v262 = vadd.f32 %v258, %v261
  %vm263 = vweird.f32 %v180
  %vm264 = vweird.f32 %v258
  %vm265 = vmor %vm263, %vm264
  %v266 = vsel %vm265, %v258, %v262
  %v267 = vand.u32 2147483647, %v180
  %vm268 = vcmp.eq.f32.partialorder %v267, 8.507059e+37
  %v269 = vand.u32 %v180, 2147483648
  %v270 = vor.u32 1.1754944e-38, %v269
  %v271 = vsel %vm268, %v270, %v266
  %v272 = vmul.f32 %v172, %v271
  %v273 = vrcp.pop %v181
  %v274 = vmul.f32 %v181, %v273
  %v275 = vsub.f32 1.0, %v274
  %v276 = vmul.f32 %v273, %v275
  %v277 = vadd.f32 %v273, %v276
  %vm278 = vweird.f32 %v181
  %vm279 = vweird.f32 %v273
  %vm280 = vmor %vm278, %vm279
  %v281 = vsel %vm280, %v273, %v277
  %v282 = vand.u32 2147483647, %v181
  %vm283 = vcmp.eq.f32.partialorder %v282, 8.507059e+37
  %v284 = vand.u32 %v181, 2147483648
  %v285 = vor.u32 1.1754944e-38, %v284
  %v286 = vsel %vm283, %v285, %v281
  %v287 = vmul.f32 %v173, %v286
  %v288 = vrcp.pop %v182
  %v289 = vmul.f32 %v182, %v288
  %v290 = vsub.f32 1.0, %v289
  %v291 = vmul.f32 %v288, %v290
  %v292 = vadd.f32 %v288, %v291
  %vm293 = vweird.f32 %v182
  %vm294 = vweird.f32 %v288
  %vm295 = vmor %vm293, %vm294
  %v296 = vsel %vm295, %v288, %v292
  %v297 = vand.u32 2147483647, %v182
  %vm298 = vcmp.eq.f32.partialorder %v297, 8.507059e+37
  %v299 = vand.u32 %v182, 2147483648
  %v300 = vor.u32 1.1754944e-38, %v299
  %v301 = vsel %vm298, %v300, %v296
  %v302 = vmul.f32 %v174, %v301
  %v303 = vadd.f32 %v197, %v257
  %v304 = vadd.f32 %v212, %v272
  %v305 = vadd.f32 %v227, %v287
  %v306 = vadd.f32 %v242, %v302
  %v307 = vrcp.pop 2.0
  %v308 = vmul.f32 2.0, %v307
  %v309 = vsub.f32 1.0, %v308
  %v310 = vmul.f32 %v307, %v309
  %v311 = vadd.f32 %v307, %v310
  %vm312 = vweird.f32 %v307
  %v313 = vsel %vm312, %v307, %v311
  %v314 = vmul.f32 %v303, %v313
  %v315 = vmul.f32 %v304, %v313
  %v316 = vmul.f32 %v305, %v313
  %v317 = vmul.f32 %v306, %v313
  %v318 = vrsqrt.pop %v175
  %v319 = vmul.f32 %v318, %v175
  %v320 = vmul.f32 %v319, %v318
  %v321 = vmul.f32 0.5, %v320
  %v322 = vsub.f32 1.5, %v321
  %v323 = vmul.f32 %v318, %v322
  %vm324 = vweird.f32 %v175
  %vm325 = vweird.f32 %v318
  %vm326 = vmor %vm324, %vm325
  %v327 = vsel %vm326, %v318, %v323
  %v328 = vrsqrt.pop %v176
  %v329 = vmul.f32 %v328, %v176
  %v330 = vmul.f32 %v329, %v328
  %v331 = vmul.f32 0.5, %v330
  %v332 = vsub.f32 1.5, %v331
  %v333 = vmul.f32 %v328, %v332
  %vm334 = vweird.f32 %v176
  %vm335 = vweird.f32 %v328
  %vm336 = vmor %vm334, %vm335
  %v337 = vsel %vm336, %v328, %v333
  %v338 = vrsqrt.pop %v177
  %v339 = vmul.f32 %v338, %v177
  %v340 = vmul.f32 %v339, %v338
  %v341 = vmul.f32 0.5, %v340
  %v342 = vsub.f32 1.5, %v341
  %v343 = vmul.f32 %v338, %v342
  %vm344 = vweird.f32 %v177
  %vm345 = vweird.f32 %v338
  %vm346 = vmor %vm344, %vm345
  %v347 = vsel %vm346, %v338, %v343
  %v348 = vrsqrt.pop %v178
  %v349 = vmul.f32 %v348, %v178
  %v350 = vmul.f32 %v349, %v348
  %v351 = vmul.f32 0.5, %v350
  %v352 = vsub.f32 1.5, %v351
  %v353 = vmul.f32 %v348, %v352
  %vm354 = vweird.f32 %v178
  %vm355 = vweird.f32 %v348
  %vm356 = vmor %vm354, %vm355
  %v357 = vsel %vm356, %v348, %v353
  %v358 = vrsqrt.pop %v179
  %v359 = vmul.f32 %v358, %v179
  %v360 = vmul.f32 %v359, %v358
  %v361 = vmul.f32 0.5, %v360
  %v362 = vsub.f32 1.5, %v361
  %v363 = vmul.f32 %v358, %v362
  %vm364 = vweird.f32 %v179
  %vm365 = vweird.f32 %v358
  %vm366 = vmor %vm364, %vm365
  %v367 = vsel %vm366, %v358, %v363
  %v368 = vrsqrt.pop %v180
  %v369 = vmul.f32 %v368, %v180
  %v370 = vmul.f32 %v369, %v368
  %v371 = vmul.f32 0.5, %v370
  %v372 = vsub.f32 1.5, %v371
  %v373 = vmul.f32 %v368, %v372
  %vm374 = vweird.f32 %v180
  %vm375 = vweird.f32 %v368
  %vm376 = vmor %vm374, %vm375
  %v377 = vsel %vm376, %v368, %v373
  %v378 = vrsqrt.pop %v181
  %v379 = vmul.f32 %v378, %v181
  %v380 = vmul.f32 %v379, %v378
  %v381 = vmul.f32 0.5, %v380
  %v382 = vsub.f32 1.5, %v381
  %v383 = vmul.f32 %v378, %v382
  %vm384 = vweird.f32 %v181
  %vm385 = vweird.f32 %v378
  %vm386 = vmor %vm384, %vm385
  %v387 = vsel %vm386, %v378, %v383
  %v388 = vrsqrt.pop %v182
  %v389 = vmul.f32 %v388, %v182
  %v390 = vmul.f32 %v389, %v388
  %v391 = vmul.f32 0.5, %v390
  %v392 = vsub.f32 1.5, %v391
  %v393 = vmul.f32 %v388, %v392
  %vm394 = vweird.f32 %v182
  %vm395 = vweird.f32 %v388
  %vm396 = vmor %vm394, %vm395
  %v397 = vsel %vm396, %v388, %v393
  %v398 = vadd.f32 %v314, 1e-05
  %v399 = vadd.f32 %v315, 1e-05
  %v400 = vadd.f32 %v316, 1e-05
  %v401 = vadd.f32 %v317, 1e-05
  %v402 = vrsqrt.pop %v398
  %v403 = vmul.f32 %v402, %v398
  %v404 = vmul.f32 %v403, %v402
  %v405 = vmul.f32 0.5, %v404
  %v406 = vsub.f32 1.5, %v405
  %v407 = vmul.f32 %v402, %v406
  %vm408 = vweird.f32 %v398
  %vm409 = vweird.f32 %v402
  %vm410 = vmor %vm408, %vm409
  %v411 = vsel %vm410, %v402, %v407
  %v412 = vrsqrt.pop %v399
  %v413 = vmul.f32 %v412, %v399
  %v414 = vmul.f32 %v413, %v412
  %v415 = vmul.f32 0.5, %v414
  %v416 = vsub.f32 1.5, %v415
  %v417 = vmul.f32 %v412, %v416
  %vm418 = vweird.f32 %v399
  %vm419 = vweird.f32 %v412
  %vm420 = vmor %vm418, %vm419
  %v421 = vsel %vm420, %v412, %v417
  %v422 = vrsqrt.pop %v400
  %v423 = vmul.f32 %v422, %v400
  %v424 = vmul.f32 %v423, %v422
  %v425 = vmul.f32 0.5, %v424
  %v426 = vsub.f32 1.5, %v425
  %v427 = vmul.f32 %v422, %v426
  %vm428 = vweird.f32 %v400
  %vm429 = vweird.f32 %v422
  %vm430 = vmor %vm428, %vm429
  %v431 = vsel %vm430, %v422, %v427
  %v432 = vrsqrt.pop %v401
  %v433 = vmul.f32 %v432, %v401
  %v434 = vmul.f32 %v433, %v432
  %v435 = vmul.f32 0.5, %v434
  %v436 = vsub.f32 1.5, %v435
  %v437 = vmul.f32 %v432, %v436
  %vm438 = vweird.f32 %v401
  %vm439 = vweird.f32 %v432
  %vm440 = vmor %vm438, %vm439
  %v441 = vsel %vm440, %v432, %v437
  %v442 = vmul.f32 %v327, %v411
  %v443 = vmul.f32 %v337, %v421
  %v444 = vmul.f32 %v347, %v431
  %v445 = vmul.f32 %v357, %v441
  %v446 = vmul.f32 %v367, %v411
  %v447 = vmul.f32 %v377, %v421
  %v448 = vmul.f32 %v387, %v431
  %v449 = vmul.f32 %v397, %v441
  %v450 = vmul.f32 %v135, %v442
  %v451 = vmul.f32 %v136, %v443
  %v452 = vmul.f32 %v137, %v444
  %v453 = vmul.f32 %v138, %v445
  %v454 = vmul.f32 %v139, %v446
  %v455 = vmul.f32 %v140, %v447
  %v456 = vmul.f32 %v141, %v448
  %v457 = vmul.f32 %v142, %v449
  %459 = vset.pattern.permute.xlu0 0
  %460 = vperm.xlu0 %459, %v53
  %v461 = vpop.permute.xlu0 %460
  %464 = vset.pattern.permute.xlu0 0
  %465 = vperm.xlu0 %464, %v54
  %v466 = vpop.permute.xlu0 %465
  %469 = vset.pattern.permute.xlu0 0
  %470 = vperm.xlu0 %469, %v55
  %v471 = vpop.permute.xlu0 %470
  %474 = vset.pattern.permute.xlu0 0
  %475 = vperm.xlu0 %474, %v56
  %v476 = vpop.permute.xlu0 %475
  %v478 = vmul.f32 %v450, %v461
  %v479 = vmul.f32 %v451, %v466
  %v480 = vmul.f32 %v452, %v471
  %v481 = vmul.f32 %v453, %v476
  %v482 = vmul.f32 %v454, %v461
  %v483 = vmul.f32 %v455, %v466
  %v484 = vmul.f32 %v456, %v471
  %v485 = vmul.f32 %v457, %v476
  %487 = vset.pattern.permute.xlu0 0
  %488 = vperm.xlu0 %487, %v57
  %v489 = vpop.permute.xlu0 %488
  %492 = vset.pattern.permute.xlu0 0
  %493 = vperm.xlu0 %492, %v58
  %v494 = vpop.permute.xlu0 %493
  %497 = vset.pattern.permute.xlu0 0
  %498 = vperm.xlu0 %497, %v59
  %v499 = vpop.permute.xlu0 %498
  %502 = vset.pattern.permute.xlu0 0
  %503 = vperm.xlu0 %502, %v60
  %v504 = vpop.permute.xlu0 %503
  %v506 = vadd.f32 %v478, %v489
  %v507 = vadd.f32 %v479, %v494
  %v508 = vadd.f32 %v480, %v499
  %v509 = vadd.f32 %v481, %v504
  %v510 = vadd.f32 %v482, %v489
  %v511 = vadd.f32 %v483, %v494
  %v512 = vadd.f32 %v484, %v499
  %v513 = vadd.f32 %v485, %v504
  %v514 = vmax.f32 %v506, 0.0
  %v515 = vmax.f32 %v507, 0.0
  %v516 = vmax.f32 %v508, 0.0
  %v517 = vmax.f32 %v509, 0.0
  %v518 = vmax.f32 %v510, 0.0
  %v519 = vmax.f32 %v511, 0.0
  %v520 = vmax.f32 %v512, 0.0
  %v521 = vmax.f32 %v513, 0.0
  %v522 = vpack.c.bf16 %v514, %v514
  %v523 = vpack.c.bf16 %v515, %v515
  %v524 = vpack.c.bf16 %v516, %v516
  %v525 = vpack.c.bf16 %v517, %v517
  %v526 = vpack.c.bf16 %v518, %v518
  %v527 = vpack.c.bf16 %v519, %v519
  %v528 = vpack.c.bf16 %v520, %v520
  %v529 = vpack.c.bf16 %v521, %v521
  %531 = vset.pattern.permute.xlu0 0
  %532 = vperm.xlu0 %531, %v61
  %v533 = vpop.permute.xlu0 %532
  %536 = vset.pattern.permute.xlu0 0
  %537 = vperm.xlu0 %536, %v62
  %v538 = vpop.permute.xlu0 %537
  %541 = vset.pattern.permute.xlu0 0
  %542 = vperm.xlu0 %541, %v63
  %v543 = vpop.permute.xlu0 %542
  %546 = vset.pattern.permute.xlu0 0
  %547 = vperm.xlu0 %546, %v64
  %v548 = vpop.permute.xlu0 %547
  %v554 = vunpack.c.l.b16 %v80
  %v555 = vunpack.c.l.b16 %v81
  %v556 = vunpack.c.l.b16 %v82
  %v557 = vunpack.c.l.b16 %v83
  %v558 = vpack.c.b16 %v555, %v554
  %v559 = vpack.c.b16 %v557, %v556
  %v564 = vunpack.c.l.b16 %v522
  %v565 = vunpack.c.l.b16 %v523
  %v566 = vunpack.c.l.b16 %v524
  %v567 = vunpack.c.l.b16 %v525
  %v568 = vpack.c.b16 %v565, %v564
  %v569 = vpack.c.b16 %v567, %v566
  %vm572 = vcmask 261120
  %v574 = vsel %vm572, %v558, 0
  %v577 = vsel %vm572, %v559, 0
  %579 = vmatpush.bf16.msra.mxu0 0
  %580 = vmatpush.bf16.msra.mxu0 0
  %581 = vmatpush.bf16.msra.mxu0 0
  %582 = vmatpush.bf16.msra.mxu0 0
  %583 = vmatpush.bf16.msra.mxu0 0
  %584 = vmatpush.bf16.msra.mxu0 0
  %585 = vmatpush.bf16.msra.mxu0 %v569
  %586 = vmatpush.bf16.msra.mxu0 %v568
  %587 = vmatmul.bf16.gmra.mxu0 %v574
  %v588 = vpop.f32.mrf.mxu0
  %v589 = vadd.f32 %v533, %v588
  %v590 = vpop.f32.mrf.mxu0
  %v591 = vadd.f32 %v538, %v590
  %592 = vmatmul.bf16.gmra.mxu0 %v577
  %v593 = vpop.f32.mrf.mxu0
  %v594 = vadd.f32 %v543, %v593
  %v595 = vpop.f32.mrf.mxu0
  %v596 = vadd.f32 %v548, %v595
  %597 = vdwg.mxu0
  %v602 = vunpack.c.l.b16 %v526
  %v603 = vunpack.c.l.b16 %v527
  %v604 = vunpack.c.l.b16 %v528
  %v605 = vunpack.c.l.b16 %v529
  %v606 = vpack.c.b16 %v603, %v602
  %v607 = vpack.c.b16 %v605, %v604
  %610 = vmatpush.bf16.msra.mxu0 0
  %611 = vmatpush.bf16.msra.mxu0 0
  %612 = vmatpush.bf16.msra.mxu0 0
  %613 = vmatpush.bf16.msra.mxu0 0
  %614 = vmatpush.bf16.msra.mxu0 0
  %615 = vmatpush.bf16.msra.mxu0 0
  %616 = vmatpush.bf16.msra.mxu0 %v607
  %617 = vmatpush.bf16.msra.mxu0 %v606
  %618 = vmatmul.bf16.gmra.mxu0 %v574
  %v619 = vpop.f32.mrf.mxu0
  %v620 = vadd.f32 %v533, %v619
  %v621 = vpop.f32.mrf.mxu0
  %v622 = vadd.f32 %v538, %v621
  %623 = vmatmul.bf16.gmra.mxu0 %v577
  %v624 = vpop.f32.mrf.mxu0
  %v625 = vadd.f32 %v543, %v624
  %v626 = vpop.f32.mrf.mxu0
  %v627 = vadd.f32 %v548, %v626
  %628 = vdwg.mxu0
  %v629 = vadd.f32 %v589, %v620
  %v630 = vadd.f32 %v591, %v622
  %v631 = vadd.f32 %v594, %v625
  %v632 = vadd.f32 %v596, %v627
  %v633 = vmul.f32 %v629, %v313
  %v634 = vmul.f32 %v630, %v313
  %v635 = vmul.f32 %v631, %v313
  %v636 = vmul.f32 %v632, %v313
  %v637 = vadd.f32 %v633, %v634
  %v638 = vadd.f32 %v637, %v635
  %v639 = vadd.f32 %v638, %v636
  %v640 = vrot.slane %v639, 4
  %v641 = vadd.f32 %v639, %v640
  %v642 = vrot.slane %v641, 2
  %v643 = vadd.f32 %v641, %v642
  %v644 = vrot.slane %v643, 1
  %v645 = vadd.f32 %v643, %v644
  %v646 = vrcp.pop 32.0
  %v647 = vmul.f32 32.0, %v646
  %v648 = vsub.f32 1.0, %v647
  %v649 = vmul.f32 %v646, %v648
  %v650 = vadd.f32 %v646, %v649
  %vm651 = vweird.f32 %v646
  %v652 = vsel %vm651, %v646, %v650
  %v653 = vmul.f32 %v645, %v652
  %v654 = vsub.f32 %v589, %v653
  %v655 = vsub.f32 %v591, %v653
  %v656 = vsub.f32 %v594, %v653
  %v657 = vsub.f32 %v596, %v653
  %v658 = vsub.f32 %v620, %v653
  %v659 = vsub.f32 %v622, %v653
  %v660 = vsub.f32 %v625, %v653
  %v661 = vsub.f32 %v627, %v653
  %v662 = vmul.f32 %v654, %v654
  %v663 = vmul.f32 %v655, %v655
  %v664 = vmul.f32 %v656, %v656
  %v665 = vmul.f32 %v657, %v657
  %v666 = vmul.f32 %v658, %v658
  %v667 = vmul.f32 %v659, %v659
  %v668 = vmul.f32 %v660, %v660
  %v669 = vmul.f32 %v661, %v661
  %v670 = vadd.f32 %v662, %v666
  %v671 = vadd.f32 %v663, %v667
  %v672 = vadd.f32 %v664, %v668
  %v673 = vadd.f32 %v665, %v669
  %v674 = vmul.f32 %v670, %v313
  %v675 = vmul.f32 %v671, %v313
  %v676 = vmul.f32 %v672, %v313
  %v677 = vmul.f32 %v673, %v313
  %v678 = vadd.f32 %v674, %v675
  %v679 = vadd.f32 %v678, %v676
  %v680 = vadd.f32 %v679, %v677
  %v681 = vrot.slane %v680, 4
  %v682 = vadd.f32 %v680, %v681
  %v683 = vrot.slane %v682, 2
  %v684 = vadd.f32 %v682, %v683
  %v685 = vrot.slane %v684, 1
  %v686 = vadd.f32 %v684, %v685
  %v687 = vmul.f32 %v686, %v652
  %v688 = vadd.f32 %v687, 1e-05
  %v689 = vrsqrt.pop %v688
  %v690 = vmul.f32 %v689, %v688
  %v691 = vmul.f32 %v690, %v689
  %v692 = vmul.f32 0.5, %v691
  %v693 = vsub.f32 1.5, %v692
  %v694 = vmul.f32 %v689, %v693
  %vm695 = vweird.f32 %v688
  %vm696 = vweird.f32 %v689
  %vm697 = vmor %vm695, %vm696
  %v698 = vsel %vm697, %v689, %v694
  %v699 = vmul.f32 %v654, %v698
  %v700 = vmul.f32 %v655, %v698
  %v701 = vmul.f32 %v656, %v698
  %v702 = vmul.f32 %v657, %v698
  %v703 = vmul.f32 %v658, %v698
  %v704 = vmul.f32 %v659, %v698
  %v705 = vmul.f32 %v660, %v698
  %v706 = vmul.f32 %v661, %v698
  %v708 = vperm.slane %v65, 0
  %v710 = vmul.f32 %v699, %v708
  %v711 = vmul.f32 %v700, %v708
  %v712 = vmul.f32 %v701, %v708
  %v713 = vmul.f32 %v702, %v708
  %v714 = vmul.f32 %v703, %v708
  %v715 = vmul.f32 %v704, %v708
  %v716 = vmul.f32 %v705, %v708
  %v717 = vmul.f32 %v706, %v708
  %v719 = vperm.slane %v66, 0
  %v721 = vadd.f32 %v710, %v719
  %v722 = vadd.f32 %v711, %v719
  %v723 = vadd.f32 %v712, %v719
  %v724 = vadd.f32 %v713, %v719
  %v725 = vadd.f32 %v714, %v719
  %v726 = vadd.f32 %v715, %v719
  %v727 = vadd.f32 %v716, %v719
  %v728 = vadd.f32 %v717, %v719
  %v729 = vmax.f32 %v721, 0.0
  %v730 = vmax.f32 %v722, 0.0
  %v731 = vmax.f32 %v723, 0.0
  %v732 = vmax.f32 %v724, 0.0
  %v733 = vmax.f32 %v725, 0.0
  %v734 = vmax.f32 %v726, 0.0
  %v735 = vmax.f32 %v727, 0.0
  %v736 = vmax.f32 %v728, 0.0
  %v737 = vpack.c.bf16 %v730, %v729
  %v738 = vpack.c.bf16 %v732, %v731
  %v739 = vpack.c.bf16 %v734, %v733
  %v740 = vpack.c.bf16 %v736, %v735
  %v757 = vunpack.c.l.b16 %v88
  %v758 = vunpack.c.l.b16 %v89
  %v759 = vunpack.c.l.b16 %v90
  %v760 = vunpack.c.l.b16 %v91
  %v761 = vunpack.c.l.b16 %v92
  %v762 = vunpack.c.l.b16 %v93
  %v763 = vunpack.c.l.b16 %v94
  %v764 = vunpack.c.l.b16 %v95
  %v765 = vunpack.c.l.b16 %v96
  %v766 = vunpack.c.l.b16 %v97
  %v767 = vunpack.c.l.b16 %v98
  %v768 = vunpack.c.l.b16 %v99
  %v769 = vunpack.c.l.b16 %v100
  %v770 = vunpack.c.l.b16 %v101
  %v771 = vunpack.c.l.b16 %v102
  %v772 = vunpack.c.l.b16 %v103
  %v773 = vpack.c.b16 %v758, %v757
  %v774 = vpack.c.b16 %v760, %v759
  %v775 = vpack.c.b16 %v762, %v761
  %v776 = vpack.c.b16 %v764, %v763
  %v777 = vpack.c.b16 %v766, %v765
  %v778 = vpack.c.b16 %v768, %v767
  %v779 = vpack.c.b16 %v770, %v769
  %v780 = vpack.c.b16 %v772, %v771
  %789 = vmatpush.bf16.msra.mxu0 %v780
  %790 = vmatpush.bf16.msra.mxu0 %v779
  %791 = vmatpush.bf16.msra.mxu0 %v778
  %792 = vmatpush.bf16.msra.mxu0 %v777
  %793 = vmatpush.bf16.msra.mxu0 %v776
  %794 = vmatpush.bf16.msra.mxu0 %v775
  %795 = vmatpush.bf16.msra.mxu0 %v774
  %796 = vmatpush.bf16.msra.mxu0 %v773
  %797 = vmatmul.bf16.gmra.mxu0 %v737
  %v798 = vpop.f32.mrf.mxu0
  %v799 = vadd.f32 0.0, %v798
  %v800 = vpop.f32.mrf.mxu0
  %v801 = vadd.f32 0.0, %v800
  %802 = vmatmul.bf16.gmra.mxu0 %v738
  %v803 = vpop.f32.mrf.mxu0
  %v804 = vadd.f32 0.0, %v803
  %v805 = vpop.f32.mrf.mxu0
  %v806 = vadd.f32 0.0, %v805
  %807 = vmatmul.bf16.gmra.mxu0 %v739
  %v808 = vpop.f32.mrf.mxu0
  %v809 = vadd.f32 0.0, %v808
  %v810 = vpop.f32.mrf.mxu0
  %v811 = vadd.f32 0.0, %v810
  %812 = vmatmul.bf16.gmra.mxu0 %v740
  %v813 = vpop.f32.mrf.mxu0
  %v814 = vadd.f32 0.0, %v813
  %v815 = vpop.f32.mrf.mxu0
  %v816 = vadd.f32 0.0, %v815
  %817 = vdwg.mxu0
  %v818 = vadd.f32 %v589, %v799
  %v819 = vadd.f32 %v591, %v801
  %v820 = vadd.f32 %v594, %v804
  %v821 = vadd.f32 %v596, %v806
  %v822 = vadd.f32 %v620, %v809
  %v823 = vadd.f32 %v622, %v811
  %v824 = vadd.f32 %v625, %v814
  %v825 = vadd.f32 %v627, %v816
  %v827 = vperm.slane %v67, 0
  %v829 = vadd.f32 %v818, %v827
  %v830 = vadd.f32 %v819, %v827
  %v831 = vadd.f32 %v820, %v827
  %v832 = vadd.f32 %v821, %v827
  %v833 = vadd.f32 %v822, %v827
  %v834 = vadd.f32 %v823, %v827
  %v835 = vadd.f32 %v824, %v827
  %v836 = vadd.f32 %v825, %v827
  %837 = vadd.xlane.f32.xlu0 %v829
  %v838 = vpop.xlane.xlu0 %837
  %839 = vadd.xlane.f32.xlu0 %v830
  %v840 = vpop.xlane.xlu0 %839
  %841 = vadd.xlane.f32.xlu0 %v831
  %v842 = vpop.xlane.xlu0 %841
  %843 = vadd.xlane.f32.xlu0 %v832
  %v844 = vpop.xlane.xlu0 %843
  %845 = vadd.xlane.f32.xlu0 %v833
  %v846 = vpop.xlane.xlu0 %845
  %847 = vadd.xlane.f32.xlu0 %v834
  %v848 = vpop.xlane.xlu0 %847
  %849 = vadd.xlane.f32.xlu0 %v835
  %v850 = vpop.xlane.xlu0 %849
  %851 = vadd.xlane.f32.xlu0 %v836
  %v852 = vpop.xlane.xlu0 %851
  %v853 = vmul.f32 %v838, %v126
  %v854 = vmul.f32 %v840, %v126
  %v855 = vmul.f32 %v842, %v126
  %v856 = vmul.f32 %v844, %v126
  %v857 = vmul.f32 %v846, %v126
  %v858 = vmul.f32 %v848, %v126
  %v859 = vmul.f32 %v850, %v126
  %v860 = vmul.f32 %v852, %v126
  %v861 = vsub.f32 %v829, %v853
  %v862 = vsub.f32 %v830, %v854
  %v863 = vsub.f32 %v831, %v855
  %v864 = vsub.f32 %v832, %v856
  %v865 = vsub.f32 %v833, %v857
  %v866 = vsub.f32 %v834, %v858
  %v867 = vsub.f32 %v835, %v859
  %v868 = vsub.f32 %v836, %v860
  %v869 = vmul.f32 %v861, %v861
  %v870 = vmul.f32 %v862, %v862
  %v871 = vmul.f32 %v863, %v863
  %v872 = vmul.f32 %v864, %v864
  %v873 = vmul.f32 %v865, %v865
  %v874 = vmul.f32 %v866, %v866
  %v875 = vmul.f32 %v867, %v867
  %v876 = vmul.f32 %v868, %v868
  %877 = vadd.xlane.f32.xlu0 %v869
  %v878 = vpop.xlane.xlu0 %877
  %879 = vadd.xlane.f32.xlu0 %v870
  %v880 = vpop.xlane.xlu0 %879
  %881 = vadd.xlane.f32.xlu0 %v871
  %v882 = vpop.xlane.xlu0 %881
  %883 = vadd.xlane.f32.xlu0 %v872
  %v884 = vpop.xlane.xlu0 %883
  %885 = vadd.xlane.f32.xlu0 %v873
  %v886 = vpop.xlane.xlu0 %885
  %887 = vadd.xlane.f32.xlu0 %v874
  %v888 = vpop.xlane.xlu0 %887
  %889 = vadd.xlane.f32.xlu0 %v875
  %v890 = vpop.xlane.xlu0 %889
  %891 = vadd.xlane.f32.xlu0 %v876
  %v892 = vpop.xlane.xlu0 %891
  %v893 = vmul.f32 %v878, %v126
  %v894 = vmul.f32 %v880, %v126
  %v895 = vmul.f32 %v882, %v126
  %v896 = vmul.f32 %v884, %v126
  %v897 = vmul.f32 %v886, %v126
  %v898 = vmul.f32 %v888, %v126
  %v899 = vmul.f32 %v890, %v126
  %v900 = vmul.f32 %v892, %v126
  %v901 = vadd.f32 %v893, 0.001
  %v902 = vadd.f32 %v894, 0.001
  %v903 = vadd.f32 %v895, 0.001
  %v904 = vadd.f32 %v896, 0.001
  %v905 = vadd.f32 %v897, 0.001
  %v906 = vadd.f32 %v898, 0.001
  %v907 = vadd.f32 %v899, 0.001
  %v908 = vadd.f32 %v900, 0.001
  %v909 = vrcp.pop %v901
  %v910 = vmul.f32 %v901, %v909
  %v911 = vsub.f32 1.0, %v910
  %v912 = vmul.f32 %v909, %v911
  %v913 = vadd.f32 %v909, %v912
  %vm914 = vweird.f32 %v901
  %vm915 = vweird.f32 %v909
  %vm916 = vmor %vm914, %vm915
  %v917 = vsel %vm916, %v909, %v913
  %v918 = vand.u32 2147483647, %v901
  %vm919 = vcmp.eq.f32.partialorder %v918, 8.507059e+37
  %v920 = vand.u32 %v901, 2147483648
  %v921 = vor.u32 1.1754944e-38, %v920
  %v922 = vsel %vm919, %v921, %v917
  %v923 = vmul.f32 %v893, %v922
  %v924 = vrcp.pop %v902
  %v925 = vmul.f32 %v902, %v924
  %v926 = vsub.f32 1.0, %v925
  %v927 = vmul.f32 %v924, %v926
  %v928 = vadd.f32 %v924, %v927
  %vm929 = vweird.f32 %v902
  %vm930 = vweird.f32 %v924
  %vm931 = vmor %vm929, %vm930
  %v932 = vsel %vm931, %v924, %v928
  %v933 = vand.u32 2147483647, %v902
  %vm934 = vcmp.eq.f32.partialorder %v933, 8.507059e+37
  %v935 = vand.u32 %v902, 2147483648
  %v936 = vor.u32 1.1754944e-38, %v935
  %v937 = vsel %vm934, %v936, %v932
  %v938 = vmul.f32 %v894, %v937
  %v939 = vrcp.pop %v903
  %v940 = vmul.f32 %v903, %v939
  %v941 = vsub.f32 1.0, %v940
  %v942 = vmul.f32 %v939, %v941
  %v943 = vadd.f32 %v939, %v942
  %vm944 = vweird.f32 %v903
  %vm945 = vweird.f32 %v939
  %vm946 = vmor %vm944, %vm945
  %v947 = vsel %vm946, %v939, %v943
  %v948 = vand.u32 2147483647, %v903
  %vm949 = vcmp.eq.f32.partialorder %v948, 8.507059e+37
  %v950 = vand.u32 %v903, 2147483648
  %v951 = vor.u32 1.1754944e-38, %v950
  %v952 = vsel %vm949, %v951, %v947
  %v953 = vmul.f32 %v895, %v952
  %v954 = vrcp.pop %v904
  %v955 = vmul.f32 %v904, %v954
  %v956 = vsub.f32 1.0, %v955
  %v957 = vmul.f32 %v954, %v956
  %v958 = vadd.f32 %v954, %v957
  %vm959 = vweird.f32 %v904
  %vm960 = vweird.f32 %v954
  %vm961 = vmor %vm959, %vm960
  %v962 = vsel %vm961, %v954, %v958
  %v963 = vand.u32 2147483647, %v904
  %vm964 = vcmp.eq.f32.partialorder %v963, 8.507059e+37
  %v965 = vand.u32 %v904, 2147483648
  %v966 = vor.u32 1.1754944e-38, %v965
  %v967 = vsel %vm964, %v966, %v962
  %v968 = vmul.f32 %v896, %v967
  %v969 = vrcp.pop %v905
  %v970 = vmul.f32 %v905, %v969
  %v971 = vsub.f32 1.0, %v970
  %v972 = vmul.f32 %v969, %v971
  %v973 = vadd.f32 %v969, %v972
  %vm974 = vweird.f32 %v905
  %vm975 = vweird.f32 %v969
  %vm976 = vmor %vm974, %vm975
  %v977 = vsel %vm976, %v969, %v973
  %v978 = vand.u32 2147483647, %v905
  %vm979 = vcmp.eq.f32.partialorder %v978, 8.507059e+37
  %v980 = vand.u32 %v905, 2147483648
  %v981 = vor.u32 1.1754944e-38, %v980
  %v982 = vsel %vm979, %v981, %v977
  %v983 = vmul.f32 %v897, %v982
  %v984 = vrcp.pop %v906
  %v985 = vmul.f32 %v906, %v984
  %v986 = vsub.f32 1.0, %v985
  %v987 = vmul.f32 %v984, %v986
  %v988 = vadd.f32 %v984, %v987
  %vm989 = vweird.f32 %v906
  %vm990 = vweird.f32 %v984
  %vm991 = vmor %vm989, %vm990
  %v992 = vsel %vm991, %v984, %v988
  %v993 = vand.u32 2147483647, %v906
  %vm994 = vcmp.eq.f32.partialorder %v993, 8.507059e+37
  %v995 = vand.u32 %v906, 2147483648
  %v996 = vor.u32 1.1754944e-38, %v995
  %v997 = vsel %vm994, %v996, %v992
  %v998 = vmul.f32 %v898, %v997
  %v999 = vrcp.pop %v907
  %v1000 = vmul.f32 %v907, %v999
  %v1001 = vsub.f32 1.0, %v1000
  %v1002 = vmul.f32 %v999, %v1001
  %v1003 = vadd.f32 %v999, %v1002
  %vm1004 = vweird.f32 %v907
  %vm1005 = vweird.f32 %v999
  %vm1006 = vmor %vm1004, %vm1005
  %v1007 = vsel %vm1006, %v999, %v1003
  %v1008 = vand.u32 2147483647, %v907
  %vm1009 = vcmp.eq.f32.partialorder %v1008, 8.507059e+37
  %v1010 = vand.u32 %v907, 2147483648
  %v1011 = vor.u32 1.1754944e-38, %v1010
  %v1012 = vsel %vm1009, %v1011, %v1007
  %v1013 = vmul.f32 %v899, %v1012
  %v1014 = vrcp.pop %v908
  %v1015 = vmul.f32 %v908, %v1014
  %v1016 = vsub.f32 1.0, %v1015
  %v1017 = vmul.f32 %v1014, %v1016
  %v1018 = vadd.f32 %v1014, %v1017
  %vm1019 = vweird.f32 %v908
  %vm1020 = vweird.f32 %v1014
  %vm1021 = vmor %vm1019, %vm1020
  %v1022 = vsel %vm1021, %v1014, %v1018
  %v1023 = vand.u32 2147483647, %v908
  %vm1024 = vcmp.eq.f32.partialorder %v1023, 8.507059e+37
  %v1025 = vand.u32 %v908, 2147483648
  %v1026 = vor.u32 1.1754944e-38, %v1025
  %v1027 = vsel %vm1024, %v1026, %v1022
  %v1028 = vmul.f32 %v900, %v1027
  %v1029 = vadd.f32 %v923, %v983
  %v1030 = vadd.f32 %v938, %v998
  %v1031 = vadd.f32 %v953, %v1013
  %v1032 = vadd.f32 %v968, %v1028
  %v1033 = vmul.f32 %v1029, %v313
  %v1034 = vmul.f32 %v1030, %v313
  %v1035 = vmul.f32 %v1031, %v313
  %v1036 = vmul.f32 %v1032, %v313
  %v1037 = vrsqrt.pop %v901
  %v1038 = vmul.f32 %v1037, %v901
  %v1039 = vmul.f32 %v1038, %v1037
  %v1040 = vmul.f32 0.5, %v1039
  %v1041 = vsub.f32 1.5, %v1040
  %v1042 = vmul.f32 %v1037, %v1041
  %vm1043 = vweird.f32 %v901
  %vm1044 = vweird.f32 %v1037
  %vm1045 = vmor %vm1043, %vm1044
  %v1046 = vsel %vm1045, %v1037, %v1042
  %v1047 = vrsqrt.pop %v902
  %v1048 = vmul.f32 %v1047, %v902
  %v1049 = vmul.f32 %v1048, %v1047
  %v1050 = vmul.f32 0.5, %v1049
  %v1051 = vsub.f32 1.5, %v1050
  %v1052 = vmul.f32 %v1047, %v1051
  %vm1053 = vweird.f32 %v902
  %vm1054 = vweird.f32 %v1047
  %vm1055 = vmor %vm1053, %vm1054
  %v1056 = vsel %vm1055, %v1047, %v1052
  %v1057 = vrsqrt.pop %v903
  %v1058 = vmul.f32 %v1057, %v903
  %v1059 = vmul.f32 %v1058, %v1057
  %v1060 = vmul.f32 0.5, %v1059
  %v1061 = vsub.f32 1.5, %v1060
  %v1062 = vmul.f32 %v1057, %v1061
  %vm1063 = vweird.f32 %v903
  %vm1064 = vweird.f32 %v1057
  %vm1065 = vmor %vm1063, %vm1064
  %v1066 = vsel %vm1065, %v1057, %v1062
  %v1067 = vrsqrt.pop %v904
  %v1068 = vmul.f32 %v1067, %v904
  %v1069 = vmul.f32 %v1068, %v1067
  %v1070 = vmul.f32 0.5, %v1069
  %v1071 = vsub.f32 1.5, %v1070
  %v1072 = vmul.f32 %v1067, %v1071
  %vm1073 = vweird.f32 %v904
  %vm1074 = vweird.f32 %v1067
  %vm1075 = vmor %vm1073, %vm1074
  %v1076 = vsel %vm1075, %v1067, %v1072
  %v1077 = vrsqrt.pop %v905
  %v1078 = vmul.f32 %v1077, %v905
  %v1079 = vmul.f32 %v1078, %v1077
  %v1080 = vmul.f32 0.5, %v1079
  %v1081 = vsub.f32 1.5, %v1080
  %v1082 = vmul.f32 %v1077, %v1081
  %vm1083 = vweird.f32 %v905
  %vm1084 = vweird.f32 %v1077
  %vm1085 = vmor %vm1083, %vm1084
  %v1086 = vsel %vm1085, %v1077, %v1082
  %v1087 = vrsqrt.pop %v906
  %v1088 = vmul.f32 %v1087, %v906
  %v1089 = vmul.f32 %v1088, %v1087
  %v1090 = vmul.f32 0.5, %v1089
  %v1091 = vsub.f32 1.5, %v1090
  %v1092 = vmul.f32 %v1087, %v1091
  %vm1093 = vweird.f32 %v906
  %vm1094 = vweird.f32 %v1087
  %vm1095 = vmor %vm1093, %vm1094
  %v1096 = vsel %vm1095, %v1087, %v1092
  %v1097 = vrsqrt.pop %v907
  %v1098 = vmul.f32 %v1097, %v907
  %v1099 = vmul.f32 %v1098, %v1097
  %v1100 = vmul.f32 0.5, %v1099
  %v1101 = vsub.f32 1.5, %v1100
  %v1102 = vmul.f32 %v1097, %v1101
  %vm1103 = vweird.f32 %v907
  %vm1104 = vweird.f32 %v1097
  %vm1105 = vmor %vm1103, %vm1104
  %v1106 = vsel %vm1105, %v1097, %v1102
  %v1107 = vrsqrt.pop %v908
  %v1108 = vmul.f32 %v1107, %v908
  %v1109 = vmul.f32 %v1108, %v1107
  %v1110 = vmul.f32 0.5, %v1109
  %v1111 = vsub.f32 1.5, %v1110
  %v1112 = vmul.f32 %v1107, %v1111
  %vm1113 = vweird.f32 %v908
  %vm1114 = vweird.f32 %v1107
  %vm1115 = vmor %vm1113, %vm1114
  %v1116 = vsel %vm1115, %v1107, %v1112
  %v1117 = vadd.f32 %v1033, 1e-05
  %v1118 = vadd.f32 %v1034, 1e-05
  %v1119 = vadd.f32 %v1035, 1e-05
  %v1120 = vadd.f32 %v1036, 1e-05
  %v1121 = vrsqrt.pop %v1117
  %v1122 = vmul.f32 %v1121, %v1117
  %v1123 = vmul.f32 %v1122, %v1121
  %v1124 = vmul.f32 0.5, %v1123
  %v1125 = vsub.f32 1.5, %v1124
  %v1126 = vmul.f32 %v1121, %v1125
  %vm1127 = vweird.f32 %v1117
  %vm1128 = vweird.f32 %v1121
  %vm1129 = vmor %vm1127, %vm1128
  %v1130 = vsel %vm1129, %v1121, %v1126
  %v1131 = vrsqrt.pop %v1118
  %v1132 = vmul.f32 %v1131, %v1118
  %v1133 = vmul.f32 %v1132, %v1131
  %v1134 = vmul.f32 0.5, %v1133
  %v1135 = vsub.f32 1.5, %v1134
  %v1136 = vmul.f32 %v1131, %v1135
  %vm1137 = vweird.f32 %v1118
  %vm1138 = vweird.f32 %v1131
  %vm1139 = vmor %vm1137, %vm1138
  %v1140 = vsel %vm1139, %v1131, %v1136
  %v1141 = vrsqrt.pop %v1119
  %v1142 = vmul.f32 %v1141, %v1119
  %v1143 = vmul.f32 %v1142, %v1141
  %v1144 = vmul.f32 0.5, %v1143
  %v1145 = vsub.f32 1.5, %v1144
  %v1146 = vmul.f32 %v1141, %v1145
  %vm1147 = vweird.f32 %v1119
  %vm1148 = vweird.f32 %v1141
  %vm1149 = vmor %vm1147, %vm1148
  %v1150 = vsel %vm1149, %v1141, %v1146
  %v1151 = vrsqrt.pop %v1120
  %v1152 = vmul.f32 %v1151, %v1120
  %v1153 = vmul.f32 %v1152, %v1151
  %v1154 = vmul.f32 0.5, %v1153
  %v1155 = vsub.f32 1.5, %v1154
  %v1156 = vmul.f32 %v1151, %v1155
  %vm1157 = vweird.f32 %v1120
  %vm1158 = vweird.f32 %v1151
  %vm1159 = vmor %vm1157, %vm1158
  %v1160 = vsel %vm1159, %v1151, %v1156
  %v1161 = vmul.f32 %v1046, %v1130
  %v1162 = vmul.f32 %v1056, %v1140
  %v1163 = vmul.f32 %v1066, %v1150
  %v1164 = vmul.f32 %v1076, %v1160
  %v1165 = vmul.f32 %v1086, %v1130
  %v1166 = vmul.f32 %v1096, %v1140
  %v1167 = vmul.f32 %v1106, %v1150
  %v1168 = vmul.f32 %v1116, %v1160
  %v1169 = vmul.f32 %v861, %v1161
  %v1170 = vmul.f32 %v862, %v1162
  %v1171 = vmul.f32 %v863, %v1163
  %v1172 = vmul.f32 %v864, %v1164
  %v1173 = vmul.f32 %v865, %v1165
  %v1174 = vmul.f32 %v866, %v1166
  %v1175 = vmul.f32 %v867, %v1167
  %v1176 = vmul.f32 %v868, %v1168
  %1178 = vset.pattern.permute.xlu0 0
  %1179 = vperm.xlu0 %1178, %v68
  %v1180 = vpop.permute.xlu0 %1179
  %1183 = vset.pattern.permute.xlu0 0
  %1184 = vperm.xlu0 %1183, %v69
  %v1185 = vpop.permute.xlu0 %1184
  %1188 = vset.pattern.permute.xlu0 0
  %1189 = vperm.xlu0 %1188, %v70
  %v1190 = vpop.permute.xlu0 %1189
  %1193 = vset.pattern.permute.xlu0 0
  %1194 = vperm.xlu0 %1193, %v71
  %v1195 = vpop.permute.xlu0 %1194
  %v1197 = vmul.f32 %v1169, %v1180
  %v1198 = vmul.f32 %v1170, %v1185
  %v1199 = vmul.f32 %v1171, %v1190
  %v1200 = vmul.f32 %v1172, %v1195
  %v1201 = vmul.f32 %v1173, %v1180
  %v1202 = vmul.f32 %v1174, %v1185
  %v1203 = vmul.f32 %v1175, %v1190
  %v1204 = vmul.f32 %v1176, %v1195
  %1206 = vset.pattern.permute.xlu0 0
  %1207 = vperm.xlu0 %1206, %v72
  %v1208 = vpop.permute.xlu0 %1207
  %1211 = vset.pattern.permute.xlu0 0
  %1212 = vperm.xlu0 %1211, %v73
  %v1213 = vpop.permute.xlu0 %1212
  %1216 = vset.pattern.permute.xlu0 0
  %1217 = vperm.xlu0 %1216, %v74
  %v1218 = vpop.permute.xlu0 %1217
  %1221 = vset.pattern.permute.xlu0 0
  %1222 = vperm.xlu0 %1221, %v75
  %v1223 = vpop.permute.xlu0 %1222
  %v1225 = vadd.f32 %v1197, %v1208
  %v1226 = vadd.f32 %v1198, %v1213
  %v1227 = vadd.f32 %v1199, %v1218
  %v1228 = vadd.f32 %v1200, %v1223
  %v1229 = vadd.f32 %v1201, %v1208
  %v1230 = vadd.f32 %v1202, %v1213
  %v1231 = vadd.f32 %v1203, %v1218
  %v1232 = vadd.f32 %v1204, %v1223
  %v1233 = vmax.f32 %v1225, 0.0
  %v1234 = vmax.f32 %v1226, 0.0
  %v1235 = vmax.f32 %v1227, 0.0
  %v1236 = vmax.f32 %v1228, 0.0
  %v1237 = vmax.f32 %v1229, 0.0
  %v1238 = vmax.f32 %v1230, 0.0
  %v1239 = vmax.f32 %v1231, 0.0
  %v1240 = vmax.f32 %v1232, 0.0
  %v1241 = vpack.c.bf16 %v1233, %v1233
  %v1242 = vpack.c.bf16 %v1234, %v1234
  %v1243 = vpack.c.bf16 %v1235, %v1235
  %v1244 = vpack.c.bf16 %v1236, %v1236
  %v1245 = vpack.c.bf16 %v1237, %v1237
  %v1246 = vpack.c.bf16 %v1238, %v1238
  %v1247 = vpack.c.bf16 %v1239, %v1239
  %v1248 = vpack.c.bf16 %v1240, %v1240
  %1250 = vset.pattern.permute.xlu0 0
  %1251 = vperm.xlu0 %1250, %v76
  %v1252 = vpop.permute.xlu0 %1251
  %1255 = vset.pattern.permute.xlu0 0
  %1256 = vperm.xlu0 %1255, %v77
  %v1257 = vpop.permute.xlu0 %1256
  %1260 = vset.pattern.permute.xlu0 0
  %1261 = vperm.xlu0 %1260, %v78
  %v1262 = vpop.permute.xlu0 %1261
  %1265 = vset.pattern.permute.xlu0 0
  %1266 = vperm.xlu0 %1265, %v79
  %v1267 = vpop.permute.xlu0 %1266
  %v1273 = vunpack.c.l.b16 %v84
  %v1274 = vunpack.c.l.b16 %v85
  %v1275 = vunpack.c.l.b16 %v86
  %v1276 = vunpack.c.l.b16 %v87
  %v1277 = vpack.c.b16 %v1274, %v1273
  %v1278 = vpack.c.b16 %v1276, %v1275
  %v1283 = vunpack.c.l.b16 %v1241
  %v1284 = vunpack.c.l.b16 %v1242
  %v1285 = vunpack.c.l.b16 %v1243
  %v1286 = vunpack.c.l.b16 %v1244
  %v1287 = vpack.c.b16 %v1284, %v1283
  %v1288 = vpack.c.b16 %v1286, %v1285
  %v1292 = vsel %vm572, %v1277, 0
  %v1295 = vsel %vm572, %v1278, 0
  %1297 = vmatpush.bf16.msra.mxu0 0
  %1298 = vmatpush.bf16.msra.mxu0 0
  %1299 = vmatpush.bf16.msra.mxu0 0
  %1300 = vmatpush.bf16.msra.mxu0 0
  %1301 = vmatpush.bf16.msra.mxu0 0
  %1302 = vmatpush.bf16.msra.mxu0 0
  %1303 = vmatpush.bf16.msra.mxu0 %v1288
  %1304 = vmatpush.bf16.msra.mxu0 %v1287
  %1305 = vmatmul.bf16.gmra.mxu0 %v1292
  %v1306 = vpop.f32.mrf.mxu0
  %v1307 = vadd.f32 %v1252, %v1306
  %v1308 = vpop.f32.mrf.mxu0
  %v1309 = vadd.f32 %v1257, %v1308
  %1310 = vmatmul.bf16.gmra.mxu0 %v1295
  %v1311 = vpop.f32.mrf.mxu0
  %v1312 = vadd.f32 %v1262, %v1311
  %v1313 = vpop.f32.mrf.mxu0
  %v1314 = vadd.f32 %v1267, %v1313
  %1315 = vdwg.mxu0
  %v1320 = vunpack.c.l.b16 %v1245
  %v1321 = vunpack.c.l.b16 %v1246
  %v1322 = vunpack.c.l.b16 %v1247
  %v1323 = vunpack.c.l.b16 %v1248
  %v1324 = vpack.c.b16 %v1321, %v1320
  %v1325 = vpack.c.b16 %v1323, %v1322
  %1328 = vmatpush.bf16.msra.mxu0 0
  %1329 = vmatpush.bf16.msra.mxu0 0
  %1330 = vmatpush.bf16.msra.mxu0 0
  %1331 = vmatpush.bf16.msra.mxu0 0
  %1332 = vmatpush.bf16.msra.mxu0 0
  %1333 = vmatpush.bf16.msra.mxu0 0
  %1334 = vmatpush.bf16.msra.mxu0 %v1325
  %1335 = vmatpush.bf16.msra.mxu0 %v1324
  %1336 = vmatmul.bf16.gmra.mxu0 %v1292
  %v1337 = vpop.f32.mrf.mxu0
  %v1338 = vadd.f32 %v1252, %v1337
  %v1339 = vpop.f32.mrf.mxu0
  %v1340 = vadd.f32 %v1257, %v1339
  %1341 = vmatmul.bf16.gmra.mxu0 %v1295
  %v1342 = vpop.f32.mrf.mxu0
  %v1343 = vadd.f32 %v1262, %v1342
  %v1344 = vpop.f32.mrf.mxu0
  %v1345 = vadd.f32 %v1267, %v1344
  %1346 = vdwg.mxu0
  %v1347 = vadd.f32 %v1307, %v45
  %v1348 = vadd.f32 %v1309, %v46
  %v1349 = vadd.f32 %v1312, %v47
  %v1350 = vadd.f32 %v1314, %v48
  %v1351 = vadd.f32 %v1338, %v49
  %v1352 = vadd.f32 %v1340, %v50
  %v1353 = vadd.f32 %v1343, %v51
  %v1354 = vadd.f32 %v1345, %v52
  %s1355 = scalar_lea.vmem %s1, 32
  %v1356 = vld [vmem:[%s1355] sm:$0xff]
  %v1357 = vld [vmem:[%s1355 + $0x8] sm:$0xff]
  %v1358 = vld [vmem:[%s1355 + $0x10] sm:$0xff]
  %v1359 = vld [vmem:[%s1355 + $0x18] sm:$0xff]
  %s1360 = scalar_lea.vmem %s2, 32
  %v1361 = vld [vmem:[%s1360] sm:$0xff]
  %v1362 = vld [vmem:[%s1360 + $0x8] sm:$0xff]
  %v1363 = vld [vmem:[%s1360 + $0x10] sm:$0xff]
  %v1364 = vld [vmem:[%s1360 + $0x18] sm:$0xff]
  %s1365 = scalar_lea.vmem %s4, 32
  %v1366 = vld [vmem:[%s1365] sm:$0xff]
  %v1367 = vld [vmem:[%s1365 + $0x8] sm:$0xff]
  %v1368 = vld [vmem:[%s1365 + $0x10] sm:$0xff]
  %v1369 = vld [vmem:[%s1365 + $0x18] sm:$0xff]
  %s1370 = scalar_lea.vmem %s5, 1
  %v1371 = vld [vmem:[%s1370] sm:$0x1]
  %s1372 = scalar_lea.vmem %s6, 1
  %v1373 = vld [vmem:[%s1372] sm:$0x1]
  %s1374 = scalar_lea.vmem %s8, 1
  %v1375 = vld [vmem:[%s1374] sm:$0x1]
  %s1376 = scalar_lea.vmem %s9, 32
  %v1377 = vld [vmem:[%s1376] sm:$0xff]
  %v1378 = vld [vmem:[%s1376 + $0x8] sm:$0xff]
  %v1379 = vld [vmem:[%s1376 + $0x10] sm:$0xff]
  %v1380 = vld [vmem:[%s1376 + $0x18] sm:$0xff]
  %s1381 = scalar_lea.vmem %s10, 32
  %v1382 = vld [vmem:[%s1381] sm:$0xff]
  %v1383 = vld [vmem:[%s1381 + $0x8] sm:$0xff]
  %v1384 = vld [vmem:[%s1381 + $0x10] sm:$0xff]
  %v1385 = vld [vmem:[%s1381 + $0x18] sm:$0xff]
  %s1386 = scalar_lea.vmem %s12, 32
  %v1387 = vld [vmem:[%s1386] sm:$0xff]
  %v1388 = vld [vmem:[%s1386 + $0x8] sm:$0xff]
  %v1389 = vld [vmem:[%s1386 + $0x10] sm:$0xff]
  %v1390 = vld [vmem:[%s1386 + $0x18] sm:$0xff]
  %s1391 = scalar_lea.vmem %s3, 16
  %v1392 = vld [vmem:[%s1391] sm:$0xf]
  %v1393 = vld [vmem:[%s1391 + $0x4] sm:$0xf]
  %v1394 = vld [vmem:[%s1391 + $0x8] sm:$0xf]
  %v1395 = vld [vmem:[%s1391 + $0xc] sm:$0xf]
  %s1396 = scalar_lea.vmem %s11, 16
  %v1397 = vld [vmem:[%s1396] sm:$0xf]
  %v1398 = vld [vmem:[%s1396 + $0x4] sm:$0xf]
  %v1399 = vld [vmem:[%s1396 + $0x8] sm:$0xf]
  %v1400 = vld [vmem:[%s1396 + $0xc] sm:$0xf]
  %s1401 = scalar_lea.vmem %s7, 64
  %v1402 = vld [vmem:[%s1401] sm:$0xf]
  %v1403 = vld [vmem:[%s1401 + $0x4] sm:$0xf]
  %v1404 = vld [vmem:[%s1401 + $0x8] sm:$0xf]
  %v1405 = vld [vmem:[%s1401 + $0xc] sm:$0xf]
  %v1406 = vld [vmem:[%s1401 + $0x10] sm:$0xf]
  %v1407 = vld [vmem:[%s1401 + $0x14] sm:$0xf]
  %v1408 = vld [vmem:[%s1401 + $0x18] sm:$0xf]
  %v1409 = vld [vmem:[%s1401 + $0x1c] sm:$0xf]
  %v1410 = vld [vmem:[%s1401 + $0x20] sm:$0xf]
  %v1411 = vld [vmem:[%s1401 + $0x24] sm:$0xf]
  %v1412 = vld [vmem:[%s1401 + $0x28] sm:$0xf]
  %v1413 = vld [vmem:[%s1401 + $0x2c] sm:$0xf]
  %v1414 = vld [vmem:[%s1401 + $0x30] sm:$0xf]
  %v1415 = vld [vmem:[%s1401 + $0x34] sm:$0xf]
  %v1416 = vld [vmem:[%s1401 + $0x38] sm:$0xf]
  %v1417 = vld [vmem:[%s1401 + $0x3c] sm:$0xf]
  %1418 = vadd.xlane.f32.xlu0 %v1347
  %v1419 = vpop.xlane.xlu0 %1418
  %1420 = vadd.xlane.f32.xlu0 %v1348
  %v1421 = vpop.xlane.xlu0 %1420
  %1422 = vadd.xlane.f32.xlu0 %v1349
  %v1423 = vpop.xlane.xlu0 %1422
  %1424 = vadd.xlane.f32.xlu0 %v1350
  %v1425 = vpop.xlane.xlu0 %1424
  %1426 = vadd.xlane.f32.xlu0 %v1351
  %v1427 = vpop.xlane.xlu0 %1426
  %1428 = vadd.xlane.f32.xlu0 %v1352
  %v1429 = vpop.xlane.xlu0 %1428
  %1430 = vadd.xlane.f32.xlu0 %v1353
  %v1431 = vpop.xlane.xlu0 %1430
  %1432 = vadd.xlane.f32.xlu0 %v1354
  %v1433 = vpop.xlane.xlu0 %1432
  %v1434 = vmul.f32 %v1419, %v126
  %v1435 = vmul.f32 %v1421, %v126
  %v1436 = vmul.f32 %v1423, %v126
  %v1437 = vmul.f32 %v1425, %v126
  %v1438 = vmul.f32 %v1427, %v126
  %v1439 = vmul.f32 %v1429, %v126
  %v1440 = vmul.f32 %v1431, %v126
  %v1441 = vmul.f32 %v1433, %v126
  %v1442 = vsub.f32 %v1347, %v1434
  %v1443 = vsub.f32 %v1348, %v1435
  %v1444 = vsub.f32 %v1349, %v1436
  %v1445 = vsub.f32 %v1350, %v1437
  %v1446 = vsub.f32 %v1351, %v1438
  %v1447 = vsub.f32 %v1352, %v1439
  %v1448 = vsub.f32 %v1353, %v1440
  %v1449 = vsub.f32 %v1354, %v1441
  %v1450 = vmul.f32 %v1442, %v1442
  %v1451 = vmul.f32 %v1443, %v1443
  %v1452 = vmul.f32 %v1444, %v1444
  %v1453 = vmul.f32 %v1445, %v1445
  %v1454 = vmul.f32 %v1446, %v1446
  %v1455 = vmul.f32 %v1447, %v1447
  %v1456 = vmul.f32 %v1448, %v1448
  %v1457 = vmul.f32 %v1449, %v1449
  %1458 = vadd.xlane.f32.xlu0 %v1450
  %v1459 = vpop.xlane.xlu0 %1458
  %1460 = vadd.xlane.f32.xlu0 %v1451
  %v1461 = vpop.xlane.xlu0 %1460
  %1462 = vadd.xlane.f32.xlu0 %v1452
  %v1463 = vpop.xlane.xlu0 %1462
  %1464 = vadd.xlane.f32.xlu0 %v1453
  %v1465 = vpop.xlane.xlu0 %1464
  %1466 = vadd.xlane.f32.xlu0 %v1454
  %v1467 = vpop.xlane.xlu0 %1466
  %1468 = vadd.xlane.f32.xlu0 %v1455
  %v1469 = vpop.xlane.xlu0 %1468
  %1470 = vadd.xlane.f32.xlu0 %v1456
  %v1471 = vpop.xlane.xlu0 %1470
  %1472 = vadd.xlane.f32.xlu0 %v1457
  %v1473 = vpop.xlane.xlu0 %1472
  %v1474 = vmul.f32 %v1459, %v126
  %v1475 = vmul.f32 %v1461, %v126
  %v1476 = vmul.f32 %v1463, %v126
  %v1477 = vmul.f32 %v1465, %v126
  %v1478 = vmul.f32 %v1467, %v126
  %v1479 = vmul.f32 %v1469, %v126
  %v1480 = vmul.f32 %v1471, %v126
  %v1481 = vmul.f32 %v1473, %v126
  %v1482 = vadd.f32 %v1474, 0.001
  %v1483 = vadd.f32 %v1475, 0.001
  %v1484 = vadd.f32 %v1476, 0.001
  %v1485 = vadd.f32 %v1477, 0.001
  %v1486 = vadd.f32 %v1478, 0.001
  %v1487 = vadd.f32 %v1479, 0.001
  %v1488 = vadd.f32 %v1480, 0.001
  %v1489 = vadd.f32 %v1481, 0.001
  %v1490 = vrcp.pop %v1482
  %v1491 = vmul.f32 %v1482, %v1490
  %v1492 = vsub.f32 1.0, %v1491
  %v1493 = vmul.f32 %v1490, %v1492
  %v1494 = vadd.f32 %v1490, %v1493
  %vm1495 = vweird.f32 %v1482
  %vm1496 = vweird.f32 %v1490
  %vm1497 = vmor %vm1495, %vm1496
  %v1498 = vsel %vm1497, %v1490, %v1494
  %v1499 = vand.u32 2147483647, %v1482
  %vm1500 = vcmp.eq.f32.partialorder %v1499, 8.507059e+37
  %v1501 = vand.u32 %v1482, 2147483648
  %v1502 = vor.u32 1.1754944e-38, %v1501
  %v1503 = vsel %vm1500, %v1502, %v1498
  %v1504 = vmul.f32 %v1474, %v1503
  %v1505 = vrcp.pop %v1483
  %v1506 = vmul.f32 %v1483, %v1505
  %v1507 = vsub.f32 1.0, %v1506
  %v1508 = vmul.f32 %v1505, %v1507
  %v1509 = vadd.f32 %v1505, %v1508
  %vm1510 = vweird.f32 %v1483
  %vm1511 = vweird.f32 %v1505
  %vm1512 = vmor %vm1510, %vm1511
  %v1513 = vsel %vm1512, %v1505, %v1509
  %v1514 = vand.u32 2147483647, %v1483
  %vm1515 = vcmp.eq.f32.partialorder %v1514, 8.507059e+37
  %v1516 = vand.u32 %v1483, 2147483648
  %v1517 = vor.u32 1.1754944e-38, %v1516
  %v1518 = vsel %vm1515, %v1517, %v1513
  %v1519 = vmul.f32 %v1475, %v1518
  %v1520 = vrcp.pop %v1484
  %v1521 = vmul.f32 %v1484, %v1520
  %v1522 = vsub.f32 1.0, %v1521
  %v1523 = vmul.f32 %v1520, %v1522
  %v1524 = vadd.f32 %v1520, %v1523
  %vm1525 = vweird.f32 %v1484
  %vm1526 = vweird.f32 %v1520
  %vm1527 = vmor %vm1525, %vm1526
  %v1528 = vsel %vm1527, %v1520, %v1524
  %v1529 = vand.u32 2147483647, %v1484
  %vm1530 = vcmp.eq.f32.partialorder %v1529, 8.507059e+37
  %v1531 = vand.u32 %v1484, 2147483648
  %v1532 = vor.u32 1.1754944e-38, %v1531
  %v1533 = vsel %vm1530, %v1532, %v1528
  %v1534 = vmul.f32 %v1476, %v1533
  %v1535 = vrcp.pop %v1485
  %v1536 = vmul.f32 %v1485, %v1535
  %v1537 = vsub.f32 1.0, %v1536
  %v1538 = vmul.f32 %v1535, %v1537
  %v1539 = vadd.f32 %v1535, %v1538
  %vm1540 = vweird.f32 %v1485
  %vm1541 = vweird.f32 %v1535
  %vm1542 = vmor %vm1540, %vm1541
  %v1543 = vsel %vm1542, %v1535, %v1539
  %v1544 = vand.u32 2147483647, %v1485
  %vm1545 = vcmp.eq.f32.partialorder %v1544, 8.507059e+37
  %v1546 = vand.u32 %v1485, 2147483648
  %v1547 = vor.u32 1.1754944e-38, %v1546
  %v1548 = vsel %vm1545, %v1547, %v1543
  %v1549 = vmul.f32 %v1477, %v1548
  %v1550 = vrcp.pop %v1486
  %v1551 = vmul.f32 %v1486, %v1550
  %v1552 = vsub.f32 1.0, %v1551
  %v1553 = vmul.f32 %v1550, %v1552
  %v1554 = vadd.f32 %v1550, %v1553
  %vm1555 = vweird.f32 %v1486
  %vm1556 = vweird.f32 %v1550
  %vm1557 = vmor %vm1555, %vm1556
  %v1558 = vsel %vm1557, %v1550, %v1554
  %v1559 = vand.u32 2147483647, %v1486
  %vm1560 = vcmp.eq.f32.partialorder %v1559, 8.507059e+37
  %v1561 = vand.u32 %v1486, 2147483648
  %v1562 = vor.u32 1.1754944e-38, %v1561
  %v1563 = vsel %vm1560, %v1562, %v1558
  %v1564 = vmul.f32 %v1478, %v1563
  %v1565 = vrcp.pop %v1487
  %v1566 = vmul.f32 %v1487, %v1565
  %v1567 = vsub.f32 1.0, %v1566
  %v1568 = vmul.f32 %v1565, %v1567
  %v1569 = vadd.f32 %v1565, %v1568
  %vm1570 = vweird.f32 %v1487
  %vm1571 = vweird.f32 %v1565
  %vm1572 = vmor %vm1570, %vm1571
  %v1573 = vsel %vm1572, %v1565, %v1569
  %v1574 = vand.u32 2147483647, %v1487
  %vm1575 = vcmp.eq.f32.partialorder %v1574, 8.507059e+37
  %v1576 = vand.u32 %v1487, 2147483648
  %v1577 = vor.u32 1.1754944e-38, %v1576
  %v1578 = vsel %vm1575, %v1577, %v1573
  %v1579 = vmul.f32 %v1479, %v1578
  %v1580 = vrcp.pop %v1488
  %v1581 = vmul.f32 %v1488, %v1580
  %v1582 = vsub.f32 1.0, %v1581
  %v1583 = vmul.f32 %v1580, %v1582
  %v1584 = vadd.f32 %v1580, %v1583
  %vm1585 = vweird.f32 %v1488
  %vm1586 = vweird.f32 %v1580
  %vm1587 = vmor %vm1585, %vm1586
  %v1588 = vsel %vm1587, %v1580, %v1584
  %v1589 = vand.u32 2147483647, %v1488
  %vm1590 = vcmp.eq.f32.partialorder %v1589, 8.507059e+37
  %v1591 = vand.u32 %v1488, 2147483648
  %v1592 = vor.u32 1.1754944e-38, %v1591
  %v1593 = vsel %vm1590, %v1592, %v1588
  %v1594 = vmul.f32 %v1480, %v1593
  %v1595 = vrcp.pop %v1489
  %v1596 = vmul.f32 %v1489, %v1595
  %v1597 = vsub.f32 1.0, %v1596
  %v1598 = vmul.f32 %v1595, %v1597
  %v1599 = vadd.f32 %v1595, %v1598
  %vm1600 = vweird.f32 %v1489
  %vm1601 = vweird.f32 %v1595
  %vm1602 = vmor %vm1600, %vm1601
  %v1603 = vsel %vm1602, %v1595, %v1599
  %v1604 = vand.u32 2147483647, %v1489
  %vm1605 = vcmp.eq.f32.partialorder %v1604, 8.507059e+37
  %v1606 = vand.u32 %v1489, 2147483648
  %v1607 = vor.u32 1.1754944e-38, %v1606
  %v1608 = vsel %vm1605, %v1607, %v1603
  %v1609 = vmul.f32 %v1481, %v1608
  %v1610 = vadd.f32 %v1504, %v1564
  %v1611 = vadd.f32 %v1519, %v1579
  %v1612 = vadd.f32 %v1534, %v1594
  %v1613 = vadd.f32 %v1549, %v1609
  %v1614 = vmul.f32 %v1610, %v313
  %v1615 = vmul.f32 %v1611, %v313
  %v1616 = vmul.f32 %v1612, %v313
  %v1617 = vmul.f32 %v1613, %v313
  %v1618 = vrsqrt.pop %v1482
  %v1619 = vmul.f32 %v1618, %v1482
  %v1620 = vmul.f32 %v1619, %v1618
  %v1621 = vmul.f32 0.5, %v1620
  %v1622 = vsub.f32 1.5, %v1621
  %v1623 = vmul.f32 %v1618, %v1622
  %vm1624 = vweird.f32 %v1482
  %vm1625 = vweird.f32 %v1618
  %vm1626 = vmor %vm1624, %vm1625
  %v1627 = vsel %vm1626, %v1618, %v1623
  %v1628 = vrsqrt.pop %v1483
  %v1629 = vmul.f32 %v1628, %v1483
  %v1630 = vmul.f32 %v1629, %v1628
  %v1631 = vmul.f32 0.5, %v1630
  %v1632 = vsub.f32 1.5, %v1631
  %v1633 = vmul.f32 %v1628, %v1632
  %vm1634 = vweird.f32 %v1483
  %vm1635 = vweird.f32 %v1628
  %vm1636 = vmor %vm1634, %vm1635
  %v1637 = vsel %vm1636, %v1628, %v1633
  %v1638 = vrsqrt.pop %v1484
  %v1639 = vmul.f32 %v1638, %v1484
  %v1640 = vmul.f32 %v1639, %v1638
  %v1641 = vmul.f32 0.5, %v1640
  %v1642 = vsub.f32 1.5, %v1641
  %v1643 = vmul.f32 %v1638, %v1642
  %vm1644 = vweird.f32 %v1484
  %vm1645 = vweird.f32 %v1638
  %vm1646 = vmor %vm1644, %vm1645
  %v1647 = vsel %vm1646, %v1638, %v1643
  %v1648 = vrsqrt.pop %v1485
  %v1649 = vmul.f32 %v1648, %v1485
  %v1650 = vmul.f32 %v1649, %v1648
  %v1651 = vmul.f32 0.5, %v1650
  %v1652 = vsub.f32 1.5, %v1651
  %v1653 = vmul.f32 %v1648, %v1652
  %vm1654 = vweird.f32 %v1485
  %vm1655 = vweird.f32 %v1648
  %vm1656 = vmor %vm1654, %vm1655
  %v1657 = vsel %vm1656, %v1648, %v1653
  %v1658 = vrsqrt.pop %v1486
  %v1659 = vmul.f32 %v1658, %v1486
  %v1660 = vmul.f32 %v1659, %v1658
  %v1661 = vmul.f32 0.5, %v1660
  %v1662 = vsub.f32 1.5, %v1661
  %v1663 = vmul.f32 %v1658, %v1662
  %vm1664 = vweird.f32 %v1486
  %vm1665 = vweird.f32 %v1658
  %vm1666 = vmor %vm1664, %vm1665
  %v1667 = vsel %vm1666, %v1658, %v1663
  %v1668 = vrsqrt.pop %v1487
  %v1669 = vmul.f32 %v1668, %v1487
  %v1670 = vmul.f32 %v1669, %v1668
  %v1671 = vmul.f32 0.5, %v1670
  %v1672 = vsub.f32 1.5, %v1671
  %v1673 = vmul.f32 %v1668, %v1672
  %vm1674 = vweird.f32 %v1487
  %vm1675 = vweird.f32 %v1668
  %vm1676 = vmor %vm1674, %vm1675
  %v1677 = vsel %vm1676, %v1668, %v1673
  %v1678 = vrsqrt.pop %v1488
  %v1679 = vmul.f32 %v1678, %v1488
  %v1680 = vmul.f32 %v1679, %v1678
  %v1681 = vmul.f32 0.5, %v1680
  %v1682 = vsub.f32 1.5, %v1681
  %v1683 = vmul.f32 %v1678, %v1682
  %vm1684 = vweird.f32 %v1488
  %vm1685 = vweird.f32 %v1678
  %vm1686 = vmor %vm1684, %vm1685
  %v1687 = vsel %vm1686, %v1678, %v1683
  %v1688 = vrsqrt.pop %v1489
  %v1689 = vmul.f32 %v1688, %v1489
  %v1690 = vmul.f32 %v1689, %v1688
  %v1691 = vmul.f32 0.5, %v1690
  %v1692 = vsub.f32 1.5, %v1691
  %v1693 = vmul.f32 %v1688, %v1692
  %vm1694 = vweird.f32 %v1489
  %vm1695 = vweird.f32 %v1688
  %vm1696 = vmor %vm1694, %vm1695
  %v1697 = vsel %vm1696, %v1688, %v1693
  %v1698 = vadd.f32 %v1614, 1e-05
  %v1699 = vadd.f32 %v1615, 1e-05
  %v1700 = vadd.f32 %v1616, 1e-05
  %v1701 = vadd.f32 %v1617, 1e-05
  %v1702 = vrsqrt.pop %v1698
  %v1703 = vmul.f32 %v1702, %v1698
  %v1704 = vmul.f32 %v1703, %v1702
  %v1705 = vmul.f32 0.5, %v1704
  %v1706 = vsub.f32 1.5, %v1705
  %v1707 = vmul.f32 %v1702, %v1706
  %vm1708 = vweird.f32 %v1698
  %vm1709 = vweird.f32 %v1702
  %vm1710 = vmor %vm1708, %vm1709
  %v1711 = vsel %vm1710, %v1702, %v1707
  %v1712 = vrsqrt.pop %v1699
  %v1713 = vmul.f32 %v1712, %v1699
  %v1714 = vmul.f32 %v1713, %v1712
  %v1715 = vmul.f32 0.5, %v1714
  %v1716 = vsub.f32 1.5, %v1715
  %v1717 = vmul.f32 %v1712, %v1716
  %vm1718 = vweird.f32 %v1699
  %vm1719 = vweird.f32 %v1712
  %vm1720 = vmor %vm1718, %vm1719
  %v1721 = vsel %vm1720, %v1712, %v1717
  %v1722 = vrsqrt.pop %v1700
  %v1723 = vmul.f32 %v1722, %v1700
  %v1724 = vmul.f32 %v1723, %v1722
  %v1725 = vmul.f32 0.5, %v1724
  %v1726 = vsub.f32 1.5, %v1725
  %v1727 = vmul.f32 %v1722, %v1726
  %vm1728 = vweird.f32 %v1700
  %vm1729 = vweird.f32 %v1722
  %vm1730 = vmor %vm1728, %vm1729
  %v1731 = vsel %vm1730, %v1722, %v1727
  %v1732 = vrsqrt.pop %v1701
  %v1733 = vmul.f32 %v1732, %v1701
  %v1734 = vmul.f32 %v1733, %v1732
  %v1735 = vmul.f32 0.5, %v1734
  %v1736 = vsub.f32 1.5, %v1735
  %v1737 = vmul.f32 %v1732, %v1736
  %vm1738 = vweird.f32 %v1701
  %vm1739 = vweird.f32 %v1732
  %vm1740 = vmor %vm1738, %vm1739
  %v1741 = vsel %vm1740, %v1732, %v1737
  %v1742 = vmul.f32 %v1627, %v1711
  %v1743 = vmul.f32 %v1637, %v1721
  %v1744 = vmul.f32 %v1647, %v1731
  %v1745 = vmul.f32 %v1657, %v1741
  %v1746 = vmul.f32 %v1667, %v1711
  %v1747 = vmul.f32 %v1677, %v1721
  %v1748 = vmul.f32 %v1687, %v1731
  %v1749 = vmul.f32 %v1697, %v1741
  %v1750 = vmul.f32 %v1442, %v1742
  %v1751 = vmul.f32 %v1443, %v1743
  %v1752 = vmul.f32 %v1444, %v1744
  %v1753 = vmul.f32 %v1445, %v1745
  %v1754 = vmul.f32 %v1446, %v1746
  %v1755 = vmul.f32 %v1447, %v1747
  %v1756 = vmul.f32 %v1448, %v1748
  %v1757 = vmul.f32 %v1449, %v1749
  %1759 = vset.pattern.permute.xlu0 0
  %1760 = vperm.xlu0 %1759, %v1356
  %v1761 = vpop.permute.xlu0 %1760
  %1764 = vset.pattern.permute.xlu0 0
  %1765 = vperm.xlu0 %1764, %v1357
  %v1766 = vpop.permute.xlu0 %1765
  %1769 = vset.pattern.permute.xlu0 0
  %1770 = vperm.xlu0 %1769, %v1358
  %v1771 = vpop.permute.xlu0 %1770
  %1774 = vset.pattern.permute.xlu0 0
  %1775 = vperm.xlu0 %1774, %v1359
  %v1776 = vpop.permute.xlu0 %1775
  %v1778 = vmul.f32 %v1750, %v1761
  %v1779 = vmul.f32 %v1751, %v1766
  %v1780 = vmul.f32 %v1752, %v1771
  %v1781 = vmul.f32 %v1753, %v1776
  %v1782 = vmul.f32 %v1754, %v1761
  %v1783 = vmul.f32 %v1755, %v1766
  %v1784 = vmul.f32 %v1756, %v1771
  %v1785 = vmul.f32 %v1757, %v1776
  %1787 = vset.pattern.permute.xlu0 0
  %1788 = vperm.xlu0 %1787, %v1361
  %v1789 = vpop.permute.xlu0 %1788
  %1792 = vset.pattern.permute.xlu0 0
  %1793 = vperm.xlu0 %1792, %v1362
  %v1794 = vpop.permute.xlu0 %1793
  %1797 = vset.pattern.permute.xlu0 0
  %1798 = vperm.xlu0 %1797, %v1363
  %v1799 = vpop.permute.xlu0 %1798
  %1802 = vset.pattern.permute.xlu0 0
  %1803 = vperm.xlu0 %1802, %v1364
  %v1804 = vpop.permute.xlu0 %1803
  %v1806 = vadd.f32 %v1778, %v1789
  %v1807 = vadd.f32 %v1779, %v1794
  %v1808 = vadd.f32 %v1780, %v1799
  %v1809 = vadd.f32 %v1781, %v1804
  %v1810 = vadd.f32 %v1782, %v1789
  %v1811 = vadd.f32 %v1783, %v1794
  %v1812 = vadd.f32 %v1784, %v1799
  %v1813 = vadd.f32 %v1785, %v1804
  %v1814 = vmax.f32 %v1806, 0.0
  %v1815 = vmax.f32 %v1807, 0.0
  %v1816 = vmax.f32 %v1808, 0.0
  %v1817 = vmax.f32 %v1809, 0.0
  %v1818 = vmax.f32 %v1810, 0.0
  %v1819 = vmax.f32 %v1811, 0.0
  %v1820 = vmax.f32 %v1812, 0.0
  %v1821 = vmax.f32 %v1813, 0.0
  %v1822 = vpack.c.bf16 %v1814, %v1814
  %v1823 = vpack.c.bf16 %v1815, %v1815
  %v1824 = vpack.c.bf16 %v1816, %v1816
  %v1825 = vpack.c.bf16 %v1817, %v1817
  %v1826 = vpack.c.bf16 %v1818, %v1818
  %v1827 = vpack.c.bf16 %v1819, %v1819
  %v1828 = vpack.c.bf16 %v1820, %v1820
  %v1829 = vpack.c.bf16 %v1821, %v1821
  %1831 = vset.pattern.permute.xlu0 0
  %1832 = vperm.xlu0 %1831, %v1366
  %v1833 = vpop.permute.xlu0 %1832
  %1836 = vset.pattern.permute.xlu0 0
  %1837 = vperm.xlu0 %1836, %v1367
  %v1838 = vpop.permute.xlu0 %1837
  %1841 = vset.pattern.permute.xlu0 0
  %1842 = vperm.xlu0 %1841, %v1368
  %v1843 = vpop.permute.xlu0 %1842
  %1846 = vset.pattern.permute.xlu0 0
  %1847 = vperm.xlu0 %1846, %v1369
  %v1848 = vpop.permute.xlu0 %1847
  %v1854 = vunpack.c.l.b16 %v1392
  %v1855 = vunpack.c.l.b16 %v1393
  %v1856 = vunpack.c.l.b16 %v1394
  %v1857 = vunpack.c.l.b16 %v1395
  %v1858 = vpack.c.b16 %v1855, %v1854
  %v1859 = vpack.c.b16 %v1857, %v1856
  %v1864 = vunpack.c.l.b16 %v1822
  %v1865 = vunpack.c.l.b16 %v1823
  %v1866 = vunpack.c.l.b16 %v1824
  %v1867 = vunpack.c.l.b16 %v1825
  %v1868 = vpack.c.b16 %v1865, %v1864
  %v1869 = vpack.c.b16 %v1867, %v1866
  %v1873 = vsel %vm572, %v1858, 0
  %v1876 = vsel %vm572, %v1859, 0
  %1878 = vmatpush.bf16.msra.mxu0 0
  %1879 = vmatpush.bf16.msra.mxu0 0
  %1880 = vmatpush.bf16.msra.mxu0 0
  %1881 = vmatpush.bf16.msra.mxu0 0
  %1882 = vmatpush.bf16.msra.mxu0 0
  %1883 = vmatpush.bf16.msra.mxu0 0
  %1884 = vmatpush.bf16.msra.mxu0 %v1869
  %1885 = vmatpush.bf16.msra.mxu0 %v1868
  %1886 = vmatmul.bf16.gmra.mxu0 %v1873
  %v1887 = vpop.f32.mrf.mxu0
  %v1888 = vadd.f32 %v1833, %v1887
  %v1889 = vpop.f32.mrf.mxu0
  %v1890 = vadd.f32 %v1838, %v1889
  %1891 = vmatmul.bf16.gmra.mxu0 %v1876
  %v1892 = vpop.f32.mrf.mxu0
  %v1893 = vadd.f32 %v1843, %v1892
  %v1894 = vpop.f32.mrf.mxu0
  %v1895 = vadd.f32 %v1848, %v1894
  %1896 = vdwg.mxu0
  %v1901 = vunpack.c.l.b16 %v1826
  %v1902 = vunpack.c.l.b16 %v1827
  %v1903 = vunpack.c.l.b16 %v1828
  %v1904 = vunpack.c.l.b16 %v1829
  %v1905 = vpack.c.b16 %v1902, %v1901
  %v1906 = vpack.c.b16 %v1904, %v1903
  %1909 = vmatpush.bf16.msra.mxu0 0
  %1910 = vmatpush.bf16.msra.mxu0 0
  %1911 = vmatpush.bf16.msra.mxu0 0
  %1912 = vmatpush.bf16.msra.mxu0 0
  %1913 = vmatpush.bf16.msra.mxu0 0
  %1914 = vmatpush.bf16.msra.mxu0 0
  %1915 = vmatpush.bf16.msra.mxu0 %v1906
  %1916 = vmatpush.bf16.msra.mxu0 %v1905
  %1917 = vmatmul.bf16.gmra.mxu0 %v1873
  %v1918 = vpop.f32.mrf.mxu0
  %v1919 = vadd.f32 %v1833, %v1918
  %v1920 = vpop.f32.mrf.mxu0
  %v1921 = vadd.f32 %v1838, %v1920
  %1922 = vmatmul.bf16.gmra.mxu0 %v1876
  %v1923 = vpop.f32.mrf.mxu0
  %v1924 = vadd.f32 %v1843, %v1923
  %v1925 = vpop.f32.mrf.mxu0
  %v1926 = vadd.f32 %v1848, %v1925
  %1927 = vdwg.mxu0
  %v1928 = vadd.f32 %v1888, %v1919
  %v1929 = vadd.f32 %v1890, %v1921
  %v1930 = vadd.f32 %v1893, %v1924
  %v1931 = vadd.f32 %v1895, %v1926
  %v1932 = vmul.f32 %v1928, %v313
  %v1933 = vmul.f32 %v1929, %v313
  %v1934 = vmul.f32 %v1930, %v313
  %v1935 = vmul.f32 %v1931, %v313
  %v1936 = vadd.f32 %v1932, %v1933
  %v1937 = vadd.f32 %v1936, %v1934
  %v1938 = vadd.f32 %v1937, %v1935
  %v1939 = vrot.slane %v1938, 4
  %v1940 = vadd.f32 %v1938, %v1939
  %v1941 = vrot.slane %v1940, 2
  %v1942 = vadd.f32 %v1940, %v1941
  %v1943 = vrot.slane %v1942, 1
  %v1944 = vadd.f32 %v1942, %v1943
  %v1945 = vmul.f32 %v1944, %v652
  %v1946 = vsub.f32 %v1888, %v1945
  %v1947 = vsub.f32 %v1890, %v1945
  %v1948 = vsub.f32 %v1893, %v1945
  %v1949 = vsub.f32 %v1895, %v1945
  %v1950 = vsub.f32 %v1919, %v1945
  %v1951 = vsub.f32 %v1921, %v1945
  %v1952 = vsub.f32 %v1924, %v1945
  %v1953 = vsub.f32 %v1926, %v1945
  %v1954 = vmul.f32 %v1946, %v1946
  %v1955 = vmul.f32 %v1947, %v1947
  %v1956 = vmul.f32 %v1948, %v1948
  %v1957 = vmul.f32 %v1949, %v1949
  %v1958 = vmul.f32 %v1950, %v1950
  %v1959 = vmul.f32 %v1951, %v1951
  %v1960 = vmul.f32 %v1952, %v1952
  %v1961 = vmul.f32 %v1953, %v1953
  %v1962 = vadd.f32 %v1954, %v1958
  %v1963 = vadd.f32 %v1955, %v1959
  %v1964 = vadd.f32 %v1956, %v1960
  %v1965 = vadd.f32 %v1957, %v1961
  %v1966 = vmul.f32 %v1962, %v313
  %v1967 = vmul.f32 %v1963, %v313
  %v1968 = vmul.f32 %v1964, %v313
  %v1969 = vmul.f32 %v1965, %v313
  %v1970 = vadd.f32 %v1966, %v1967
  %v1971 = vadd.f32 %v1970, %v1968
  %v1972 = vadd.f32 %v1971, %v1969
  %v1973 = vrot.slane %v1972, 4
  %v1974 = vadd.f32 %v1972, %v1973
  %v1975 = vrot.slane %v1974, 2
  %v1976 = vadd.f32 %v1974, %v1975
  %v1977 = vrot.slane %v1976, 1
  %v1978 = vadd.f32 %v1976, %v1977
  %v1979 = vmul.f32 %v1978, %v652
  %v1980 = vadd.f32 %v1979, 1e-05
  %v1981 = vrsqrt.pop %v1980
  %v1982 = vmul.f32 %v1981, %v1980
  %v1983 = vmul.f32 %v1982, %v1981
  %v1984 = vmul.f32 0.5, %v1983
  %v1985 = vsub.f32 1.5, %v1984
  %v1986 = vmul.f32 %v1981, %v1985
  %vm1987 = vweird.f32 %v1980
  %vm1988 = vweird.f32 %v1981
  %vm1989 = vmor %vm1987, %vm1988
  %v1990 = vsel %vm1989, %v1981, %v1986
  %v1991 = vmul.f32 %v1946, %v1990
  %v1992 = vmul.f32 %v1947, %v1990
  %v1993 = vmul.f32 %v1948, %v1990
  %v1994 = vmul.f32 %v1949, %v1990
  %v1995 = vmul.f32 %v1950, %v1990
  %v1996 = vmul.f32 %v1951, %v1990
  %v1997 = vmul.f32 %v1952, %v1990
  %v1998 = vmul.f32 %v1953, %v1990
  %v2000 = vperm.slane %v1371, 0
  %v2002 = vmul.f32 %v1991, %v2000
  %v2003 = vmul.f32 %v1992, %v2000
  %v2004 = vmul.f32 %v1993, %v2000
  %v2005 = vmul.f32 %v1994, %v2000
  %v2006 = vmul.f32 %v1995, %v2000
  %v2007 = vmul.f32 %v1996, %v2000
  %v2008 = vmul.f32 %v1997, %v2000
  %v2009 = vmul.f32 %v1998, %v2000
  %v2011 = vperm.slane %v1373, 0
  %v2013 = vadd.f32 %v2002, %v2011
  %v2014 = vadd.f32 %v2003, %v2011
  %v2015 = vadd.f32 %v2004, %v2011
  %v2016 = vadd.f32 %v2005, %v2011
  %v2017 = vadd.f32 %v2006, %v2011
  %v2018 = vadd.f32 %v2007, %v2011
  %v2019 = vadd.f32 %v2008, %v2011
  %v2020 = vadd.f32 %v2009, %v2011
  %v2021 = vmax.f32 %v2013, 0.0
  %v2022 = vmax.f32 %v2014, 0.0
  %v2023 = vmax.f32 %v2015, 0.0
  %v2024 = vmax.f32 %v2016, 0.0
  %v2025 = vmax.f32 %v2017, 0.0
  %v2026 = vmax.f32 %v2018, 0.0
  %v2027 = vmax.f32 %v2019, 0.0
  %v2028 = vmax.f32 %v2020, 0.0
  %v2029 = vpack.c.bf16 %v2022, %v2021
  %v2030 = vpack.c.bf16 %v2024, %v2023
  %v2031 = vpack.c.bf16 %v2026, %v2025
  %v2032 = vpack.c.bf16 %v2028, %v2027
  %v2049 = vunpack.c.l.b16 %v1402
  %v2050 = vunpack.c.l.b16 %v1403
  %v2051 = vunpack.c.l.b16 %v1404
  %v2052 = vunpack.c.l.b16 %v1405
  %v2053 = vunpack.c.l.b16 %v1406
  %v2054 = vunpack.c.l.b16 %v1407
  %v2055 = vunpack.c.l.b16 %v1408
  %v2056 = vunpack.c.l.b16 %v1409
  %v2057 = vunpack.c.l.b16 %v1410
  %v2058 = vunpack.c.l.b16 %v1411
  %v2059 = vunpack.c.l.b16 %v1412
  %v2060 = vunpack.c.l.b16 %v1413
  %v2061 = vunpack.c.l.b16 %v1414
  %v2062 = vunpack.c.l.b16 %v1415
  %v2063 = vunpack.c.l.b16 %v1416
  %v2064 = vunpack.c.l.b16 %v1417
  %v2065 = vpack.c.b16 %v2050, %v2049
  %v2066 = vpack.c.b16 %v2052, %v2051
  %v2067 = vpack.c.b16 %v2054, %v2053
  %v2068 = vpack.c.b16 %v2056, %v2055
  %v2069 = vpack.c.b16 %v2058, %v2057
  %v2070 = vpack.c.b16 %v2060, %v2059
  %v2071 = vpack.c.b16 %v2062, %v2061
  %v2072 = vpack.c.b16 %v2064, %v2063
  %2081 = vmatpush.bf16.msra.mxu0 %v2072
  %2082 = vmatpush.bf16.msra.mxu0 %v2071
  %2083 = vmatpush.bf16.msra.mxu0 %v2070
  %2084 = vmatpush.bf16.msra.mxu0 %v2069
  %2085 = vmatpush.bf16.msra.mxu0 %v2068
  %2086 = vmatpush.bf16.msra.mxu0 %v2067
  %2087 = vmatpush.bf16.msra.mxu0 %v2066
  %2088 = vmatpush.bf16.msra.mxu0 %v2065
  %2089 = vmatmul.bf16.gmra.mxu0 %v2029
  %v2090 = vpop.f32.mrf.mxu0
  %v2091 = vadd.f32 0.0, %v2090
  %v2092 = vpop.f32.mrf.mxu0
  %v2093 = vadd.f32 0.0, %v2092
  %2094 = vmatmul.bf16.gmra.mxu0 %v2030
  %v2095 = vpop.f32.mrf.mxu0
  %v2096 = vadd.f32 0.0, %v2095
  %v2097 = vpop.f32.mrf.mxu0
  %v2098 = vadd.f32 0.0, %v2097
  %2099 = vmatmul.bf16.gmra.mxu0 %v2031
  %v2100 = vpop.f32.mrf.mxu0
  %v2101 = vadd.f32 0.0, %v2100
  %v2102 = vpop.f32.mrf.mxu0
  %v2103 = vadd.f32 0.0, %v2102
  %2104 = vmatmul.bf16.gmra.mxu0 %v2032
  %v2105 = vpop.f32.mrf.mxu0
  %v2106 = vadd.f32 0.0, %v2105
  %v2107 = vpop.f32.mrf.mxu0
  %v2108 = vadd.f32 0.0, %v2107
  %2109 = vdwg.mxu0
  %v2110 = vadd.f32 %v1888, %v2091
  %v2111 = vadd.f32 %v1890, %v2093
  %v2112 = vadd.f32 %v1893, %v2096
  %v2113 = vadd.f32 %v1895, %v2098
  %v2114 = vadd.f32 %v1919, %v2101
  %v2115 = vadd.f32 %v1921, %v2103
  %v2116 = vadd.f32 %v1924, %v2106
  %v2117 = vadd.f32 %v1926, %v2108
  %v2119 = vperm.slane %v1375, 0
  %v2121 = vadd.f32 %v2110, %v2119
  %v2122 = vadd.f32 %v2111, %v2119
  %v2123 = vadd.f32 %v2112, %v2119
  %v2124 = vadd.f32 %v2113, %v2119
  %v2125 = vadd.f32 %v2114, %v2119
  %v2126 = vadd.f32 %v2115, %v2119
  %v2127 = vadd.f32 %v2116, %v2119
  %v2128 = vadd.f32 %v2117, %v2119
  %2129 = vadd.xlane.f32.xlu0 %v2121
  %v2130 = vpop.xlane.xlu0 %2129
  %2131 = vadd.xlane.f32.xlu0 %v2122
  %v2132 = vpop.xlane.xlu0 %2131
  %2133 = vadd.xlane.f32.xlu0 %v2123
  %v2134 = vpop.xlane.xlu0 %2133
  %2135 = vadd.xlane.f32.xlu0 %v2124
  %v2136 = vpop.xlane.xlu0 %2135
  %2137 = vadd.xlane.f32.xlu0 %v2125
  %v2138 = vpop.xlane.xlu0 %2137
  %2139 = vadd.xlane.f32.xlu0 %v2126
  %v2140 = vpop.xlane.xlu0 %2139
  %2141 = vadd.xlane.f32.xlu0 %v2127
  %v2142 = vpop.xlane.xlu0 %2141
  %2143 = vadd.xlane.f32.xlu0 %v2128
  %v2144 = vpop.xlane.xlu0 %2143
  %v2145 = vmul.f32 %v2130, %v126
  %v2146 = vmul.f32 %v2132, %v126
  %v2147 = vmul.f32 %v2134, %v126
  %v2148 = vmul.f32 %v2136, %v126
  %v2149 = vmul.f32 %v2138, %v126
  %v2150 = vmul.f32 %v2140, %v126
  %v2151 = vmul.f32 %v2142, %v126
  %v2152 = vmul.f32 %v2144, %v126
  %v2153 = vsub.f32 %v2121, %v2145
  %v2154 = vsub.f32 %v2122, %v2146
  %v2155 = vsub.f32 %v2123, %v2147
  %v2156 = vsub.f32 %v2124, %v2148
  %v2157 = vsub.f32 %v2125, %v2149
  %v2158 = vsub.f32 %v2126, %v2150
  %v2159 = vsub.f32 %v2127, %v2151
  %v2160 = vsub.f32 %v2128, %v2152
  %v2161 = vmul.f32 %v2153, %v2153
  %v2162 = vmul.f32 %v2154, %v2154
  %v2163 = vmul.f32 %v2155, %v2155
  %v2164 = vmul.f32 %v2156, %v2156
  %v2165 = vmul.f32 %v2157, %v2157
  %v2166 = vmul.f32 %v2158, %v2158
  %v2167 = vmul.f32 %v2159, %v2159
  %v2168 = vmul.f32 %v2160, %v2160
  %2169 = vadd.xlane.f32.xlu0 %v2161
  %v2170 = vpop.xlane.xlu0 %2169
  %2171 = vadd.xlane.f32.xlu0 %v2162
  %v2172 = vpop.xlane.xlu0 %2171
  %2173 = vadd.xlane.f32.xlu0 %v2163
  %v2174 = vpop.xlane.xlu0 %2173
  %2175 = vadd.xlane.f32.xlu0 %v2164
  %v2176 = vpop.xlane.xlu0 %2175
  %2177 = vadd.xlane.f32.xlu0 %v2165
  %v2178 = vpop.xlane.xlu0 %2177
  %2179 = vadd.xlane.f32.xlu0 %v2166
  %v2180 = vpop.xlane.xlu0 %2179
  %2181 = vadd.xlane.f32.xlu0 %v2167
  %v2182 = vpop.xlane.xlu0 %2181
  %2183 = vadd.xlane.f32.xlu0 %v2168
  %v2184 = vpop.xlane.xlu0 %2183
  %v2185 = vmul.f32 %v2170, %v126
  %v2186 = vmul.f32 %v2172, %v126
  %v2187 = vmul.f32 %v2174, %v126
  %v2188 = vmul.f32 %v2176, %v126
  %v2189 = vmul.f32 %v2178, %v126
  %v2190 = vmul.f32 %v2180, %v126
  %v2191 = vmul.f32 %v2182, %v126
  %v2192 = vmul.f32 %v2184, %v126
  %v2193 = vadd.f32 %v2185, 0.001
  %v2194 = vadd.f32 %v2186, 0.001
  %v2195 = vadd.f32 %v2187, 0.001
  %v2196 = vadd.f32 %v2188, 0.001
  %v2197 = vadd.f32 %v2189, 0.001
  %v2198 = vadd.f32 %v2190, 0.001
  %v2199 = vadd.f32 %v2191, 0.001
  %v2200 = vadd.f32 %v2192, 0.001
  %v2201 = vrcp.pop %v2193
  %v2202 = vmul.f32 %v2193, %v2201
  %v2203 = vsub.f32 1.0, %v2202
  %v2204 = vmul.f32 %v2201, %v2203
  %v2205 = vadd.f32 %v2201, %v2204
  %vm2206 = vweird.f32 %v2193
  %vm2207 = vweird.f32 %v2201
  %vm2208 = vmor %vm2206, %vm2207
  %v2209 = vsel %vm2208, %v2201, %v2205
  %v2210 = vand.u32 2147483647, %v2193
  %vm2211 = vcmp.eq.f32.partialorder %v2210, 8.507059e+37
  %v2212 = vand.u32 %v2193, 2147483648
  %v2213 = vor.u32 1.1754944e-38, %v2212
  %v2214 = vsel %vm2211, %v2213, %v2209
  %v2215 = vmul.f32 %v2185, %v2214
  %v2216 = vrcp.pop %v2194
  %v2217 = vmul.f32 %v2194, %v2216
  %v2218 = vsub.f32 1.0, %v2217
  %v2219 = vmul.f32 %v2216, %v2218
  %v2220 = vadd.f32 %v2216, %v2219
  %vm2221 = vweird.f32 %v2194
  %vm2222 = vweird.f32 %v2216
  %vm2223 = vmor %vm2221, %vm2222
  %v2224 = vsel %vm2223, %v2216, %v2220
  %v2225 = vand.u32 2147483647, %v2194
  %vm2226 = vcmp.eq.f32.partialorder %v2225, 8.507059e+37
  %v2227 = vand.u32 %v2194, 2147483648
  %v2228 = vor.u32 1.1754944e-38, %v2227
  %v2229 = vsel %vm2226, %v2228, %v2224
  %v2230 = vmul.f32 %v2186, %v2229
  %v2231 = vrcp.pop %v2195
  %v2232 = vmul.f32 %v2195, %v2231
  %v2233 = vsub.f32 1.0, %v2232
  %v2234 = vmul.f32 %v2231, %v2233
  %v2235 = vadd.f32 %v2231, %v2234
  %vm2236 = vweird.f32 %v2195
  %vm2237 = vweird.f32 %v2231
  %vm2238 = vmor %vm2236, %vm2237
  %v2239 = vsel %vm2238, %v2231, %v2235
  %v2240 = vand.u32 2147483647, %v2195
  %vm2241 = vcmp.eq.f32.partialorder %v2240, 8.507059e+37
  %v2242 = vand.u32 %v2195, 2147483648
  %v2243 = vor.u32 1.1754944e-38, %v2242
  %v2244 = vsel %vm2241, %v2243, %v2239
  %v2245 = vmul.f32 %v2187, %v2244
  %v2246 = vrcp.pop %v2196
  %v2247 = vmul.f32 %v2196, %v2246
  %v2248 = vsub.f32 1.0, %v2247
  %v2249 = vmul.f32 %v2246, %v2248
  %v2250 = vadd.f32 %v2246, %v2249
  %vm2251 = vweird.f32 %v2196
  %vm2252 = vweird.f32 %v2246
  %vm2253 = vmor %vm2251, %vm2252
  %v2254 = vsel %vm2253, %v2246, %v2250
  %v2255 = vand.u32 2147483647, %v2196
  %vm2256 = vcmp.eq.f32.partialorder %v2255, 8.507059e+37
  %v2257 = vand.u32 %v2196, 2147483648
  %v2258 = vor.u32 1.1754944e-38, %v2257
  %v2259 = vsel %vm2256, %v2258, %v2254
  %v2260 = vmul.f32 %v2188, %v2259
  %v2261 = vrcp.pop %v2197
  %v2262 = vmul.f32 %v2197, %v2261
  %v2263 = vsub.f32 1.0, %v2262
  %v2264 = vmul.f32 %v2261, %v2263
  %v2265 = vadd.f32 %v2261, %v2264
  %vm2266 = vweird.f32 %v2197
  %vm2267 = vweird.f32 %v2261
  %vm2268 = vmor %vm2266, %vm2267
  %v2269 = vsel %vm2268, %v2261, %v2265
  %v2270 = vand.u32 2147483647, %v2197
  %vm2271 = vcmp.eq.f32.partialorder %v2270, 8.507059e+37
  %v2272 = vand.u32 %v2197, 2147483648
  %v2273 = vor.u32 1.1754944e-38, %v2272
  %v2274 = vsel %vm2271, %v2273, %v2269
  %v2275 = vmul.f32 %v2189, %v2274
  %v2276 = vrcp.pop %v2198
  %v2277 = vmul.f32 %v2198, %v2276
  %v2278 = vsub.f32 1.0, %v2277
  %v2279 = vmul.f32 %v2276, %v2278
  %v2280 = vadd.f32 %v2276, %v2279
  %vm2281 = vweird.f32 %v2198
  %vm2282 = vweird.f32 %v2276
  %vm2283 = vmor %vm2281, %vm2282
  %v2284 = vsel %vm2283, %v2276, %v2280
  %v2285 = vand.u32 2147483647, %v2198
  %vm2286 = vcmp.eq.f32.partialorder %v2285, 8.507059e+37
  %v2287 = vand.u32 %v2198, 2147483648
  %v2288 = vor.u32 1.1754944e-38, %v2287
  %v2289 = vsel %vm2286, %v2288, %v2284
  %v2290 = vmul.f32 %v2190, %v2289
  %v2291 = vrcp.pop %v2199
  %v2292 = vmul.f32 %v2199, %v2291
  %v2293 = vsub.f32 1.0, %v2292
  %v2294 = vmul.f32 %v2291, %v2293
  %v2295 = vadd.f32 %v2291, %v2294
  %vm2296 = vweird.f32 %v2199
  %vm2297 = vweird.f32 %v2291
  %vm2298 = vmor %vm2296, %vm2297
  %v2299 = vsel %vm2298, %v2291, %v2295
  %v2300 = vand.u32 2147483647, %v2199
  %vm2301 = vcmp.eq.f32.partialorder %v2300, 8.507059e+37
  %v2302 = vand.u32 %v2199, 2147483648
  %v2303 = vor.u32 1.1754944e-38, %v2302
  %v2304 = vsel %vm2301, %v2303, %v2299
  %v2305 = vmul.f32 %v2191, %v2304
  %v2306 = vrcp.pop %v2200
  %v2307 = vmul.f32 %v2200, %v2306
  %v2308 = vsub.f32 1.0, %v2307
  %v2309 = vmul.f32 %v2306, %v2308
  %v2310 = vadd.f32 %v2306, %v2309
  %vm2311 = vweird.f32 %v2200
  %vm2312 = vweird.f32 %v2306
  %vm2313 = vmor %vm2311, %vm2312
  %v2314 = vsel %vm2313, %v2306, %v2310
  %v2315 = vand.u32 2147483647, %v2200
  %vm2316 = vcmp.eq.f32.partialorder %v2315, 8.507059e+37
  %v2317 = vand.u32 %v2200, 2147483648
  %v2318 = vor.u32 1.1754944e-38, %v2317
  %v2319 = vsel %vm2316, %v2318, %v2314
  %v2320 = vmul.f32 %v2192, %v2319
  %v2321 = vadd.f32 %v2215, %v2275
  %v2322 = vadd.f32 %v2230, %v2290
  %v2323 = vadd.f32 %v2245, %v2305
  %v2324 = vadd.f32 %v2260, %v2320
  %v2325 = vmul.f32 %v2321, %v313
  %v2326 = vmul.f32 %v2322, %v313
  %v2327 = vmul.f32 %v2323, %v313
  %v2328 = vmul.f32 %v2324, %v313
  %v2329 = vrsqrt.pop %v2193
  %v2330 = vmul.f32 %v2329, %v2193
  %v2331 = vmul.f32 %v2330, %v2329
  %v2332 = vmul.f32 0.5, %v2331
  %v2333 = vsub.f32 1.5, %v2332
  %v2334 = vmul.f32 %v2329, %v2333
  %vm2335 = vweird.f32 %v2193
  %vm2336 = vweird.f32 %v2329
  %vm2337 = vmor %vm2335, %vm2336
  %v2338 = vsel %vm2337, %v2329, %v2334
  %v2339 = vrsqrt.pop %v2194
  %v2340 = vmul.f32 %v2339, %v2194
  %v2341 = vmul.f32 %v2340, %v2339
  %v2342 = vmul.f32 0.5, %v2341
  %v2343 = vsub.f32 1.5, %v2342
  %v2344 = vmul.f32 %v2339, %v2343
  %vm2345 = vweird.f32 %v2194
  %vm2346 = vweird.f32 %v2339
  %vm2347 = vmor %vm2345, %vm2346
  %v2348 = vsel %vm2347, %v2339, %v2344
  %v2349 = vrsqrt.pop %v2195
  %v2350 = vmul.f32 %v2349, %v2195
  %v2351 = vmul.f32 %v2350, %v2349
  %v2352 = vmul.f32 0.5, %v2351
  %v2353 = vsub.f32 1.5, %v2352
  %v2354 = vmul.f32 %v2349, %v2353
  %vm2355 = vweird.f32 %v2195
  %vm2356 = vweird.f32 %v2349
  %vm2357 = vmor %vm2355, %vm2356
  %v2358 = vsel %vm2357, %v2349, %v2354
  %v2359 = vrsqrt.pop %v2196
  %v2360 = vmul.f32 %v2359, %v2196
  %v2361 = vmul.f32 %v2360, %v2359
  %v2362 = vmul.f32 0.5, %v2361
  %v2363 = vsub.f32 1.5, %v2362
  %v2364 = vmul.f32 %v2359, %v2363
  %vm2365 = vweird.f32 %v2196
  %vm2366 = vweird.f32 %v2359
  %vm2367 = vmor %vm2365, %vm2366
  %v2368 = vsel %vm2367, %v2359, %v2364
  %v2369 = vrsqrt.pop %v2197
  %v2370 = vmul.f32 %v2369, %v2197
  %v2371 = vmul.f32 %v2370, %v2369
  %v2372 = vmul.f32 0.5, %v2371
  %v2373 = vsub.f32 1.5, %v2372
  %v2374 = vmul.f32 %v2369, %v2373
  %vm2375 = vweird.f32 %v2197
  %vm2376 = vweird.f32 %v2369
  %vm2377 = vmor %vm2375, %vm2376
  %v2378 = vsel %vm2377, %v2369, %v2374
  %v2379 = vrsqrt.pop %v2198
  %v2380 = vmul.f32 %v2379, %v2198
  %v2381 = vmul.f32 %v2380, %v2379
  %v2382 = vmul.f32 0.5, %v2381
  %v2383 = vsub.f32 1.5, %v2382
  %v2384 = vmul.f32 %v2379, %v2383
  %vm2385 = vweird.f32 %v2198
  %vm2386 = vweird.f32 %v2379
  %vm2387 = vmor %vm2385, %vm2386
  %v2388 = vsel %vm2387, %v2379, %v2384
  %v2389 = vrsqrt.pop %v2199
  %v2390 = vmul.f32 %v2389, %v2199
  %v2391 = vmul.f32 %v2390, %v2389
  %v2392 = vmul.f32 0.5, %v2391
  %v2393 = vsub.f32 1.5, %v2392
  %v2394 = vmul.f32 %v2389, %v2393
  %vm2395 = vweird.f32 %v2199
  %vm2396 = vweird.f32 %v2389
  %vm2397 = vmor %vm2395, %vm2396
  %v2398 = vsel %vm2397, %v2389, %v2394
  %v2399 = vrsqrt.pop %v2200
  %v2400 = vmul.f32 %v2399, %v2200
  %v2401 = vmul.f32 %v2400, %v2399
  %v2402 = vmul.f32 0.5, %v2401
  %v2403 = vsub.f32 1.5, %v2402
  %v2404 = vmul.f32 %v2399, %v2403
  %vm2405 = vweird.f32 %v2200
  %vm2406 = vweird.f32 %v2399
  %vm2407 = vmor %vm2405, %vm2406
  %v2408 = vsel %vm2407, %v2399, %v2404
  %v2409 = vadd.f32 %v2325, 1e-05
  %v2410 = vadd.f32 %v2326, 1e-05
  %v2411 = vadd.f32 %v2327, 1e-05
  %v2412 = vadd.f32 %v2328, 1e-05
  %v2413 = vrsqrt.pop %v2409
  %v2414 = vmul.f32 %v2413, %v2409
  %v2415 = vmul.f32 %v2414, %v2413
  %v2416 = vmul.f32 0.5, %v2415
  %v2417 = vsub.f32 1.5, %v2416
  %v2418 = vmul.f32 %v2413, %v2417
  %vm2419 = vweird.f32 %v2409
  %vm2420 = vweird.f32 %v2413
  %vm2421 = vmor %vm2419, %vm2420
  %v2422 = vsel %vm2421, %v2413, %v2418
  %v2423 = vrsqrt.pop %v2410
  %v2424 = vmul.f32 %v2423, %v2410
  %v2425 = vmul.f32 %v2424, %v2423
  %v2426 = vmul.f32 0.5, %v2425
  %v2427 = vsub.f32 1.5, %v2426
  %v2428 = vmul.f32 %v2423, %v2427
  %vm2429 = vweird.f32 %v2410
  %vm2430 = vweird.f32 %v2423
  %vm2431 = vmor %vm2429, %vm2430
  %v2432 = vsel %vm2431, %v2423, %v2428
  %v2433 = vrsqrt.pop %v2411
  %v2434 = vmul.f32 %v2433, %v2411
  %v2435 = vmul.f32 %v2434, %v2433
  %v2436 = vmul.f32 0.5, %v2435
  %v2437 = vsub.f32 1.5, %v2436
  %v2438 = vmul.f32 %v2433, %v2437
  %vm2439 = vweird.f32 %v2411
  %vm2440 = vweird.f32 %v2433
  %vm2441 = vmor %vm2439, %vm2440
  %v2442 = vsel %vm2441, %v2433, %v2438
  %v2443 = vrsqrt.pop %v2412
  %v2444 = vmul.f32 %v2443, %v2412
  %v2445 = vmul.f32 %v2444, %v2443
  %v2446 = vmul.f32 0.5, %v2445
  %v2447 = vsub.f32 1.5, %v2446
  %v2448 = vmul.f32 %v2443, %v2447
  %vm2449 = vweird.f32 %v2412
  %vm2450 = vweird.f32 %v2443
  %vm2451 = vmor %vm2449, %vm2450
  %v2452 = vsel %vm2451, %v2443, %v2448
  %v2453 = vmul.f32 %v2338, %v2422
  %v2454 = vmul.f32 %v2348, %v2432
  %v2455 = vmul.f32 %v2358, %v2442
  %v2456 = vmul.f32 %v2368, %v2452
  %v2457 = vmul.f32 %v2378, %v2422
  %v2458 = vmul.f32 %v2388, %v2432
  %v2459 = vmul.f32 %v2398, %v2442
  %v2460 = vmul.f32 %v2408, %v2452
  %v2461 = vmul.f32 %v2153, %v2453
  %v2462 = vmul.f32 %v2154, %v2454
  %v2463 = vmul.f32 %v2155, %v2455
  %v2464 = vmul.f32 %v2156, %v2456
  %v2465 = vmul.f32 %v2157, %v2457
  %v2466 = vmul.f32 %v2158, %v2458
  %v2467 = vmul.f32 %v2159, %v2459
  %v2468 = vmul.f32 %v2160, %v2460
  %2470 = vset.pattern.permute.xlu0 0
  %2471 = vperm.xlu0 %2470, %v1377
  %v2472 = vpop.permute.xlu0 %2471
  %2475 = vset.pattern.permute.xlu0 0
  %2476 = vperm.xlu0 %2475, %v1378
  %v2477 = vpop.permute.xlu0 %2476
  %2480 = vset.pattern.permute.xlu0 0
  %2481 = vperm.xlu0 %2480, %v1379
  %v2482 = vpop.permute.xlu0 %2481
  %2485 = vset.pattern.permute.xlu0 0
  %2486 = vperm.xlu0 %2485, %v1380
  %v2487 = vpop.permute.xlu0 %2486
  %v2489 = vmul.f32 %v2461, %v2472
  %v2490 = vmul.f32 %v2462, %v2477
  %v2491 = vmul.f32 %v2463, %v2482
  %v2492 = vmul.f32 %v2464, %v2487
  %v2493 = vmul.f32 %v2465, %v2472
  %v2494 = vmul.f32 %v2466, %v2477
  %v2495 = vmul.f32 %v2467, %v2482
  %v2496 = vmul.f32 %v2468, %v2487
  %2498 = vset.pattern.permute.xlu0 0
  %2499 = vperm.xlu0 %2498, %v1382
  %v2500 = vpop.permute.xlu0 %2499
  %2503 = vset.pattern.permute.xlu0 0
  %2504 = vperm.xlu0 %2503, %v1383
  %v2505 = vpop.permute.xlu0 %2504
  %2508 = vset.pattern.permute.xlu0 0
  %2509 = vperm.xlu0 %2508, %v1384
  %v2510 = vpop.permute.xlu0 %2509
  %2513 = vset.pattern.permute.xlu0 0
  %2514 = vperm.xlu0 %2513, %v1385
  %v2515 = vpop.permute.xlu0 %2514
  %v2517 = vadd.f32 %v2489, %v2500
  %v2518 = vadd.f32 %v2490, %v2505
  %v2519 = vadd.f32 %v2491, %v2510
  %v2520 = vadd.f32 %v2492, %v2515
  %v2521 = vadd.f32 %v2493, %v2500
  %v2522 = vadd.f32 %v2494, %v2505
  %v2523 = vadd.f32 %v2495, %v2510
  %v2524 = vadd.f32 %v2496, %v2515
  %v2525 = vmax.f32 %v2517, 0.0
  %v2526 = vmax.f32 %v2518, 0.0
  %v2527 = vmax.f32 %v2519, 0.0
  %v2528 = vmax.f32 %v2520, 0.0
  %v2529 = vmax.f32 %v2521, 0.0
  %v2530 = vmax.f32 %v2522, 0.0
  %v2531 = vmax.f32 %v2523, 0.0
  %v2532 = vmax.f32 %v2524, 0.0
  %v2533 = vpack.c.bf16 %v2525, %v2525
  %v2534 = vpack.c.bf16 %v2526, %v2526
  %v2535 = vpack.c.bf16 %v2527, %v2527
  %v2536 = vpack.c.bf16 %v2528, %v2528
  %v2537 = vpack.c.bf16 %v2529, %v2529
  %v2538 = vpack.c.bf16 %v2530, %v2530
  %v2539 = vpack.c.bf16 %v2531, %v2531
  %v2540 = vpack.c.bf16 %v2532, %v2532
  %2542 = vset.pattern.permute.xlu0 0
  %2543 = vperm.xlu0 %2542, %v1387
  %v2544 = vpop.permute.xlu0 %2543
  %2547 = vset.pattern.permute.xlu0 0
  %2548 = vperm.xlu0 %2547, %v1388
  %v2549 = vpop.permute.xlu0 %2548
  %2552 = vset.pattern.permute.xlu0 0
  %2553 = vperm.xlu0 %2552, %v1389
  %v2554 = vpop.permute.xlu0 %2553
  %2557 = vset.pattern.permute.xlu0 0
  %2558 = vperm.xlu0 %2557, %v1390
  %v2559 = vpop.permute.xlu0 %2558
  %v2565 = vunpack.c.l.b16 %v1397
  %v2566 = vunpack.c.l.b16 %v1398
  %v2567 = vunpack.c.l.b16 %v1399
  %v2568 = vunpack.c.l.b16 %v1400
  %v2569 = vpack.c.b16 %v2566, %v2565
  %v2570 = vpack.c.b16 %v2568, %v2567
  %v2575 = vunpack.c.l.b16 %v2533
  %v2576 = vunpack.c.l.b16 %v2534
  %v2577 = vunpack.c.l.b16 %v2535
  %v2578 = vunpack.c.l.b16 %v2536
  %v2579 = vpack.c.b16 %v2576, %v2575
  %v2580 = vpack.c.b16 %v2578, %v2577
  %v2584 = vsel %vm572, %v2569, 0
  %v2587 = vsel %vm572, %v2570, 0
  %2589 = vmatpush.bf16.msra.mxu0 0
  %2590 = vmatpush.bf16.msra.mxu0 0
  %2591 = vmatpush.bf16.msra.mxu0 0
  %2592 = vmatpush.bf16.msra.mxu0 0
  %2593 = vmatpush.bf16.msra.mxu0 0
  %2594 = vmatpush.bf16.msra.mxu0 0
  %2595 = vmatpush.bf16.msra.mxu0 %v2580
  %2596 = vmatpush.bf16.msra.mxu0 %v2579
  %2597 = vmatmul.bf16.gmra.mxu0 %v2584
  %v2598 = vpop.f32.mrf.mxu0
  %v2599 = vadd.f32 %v2544, %v2598
  %v2600 = vpop.f32.mrf.mxu0
  %v2601 = vadd.f32 %v2549, %v2600
  %2602 = vmatmul.bf16.gmra.mxu0 %v2587
  %v2603 = vpop.f32.mrf.mxu0
  %v2604 = vadd.f32 %v2554, %v2603
  %v2605 = vpop.f32.mrf.mxu0
  %v2606 = vadd.f32 %v2559, %v2605
  %2607 = vdwg.mxu0
  %v2612 = vunpack.c.l.b16 %v2537
  %v2613 = vunpack.c.l.b16 %v2538
  %v2614 = vunpack.c.l.b16 %v2539
  %v2615 = vunpack.c.l.b16 %v2540
  %v2616 = vpack.c.b16 %v2613, %v2612
  %v2617 = vpack.c.b16 %v2615, %v2614
  %2620 = vmatpush.bf16.msra.mxu0 0
  %2621 = vmatpush.bf16.msra.mxu0 0
  %2622 = vmatpush.bf16.msra.mxu0 0
  %2623 = vmatpush.bf16.msra.mxu0 0
  %2624 = vmatpush.bf16.msra.mxu0 0
  %2625 = vmatpush.bf16.msra.mxu0 0
  %2626 = vmatpush.bf16.msra.mxu0 %v2617
  %2627 = vmatpush.bf16.msra.mxu0 %v2616
  %2628 = vmatmul.bf16.gmra.mxu0 %v2584
  %v2629 = vpop.f32.mrf.mxu0
  %v2630 = vadd.f32 %v2544, %v2629
  %v2631 = vpop.f32.mrf.mxu0
  %v2632 = vadd.f32 %v2549, %v2631
  %2633 = vmatmul.bf16.gmra.mxu0 %v2587
  %v2634 = vpop.f32.mrf.mxu0
  %v2635 = vadd.f32 %v2554, %v2634
  %v2636 = vpop.f32.mrf.mxu0
  %v2637 = vadd.f32 %v2559, %v2636
  %2638 = vdwg.mxu0
  %v2639 = vadd.f32 %v2599, %v1347
  %v2640 = vadd.f32 %v2601, %v1348
  %v2641 = vadd.f32 %v2604, %v1349
  %v2642 = vadd.f32 %v2606, %v1350
  %v2643 = vadd.f32 %v2630, %v1351
  %v2644 = vadd.f32 %v2632, %v1352
  %v2645 = vadd.f32 %v2635, %v1353
  %v2646 = vadd.f32 %v2637, %v1354
  %s2647 = scalar_lea.vmem %s1, 64
  %v2648 = vld [vmem:[%s2647] sm:$0xff]
  %v2649 = vld [vmem:[%s2647 + $0x8] sm:$0xff]
  %v2650 = vld [vmem:[%s2647 + $0x10] sm:$0xff]
  %v2651 = vld [vmem:[%s2647 + $0x18] sm:$0xff]
  %s2652 = scalar_lea.vmem %s2, 64
  %v2653 = vld [vmem:[%s2652] sm:$0xff]
  %v2654 = vld [vmem:[%s2652 + $0x8] sm:$0xff]
  %v2655 = vld [vmem:[%s2652 + $0x10] sm:$0xff]
  %v2656 = vld [vmem:[%s2652 + $0x18] sm:$0xff]
  %s2657 = scalar_lea.vmem %s4, 64
  %v2658 = vld [vmem:[%s2657] sm:$0xff]
  %v2659 = vld [vmem:[%s2657 + $0x8] sm:$0xff]
  %v2660 = vld [vmem:[%s2657 + $0x10] sm:$0xff]
  %v2661 = vld [vmem:[%s2657 + $0x18] sm:$0xff]
  %s2662 = scalar_lea.vmem %s5, 2
  %v2663 = vld [vmem:[%s2662] sm:$0x1]
  %s2664 = scalar_lea.vmem %s6, 2
  %v2665 = vld [vmem:[%s2664] sm:$0x1]
  %s2666 = scalar_lea.vmem %s8, 2
  %v2667 = vld [vmem:[%s2666] sm:$0x1]
  %s2668 = scalar_lea.vmem %s9, 64
  %v2669 = vld [vmem:[%s2668] sm:$0xff]
  %v2670 = vld [vmem:[%s2668 + $0x8] sm:$0xff]
  %v2671 = vld [vmem:[%s2668 + $0x10] sm:$0xff]
  %v2672 = vld [vmem:[%s2668 + $0x18] sm:$0xff]
  %s2673 = scalar_lea.vmem %s10, 64
  %v2674 = vld [vmem:[%s2673] sm:$0xff]
  %v2675 = vld [vmem:[%s2673 + $0x8] sm:$0xff]
  %v2676 = vld [vmem:[%s2673 + $0x10] sm:$0xff]
  %v2677 = vld [vmem:[%s2673 + $0x18] sm:$0xff]
  %s2678 = scalar_lea.vmem %s12, 64
  %v2679 = vld [vmem:[%s2678] sm:$0xff]
  %v2680 = vld [vmem:[%s2678 + $0x8] sm:$0xff]
  %v2681 = vld [vmem:[%s2678 + $0x10] sm:$0xff]
  %v2682 = vld [vmem:[%s2678 + $0x18] sm:$0xff]
  %s2683 = scalar_lea.vmem %s3, 32
  %v2684 = vld [vmem:[%s2683] sm:$0xf]
  %v2685 = vld [vmem:[%s2683 + $0x4] sm:$0xf]
  %v2686 = vld [vmem:[%s2683 + $0x8] sm:$0xf]
  %v2687 = vld [vmem:[%s2683 + $0xc] sm:$0xf]
  %s2688 = scalar_lea.vmem %s11, 32
  %v2689 = vld [vmem:[%s2688] sm:$0xf]
  %v2690 = vld [vmem:[%s2688 + $0x4] sm:$0xf]
  %v2691 = vld [vmem:[%s2688 + $0x8] sm:$0xf]
  %v2692 = vld [vmem:[%s2688 + $0xc] sm:$0xf]
  %s2693 = scalar_lea.vmem %s7, 128
  %v2694 = vld [vmem:[%s2693] sm:$0xf]
  %v2695 = vld [vmem:[%s2693 + $0x4] sm:$0xf]
  %v2696 = vld [vmem:[%s2693 + $0x8] sm:$0xf]
  %v2697 = vld [vmem:[%s2693 + $0xc] sm:$0xf]
  %v2698 = vld [vmem:[%s2693 + $0x10] sm:$0xf]
  %v2699 = vld [vmem:[%s2693 + $0x14] sm:$0xf]
  %v2700 = vld [vmem:[%s2693 + $0x18] sm:$0xf]
  %v2701 = vld [vmem:[%s2693 + $0x1c] sm:$0xf]
  %v2702 = vld [vmem:[%s2693 + $0x20] sm:$0xf]
  %v2703 = vld [vmem:[%s2693 + $0x24] sm:$0xf]
  %v2704 = vld [vmem:[%s2693 + $0x28] sm:$0xf]
  %v2705 = vld [vmem:[%s2693 + $0x2c] sm:$0xf]
  %v2706 = vld [vmem:[%s2693 + $0x30] sm:$0xf]
  %v2707 = vld [vmem:[%s2693 + $0x34] sm:$0xf]
  %v2708 = vld [vmem:[%s2693 + $0x38] sm:$0xf]
  %v2709 = vld [vmem:[%s2693 + $0x3c] sm:$0xf]
  %2710 = vadd.xlane.f32.xlu0 %v2639
  %v2711 = vpop.xlane.xlu0 %2710
  %2712 = vadd.xlane.f32.xlu0 %v2640
  %v2713 = vpop.xlane.xlu0 %2712
  %2714 = vadd.xlane.f32.xlu0 %v2641
  %v2715 = vpop.xlane.xlu0 %2714
  %2716 = vadd.xlane.f32.xlu0 %v2642
  %v2717 = vpop.xlane.xlu0 %2716
  %2718 = vadd.xlane.f32.xlu0 %v2643
  %v2719 = vpop.xlane.xlu0 %2718
  %2720 = vadd.xlane.f32.xlu0 %v2644
  %v2721 = vpop.xlane.xlu0 %2720
  %2722 = vadd.xlane.f32.xlu0 %v2645
  %v2723 = vpop.xlane.xlu0 %2722
  %2724 = vadd.xlane.f32.xlu0 %v2646
  %v2725 = vpop.xlane.xlu0 %2724
  %v2726 = vmul.f32 %v2711, %v126
  %v2727 = vmul.f32 %v2713, %v126
  %v2728 = vmul.f32 %v2715, %v126
  %v2729 = vmul.f32 %v2717, %v126
  %v2730 = vmul.f32 %v2719, %v126
  %v2731 = vmul.f32 %v2721, %v126
  %v2732 = vmul.f32 %v2723, %v126
  %v2733 = vmul.f32 %v2725, %v126
  %v2734 = vsub.f32 %v2639, %v2726
  %v2735 = vsub.f32 %v2640, %v2727
  %v2736 = vsub.f32 %v2641, %v2728
  %v2737 = vsub.f32 %v2642, %v2729
  %v2738 = vsub.f32 %v2643, %v2730
  %v2739 = vsub.f32 %v2644, %v2731
  %v2740 = vsub.f32 %v2645, %v2732
  %v2741 = vsub.f32 %v2646, %v2733
  %v2742 = vmul.f32 %v2734, %v2734
  %v2743 = vmul.f32 %v2735, %v2735
  %v2744 = vmul.f32 %v2736, %v2736
  %v2745 = vmul.f32 %v2737, %v2737
  %v2746 = vmul.f32 %v2738, %v2738
  %v2747 = vmul.f32 %v2739, %v2739
  %v2748 = vmul.f32 %v2740, %v2740
  %v2749 = vmul.f32 %v2741, %v2741
  %2750 = vadd.xlane.f32.xlu0 %v2742
  %v2751 = vpop.xlane.xlu0 %2750
  %2752 = vadd.xlane.f32.xlu0 %v2743
  %v2753 = vpop.xlane.xlu0 %2752
  %2754 = vadd.xlane.f32.xlu0 %v2744
  %v2755 = vpop.xlane.xlu0 %2754
  %2756 = vadd.xlane.f32.xlu0 %v2745
  %v2757 = vpop.xlane.xlu0 %2756
  %2758 = vadd.xlane.f32.xlu0 %v2746
  %v2759 = vpop.xlane.xlu0 %2758
  %2760 = vadd.xlane.f32.xlu0 %v2747
  %v2761 = vpop.xlane.xlu0 %2760
  %2762 = vadd.xlane.f32.xlu0 %v2748
  %v2763 = vpop.xlane.xlu0 %2762
  %2764 = vadd.xlane.f32.xlu0 %v2749
  %v2765 = vpop.xlane.xlu0 %2764
  %v2766 = vmul.f32 %v2751, %v126
  %v2767 = vmul.f32 %v2753, %v126
  %v2768 = vmul.f32 %v2755, %v126
  %v2769 = vmul.f32 %v2757, %v126
  %v2770 = vmul.f32 %v2759, %v126
  %v2771 = vmul.f32 %v2761, %v126
  %v2772 = vmul.f32 %v2763, %v126
  %v2773 = vmul.f32 %v2765, %v126
  %v2774 = vadd.f32 %v2766, 0.001
  %v2775 = vadd.f32 %v2767, 0.001
  %v2776 = vadd.f32 %v2768, 0.001
  %v2777 = vadd.f32 %v2769, 0.001
  %v2778 = vadd.f32 %v2770, 0.001
  %v2779 = vadd.f32 %v2771, 0.001
  %v2780 = vadd.f32 %v2772, 0.001
  %v2781 = vadd.f32 %v2773, 0.001
  %v2782 = vrcp.pop %v2774
  %v2783 = vmul.f32 %v2774, %v2782
  %v2784 = vsub.f32 1.0, %v2783
  %v2785 = vmul.f32 %v2782, %v2784
  %v2786 = vadd.f32 %v2782, %v2785
  %vm2787 = vweird.f32 %v2774
  %vm2788 = vweird.f32 %v2782
  %vm2789 = vmor %vm2787, %vm2788
  %v2790 = vsel %vm2789, %v2782, %v2786
  %v2791 = vand.u32 2147483647, %v2774
  %vm2792 = vcmp.eq.f32.partialorder %v2791, 8.507059e+37
  %v2793 = vand.u32 %v2774, 2147483648
  %v2794 = vor.u32 1.1754944e-38, %v2793
  %v2795 = vsel %vm2792, %v2794, %v2790
  %v2796 = vmul.f32 %v2766, %v2795
  %v2797 = vrcp.pop %v2775
  %v2798 = vmul.f32 %v2775, %v2797
  %v2799 = vsub.f32 1.0, %v2798
  %v2800 = vmul.f32 %v2797, %v2799
  %v2801 = vadd.f32 %v2797, %v2800
  %vm2802 = vweird.f32 %v2775
  %vm2803 = vweird.f32 %v2797
  %vm2804 = vmor %vm2802, %vm2803
  %v2805 = vsel %vm2804, %v2797, %v2801
  %v2806 = vand.u32 2147483647, %v2775
  %vm2807 = vcmp.eq.f32.partialorder %v2806, 8.507059e+37
  %v2808 = vand.u32 %v2775, 2147483648
  %v2809 = vor.u32 1.1754944e-38, %v2808
  %v2810 = vsel %vm2807, %v2809, %v2805
  %v2811 = vmul.f32 %v2767, %v2810
  %v2812 = vrcp.pop %v2776
  %v2813 = vmul.f32 %v2776, %v2812
  %v2814 = vsub.f32 1.0, %v2813
  %v2815 = vmul.f32 %v2812, %v2814
  %v2816 = vadd.f32 %v2812, %v2815
  %vm2817 = vweird.f32 %v2776
  %vm2818 = vweird.f32 %v2812
  %vm2819 = vmor %vm2817, %vm2818
  %v2820 = vsel %vm2819, %v2812, %v2816
  %v2821 = vand.u32 2147483647, %v2776
  %vm2822 = vcmp.eq.f32.partialorder %v2821, 8.507059e+37
  %v2823 = vand.u32 %v2776, 2147483648
  %v2824 = vor.u32 1.1754944e-38, %v2823
  %v2825 = vsel %vm2822, %v2824, %v2820
  %v2826 = vmul.f32 %v2768, %v2825
  %v2827 = vrcp.pop %v2777
  %v2828 = vmul.f32 %v2777, %v2827
  %v2829 = vsub.f32 1.0, %v2828
  %v2830 = vmul.f32 %v2827, %v2829
  %v2831 = vadd.f32 %v2827, %v2830
  %vm2832 = vweird.f32 %v2777
  %vm2833 = vweird.f32 %v2827
  %vm2834 = vmor %vm2832, %vm2833
  %v2835 = vsel %vm2834, %v2827, %v2831
  %v2836 = vand.u32 2147483647, %v2777
  %vm2837 = vcmp.eq.f32.partialorder %v2836, 8.507059e+37
  %v2838 = vand.u32 %v2777, 2147483648
  %v2839 = vor.u32 1.1754944e-38, %v2838
  %v2840 = vsel %vm2837, %v2839, %v2835
  %v2841 = vmul.f32 %v2769, %v2840
  %v2842 = vrcp.pop %v2778
  %v2843 = vmul.f32 %v2778, %v2842
  %v2844 = vsub.f32 1.0, %v2843
  %v2845 = vmul.f32 %v2842, %v2844
  %v2846 = vadd.f32 %v2842, %v2845
  %vm2847 = vweird.f32 %v2778
  %vm2848 = vweird.f32 %v2842
  %vm2849 = vmor %vm2847, %vm2848
  %v2850 = vsel %vm2849, %v2842, %v2846
  %v2851 = vand.u32 2147483647, %v2778
  %vm2852 = vcmp.eq.f32.partialorder %v2851, 8.507059e+37
  %v2853 = vand.u32 %v2778, 2147483648
  %v2854 = vor.u32 1.1754944e-38, %v2853
  %v2855 = vsel %vm2852, %v2854, %v2850
  %v2856 = vmul.f32 %v2770, %v2855
  %v2857 = vrcp.pop %v2779
  %v2858 = vmul.f32 %v2779, %v2857
  %v2859 = vsub.f32 1.0, %v2858
  %v2860 = vmul.f32 %v2857, %v2859
  %v2861 = vadd.f32 %v2857, %v2860
  %vm2862 = vweird.f32 %v2779
  %vm2863 = vweird.f32 %v2857
  %vm2864 = vmor %vm2862, %vm2863
  %v2865 = vsel %vm2864, %v2857, %v2861
  %v2866 = vand.u32 2147483647, %v2779
  %vm2867 = vcmp.eq.f32.partialorder %v2866, 8.507059e+37
  %v2868 = vand.u32 %v2779, 2147483648
  %v2869 = vor.u32 1.1754944e-38, %v2868
  %v2870 = vsel %vm2867, %v2869, %v2865
  %v2871 = vmul.f32 %v2771, %v2870
  %v2872 = vrcp.pop %v2780
  %v2873 = vmul.f32 %v2780, %v2872
  %v2874 = vsub.f32 1.0, %v2873
  %v2875 = vmul.f32 %v2872, %v2874
  %v2876 = vadd.f32 %v2872, %v2875
  %vm2877 = vweird.f32 %v2780
  %vm2878 = vweird.f32 %v2872
  %vm2879 = vmor %vm2877, %vm2878
  %v2880 = vsel %vm2879, %v2872, %v2876
  %v2881 = vand.u32 2147483647, %v2780
  %vm2882 = vcmp.eq.f32.partialorder %v2881, 8.507059e+37
  %v2883 = vand.u32 %v2780, 2147483648
  %v2884 = vor.u32 1.1754944e-38, %v2883
  %v2885 = vsel %vm2882, %v2884, %v2880
  %v2886 = vmul.f32 %v2772, %v2885
  %v2887 = vrcp.pop %v2781
  %v2888 = vmul.f32 %v2781, %v2887
  %v2889 = vsub.f32 1.0, %v2888
  %v2890 = vmul.f32 %v2887, %v2889
  %v2891 = vadd.f32 %v2887, %v2890
  %vm2892 = vweird.f32 %v2781
  %vm2893 = vweird.f32 %v2887
  %vm2894 = vmor %vm2892, %vm2893
  %v2895 = vsel %vm2894, %v2887, %v2891
  %v2896 = vand.u32 2147483647, %v2781
  %vm2897 = vcmp.eq.f32.partialorder %v2896, 8.507059e+37
  %v2898 = vand.u32 %v2781, 2147483648
  %v2899 = vor.u32 1.1754944e-38, %v2898
  %v2900 = vsel %vm2897, %v2899, %v2895
  %v2901 = vmul.f32 %v2773, %v2900
  %v2902 = vadd.f32 %v2796, %v2856
  %v2903 = vadd.f32 %v2811, %v2871
  %v2904 = vadd.f32 %v2826, %v2886
  %v2905 = vadd.f32 %v2841, %v2901
  %v2906 = vmul.f32 %v2902, %v313
  %v2907 = vmul.f32 %v2903, %v313
  %v2908 = vmul.f32 %v2904, %v313
  %v2909 = vmul.f32 %v2905, %v313
  %v2910 = vrsqrt.pop %v2774
  %v2911 = vmul.f32 %v2910, %v2774
  %v2912 = vmul.f32 %v2911, %v2910
  %v2913 = vmul.f32 0.5, %v2912
  %v2914 = vsub.f32 1.5, %v2913
  %v2915 = vmul.f32 %v2910, %v2914
  %vm2916 = vweird.f32 %v2774
  %vm2917 = vweird.f32 %v2910
  %vm2918 = vmor %vm2916, %vm2917
  %v2919 = vsel %vm2918, %v2910, %v2915
  %v2920 = vrsqrt.pop %v2775
  %v2921 = vmul.f32 %v2920, %v2775
  %v2922 = vmul.f32 %v2921, %v2920
  %v2923 = vmul.f32 0.5, %v2922
  %v2924 = vsub.f32 1.5, %v2923
  %v2925 = vmul.f32 %v2920, %v2924
  %vm2926 = vweird.f32 %v2775
  %vm2927 = vweird.f32 %v2920
  %vm2928 = vmor %vm2926, %vm2927
  %v2929 = vsel %vm2928, %v2920, %v2925
  %v2930 = vrsqrt.pop %v2776
  %v2931 = vmul.f32 %v2930, %v2776
  %v2932 = vmul.f32 %v2931, %v2930
  %v2933 = vmul.f32 0.5, %v2932
  %v2934 = vsub.f32 1.5, %v2933
  %v2935 = vmul.f32 %v2930, %v2934
  %vm2936 = vweird.f32 %v2776
  %vm2937 = vweird.f32 %v2930
  %vm2938 = vmor %vm2936, %vm2937
  %v2939 = vsel %vm2938, %v2930, %v2935
  %v2940 = vrsqrt.pop %v2777
  %v2941 = vmul.f32 %v2940, %v2777
  %v2942 = vmul.f32 %v2941, %v2940
  %v2943 = vmul.f32 0.5, %v2942
  %v2944 = vsub.f32 1.5, %v2943
  %v2945 = vmul.f32 %v2940, %v2944
  %vm2946 = vweird.f32 %v2777
  %vm2947 = vweird.f32 %v2940
  %vm2948 = vmor %vm2946, %vm2947
  %v2949 = vsel %vm2948, %v2940, %v2945
  %v2950 = vrsqrt.pop %v2778
  %v2951 = vmul.f32 %v2950, %v2778
  %v2952 = vmul.f32 %v2951, %v2950
  %v2953 = vmul.f32 0.5, %v2952
  %v2954 = vsub.f32 1.5, %v2953
  %v2955 = vmul.f32 %v2950, %v2954
  %vm2956 = vweird.f32 %v2778
  %vm2957 = vweird.f32 %v2950
  %vm2958 = vmor %vm2956, %vm2957
  %v2959 = vsel %vm2958, %v2950, %v2955
  %v2960 = vrsqrt.pop %v2779
  %v2961 = vmul.f32 %v2960, %v2779
  %v2962 = vmul.f32 %v2961, %v2960
  %v2963 = vmul.f32 0.5, %v2962
  %v2964 = vsub.f32 1.5, %v2963
  %v2965 = vmul.f32 %v2960, %v2964
  %vm2966 = vweird.f32 %v2779
  %vm2967 = vweird.f32 %v2960
  %vm2968 = vmor %vm2966, %vm2967
  %v2969 = vsel %vm2968, %v2960, %v2965
  %v2970 = vrsqrt.pop %v2780
  %v2971 = vmul.f32 %v2970, %v2780
  %v2972 = vmul.f32 %v2971, %v2970
  %v2973 = vmul.f32 0.5, %v2972
  %v2974 = vsub.f32 1.5, %v2973
  %v2975 = vmul.f32 %v2970, %v2974
  %vm2976 = vweird.f32 %v2780
  %vm2977 = vweird.f32 %v2970
  %vm2978 = vmor %vm2976, %vm2977
  %v2979 = vsel %vm2978, %v2970, %v2975
  %v2980 = vrsqrt.pop %v2781
  %v2981 = vmul.f32 %v2980, %v2781
  %v2982 = vmul.f32 %v2981, %v2980
  %v2983 = vmul.f32 0.5, %v2982
  %v2984 = vsub.f32 1.5, %v2983
  %v2985 = vmul.f32 %v2980, %v2984
  %vm2986 = vweird.f32 %v2781
  %vm2987 = vweird.f32 %v2980
  %vm2988 = vmor %vm2986, %vm2987
  %v2989 = vsel %vm2988, %v2980, %v2985
  %v2990 = vadd.f32 %v2906, 1e-05
  %v2991 = vadd.f32 %v2907, 1e-05
  %v2992 = vadd.f32 %v2908, 1e-05
  %v2993 = vadd.f32 %v2909, 1e-05
  %v2994 = vrsqrt.pop %v2990
  %v2995 = vmul.f32 %v2994, %v2990
  %v2996 = vmul.f32 %v2995, %v2994
  %v2997 = vmul.f32 0.5, %v2996
  %v2998 = vsub.f32 1.5, %v2997
  %v2999 = vmul.f32 %v2994, %v2998
  %vm3000 = vweird.f32 %v2990
  %vm3001 = vweird.f32 %v2994
  %vm3002 = vmor %vm3000, %vm3001
  %v3003 = vsel %vm3002, %v2994, %v2999
  %v3004 = vrsqrt.pop %v2991
  %v3005 = vmul.f32 %v3004, %v2991
  %v3006 = vmul.f32 %v3005, %v3004
  %v3007 = vmul.f32 0.5, %v3006
  %v3008 = vsub.f32 1.5, %v3007
  %v3009 = vmul.f32 %v3004, %v3008
  %vm3010 = vweird.f32 %v2991
  %vm3011 = vweird.f32 %v3004
  %vm3012 = vmor %vm3010, %vm3011
  %v3013 = vsel %vm3012, %v3004, %v3009
  %v3014 = vrsqrt.pop %v2992
  %v3015 = vmul.f32 %v3014, %v2992
  %v3016 = vmul.f32 %v3015, %v3014
  %v3017 = vmul.f32 0.5, %v3016
  %v3018 = vsub.f32 1.5, %v3017
  %v3019 = vmul.f32 %v3014, %v3018
  %vm3020 = vweird.f32 %v2992
  %vm3021 = vweird.f32 %v3014
  %vm3022 = vmor %vm3020, %vm3021
  %v3023 = vsel %vm3022, %v3014, %v3019
  %v3024 = vrsqrt.pop %v2993
  %v3025 = vmul.f32 %v3024, %v2993
  %v3026 = vmul.f32 %v3025, %v3024
  %v3027 = vmul.f32 0.5, %v3026
  %v3028 = vsub.f32 1.5, %v3027
  %v3029 = vmul.f32 %v3024, %v3028
  %vm3030 = vweird.f32 %v2993
  %vm3031 = vweird.f32 %v3024
  %vm3032 = vmor %vm3030, %vm3031
  %v3033 = vsel %vm3032, %v3024, %v3029
  %v3034 = vmul.f32 %v2919, %v3003
  %v3035 = vmul.f32 %v2929, %v3013
  %v3036 = vmul.f32 %v2939, %v3023
  %v3037 = vmul.f32 %v2949, %v3033
  %v3038 = vmul.f32 %v2959, %v3003
  %v3039 = vmul.f32 %v2969, %v3013
  %v3040 = vmul.f32 %v2979, %v3023
  %v3041 = vmul.f32 %v2989, %v3033
  %v3042 = vmul.f32 %v2734, %v3034
  %v3043 = vmul.f32 %v2735, %v3035
  %v3044 = vmul.f32 %v2736, %v3036
  %v3045 = vmul.f32 %v2737, %v3037
  %v3046 = vmul.f32 %v2738, %v3038
  %v3047 = vmul.f32 %v2739, %v3039
  %v3048 = vmul.f32 %v2740, %v3040
  %v3049 = vmul.f32 %v2741, %v3041
  %3051 = vset.pattern.permute.xlu0 0
  %3052 = vperm.xlu0 %3051, %v2648
  %v3053 = vpop.permute.xlu0 %3052
  %3056 = vset.pattern.permute.xlu0 0
  %3057 = vperm.xlu0 %3056, %v2649
  %v3058 = vpop.permute.xlu0 %3057
  %3061 = vset.pattern.permute.xlu0 0
  %3062 = vperm.xlu0 %3061, %v2650
  %v3063 = vpop.permute.xlu0 %3062
  %3066 = vset.pattern.permute.xlu0 0
  %3067 = vperm.xlu0 %3066, %v2651
  %v3068 = vpop.permute.xlu0 %3067
  %v3070 = vmul.f32 %v3042, %v3053
  %v3071 = vmul.f32 %v3043, %v3058
  %v3072 = vmul.f32 %v3044, %v3063
  %v3073 = vmul.f32 %v3045, %v3068
  %v3074 = vmul.f32 %v3046, %v3053
  %v3075 = vmul.f32 %v3047, %v3058
  %v3076 = vmul.f32 %v3048, %v3063
  %v3077 = vmul.f32 %v3049, %v3068
  %3079 = vset.pattern.permute.xlu0 0
  %3080 = vperm.xlu0 %3079, %v2653
  %v3081 = vpop.permute.xlu0 %3080
  %3084 = vset.pattern.permute.xlu0 0
  %3085 = vperm.xlu0 %3084, %v2654
  %v3086 = vpop.permute.xlu0 %3085
  %3089 = vset.pattern.permute.xlu0 0
  %3090 = vperm.xlu0 %3089, %v2655
  %v3091 = vpop.permute.xlu0 %3090
  %3094 = vset.pattern.permute.xlu0 0
  %3095 = vperm.xlu0 %3094, %v2656
  %v3096 = vpop.permute.xlu0 %3095
  %v3098 = vadd.f32 %v3070, %v3081
  %v3099 = vadd.f32 %v3071, %v3086
  %v3100 = vadd.f32 %v3072, %v3091
  %v3101 = vadd.f32 %v3073, %v3096
  %v3102 = vadd.f32 %v3074, %v3081
  %v3103 = vadd.f32 %v3075, %v3086
  %v3104 = vadd.f32 %v3076, %v3091
  %v3105 = vadd.f32 %v3077, %v3096
  %v3106 = vmax.f32 %v3098, 0.0
  %v3107 = vmax.f32 %v3099, 0.0
  %v3108 = vmax.f32 %v3100, 0.0
  %v3109 = vmax.f32 %v3101, 0.0
  %v3110 = vmax.f32 %v3102, 0.0
  %v3111 = vmax.f32 %v3103, 0.0
  %v3112 = vmax.f32 %v3104, 0.0
  %v3113 = vmax.f32 %v3105, 0.0
  %v3114 = vpack.c.bf16 %v3106, %v3106
  %v3115 = vpack.c.bf16 %v3107, %v3107
  %v3116 = vpack.c.bf16 %v3108, %v3108
  %v3117 = vpack.c.bf16 %v3109, %v3109
  %v3118 = vpack.c.bf16 %v3110, %v3110
  %v3119 = vpack.c.bf16 %v3111, %v3111
  %v3120 = vpack.c.bf16 %v3112, %v3112
  %v3121 = vpack.c.bf16 %v3113, %v3113
  %3123 = vset.pattern.permute.xlu0 0
  %3124 = vperm.xlu0 %3123, %v2658
  %v3125 = vpop.permute.xlu0 %3124
  %3128 = vset.pattern.permute.xlu0 0
  %3129 = vperm.xlu0 %3128, %v2659
  %v3130 = vpop.permute.xlu0 %3129
  %3133 = vset.pattern.permute.xlu0 0
  %3134 = vperm.xlu0 %3133, %v2660
  %v3135 = vpop.permute.xlu0 %3134
  %3138 = vset.pattern.permute.xlu0 0
  %3139 = vperm.xlu0 %3138, %v2661
  %v3140 = vpop.permute.xlu0 %3139
  %v3146 = vunpack.c.l.b16 %v2684
  %v3147 = vunpack.c.l.b16 %v2685
  %v3148 = vunpack.c.l.b16 %v2686
  %v3149 = vunpack.c.l.b16 %v2687
  %v3150 = vpack.c.b16 %v3147, %v3146
  %v3151 = vpack.c.b16 %v3149, %v3148
  %v3156 = vunpack.c.l.b16 %v3114
  %v3157 = vunpack.c.l.b16 %v3115
  %v3158 = vunpack.c.l.b16 %v3116
  %v3159 = vunpack.c.l.b16 %v3117
  %v3160 = vpack.c.b16 %v3157, %v3156
  %v3161 = vpack.c.b16 %v3159, %v3158
  %v3165 = vsel %vm572, %v3150, 0
  %v3168 = vsel %vm572, %v3151, 0
  %3170 = vmatpush.bf16.msra.mxu0 0
  %3171 = vmatpush.bf16.msra.mxu0 0
  %3172 = vmatpush.bf16.msra.mxu0 0
  %3173 = vmatpush.bf16.msra.mxu0 0
  %3174 = vmatpush.bf16.msra.mxu0 0
  %3175 = vmatpush.bf16.msra.mxu0 0
  %3176 = vmatpush.bf16.msra.mxu0 %v3161
  %3177 = vmatpush.bf16.msra.mxu0 %v3160
  %3178 = vmatmul.bf16.gmra.mxu0 %v3165
  %v3179 = vpop.f32.mrf.mxu0
  %v3180 = vadd.f32 %v3125, %v3179
  %v3181 = vpop.f32.mrf.mxu0
  %v3182 = vadd.f32 %v3130, %v3181
  %3183 = vmatmul.bf16.gmra.mxu0 %v3168
  %v3184 = vpop.f32.mrf.mxu0
  %v3185 = vadd.f32 %v3135, %v3184
  %v3186 = vpop.f32.mrf.mxu0
  %v3187 = vadd.f32 %v3140, %v3186
  %3188 = vdwg.mxu0
  %v3193 = vunpack.c.l.b16 %v3118
  %v3194 = vunpack.c.l.b16 %v3119
  %v3195 = vunpack.c.l.b16 %v3120
  %v3196 = vunpack.c.l.b16 %v3121
  %v3197 = vpack.c.b16 %v3194, %v3193
  %v3198 = vpack.c.b16 %v3196, %v3195
  %3201 = vmatpush.bf16.msra.mxu0 0
  %3202 = vmatpush.bf16.msra.mxu0 0
  %3203 = vmatpush.bf16.msra.mxu0 0
  %3204 = vmatpush.bf16.msra.mxu0 0
  %3205 = vmatpush.bf16.msra.mxu0 0
  %3206 = vmatpush.bf16.msra.mxu0 0
  %3207 = vmatpush.bf16.msra.mxu0 %v3198
  %3208 = vmatpush.bf16.msra.mxu0 %v3197
  %3209 = vmatmul.bf16.gmra.mxu0 %v3165
  %v3210 = vpop.f32.mrf.mxu0
  %v3211 = vadd.f32 %v3125, %v3210
  %v3212 = vpop.f32.mrf.mxu0
  %v3213 = vadd.f32 %v3130, %v3212
  %3214 = vmatmul.bf16.gmra.mxu0 %v3168
  %v3215 = vpop.f32.mrf.mxu0
  %v3216 = vadd.f32 %v3135, %v3215
  %v3217 = vpop.f32.mrf.mxu0
  %v3218 = vadd.f32 %v3140, %v3217
  %3219 = vdwg.mxu0
  %v3220 = vadd.f32 %v3180, %v3211
  %v3221 = vadd.f32 %v3182, %v3213
  %v3222 = vadd.f32 %v3185, %v3216
  %v3223 = vadd.f32 %v3187, %v3218
  %v3224 = vmul.f32 %v3220, %v313
  %v3225 = vmul.f32 %v3221, %v313
  %v3226 = vmul.f32 %v3222, %v313
  %v3227 = vmul.f32 %v3223, %v313
  %v3228 = vadd.f32 %v3224, %v3225
  %v3229 = vadd.f32 %v3228, %v3226
  %v3230 = vadd.f32 %v3229, %v3227
  %v3231 = vrot.slane %v3230, 4
  %v3232 = vadd.f32 %v3230, %v3231
  %v3233 = vrot.slane %v3232, 2
  %v3234 = vadd.f32 %v3232, %v3233
  %v3235 = vrot.slane %v3234, 1
  %v3236 = vadd.f32 %v3234, %v3235
  %v3237 = vmul.f32 %v3236, %v652
  %v3238 = vsub.f32 %v3180, %v3237
  %v3239 = vsub.f32 %v3182, %v3237
  %v3240 = vsub.f32 %v3185, %v3237
  %v3241 = vsub.f32 %v3187, %v3237
  %v3242 = vsub.f32 %v3211, %v3237
  %v3243 = vsub.f32 %v3213, %v3237
  %v3244 = vsub.f32 %v3216, %v3237
  %v3245 = vsub.f32 %v3218, %v3237
  %v3246 = vmul.f32 %v3238, %v3238
  %v3247 = vmul.f32 %v3239, %v3239
  %v3248 = vmul.f32 %v3240, %v3240
  %v3249 = vmul.f32 %v3241, %v3241
  %v3250 = vmul.f32 %v3242, %v3242
  %v3251 = vmul.f32 %v3243, %v3243
  %v3252 = vmul.f32 %v3244, %v3244
  %v3253 = vmul.f32 %v3245, %v3245
  %v3254 = vadd.f32 %v3246, %v3250
  %v3255 = vadd.f32 %v3247, %v3251
  %v3256 = vadd.f32 %v3248, %v3252
  %v3257 = vadd.f32 %v3249, %v3253
  %v3258 = vmul.f32 %v3254, %v313
  %v3259 = vmul.f32 %v3255, %v313
  %v3260 = vmul.f32 %v3256, %v313
  %v3261 = vmul.f32 %v3257, %v313
  %v3262 = vadd.f32 %v3258, %v3259
  %v3263 = vadd.f32 %v3262, %v3260
  %v3264 = vadd.f32 %v3263, %v3261
  %v3265 = vrot.slane %v3264, 4
  %v3266 = vadd.f32 %v3264, %v3265
  %v3267 = vrot.slane %v3266, 2
  %v3268 = vadd.f32 %v3266, %v3267
  %v3269 = vrot.slane %v3268, 1
  %v3270 = vadd.f32 %v3268, %v3269
  %v3271 = vmul.f32 %v3270, %v652
  %v3272 = vadd.f32 %v3271, 1e-05
  %v3273 = vrsqrt.pop %v3272
  %v3274 = vmul.f32 %v3273, %v3272
  %v3275 = vmul.f32 %v3274, %v3273
  %v3276 = vmul.f32 0.5, %v3275
  %v3277 = vsub.f32 1.5, %v3276
  %v3278 = vmul.f32 %v3273, %v3277
  %vm3279 = vweird.f32 %v3272
  %vm3280 = vweird.f32 %v3273
  %vm3281 = vmor %vm3279, %vm3280
  %v3282 = vsel %vm3281, %v3273, %v3278
  %v3283 = vmul.f32 %v3238, %v3282
  %v3284 = vmul.f32 %v3239, %v3282
  %v3285 = vmul.f32 %v3240, %v3282
  %v3286 = vmul.f32 %v3241, %v3282
  %v3287 = vmul.f32 %v3242, %v3282
  %v3288 = vmul.f32 %v3243, %v3282
  %v3289 = vmul.f32 %v3244, %v3282
  %v3290 = vmul.f32 %v3245, %v3282
  %v3292 = vperm.slane %v2663, 0
  %v3294 = vmul.f32 %v3283, %v3292
  %v3295 = vmul.f32 %v3284, %v3292
  %v3296 = vmul.f32 %v3285, %v3292
  %v3297 = vmul.f32 %v3286, %v3292
  %v3298 = vmul.f32 %v3287, %v3292
  %v3299 = vmul.f32 %v3288, %v3292
  %v3300 = vmul.f32 %v3289, %v3292
  %v3301 = vmul.f32 %v3290, %v3292
  %v3303 = vperm.slane %v2665, 0
  %v3305 = vadd.f32 %v3294, %v3303
  %v3306 = vadd.f32 %v3295, %v3303
  %v3307 = vadd.f32 %v3296, %v3303
  %v3308 = vadd.f32 %v3297, %v3303
  %v3309 = vadd.f32 %v3298, %v3303
  %v3310 = vadd.f32 %v3299, %v3303
  %v3311 = vadd.f32 %v3300, %v3303
  %v3312 = vadd.f32 %v3301, %v3303
  %v3313 = vmax.f32 %v3305, 0.0
  %v3314 = vmax.f32 %v3306, 0.0
  %v3315 = vmax.f32 %v3307, 0.0
  %v3316 = vmax.f32 %v3308, 0.0
  %v3317 = vmax.f32 %v3309, 0.0
  %v3318 = vmax.f32 %v3310, 0.0
  %v3319 = vmax.f32 %v3311, 0.0
  %v3320 = vmax.f32 %v3312, 0.0
  %v3321 = vpack.c.bf16 %v3314, %v3313
  %v3322 = vpack.c.bf16 %v3316, %v3315
  %v3323 = vpack.c.bf16 %v3318, %v3317
  %v3324 = vpack.c.bf16 %v3320, %v3319
  %v3341 = vunpack.c.l.b16 %v2694
  %v3342 = vunpack.c.l.b16 %v2695
  %v3343 = vunpack.c.l.b16 %v2696
  %v3344 = vunpack.c.l.b16 %v2697
  %v3345 = vunpack.c.l.b16 %v2698
  %v3346 = vunpack.c.l.b16 %v2699
  %v3347 = vunpack.c.l.b16 %v2700
  %v3348 = vunpack.c.l.b16 %v2701
  %v3349 = vunpack.c.l.b16 %v2702
  %v3350 = vunpack.c.l.b16 %v2703
  %v3351 = vunpack.c.l.b16 %v2704
  %v3352 = vunpack.c.l.b16 %v2705
  %v3353 = vunpack.c.l.b16 %v2706
  %v3354 = vunpack.c.l.b16 %v2707
  %v3355 = vunpack.c.l.b16 %v2708
  %v3356 = vunpack.c.l.b16 %v2709
  %v3357 = vpack.c.b16 %v3342, %v3341
  %v3358 = vpack.c.b16 %v3344, %v3343
  %v3359 = vpack.c.b16 %v3346, %v3345
  %v3360 = vpack.c.b16 %v3348, %v3347
  %v3361 = vpack.c.b16 %v3350, %v3349
  %v3362 = vpack.c.b16 %v3352, %v3351
  %v3363 = vpack.c.b16 %v3354, %v3353
  %v3364 = vpack.c.b16 %v3356, %v3355
  %3373 = vmatpush.bf16.msra.mxu0 %v3364
  %3374 = vmatpush.bf16.msra.mxu0 %v3363
  %3375 = vmatpush.bf16.msra.mxu0 %v3362
  %3376 = vmatpush.bf16.msra.mxu0 %v3361
  %3377 = vmatpush.bf16.msra.mxu0 %v3360
  %3378 = vmatpush.bf16.msra.mxu0 %v3359
  %3379 = vmatpush.bf16.msra.mxu0 %v3358
  %3380 = vmatpush.bf16.msra.mxu0 %v3357
  %3381 = vmatmul.bf16.gmra.mxu0 %v3321
  %v3382 = vpop.f32.mrf.mxu0
  %v3383 = vadd.f32 0.0, %v3382
  %v3384 = vpop.f32.mrf.mxu0
  %v3385 = vadd.f32 0.0, %v3384
  %3386 = vmatmul.bf16.gmra.mxu0 %v3322
  %v3387 = vpop.f32.mrf.mxu0
  %v3388 = vadd.f32 0.0, %v3387
  %v3389 = vpop.f32.mrf.mxu0
  %v3390 = vadd.f32 0.0, %v3389
  %3391 = vmatmul.bf16.gmra.mxu0 %v3323
  %v3392 = vpop.f32.mrf.mxu0
  %v3393 = vadd.f32 0.0, %v3392
  %v3394 = vpop.f32.mrf.mxu0
  %v3395 = vadd.f32 0.0, %v3394
  %3396 = vmatmul.bf16.gmra.mxu0 %v3324
  %v3397 = vpop.f32.mrf.mxu0
  %v3398 = vadd.f32 0.0, %v3397
  %v3399 = vpop.f32.mrf.mxu0
  %v3400 = vadd.f32 0.0, %v3399
  %3401 = vdwg.mxu0
  %v3402 = vadd.f32 %v3180, %v3383
  %v3403 = vadd.f32 %v3182, %v3385
  %v3404 = vadd.f32 %v3185, %v3388
  %v3405 = vadd.f32 %v3187, %v3390
  %v3406 = vadd.f32 %v3211, %v3393
  %v3407 = vadd.f32 %v3213, %v3395
  %v3408 = vadd.f32 %v3216, %v3398
  %v3409 = vadd.f32 %v3218, %v3400
  %v3411 = vperm.slane %v2667, 0
  %v3413 = vadd.f32 %v3402, %v3411
  %v3414 = vadd.f32 %v3403, %v3411
  %v3415 = vadd.f32 %v3404, %v3411
  %v3416 = vadd.f32 %v3405, %v3411
  %v3417 = vadd.f32 %v3406, %v3411
  %v3418 = vadd.f32 %v3407, %v3411
  %v3419 = vadd.f32 %v3408, %v3411
  %v3420 = vadd.f32 %v3409, %v3411
  %3421 = vadd.xlane.f32.xlu0 %v3413
  %v3422 = vpop.xlane.xlu0 %3421
  %3423 = vadd.xlane.f32.xlu0 %v3414
  %v3424 = vpop.xlane.xlu0 %3423
  %3425 = vadd.xlane.f32.xlu0 %v3415
  %v3426 = vpop.xlane.xlu0 %3425
  %3427 = vadd.xlane.f32.xlu0 %v3416
  %v3428 = vpop.xlane.xlu0 %3427
  %3429 = vadd.xlane.f32.xlu0 %v3417
  %v3430 = vpop.xlane.xlu0 %3429
  %3431 = vadd.xlane.f32.xlu0 %v3418
  %v3432 = vpop.xlane.xlu0 %3431
  %3433 = vadd.xlane.f32.xlu0 %v3419
  %v3434 = vpop.xlane.xlu0 %3433
  %3435 = vadd.xlane.f32.xlu0 %v3420
  %v3436 = vpop.xlane.xlu0 %3435
  %v3437 = vmul.f32 %v3422, %v126
  %v3438 = vmul.f32 %v3424, %v126
  %v3439 = vmul.f32 %v3426, %v126
  %v3440 = vmul.f32 %v3428, %v126
  %v3441 = vmul.f32 %v3430, %v126
  %v3442 = vmul.f32 %v3432, %v126
  %v3443 = vmul.f32 %v3434, %v126
  %v3444 = vmul.f32 %v3436, %v126
  %v3445 = vsub.f32 %v3413, %v3437
  %v3446 = vsub.f32 %v3414, %v3438
  %v3447 = vsub.f32 %v3415, %v3439
  %v3448 = vsub.f32 %v3416, %v3440
  %v3449 = vsub.f32 %v3417, %v3441
  %v3450 = vsub.f32 %v3418, %v3442
  %v3451 = vsub.f32 %v3419, %v3443
  %v3452 = vsub.f32 %v3420, %v3444
  %v3453 = vmul.f32 %v3445, %v3445
  %v3454 = vmul.f32 %v3446, %v3446
  %v3455 = vmul.f32 %v3447, %v3447
  %v3456 = vmul.f32 %v3448, %v3448
  %v3457 = vmul.f32 %v3449, %v3449
  %v3458 = vmul.f32 %v3450, %v3450
  %v3459 = vmul.f32 %v3451, %v3451
  %v3460 = vmul.f32 %v3452, %v3452
  %3461 = vadd.xlane.f32.xlu0 %v3453
  %v3462 = vpop.xlane.xlu0 %3461
  %3463 = vadd.xlane.f32.xlu0 %v3454
  %v3464 = vpop.xlane.xlu0 %3463
  %3465 = vadd.xlane.f32.xlu0 %v3455
  %v3466 = vpop.xlane.xlu0 %3465
  %3467 = vadd.xlane.f32.xlu0 %v3456
  %v3468 = vpop.xlane.xlu0 %3467
  %3469 = vadd.xlane.f32.xlu0 %v3457
  %v3470 = vpop.xlane.xlu0 %3469
  %3471 = vadd.xlane.f32.xlu0 %v3458
  %v3472 = vpop.xlane.xlu0 %3471
  %3473 = vadd.xlane.f32.xlu0 %v3459
  %v3474 = vpop.xlane.xlu0 %3473
  %3475 = vadd.xlane.f32.xlu0 %v3460
  %v3476 = vpop.xlane.xlu0 %3475
  %v3477 = vmul.f32 %v3462, %v126
  %v3478 = vmul.f32 %v3464, %v126
  %v3479 = vmul.f32 %v3466, %v126
  %v3480 = vmul.f32 %v3468, %v126
  %v3481 = vmul.f32 %v3470, %v126
  %v3482 = vmul.f32 %v3472, %v126
  %v3483 = vmul.f32 %v3474, %v126
  %v3484 = vmul.f32 %v3476, %v126
  %v3485 = vadd.f32 %v3477, 0.001
  %v3486 = vadd.f32 %v3478, 0.001
  %v3487 = vadd.f32 %v3479, 0.001
  %v3488 = vadd.f32 %v3480, 0.001
  %v3489 = vadd.f32 %v3481, 0.001
  %v3490 = vadd.f32 %v3482, 0.001
  %v3491 = vadd.f32 %v3483, 0.001
  %v3492 = vadd.f32 %v3484, 0.001
  %v3493 = vrcp.pop %v3485
  %v3494 = vmul.f32 %v3485, %v3493
  %v3495 = vsub.f32 1.0, %v3494
  %v3496 = vmul.f32 %v3493, %v3495
  %v3497 = vadd.f32 %v3493, %v3496
  %vm3498 = vweird.f32 %v3485
  %vm3499 = vweird.f32 %v3493
  %vm3500 = vmor %vm3498, %vm3499
  %v3501 = vsel %vm3500, %v3493, %v3497
  %v3502 = vand.u32 2147483647, %v3485
  %vm3503 = vcmp.eq.f32.partialorder %v3502, 8.507059e+37
  %v3504 = vand.u32 %v3485, 2147483648
  %v3505 = vor.u32 1.1754944e-38, %v3504
  %v3506 = vsel %vm3503, %v3505, %v3501
  %v3507 = vmul.f32 %v3477, %v3506
  %v3508 = vrcp.pop %v3486
  %v3509 = vmul.f32 %v3486, %v3508
  %v3510 = vsub.f32 1.0, %v3509
  %v3511 = vmul.f32 %v3508, %v3510
  %v3512 = vadd.f32 %v3508, %v3511
  %vm3513 = vweird.f32 %v3486
  %vm3514 = vweird.f32 %v3508
  %vm3515 = vmor %vm3513, %vm3514
  %v3516 = vsel %vm3515, %v3508, %v3512
  %v3517 = vand.u32 2147483647, %v3486
  %vm3518 = vcmp.eq.f32.partialorder %v3517, 8.507059e+37
  %v3519 = vand.u32 %v3486, 2147483648
  %v3520 = vor.u32 1.1754944e-38, %v3519
  %v3521 = vsel %vm3518, %v3520, %v3516
  %v3522 = vmul.f32 %v3478, %v3521
  %v3523 = vrcp.pop %v3487
  %v3524 = vmul.f32 %v3487, %v3523
  %v3525 = vsub.f32 1.0, %v3524
  %v3526 = vmul.f32 %v3523, %v3525
  %v3527 = vadd.f32 %v3523, %v3526
  %vm3528 = vweird.f32 %v3487
  %vm3529 = vweird.f32 %v3523
  %vm3530 = vmor %vm3528, %vm3529
  %v3531 = vsel %vm3530, %v3523, %v3527
  %v3532 = vand.u32 2147483647, %v3487
  %vm3533 = vcmp.eq.f32.partialorder %v3532, 8.507059e+37
  %v3534 = vand.u32 %v3487, 2147483648
  %v3535 = vor.u32 1.1754944e-38, %v3534
  %v3536 = vsel %vm3533, %v3535, %v3531
  %v3537 = vmul.f32 %v3479, %v3536
  %v3538 = vrcp.pop %v3488
  %v3539 = vmul.f32 %v3488, %v3538
  %v3540 = vsub.f32 1.0, %v3539
  %v3541 = vmul.f32 %v3538, %v3540
  %v3542 = vadd.f32 %v3538, %v3541
  %vm3543 = vweird.f32 %v3488
  %vm3544 = vweird.f32 %v3538
  %vm3545 = vmor %vm3543, %vm3544
  %v3546 = vsel %vm3545, %v3538, %v3542
  %v3547 = vand.u32 2147483647, %v3488
  %vm3548 = vcmp.eq.f32.partialorder %v3547, 8.507059e+37
  %v3549 = vand.u32 %v3488, 2147483648
  %v3550 = vor.u32 1.1754944e-38, %v3549
  %v3551 = vsel %vm3548, %v3550, %v3546
  %v3552 = vmul.f32 %v3480, %v3551
  %v3553 = vrcp.pop %v3489
  %v3554 = vmul.f32 %v3489, %v3553
  %v3555 = vsub.f32 1.0, %v3554
  %v3556 = vmul.f32 %v3553, %v3555
  %v3557 = vadd.f32 %v3553, %v3556
  %vm3558 = vweird.f32 %v3489
  %vm3559 = vweird.f32 %v3553
  %vm3560 = vmor %vm3558, %vm3559
  %v3561 = vsel %vm3560, %v3553, %v3557
  %v3562 = vand.u32 2147483647, %v3489
  %vm3563 = vcmp.eq.f32.partialorder %v3562, 8.507059e+37
  %v3564 = vand.u32 %v3489, 2147483648
  %v3565 = vor.u32 1.1754944e-38, %v3564
  %v3566 = vsel %vm3563, %v3565, %v3561
  %v3567 = vmul.f32 %v3481, %v3566
  %v3568 = vrcp.pop %v3490
  %v3569 = vmul.f32 %v3490, %v3568
  %v3570 = vsub.f32 1.0, %v3569
  %v3571 = vmul.f32 %v3568, %v3570
  %v3572 = vadd.f32 %v3568, %v3571
  %vm3573 = vweird.f32 %v3490
  %vm3574 = vweird.f32 %v3568
  %vm3575 = vmor %vm3573, %vm3574
  %v3576 = vsel %vm3575, %v3568, %v3572
  %v3577 = vand.u32 2147483647, %v3490
  %vm3578 = vcmp.eq.f32.partialorder %v3577, 8.507059e+37
  %v3579 = vand.u32 %v3490, 2147483648
  %v3580 = vor.u32 1.1754944e-38, %v3579
  %v3581 = vsel %vm3578, %v3580, %v3576
  %v3582 = vmul.f32 %v3482, %v3581
  %v3583 = vrcp.pop %v3491
  %v3584 = vmul.f32 %v3491, %v3583
  %v3585 = vsub.f32 1.0, %v3584
  %v3586 = vmul.f32 %v3583, %v3585
  %v3587 = vadd.f32 %v3583, %v3586
  %vm3588 = vweird.f32 %v3491
  %vm3589 = vweird.f32 %v3583
  %vm3590 = vmor %vm3588, %vm3589
  %v3591 = vsel %vm3590, %v3583, %v3587
  %v3592 = vand.u32 2147483647, %v3491
  %vm3593 = vcmp.eq.f32.partialorder %v3592, 8.507059e+37
  %v3594 = vand.u32 %v3491, 2147483648
  %v3595 = vor.u32 1.1754944e-38, %v3594
  %v3596 = vsel %vm3593, %v3595, %v3591
  %v3597 = vmul.f32 %v3483, %v3596
  %v3598 = vrcp.pop %v3492
  %v3599 = vmul.f32 %v3492, %v3598
  %v3600 = vsub.f32 1.0, %v3599
  %v3601 = vmul.f32 %v3598, %v3600
  %v3602 = vadd.f32 %v3598, %v3601
  %vm3603 = vweird.f32 %v3492
  %vm3604 = vweird.f32 %v3598
  %vm3605 = vmor %vm3603, %vm3604
  %v3606 = vsel %vm3605, %v3598, %v3602
  %v3607 = vand.u32 2147483647, %v3492
  %vm3608 = vcmp.eq.f32.partialorder %v3607, 8.507059e+37
  %v3609 = vand.u32 %v3492, 2147483648
  %v3610 = vor.u32 1.1754944e-38, %v3609
  %v3611 = vsel %vm3608, %v3610, %v3606
  %v3612 = vmul.f32 %v3484, %v3611
  %v3613 = vadd.f32 %v3507, %v3567
  %v3614 = vadd.f32 %v3522, %v3582
  %v3615 = vadd.f32 %v3537, %v3597
  %v3616 = vadd.f32 %v3552, %v3612
  %v3617 = vmul.f32 %v3613, %v313
  %v3618 = vmul.f32 %v3614, %v313
  %v3619 = vmul.f32 %v3615, %v313
  %v3620 = vmul.f32 %v3616, %v313
  %v3621 = vrsqrt.pop %v3485
  %v3622 = vmul.f32 %v3621, %v3485
  %v3623 = vmul.f32 %v3622, %v3621
  %v3624 = vmul.f32 0.5, %v3623
  %v3625 = vsub.f32 1.5, %v3624
  %v3626 = vmul.f32 %v3621, %v3625
  %vm3627 = vweird.f32 %v3485
  %vm3628 = vweird.f32 %v3621
  %vm3629 = vmor %vm3627, %vm3628
  %v3630 = vsel %vm3629, %v3621, %v3626
  %v3631 = vrsqrt.pop %v3486
  %v3632 = vmul.f32 %v3631, %v3486
  %v3633 = vmul.f32 %v3632, %v3631
  %v3634 = vmul.f32 0.5, %v3633
  %v3635 = vsub.f32 1.5, %v3634
  %v3636 = vmul.f32 %v3631, %v3635
  %vm3637 = vweird.f32 %v3486
  %vm3638 = vweird.f32 %v3631
  %vm3639 = vmor %vm3637, %vm3638
  %v3640 = vsel %vm3639, %v3631, %v3636
  %v3641 = vrsqrt.pop %v3487
  %v3642 = vmul.f32 %v3641, %v3487
  %v3643 = vmul.f32 %v3642, %v3641
  %v3644 = vmul.f32 0.5, %v3643
  %v3645 = vsub.f32 1.5, %v3644
  %v3646 = vmul.f32 %v3641, %v3645
  %vm3647 = vweird.f32 %v3487
  %vm3648 = vweird.f32 %v3641
  %vm3649 = vmor %vm3647, %vm3648
  %v3650 = vsel %vm3649, %v3641, %v3646
  %v3651 = vrsqrt.pop %v3488
  %v3652 = vmul.f32 %v3651, %v3488
  %v3653 = vmul.f32 %v3652, %v3651
  %v3654 = vmul.f32 0.5, %v3653
  %v3655 = vsub.f32 1.5, %v3654
  %v3656 = vmul.f32 %v3651, %v3655
  %vm3657 = vweird.f32 %v3488
  %vm3658 = vweird.f32 %v3651
  %vm3659 = vmor %vm3657, %vm3658
  %v3660 = vsel %vm3659, %v3651, %v3656
  %v3661 = vrsqrt.pop %v3489
  %v3662 = vmul.f32 %v3661, %v3489
  %v3663 = vmul.f32 %v3662, %v3661
  %v3664 = vmul.f32 0.5, %v3663
  %v3665 = vsub.f32 1.5, %v3664
  %v3666 = vmul.f32 %v3661, %v3665
  %vm3667 = vweird.f32 %v3489
  %vm3668 = vweird.f32 %v3661
  %vm3669 = vmor %vm3667, %vm3668
  %v3670 = vsel %vm3669, %v3661, %v3666
  %v3671 = vrsqrt.pop %v3490
  %v3672 = vmul.f32 %v3671, %v3490
  %v3673 = vmul.f32 %v3672, %v3671
  %v3674 = vmul.f32 0.5, %v3673
  %v3675 = vsub.f32 1.5, %v3674
  %v3676 = vmul.f32 %v3671, %v3675
  %vm3677 = vweird.f32 %v3490
  %vm3678 = vweird.f32 %v3671
  %vm3679 = vmor %vm3677, %vm3678
  %v3680 = vsel %vm3679, %v3671, %v3676
  %v3681 = vrsqrt.pop %v3491
  %v3682 = vmul.f32 %v3681, %v3491
  %v3683 = vmul.f32 %v3682, %v3681
  %v3684 = vmul.f32 0.5, %v3683
  %v3685 = vsub.f32 1.5, %v3684
  %v3686 = vmul.f32 %v3681, %v3685
  %vm3687 = vweird.f32 %v3491
  %vm3688 = vweird.f32 %v3681
  %vm3689 = vmor %vm3687, %vm3688
  %v3690 = vsel %vm3689, %v3681, %v3686
  %v3691 = vrsqrt.pop %v3492
  %v3692 = vmul.f32 %v3691, %v3492
  %v3693 = vmul.f32 %v3692, %v3691
  %v3694 = vmul.f32 0.5, %v3693
  %v3695 = vsub.f32 1.5, %v3694
  %v3696 = vmul.f32 %v3691, %v3695
  %vm3697 = vweird.f32 %v3492
  %vm3698 = vweird.f32 %v3691
  %vm3699 = vmor %vm3697, %vm3698
  %v3700 = vsel %vm3699, %v3691, %v3696
  %v3701 = vadd.f32 %v3617, 1e-05
  %v3702 = vadd.f32 %v3618, 1e-05
  %v3703 = vadd.f32 %v3619, 1e-05
  %v3704 = vadd.f32 %v3620, 1e-05
  %v3705 = vrsqrt.pop %v3701
  %v3706 = vmul.f32 %v3705, %v3701
  %v3707 = vmul.f32 %v3706, %v3705
  %v3708 = vmul.f32 0.5, %v3707
  %v3709 = vsub.f32 1.5, %v3708
  %v3710 = vmul.f32 %v3705, %v3709
  %vm3711 = vweird.f32 %v3701
  %vm3712 = vweird.f32 %v3705
  %vm3713 = vmor %vm3711, %vm3712
  %v3714 = vsel %vm3713, %v3705, %v3710
  %v3715 = vrsqrt.pop %v3702
  %v3716 = vmul.f32 %v3715, %v3702
  %v3717 = vmul.f32 %v3716, %v3715
  %v3718 = vmul.f32 0.5, %v3717
  %v3719 = vsub.f32 1.5, %v3718
  %v3720 = vmul.f32 %v3715, %v3719
  %vm3721 = vweird.f32 %v3702
  %vm3722 = vweird.f32 %v3715
  %vm3723 = vmor %vm3721, %vm3722
  %v3724 = vsel %vm3723, %v3715, %v3720
  %v3725 = vrsqrt.pop %v3703
  %v3726 = vmul.f32 %v3725, %v3703
  %v3727 = vmul.f32 %v3726, %v3725
  %v3728 = vmul.f32 0.5, %v3727
  %v3729 = vsub.f32 1.5, %v3728
  %v3730 = vmul.f32 %v3725, %v3729
  %vm3731 = vweird.f32 %v3703
  %vm3732 = vweird.f32 %v3725
  %vm3733 = vmor %vm3731, %vm3732
  %v3734 = vsel %vm3733, %v3725, %v3730
  %v3735 = vrsqrt.pop %v3704
  %v3736 = vmul.f32 %v3735, %v3704
  %v3737 = vmul.f32 %v3736, %v3735
  %v3738 = vmul.f32 0.5, %v3737
  %v3739 = vsub.f32 1.5, %v3738
  %v3740 = vmul.f32 %v3735, %v3739
  %vm3741 = vweird.f32 %v3704
  %vm3742 = vweird.f32 %v3735
  %vm3743 = vmor %vm3741, %vm3742
  %v3744 = vsel %vm3743, %v3735, %v3740
  %v3745 = vmul.f32 %v3630, %v3714
  %v3746 = vmul.f32 %v3640, %v3724
  %v3747 = vmul.f32 %v3650, %v3734
  %v3748 = vmul.f32 %v3660, %v3744
  %v3749 = vmul.f32 %v3670, %v3714
  %v3750 = vmul.f32 %v3680, %v3724
  %v3751 = vmul.f32 %v3690, %v3734
  %v3752 = vmul.f32 %v3700, %v3744
  %v3753 = vmul.f32 %v3445, %v3745
  %v3754 = vmul.f32 %v3446, %v3746
  %v3755 = vmul.f32 %v3447, %v3747
  %v3756 = vmul.f32 %v3448, %v3748
  %v3757 = vmul.f32 %v3449, %v3749
  %v3758 = vmul.f32 %v3450, %v3750
  %v3759 = vmul.f32 %v3451, %v3751
  %v3760 = vmul.f32 %v3452, %v3752
  %3762 = vset.pattern.permute.xlu0 0
  %3763 = vperm.xlu0 %3762, %v2669
  %v3764 = vpop.permute.xlu0 %3763
  %3767 = vset.pattern.permute.xlu0 0
  %3768 = vperm.xlu0 %3767, %v2670
  %v3769 = vpop.permute.xlu0 %3768
  %3772 = vset.pattern.permute.xlu0 0
  %3773 = vperm.xlu0 %3772, %v2671
  %v3774 = vpop.permute.xlu0 %3773
  %3777 = vset.pattern.permute.xlu0 0
  %3778 = vperm.xlu0 %3777, %v2672
  %v3779 = vpop.permute.xlu0 %3778
  %v3781 = vmul.f32 %v3753, %v3764
  %v3782 = vmul.f32 %v3754, %v3769
  %v3783 = vmul.f32 %v3755, %v3774
  %v3784 = vmul.f32 %v3756, %v3779
  %v3785 = vmul.f32 %v3757, %v3764
  %v3786 = vmul.f32 %v3758, %v3769
  %v3787 = vmul.f32 %v3759, %v3774
  %v3788 = vmul.f32 %v3760, %v3779
  %3790 = vset.pattern.permute.xlu0 0
  %3791 = vperm.xlu0 %3790, %v2674
  %v3792 = vpop.permute.xlu0 %3791
  %3795 = vset.pattern.permute.xlu0 0
  %3796 = vperm.xlu0 %3795, %v2675
  %v3797 = vpop.permute.xlu0 %3796
  %3800 = vset.pattern.permute.xlu0 0
  %3801 = vperm.xlu0 %3800, %v2676
  %v3802 = vpop.permute.xlu0 %3801
  %3805 = vset.pattern.permute.xlu0 0
  %3806 = vperm.xlu0 %3805, %v2677
  %v3807 = vpop.permute.xlu0 %3806
  %v3809 = vadd.f32 %v3781, %v3792
  %v3810 = vadd.f32 %v3782, %v3797
  %v3811 = vadd.f32 %v3783, %v3802
  %v3812 = vadd.f32 %v3784, %v3807
  %v3813 = vadd.f32 %v3785, %v3792
  %v3814 = vadd.f32 %v3786, %v3797
  %v3815 = vadd.f32 %v3787, %v3802
  %v3816 = vadd.f32 %v3788, %v3807
  %v3817 = vmax.f32 %v3809, 0.0
  %v3818 = vmax.f32 %v3810, 0.0
  %v3819 = vmax.f32 %v3811, 0.0
  %v3820 = vmax.f32 %v3812, 0.0
  %v3821 = vmax.f32 %v3813, 0.0
  %v3822 = vmax.f32 %v3814, 0.0
  %v3823 = vmax.f32 %v3815, 0.0
  %v3824 = vmax.f32 %v3816, 0.0
  %v3825 = vpack.c.bf16 %v3817, %v3817
  %v3826 = vpack.c.bf16 %v3818, %v3818
  %v3827 = vpack.c.bf16 %v3819, %v3819
  %v3828 = vpack.c.bf16 %v3820, %v3820
  %v3829 = vpack.c.bf16 %v3821, %v3821
  %v3830 = vpack.c.bf16 %v3822, %v3822
  %v3831 = vpack.c.bf16 %v3823, %v3823
  %v3832 = vpack.c.bf16 %v3824, %v3824
  %3834 = vset.pattern.permute.xlu0 0
  %3835 = vperm.xlu0 %3834, %v2679
  %v3836 = vpop.permute.xlu0 %3835
  %3839 = vset.pattern.permute.xlu0 0
  %3840 = vperm.xlu0 %3839, %v2680
  %v3841 = vpop.permute.xlu0 %3840
  %3844 = vset.pattern.permute.xlu0 0
  %3845 = vperm.xlu0 %3844, %v2681
  %v3846 = vpop.permute.xlu0 %3845
  %3849 = vset.pattern.permute.xlu0 0
  %3850 = vperm.xlu0 %3849, %v2682
  %v3851 = vpop.permute.xlu0 %3850
  %v3857 = vunpack.c.l.b16 %v2689
  %v3858 = vunpack.c.l.b16 %v2690
  %v3859 = vunpack.c.l.b16 %v2691
  %v3860 = vunpack.c.l.b16 %v2692
  %v3861 = vpack.c.b16 %v3858, %v3857
  %v3862 = vpack.c.b16 %v3860, %v3859
  %v3867 = vunpack.c.l.b16 %v3825
  %v3868 = vunpack.c.l.b16 %v3826
  %v3869 = vunpack.c.l.b16 %v3827
  %v3870 = vunpack.c.l.b16 %v3828
  %v3871 = vpack.c.b16 %v3868, %v3867
  %v3872 = vpack.c.b16 %v3870, %v3869
  %v3876 = vsel %vm572, %v3861, 0
  %v3879 = vsel %vm572, %v3862, 0
  %3881 = vmatpush.bf16.msra.mxu0 0
  %3882 = vmatpush.bf16.msra.mxu0 0
  %3883 = vmatpush.bf16.msra.mxu0 0
  %3884 = vmatpush.bf16.msra.mxu0 0
  %3885 = vmatpush.bf16.msra.mxu0 0
  %3886 = vmatpush.bf16.msra.mxu0 0
  %3887 = vmatpush.bf16.msra.mxu0 %v3872
  %3888 = vmatpush.bf16.msra.mxu0 %v3871
  %3889 = vmatmul.bf16.gmra.mxu0 %v3876
  %v3890 = vpop.f32.mrf.mxu0
  %v3891 = vadd.f32 %v3836, %v3890
  %v3892 = vpop.f32.mrf.mxu0
  %v3893 = vadd.f32 %v3841, %v3892
  %3894 = vmatmul.bf16.gmra.mxu0 %v3879
  %v3895 = vpop.f32.mrf.mxu0
  %v3896 = vadd.f32 %v3846, %v3895
  %v3897 = vpop.f32.mrf.mxu0
  %v3898 = vadd.f32 %v3851, %v3897
  %3899 = vdwg.mxu0
  %v3904 = vunpack.c.l.b16 %v3829
  %v3905 = vunpack.c.l.b16 %v3830
  %v3906 = vunpack.c.l.b16 %v3831
  %v3907 = vunpack.c.l.b16 %v3832
  %v3908 = vpack.c.b16 %v3905, %v3904
  %v3909 = vpack.c.b16 %v3907, %v3906
  %3912 = vmatpush.bf16.msra.mxu0 0
  %3913 = vmatpush.bf16.msra.mxu0 0
  %3914 = vmatpush.bf16.msra.mxu0 0
  %3915 = vmatpush.bf16.msra.mxu0 0
  %3916 = vmatpush.bf16.msra.mxu0 0
  %3917 = vmatpush.bf16.msra.mxu0 0
  %3918 = vmatpush.bf16.msra.mxu0 %v3909
  %3919 = vmatpush.bf16.msra.mxu0 %v3908
  %3920 = vmatmul.bf16.gmra.mxu0 %v3876
  %v3921 = vpop.f32.mrf.mxu0
  %v3922 = vadd.f32 %v3836, %v3921
  %v3923 = vpop.f32.mrf.mxu0
  %v3924 = vadd.f32 %v3841, %v3923
  %3925 = vmatmul.bf16.gmra.mxu0 %v3879
  %v3926 = vpop.f32.mrf.mxu0
  %v3927 = vadd.f32 %v3846, %v3926
  %v3928 = vpop.f32.mrf.mxu0
  %v3929 = vadd.f32 %v3851, %v3928
  %3930 = vdwg.mxu0
  %v3931 = vadd.f32 %v3891, %v2639
  %v3932 = vadd.f32 %v3893, %v2640
  %v3933 = vadd.f32 %v3896, %v2641
  %v3934 = vadd.f32 %v3898, %v2642
  %v3935 = vadd.f32 %v3922, %v2643
  %v3936 = vadd.f32 %v3924, %v2644
  %v3937 = vadd.f32 %v3927, %v2645
  %v3938 = vadd.f32 %v3929, %v2646
  %3939 = vst [vmem:[%s13] sm:$0xff] %v3931
  %3940 = vst [vmem:[%s13 + $0x8] sm:$0xff] %v3932
  %3941 = vst [vmem:[%s13 + $0x10] sm:$0xff] %v3933
  %3942 = vst [vmem:[%s13 + $0x18] sm:$0xff] %v3934
  %3943 = vst [vmem:[%s13 + $0x20] sm:$0xff] %v3935
  %3944 = vst [vmem:[%s13 + $0x28] sm:$0xff] %v3936
  %3945 = vst [vmem:[%s13 + $0x30] sm:$0xff] %v3937
  %3946 = vst [vmem:[%s13 + $0x38] sm:$0xff] %v3938
  // Predicated region
  $region54: #{geo_attention_block.6} parent=0 // pred_check
    _
  $region55: #{geo_attention_block.6} parent=0 // pred_check_branch
    %3948 = sbr.rel (0) target = $region57
  $region56: #{geo_attention_block.6} parent=0 // pred_region
    _
  $region57: #{geo_attention_block.6} parent=0 // pred_fallthru
    _
  // Predicated region
  $region58: #{geo_attention_block.6} parent=0 // pred_check
    _
  $region59: #{geo_attention_block.6} parent=0 // pred_check_branch
    %3950 = sbr.rel (0) target = $region61
  $region60: #{geo_attention_block.6} parent=0 // pred_region
    _
  $region61: #{geo_attention_block.6} parent=0 // pred_fallthru
    _

</llo_original>
